<compile_context>
chip_gen: v6e
topology: v6e:2x2x1
jax: 0.10.0
libtpu: 0.0.40
codegen_flags: <defaults>
</compile_context>

<pallas_src>
import jax
import jax.numpy as jnp
from jax.experimental import pallas as pl
from jax.experimental.pallas import tpu as pltpu

# ----------------------------- model dims -----------------------------------
FEAT_DIM   = 64                              # stand-in for resnet18 feat_dims[-1] (=512)
SPATIAL    = 5                               # resnet18 final spatial map is 5x5
FLAT_FEATS = FEAT_DIM * SPATIAL * SPATIAL    # feat_dims[-1] * 25 = 1600
LATENT_DIM = 8
HIDDEN_DIM = 128
NUM_POINTS = 16                              # SmallDecoder output points (stand-in)

LANE = 128
TK   = 1024                                  # encoder reduction (image-K) tile


def _round_up(x, m):
    return (x + m - 1) // m * m


FLAT_PAD = _round_up(FLAT_FEATS, LANE)       # 1664 = 13 * 128 (lane-dense)


# -------------------------- fused forward kernel ----------------------------
def _vae_fused_kernel(x_ref, wenc_ref, benc_ref,
                      wmu_ref, bmu_ref, wlv_ref, blv_ref, eps_ref,
                      wdec_ref, bdec_ref, wd1_ref, bd1_ref, wd2_ref, bd2_ref,
                      mu_ref, lv_ref, pts_ref, acc_ref):
    k = pl.program_id(0)

    @pl.when(k == 0)
    def _():
        acc_ref[...] = jnp.zeros_like(acc_ref)

    # Encoder stand-in: accumulate flat_img @ w_enc over the K grid axis.
    # Weight streamed as bf16; accumulate in f32 on the MXU.
    acc_ref[...] += jnp.dot(x_ref[...].astype(jnp.bfloat16), wenc_ref[...],
                            preferred_element_type=jnp.float32)

    @pl.when(k == pl.num_programs(0) - 1)
    def _():
        # encoder(images)[-1].view(bs, -1)  (ReLU'd linear stand-in, padded F)
        feats = jnp.maximum(acc_ref[...] + benc_ref[...], 0.0)          # (B, Fp)

        # fc_mu / fc_logvar
        mu = jnp.dot(feats, wmu_ref[...],
                     preferred_element_type=jnp.float32) + bmu_ref[...]  # (B, L)
        lv = jnp.dot(feats, wlv_ref[...],
                     preferred_element_type=jnp.float32) + blv_ref[...]  # (B, L)

        # latent_sample (training mode): z = mu + eps * exp(0.5 * logvar)
        z = mu + eps_ref[...] * jnp.exp(0.5 * lv)                        # (B, L)

        # fc_decode
        dec = jnp.dot(z, wdec_ref[...],
                      preferred_element_type=jnp.float32) + bdec_ref[...]  # (B, Fp)

        # SmallDecoder stand-in: fused 2-layer MLP (bf16 first weight)
        h = jnp.dot(dec.astype(jnp.bfloat16), wd1_ref[...],
                    preferred_element_type=jnp.float32) + bd1_ref[...]
        h = jnp.maximum(h, 0.0)
        pts = jnp.dot(h, wd2_ref[...],
                      preferred_element_type=jnp.float32) + bd2_ref[...]

        mu_ref[...] = mu
        lv_ref[...] = lv
        pts_ref[...] = pts


def _vae_fused_call(flat_img, eps, p):
    B, k_pad = flat_img.shape
    assert k_pad % TK == 0
    Fp, L, H, O = FLAT_PAD, LATENT_DIM, HIDDEN_DIM, NUM_POINTS * 3

    def full(shape):
        # constant index map -> block is DMA'd into VMEM once and stays resident
        return pl.BlockSpec(shape, lambda k: (0,) * len(shape))

    return pl.pallas_call(
        _vae_fused_kernel,
        out_shape=(jax.ShapeDtypeStruct((B, L), jnp.float32),
                   jax.ShapeDtypeStruct((B, L), jnp.float32),
                   jax.ShapeDtypeStruct((B, O), jnp.float32)),
        grid_spec=pltpu.PrefetchScalarGridSpec(
            num_scalar_prefetch=0,
            grid=(k_pad // TK,),
            in_specs=[
                pl.BlockSpec((B, TK), lambda k: (0, k)),     # flat image tile
                pl.BlockSpec((TK, Fp), lambda k: (k, 0)),    # w_enc tile (bf16)
                full((1, Fp)),                               # b_enc
                full((Fp, L)), full((1, L)),                 # fc_mu
                full((Fp, L)), full((1, L)),                 # fc_logvar
                full((B, L)),                                # eps
                full((L, Fp)), full((1, Fp)),                # fc_decode
                full((Fp, H)), full((1, H)),                 # decoder fc1 (bf16)
                full((H, O)), full((1, O)),                  # decoder fc2
            ],
            out_specs=[full((B, L)), full((B, L)), full((B, O))],
            scratch_shapes=[pltpu.VMEM((B, Fp), jnp.float32)],
        ),
        compiler_params=pltpu.CompilerParams(
            dimension_semantics=("arbitrary",)),
    )(flat_img,
      p["w_enc_t"], p["b_enc"],
      p["w_mu_t"], p["b_mu"],
      p["w_lv_t"], p["b_lv"],
      eps,
      p["w_dec_t"], p["b_dec"],
      p["w_d1_t"], p["b_d1"],
      p["w_d2_t"], p["b_d2"])


# ------------------------------ parameters -----------------------------------
def _init_linear(key, out_dim, in_dim):
    kw, kb = jax.random.split(key)
    bound = 1.0 / (in_dim ** 0.5)
    w = jax.random.uniform(kw, (out_dim, in_dim), jnp.float32, -bound, bound)
    b = jax.random.uniform(kb, (out_dim,), jnp.float32, -bound, bound)
    return w, b


def _pack(w, b, *, k_pad=None, o_pad=None, w_dtype=jnp.float32):
    """(O, K) PyTorch-layout weight -> pre-transposed, zero-padded (K_pad, O_pad)
    HBM layout done ONCE at init (no per-call transpose copies)."""
    O, K = w.shape
    k_pad = K if k_pad is None else k_pad
    o_pad = O if o_pad is None else o_pad
    wt = jnp.zeros((k_pad, o_pad), jnp.float32).at[:K, :O].set(w.T).astype(w_dtype)
    bp = jnp.zeros((1, o_pad), jnp.float32).at[0, :O].set(b)
    return wt, bp


def init_params(key, img_flat_dim):
    keys = jax.random.split(key, 6)
    k_pad = _round_up(img_flat_dim, TK)
    p = {}
    # TODO(synk): build_backbone('resnet18') is not defined in the source module;
    # the encoder is stood in by a single linear+ReLU producing (B, FEAT_DIM*25).
    w, b = _init_linear(keys[0], FLAT_FEATS, img_flat_dim)
    p["w_enc_t"], p["b_enc"] = _pack(w, b, k_pad=k_pad, o_pad=FLAT_PAD,
                                     w_dtype=jnp.bfloat16)
    w, b = _init_linear(keys[1], LATENT_DIM, FLAT_FEATS)
    p["w_mu_t"], p["b_mu"] = _pack(w, b, k_pad=FLAT_PAD)
    w, b = _init_linear(keys[2], LATENT_DIM, FLAT_FEATS)
    p["w_lv_t"], p["b_lv"] = _pack(w, b, k_pad=FLAT_PAD)
    w, b = _init_linear(keys[3], FLAT_FEATS, LATENT_DIM)
    p["w_dec_t"], p["b_dec"] = _pack(w, b, o_pad=FLAT_PAD)
    # TODO(synk): SmallDecoder is not defined in the source module; stood in by a
    # fused 2-layer MLP producing (B, NUM_POINTS, 3); the optional `P` arg is ignored.
    w, b = _init_linear(keys[4], HIDDEN_DIM, FLAT_FEATS)
    p["w_d1_t"], p["b_d1"] = _pack(w, b, k_pad=FLAT_PAD, w_dtype=jnp.bfloat16)
    w, b = _init_linear(keys[5], NUM_POINTS * 3, HIDDEN_DIM)
    p["w_d2_t"], p["b_d2"] = _pack(w, b)
    return p


# ------------------------------- forward --------------------------------------
def vae_forward(images, params, eps_key, P=None):
    B = images.shape[0]
    flat_img = images.reshape(B, -1).astype(jnp.float32)     # NCHW flattened
    k_img = flat_img.shape[1]
    k_pad = _round_up(k_img, TK)
    if k_pad != k_img:
        flat_img = jnp.pad(flat_img, ((0, 0), (0, k_pad - k_img)))

    # eps = randn_like(logvar)  (generated host/XLA-side; consumed in-kernel)
    eps = jax.random.normal(eps_key, (B, LATENT_DIM), jnp.float32)

    mu, logvar, pts_flat = _vae_fused_call(flat_img, eps, params)
    ptclds = pts_flat.reshape(B, NUM_POINTS, 3)
    return ptclds, mu, logvar


# --------------------------------- main ----------------------------------------
if __name__ == "__main__":
    key = jax.random.PRNGKey(0)
    k_img, k_par, k_eps = jax.random.split(key, 3)

    B, C, H, W = 2, 3, 32, 32
    images = jax.random.normal(k_img, (B, C, H, W), jnp.float32)

    params = init_params(k_par, C * H * W)

    fwd = jax.jit(vae_forward)
    ptclds, mu, logvar = fwd(images, params, k_eps)
    jax.block_until_ready((ptclds, mu, logvar))

    assert ptclds.shape == (B, NUM_POINTS, 3)
    assert mu.shape == (B, LATENT_DIM)
    assert logvar.shape == (B, LATENT_DIM)
    print("KERNEL_OK")
</pallas_src>

<mosaic_0001>
module attributes {stable_mosaic.version = 11 : i64} {
  func.func @_vae_fused_kernel(%arg0: i32, %arg1: memref<2x1024xf32, #tpu.memory_space<vmem>>, %arg2: memref<1024x1664xbf16, #tpu.memory_space<vmem>>, %arg3: memref<1x1664xf32, #tpu.memory_space<vmem>>, %arg4: memref<1664x8xf32, #tpu.memory_space<vmem>>, %arg5: memref<1x8xf32, #tpu.memory_space<vmem>>, %arg6: memref<1664x8xf32, #tpu.memory_space<vmem>>, %arg7: memref<1x8xf32, #tpu.memory_space<vmem>>, %arg8: memref<2x8xf32, #tpu.memory_space<vmem>>, %arg9: memref<8x1664xf32, #tpu.memory_space<vmem>>, %arg10: memref<1x1664xf32, #tpu.memory_space<vmem>>, %arg11: memref<1664x128xbf16, #tpu.memory_space<vmem>>, %arg12: memref<1x128xf32, #tpu.memory_space<vmem>>, %arg13: memref<128x48xf32, #tpu.memory_space<vmem>>, %arg14: memref<1x48xf32, #tpu.memory_space<vmem>>, %arg15: memref<2x8xf32, #tpu.memory_space<vmem>>, %arg16: memref<2x8xf32, #tpu.memory_space<vmem>>, %arg17: memref<2x48xf32, #tpu.memory_space<vmem>>, %arg18: memref<2x1664xf32, #tpu.memory_space<vmem>>) attributes {dimension_semantics = [#tpu.dimension_semantics<arbitrary>], iteration_bounds = array<i64: 3>, scalar_prefetch = 0 : i64, scratch_operands = 1 : i64, tpu.core_type = #tpu.core_type<tc>, window_params = [{transform_indices = @transform_0, window_bounds = array<i64: 2, 1024>}, {transform_indices = @transform_1, window_bounds = array<i64: 1024, 1664>}, {pipeline_mode = #tpu.pipeline_mode<synchronous>, transform_indices = @transform_2, window_bounds = array<i64: 1, 1664>}, {pipeline_mode = #tpu.pipeline_mode<synchronous>, transform_indices = @transform_3, window_bounds = array<i64: 1664, 8>}, {pipeline_mode = #tpu.pipeline_mode<synchronous>, transform_indices = @transform_4, window_bounds = array<i64: 1, 8>}, {pipeline_mode = #tpu.pipeline_mode<synchronous>, transform_indices = @transform_5, window_bounds = array<i64: 1664, 8>}, {pipeline_mode = #tpu.pipeline_mode<synchronous>, transform_indices = @transform_6, window_bounds = array<i64: 1, 8>}, {pipeline_mode = #tpu.pipeline_mode<synchronous>, transform_indices = @transform_7, window_bounds = array<i64: 2, 8>}, {pipeline_mode = #tpu.pipeline_mode<synchronous>, transform_indices = @transform_8, window_bounds = array<i64: 8, 1664>}, {pipeline_mode = #tpu.pipeline_mode<synchronous>, transform_indices = @transform_9, window_bounds = array<i64: 1, 1664>}, {pipeline_mode = #tpu.pipeline_mode<synchronous>, transform_indices = @transform_10, window_bounds = array<i64: 1664, 128>}, {pipeline_mode = #tpu.pipeline_mode<synchronous>, transform_indices = @transform_11, window_bounds = array<i64: 1, 128>}, {pipeline_mode = #tpu.pipeline_mode<synchronous>, transform_indices = @transform_12, window_bounds = array<i64: 128, 48>}, {pipeline_mode = #tpu.pipeline_mode<synchronous>, transform_indices = @transform_13, window_bounds = array<i64: 1, 48>}, {pipeline_mode = #tpu.pipeline_mode<synchronous>, transform_indices = @transform_14, window_bounds = array<i64: 2, 8>}, {pipeline_mode = #tpu.pipeline_mode<synchronous>, transform_indices = @transform_15, window_bounds = array<i64: 2, 8>}, {pipeline_mode = #tpu.pipeline_mode<synchronous>, transform_indices = @transform_16, window_bounds = array<i64: 2, 48>}]} {
    %c0_i32 = arith.constant 0 : i32
    %0 = arith.cmpi eq, %arg0, %c0_i32 : i32
    %1 = arith.extui %0 : i1 to i32
    %c0_i32_0 = arith.constant 0 : i32
    %2 = arith.cmpi ne, %1, %c0_i32_0 : i32
    scf.if %2 {
      %cst_9 = arith.constant 0.000000e+00 : f32
      %13 = vector.broadcast %cst_9 : f32 to vector<2x1664xf32>
      %c0_10 = arith.constant 0 : index
      %c0_11 = arith.constant 0 : index
      %14 = vector.load %arg18[%c0_10, %c0_11] : memref<2x1664xf32, #tpu.memory_space<vmem>>, vector<2x1664xf32>
      tpu.vector_store %arg18[%c0_10, %c0_11], %13 {strides = array<i32>} : memref<2x1664xf32, #tpu.memory_space<vmem>>, vector<2x1664xf32>,
    } else {
    }
    %c0 = arith.constant 0 : index
    %c0_1 = arith.constant 0 : index
    %3 = vector.load %arg18[%c0, %c0_1] : memref<2x1664xf32, #tpu.memory_space<vmem>>, vector<2x1664xf32>
    %c0_2 = arith.constant 0 : index
    %c0_3 = arith.constant 0 : index
    %4 = vector.load %arg1[%c0_2, %c0_3] : memref<2x1024xf32, #tpu.memory_space<vmem>>, vector<2x1024xf32>
    %5 = arith.truncf %4 : vector<2x1024xf32> to vector<2x1024xbf16>
    %c0_4 = arith.constant 0 : index
    %c0_5 = arith.constant 0 : index
    %6 = vector.load %arg2[%c0_4, %c0_5] : memref<1024x1664xbf16, #tpu.memory_space<vmem>>, vector<1024x1664xbf16>
    %cst = arith.constant dense<0.000000e+00> : vector<2x1664xf32>
    %7 = tpu.matmul %5, %6, %cst {dimension_numbers = #tpu.dot_dimension_numbers<[1], [0], [0], [1], [0, 0, 1, 1], [], []>} : vector<2x1024xbf16>, vector<1024x1664xbf16>, vector<2x1664xf32> -> vector<2x1664xf32>
    %8 = arith.addf %3, %7 : vector<2x1664xf32>
    %c0_6 = arith.constant 0 : index
    %c0_7 = arith.constant 0 : index
    %9 = vector.load %arg18[%c0_6, %c0_7] : memref<2x1664xf32, #tpu.memory_space<vmem>>, vector<2x1664xf32>
    tpu.vector_store %arg18[%c0_6, %c0_7], %8 {strides = array<i32>} : memref<2x1664xf32, #tpu.memory_space<vmem>>, vector<2x1664xf32>,
    %c2_i32 = arith.constant 2 : i32
    %10 = arith.cmpi eq, %arg0, %c2_i32 : i32
    %11 = arith.extui %10 : i1 to i32
    %c0_i32_8 = arith.constant 0 : i32
    %12 = arith.cmpi ne, %11, %c0_i32_8 : i32
    scf.if %12 {
      %c0_9 = arith.constant 0 : index
      %c0_10 = arith.constant 0 : index
      %13 = vector.load %arg18[%c0_9, %c0_10] : memref<2x1664xf32, #tpu.memory_space<vmem>>, vector<2x1664xf32>
      %c0_11 = arith.constant 0 : index
      %c0_12 = arith.constant 0 : index
      %14 = vector.load %arg3[%c0_11, %c0_12] : memref<1x1664xf32, #tpu.memory_space<vmem>>, vector<1x1664xf32>
      %15 = vector.broadcast %14 : vector<1x1664xf32> to vector<2x1664xf32>
      %16 = arith.addf %13, %15 : vector<2x1664xf32>
      %cst_13 = arith.constant 0.000000e+00 : f32
      %17 = vector.broadcast %cst_13 : f32 to vector<2x1664xf32>
      %18 = arith.maximumf %16, %17 : vector<2x1664xf32>
      %c0_14 = arith.constant 0 : index
      %c0_15 = arith.constant 0 : index
      %19 = vector.load %arg4[%c0_14, %c0_15] : memref<1664x8xf32, #tpu.memory_space<vmem>>, vector<1664x8xf32>
      %cst_16 = arith.constant dense<0.000000e+00> : vector<2x8xf32>
      %20 = tpu.matmul %18, %19, %cst_16 {dimension_numbers = #tpu.dot_dimension_numbers<[1], [0], [0], [1], [0, 0, 1, 1], [], []>} : vector<2x1664xf32>, vector<1664x8xf32>, vector<2x8xf32> -> vector<2x8xf32>
      %c0_17 = arith.constant 0 : index
      %c0_18 = arith.constant 0 : index
      %21 = vector.load %arg5[%c0_17, %c0_18] : memref<1x8xf32, #tpu.memory_space<vmem>>, vector<1x8xf32>
      %22 = vector.broadcast %21 : vector<1x8xf32> to vector<2x8xf32>
      %23 = arith.addf %20, %22 : vector<2x8xf32>
      %c0_19 = arith.constant 0 : index
      %c0_20 = arith.constant 0 : index
      %24 = vector.load %arg6[%c0_19, %c0_20] : memref<1664x8xf32, #tpu.memory_space<vmem>>, vector<1664x8xf32>
      %cst_21 = arith.constant dense<0.000000e+00> : vector<2x8xf32>
      %25 = tpu.matmul %18, %24, %cst_21 {dimension_numbers = #tpu.dot_dimension_numbers<[1], [0], [0], [1], [0, 0, 1, 1], [], []>} : vector<2x1664xf32>, vector<1664x8xf32>, vector<2x8xf32> -> vector<2x8xf32>
      %c0_22 = arith.constant 0 : index
      %c0_23 = arith.constant 0 : index
      %26 = vector.load %arg7[%c0_22, %c0_23] : memref<1x8xf32, #tpu.memory_space<vmem>>, vector<1x8xf32>
      %27 = vector.broadcast %26 : vector<1x8xf32> to vector<2x8xf32>
      %28 = arith.addf %25, %27 : vector<2x8xf32>
      %c0_24 = arith.constant 0 : index
      %c0_25 = arith.constant 0 : index
      %29 = vector.load %arg8[%c0_24, %c0_25] : memref<2x8xf32, #tpu.memory_space<vmem>>, vector<2x8xf32>
      %cst_26 = arith.constant 5.000000e-01 : f32
      %30 = vector.broadcast %cst_26 : f32 to vector<2x8xf32>
      %31 = arith.mulf %30, %28 : vector<2x8xf32>
      %32 = math.exp %31 : vector<2x8xf32>
      %33 = arith.mulf %29, %32 : vector<2x8xf32>
      %34 = arith.addf %23, %33 : vector<2x8xf32>
      %c0_27 = arith.constant 0 : index
      %c0_28 = arith.constant 0 : index
      %35 = vector.load %arg9[%c0_27, %c0_28] : memref<8x1664xf32, #tpu.memory_space<vmem>>, vector<8x1664xf32>
      %cst_29 = arith.constant dense<0.000000e+00> : vector<2x1664xf32>
      %36 = tpu.matmul %34, %35, %cst_29 {dimension_numbers = #tpu.dot_dimension_numbers<[1], [0], [0], [1], [0, 0, 1, 1], [], []>} : vector<2x8xf32>, vector<8x1664xf32>, vector<2x1664xf32> -> vector<2x1664xf32>
      %c0_30 = arith.constant 0 : index
      %c0_31 = arith.constant 0 : index
      %37 = vector.load %arg10[%c0_30, %c0_31] : memref<1x1664xf32, #tpu.memory_space<vmem>>, vector<1x1664xf32>
      %38 = vector.broadcast %37 : vector<1x1664xf32> to vector<2x1664xf32>
      %39 = arith.addf %36, %38 : vector<2x1664xf32>
      %40 = arith.truncf %39 : vector<2x1664xf32> to vector<2x1664xbf16>
      %c0_32 = arith.constant 0 : index
      %c0_33 = arith.constant 0 : index
      %41 = vector.load %arg11[%c0_32, %c0_33] : memref<1664x128xbf16, #tpu.memory_space<vmem>>, vector<1664x128xbf16>
      %cst_34 = arith.constant dense<0.000000e+00> : vector<2x128xf32>
      %42 = tpu.matmul %40, %41, %cst_34 {dimension_numbers = #tpu.dot_dimension_numbers<[1], [0], [0], [1], [0, 0, 1, 1], [], []>} : vector<2x1664xbf16>, vector<1664x128xbf16>, vector<2x128xf32> -> vector<2x128xf32>
      %c0_35 = arith.constant 0 : index
      %c0_36 = arith.constant 0 : index
      %43 = vector.load %arg12[%c0_35, %c0_36] : memref<1x128xf32, #tpu.memory_space<vmem>>, vector<1x128xf32>
      %44 = vector.broadcast %43 : vector<1x128xf32> to vector<2x128xf32>
      %45 = arith.addf %42, %44 : vector<2x128xf32>
      %cst_37 = arith.constant 0.000000e+00 : f32
      %46 = vector.broadcast %cst_37 : f32 to vector<2x128xf32>
      %47 = arith.maximumf %45, %46 : vector<2x128xf32>
      %c0_38 = arith.constant 0 : index
      %c0_39 = arith.constant 0 : index
      %48 = vector.load %arg13[%c0_38, %c0_39] : memref<128x48xf32, #tpu.memory_space<vmem>>, vector<128x48xf32>
      %cst_40 = arith.constant dense<0.000000e+00> : vector<2x48xf32>
      %49 = tpu.matmul %47, %48, %cst_40 {dimension_numbers = #tpu.dot_dimension_numbers<[1], [0], [0], [1], [0, 0, 1, 1], [], []>} : vector<2x128xf32>, vector<128x48xf32>, vector<2x48xf32> -> vector<2x48xf32>
      %c0_41 = arith.constant 0 : index
      %c0_42 = arith.constant 0 : index
      %50 = vector.load %arg14[%c0_41, %c0_42] : memref<1x48xf32, #tpu.memory_space<vmem>>, vector<1x48xf32>
      %51 = vector.broadcast %50 : vector<1x48xf32> to vector<2x48xf32>
      %52 = arith.addf %49, %51 : vector<2x48xf32>
      %c0_43 = arith.constant 0 : index
      %c0_44 = arith.constant 0 : index
      %53 = vector.load %arg15[%c0_43, %c0_44] : memref<2x8xf32, #tpu.memory_space<vmem>>, vector<2x8xf32>
      tpu.vector_store %arg15[%c0_43, %c0_44], %23 {strides = array<i32>} : memref<2x8xf32, #tpu.memory_space<vmem>>, vector<2x8xf32>,
      %c0_45 = arith.constant 0 : index
      %c0_46 = arith.constant 0 : index
      %54 = vector.load %arg16[%c0_45, %c0_46] : memref<2x8xf32, #tpu.memory_space<vmem>>, vector<2x8xf32>
      tpu.vector_store %arg16[%c0_45, %c0_46], %28 {strides = array<i32>} : memref<2x8xf32, #tpu.memory_space<vmem>>, vector<2x8xf32>,
      %c0_47 = arith.constant 0 : index
      %c0_48 = arith.constant 0 : index
      %55 = vector.load %arg17[%c0_47, %c0_48] : memref<2x48xf32, #tpu.memory_space<vmem>>, vector<2x48xf32>
      tpu.vector_store %arg17[%c0_47, %c0_48], %52 {strides = array<i32>} : memref<2x48xf32, #tpu.memory_space<vmem>>, vector<2x48xf32>,
    } else {
    }
    return
  }
  func.func @transform_0(%arg0: i32) -> (i32, i32) {
    %c0_i32 = arith.constant 0 : i32
    %c0_i32_0 = arith.constant 0 : i32
    return %c0_i32, %arg0 : i32, i32
  }
  func.func @transform_1(%arg0: i32) -> (i32, i32) {
    %c0_i32 = arith.constant 0 : i32
    %c0_i32_0 = arith.constant 0 : i32
    return %arg0, %c0_i32 : i32, i32
  }
  func.func @transform_2(%arg0: i32) -> (i32, i32) {
    %c0_i32 = arith.constant 0 : i32
    %c0_i32_0 = arith.constant 0 : i32
    %c0_i32_1 = arith.constant 0 : i32
    return %c0_i32, %c0_i32_0 : i32, i32
  }
  func.func @transform_3(%arg0: i32) -> (i32, i32) {
    %c0_i32 = arith.constant 0 : i32
    %c0_i32_0 = arith.constant 0 : i32
    %c0_i32_1 = arith.constant 0 : i32
    return %c0_i32, %c0_i32_0 : i32, i32
  }
  func.func @transform_4(%arg0: i32) -> (i32, i32) {
    %c0_i32 = arith.constant 0 : i32
    %c0_i32_0 = arith.constant 0 : i32
    %c0_i32_1 = arith.constant 0 : i32
    return %c0_i32, %c0_i32_0 : i32, i32
  }
  func.func @transform_5(%arg0: i32) -> (i32, i32) {
    %c0_i32 = arith.constant 0 : i32
    %c0_i32_0 = arith.constant 0 : i32
    %c0_i32_1 = arith.constant 0 : i32
    return %c0_i32, %c0_i32_0 : i32, i32
  }
  func.func @transform_6(%arg0: i32) -> (i32, i32) {
    %c0_i32 = arith.constant 0 : i32
    %c0_i32_0 = arith.constant 0 : i32
    %c0_i32_1 = arith.constant 0 : i32
    return %c0_i32, %c0_i32_0 : i32, i32
  }
  func.func @transform_7(%arg0: i32) -> (i32, i32) {
    %c0_i32 = arith.constant 0 : i32
    %c0_i32_0 = arith.constant 0 : i32
    %c0_i32_1 = arith.constant 0 : i32
    return %c0_i32, %c0_i32_0 : i32, i32
  }
  func.func @transform_8(%arg0: i32) -> (i32, i32) {
    %c0_i32 = arith.constant 0 : i32
    %c0_i32_0 = arith.constant 0 : i32
    %c0_i32_1 = arith.constant 0 : i32
    return %c0_i32, %c0_i32_0 : i32, i32
  }
  func.func @transform_9(%arg0: i32) -> (i32, i32) {
    %c0_i32 = arith.constant 0 : i32
    %c0_i32_0 = arith.constant 0 : i32
    %c0_i32_1 = arith.constant 0 : i32
    return %c0_i32, %c0_i32_0 : i32, i32
  }
  func.func @transform_10(%arg0: i32) -> (i32, i32) {
    %c0_i32 = arith.constant 0 : i32
    %c0_i32_0 = arith.constant 0 : i32
    %c0_i32_1 = arith.constant 0 : i32
    return %c0_i32, %c0_i32_0 : i32, i32
  }
  func.func @transform_11(%arg0: i32) -> (i32, i32) {
    %c0_i32 = arith.constant 0 : i32
    %c0_i32_0 = arith.constant 0 : i32
    %c0_i32_1 = arith.constant 0 : i32
    return %c0_i32, %c0_i32_0 : i32, i32
  }
  func.func @transform_12(%arg0: i32) -> (i32, i32) {
    %c0_i32 = arith.constant 0 : i32
    %c0_i32_0 = arith.constant 0 : i32
    %c0_i32_1 = arith.constant 0 : i32
    return %c0_i32, %c0_i32_0 : i32, i32
  }
  func.func @transform_13(%arg0: i32) -> (i32, i32) {
    %c0_i32 = arith.constant 0 : i32
    %c0_i32_0 = arith.constant 0 : i32
    %c0_i32_1 = arith.constant 0 : i32
    return %c0_i32, %c0_i32_0 : i32, i32
  }
  func.func @transform_14(%arg0: i32) -> (i32, i32) {
    %c0_i32 = arith.constant 0 : i32
    %c0_i32_0 = arith.constant 0 : i32
    %c0_i32_1 = arith.constant 0 : i32
    return %c0_i32, %c0_i32_0 : i32, i32
  }
  func.func @transform_15(%arg0: i32) -> (i32, i32) {
    %c0_i32 = arith.constant 0 : i32
    %c0_i32_0 = arith.constant 0 : i32
    %c0_i32_1 = arith.constant 0 : i32
    return %c0_i32, %c0_i32_0 : i32, i32
  }
  func.func @transform_16(%arg0: i32) -> (i32, i32) {
    %c0_i32 = arith.constant 0 : i32
    %c0_i32_0 = arith.constant 0 : i32
    %c0_i32_1 = arith.constant 0 : i32
    return %c0_i32, %c0_i32_0 : i32, i32
  }
}

</mosaic_0001>

<llo_original>
// kernel: vae_forward.1
$region0: #{vae_forward.1}
  #allocation0 [shape = 'u32[]', space=smem, size = 0x4, offset = 0x4, fixed_abs, tag = 'smem constant byte address 0x4 - core index']
  #allocation1 [shape = 'u32[144,128]{1,0:T(1,128)}', space=vmem, size = 0x12000, scoped, tag = 'internal scratch']
  #allocation2 [shape = 'f32[2,1664]{1,0:T(2,128)}', space=vmem, size = 0x3400, scoped, tag = 'scratch operand']
  %s0 = inlined_call_operand.vmem [shape: f32[2,3072], index: 0, kind: input, shape index: {}]
  %s1 = inlined_call_operand.hbm [shape: bf16[3072,1664], index: 1, kind: input, shape index: {}]
  %s2 = inlined_call_operand.hbm [shape: f32[1,1664], index: 2, kind: input, shape index: {}]
  %s3 = inlined_call_operand.vmem [shape: f32[1664,8], index: 3, kind: input, shape index: {}]
  %s4 = inlined_call_operand.hbm [shape: f32[1,8], index: 4, kind: input, shape index: {}]
  %s5 = inlined_call_operand.vmem [shape: f32[1664,8], index: 5, kind: input, shape index: {}]
  %s6 = inlined_call_operand.hbm [shape: f32[1,8], index: 6, kind: input, shape index: {}]
  %s7 = inlined_call_operand.vmem [shape: f32[2,8], index: 7, kind: input, shape index: {}]
  %s8 = inlined_call_operand.hbm [shape: f32[8,1664], index: 8, kind: input, shape index: {}]
  %s9 = inlined_call_operand.hbm [shape: f32[1,1664], index: 9, kind: input, shape index: {}]
  %s10 = inlined_call_operand.hbm [shape: bf16[1664,128], index: 10, kind: input, shape index: {}]
  %s11 = inlined_call_operand.hbm [shape: f32[1,128], index: 11, kind: input, shape index: {}]
  %s12 = inlined_call_operand.vmem [shape: f32[128,48], index: 12, kind: input, shape index: {}]
  %s13 = inlined_call_operand.hbm [shape: f32[1,48], index: 13, kind: input, shape index: {}]
  %s14 = inlined_call_operand.hbm [shape: f32[2,8], index: 14, kind: output, shape index: {0}]
  %s15 = inlined_call_operand.hbm [shape: f32[2,8], index: 15, kind: output, shape index: {1}]
  %s16 = inlined_call_operand.vmem [shape: f32[2,48], index: 16, kind: output, shape index: {2}]
  %17 = xla_tuple %s14, %s15, %s16
  %s18 = sld [smem:[#allocation0]]
  $region149: #{vae_forward.1} parent=0
    _
  %s20 = ssub.s32 1, %s18
  %s21 = scalar_select 0, %s20, %s18
  $region1: #{vae_forward.1} parent=0
    #allocation3 [shape = 'u8[6815744]{0}', space=vmem, size = 0x680000, scoped, tag = 'input window, operand 1']
    #allocation4 [shape = 's32[2]{0}', space=sflag, size = 0x8, scoped, tag = 'scoped memory for vae_forward.1']
    #allocation5 [shape = 's32[2]{0}', space=sflag, size = 0x8, scoped, tag = 'scoped memory for vae_forward.1']
    #allocation6 [shape = 'u8[6656]{0}', space=vmem, size = 0x1c00, scoped, tag = 'input window, operand 2, single buffered']
    #allocation7 [shape = 's32[1]{0}', space=sflag, size = 0x4, scoped, tag = 'scoped memory for vae_forward.1']
    #allocation8 [shape = 'u8[512]{0}', space=vmem, size = 0x400, scoped, tag = 'input window, operand 4, single buffered']
    #allocation9 [shape = 'u8[512]{0}', space=vmem, size = 0x400, scoped, tag = 'input window, operand 6, single buffered']
    #allocation10 [shape = 's32[1]{0}', space=sflag, size = 0x4, scoped, tag = 'scoped memory for vae_forward.1']
    #allocation11 [shape = 'u8[53248]{0}', space=vmem, size = 0xd000, scoped, tag = 'input window, operand 8, single buffered']
    #allocation12 [shape = 'u8[6656]{0}', space=vmem, size = 0x1c00, scoped, tag = 'input window, operand 9, single buffered']
    #allocation13 [shape = 's32[1]{0}', space=sflag, size = 0x4, scoped, tag = 'scoped memory for vae_forward.1']
    #allocation14 [shape = 'u8[425984]{0}', space=vmem, size = 0x68000, scoped, tag = 'input window, operand 10, single buffered']
    #allocation15 [shape = 'u8[512]{0}', space=vmem, size = 0x400, scoped, tag = 'input window, operand 11, single buffered']
    #allocation16 [shape = 's32[1]{0}', space=sflag, size = 0x4, scoped, tag = 'scoped memory for vae_forward.1']
    #allocation17 [shape = 'u8[512]{0}', space=vmem, size = 0x400, scoped, tag = 'input window, operand 13, single buffered']
    #allocation18 [shape = 'u8[1024]{0}', space=vmem, size = 0x400, scoped, tag = 'output window, operand 0, single buffered']
    #allocation19 [shape = 'u8[1024]{0}', space=vmem, size = 0x400, scoped, tag = 'output window, operand 1, single buffered']
    #allocation20 [shape = 's32[1]{0}', space=sflag, size = 0x4, scoped, tag = 'scoped memory for vae_forward.1']
    %22 = vsyncpa [#allocation4], 0
    %s23 = scalar_lea.sflag [#allocation4], 1
    %24 = vsyncpa %s23, 0
    %25 = vsyncpa [#allocation7], 0
    %26 = vsyncpa [#allocation10], 0
    %27 = vsyncpa [#allocation13], 0
    %28 = vsyncpa [#allocation16], 0
    %29 = vsyncpa [#allocation5], 0
    %30 = vsyncpa [#allocation20], 0
    loop: start=0, step=1, limit=5
    $region2: #{vae_forward.1} parent=1 // loop_pre_header
      _
    $region3: #{vae_forward.1} parent=1 // loop_header
      %s32 = sphi 0, %s36
      %p33 = scmp.ge.s32.totalorder %s32, 5
      %s42 = sphi 0, %s44
      %s45 = sphi 0, %s42
      %s46 = sphi 0, %s45
      %s62 = sphi 0, %s46
      %s68 = sphi 0, %s70
      %s71 = sphi 0, %s68
      %s72 = sphi 0, %s71
      %s88 = sphi 0, %s72
      %s92 = sphi 0, %s92
      %s94 = sphi 0, %s92
      %s95 = sphi 0, %s94
      %s109 = sphi 0, %s95
      %s113 = sphi 0, %s113
      %s115 = sphi 0, %s113
      %s116 = sphi 0, %s115
      %s130 = sphi 0, %s116
      %s134 = sphi 0, %s134
      %s136 = sphi 0, %s134
      %s137 = sphi 0, %s136
      %s151 = sphi 0, %s137
      %s155 = sphi 0, %s155
      %s157 = sphi 0, %s155
      %s158 = sphi 0, %s157
      %s172 = sphi 0, %s158
      %s176 = sphi 0, %s176
      %s178 = sphi 0, %s176
      %s179 = sphi 0, %s178
      %s193 = sphi 0, %s179
      %s197 = sphi 0, %s197
      %s199 = sphi 0, %s197
      %s200 = sphi 0, %s199
      %s214 = sphi 0, %s200
      %s218 = sphi 0, %s218
      %s220 = sphi 0, %s218
      %s221 = sphi 0, %s220
      %s235 = sphi 0, %s221
      %s239 = sphi 0, %s239
      %s241 = sphi 0, %s239
      %s242 = sphi 0, %s241
      %s256 = sphi 0, %s242
      %s260 = sphi 0, %s260
      %s262 = sphi 0, %s260
      %s263 = sphi 0, %s262
      %s277 = sphi 0, %s263
      %s281 = sphi 0, %s281
      %s283 = sphi 0, %s281
      %s284 = sphi 0, %s283
      %s298 = sphi 0, %s284
      %s302 = sphi 0, %s302
      %s304 = sphi 0, %s302
      %s305 = sphi 0, %s304
      %s319 = sphi 0, %s305
      %s323 = sphi 0, %s323
      %s325 = sphi 0, %s323
      %s326 = sphi 0, %s325
      %s340 = sphi 0, %s326
      %s344 = sphi 0, %s344
      %s346 = sphi 0, %s344
      %s347 = sphi 0, %s346
      %s361 = sphi 0, %s347
      %s365 = sphi 0, %s365
      %s367 = sphi 0, %s365
      %s368 = sphi 0, %s367
      %s382 = sphi 0, %s368
      %s386 = sphi 0, %s386
      %s388 = sphi 0, %s386
      %s389 = sphi 0, %s388
      %s403 = sphi 0, %s389
    $region4: #{vae_forward.1} parent=1 // loop_header_branch
      %35 = sbr.rel (%p33) target = $region8
    $region5: #{vae_forward.1} parent=1 // loop_body
      %s37 = ssub.s32 %s32, 1
      %s38 = ssub.s32 %s32, 2
      %s39 = sadd.s32 %s32, 1
      %s40 = ssub.s32 %s32, %s39
      %p41 = scmp.eq.s32.totalorder %s40, 0
      %s43 = sadd.s32 %s42, 1
      %s44 = scalar_select %p41, %s42, %s43
      %p47 = pneg %p41
      %p48 = scmp.eq.s32.totalorder %s32, 2
      %p49 = por %p47, %p48
      %p50 = scmp.ne.s32.totalorder %s42, %s45
      %p51 = scmp.eq.s32.totalorder %s32, 0
      %p52 = por %p50, %p51
      %p53 = scmp.ne.s32.totalorder %s42, %s45
      %p54 = scmp.eq.s32.totalorder %s37, 2
      %p55 = por %p53, %p54
      %p56 = scmp.ne.s32.totalorder %s45, %s46
      %p57 = scmp.eq.s32.totalorder %s37, 0
      %p58 = por %p56, %p57
      %p59 = scmp.ne.s32.totalorder %s45, %s46
      %p60 = scmp.eq.s32.totalorder %s38, 2
      %p61 = por %p59, %p60
      %p63 = scmp.ne.s32.totalorder %s46, %s62
      %p64 = scmp.eq.s32.totalorder %s38, 0
      %p65 = por %p63, %p64
      %s66 = ssub.s32 %s32, %s39
      %p67 = scmp.eq.s32.totalorder %s66, 0
      %s69 = sadd.s32 %s68, 1
      %s70 = scalar_select %p67, %s68, %s69
      %p73 = pneg %p67
      %p74 = scmp.eq.s32.totalorder %s32, 2
      %p75 = por %p73, %p74
      %p76 = scmp.ne.s32.totalorder %s68, %s71
      %p77 = scmp.eq.s32.totalorder %s32, 0
      %p78 = por %p76, %p77
      %p79 = scmp.ne.s32.totalorder %s68, %s71
      %p80 = scmp.eq.s32.totalorder %s37, 2
      %p81 = por %p79, %p80
      %p82 = scmp.ne.s32.totalorder %s71, %s72
      %p83 = scmp.eq.s32.totalorder %s37, 0
      %p84 = por %p82, %p83
      %p85 = scmp.ne.s32.totalorder %s71, %s72
      %p86 = scmp.eq.s32.totalorder %s38, 2
      %p87 = por %p85, %p86
      %p89 = scmp.ne.s32.totalorder %s72, %s88
      %p90 = scmp.eq.s32.totalorder %s38, 0
      %p91 = por %p89, %p90
      %s93 = sadd.s32 %s92, 1
      %p96 = scmp.eq.s32.totalorder %s32, 2
      %p97 = scmp.ne.s32.totalorder %s92, %s94
      %p98 = scmp.eq.s32.totalorder %s32, 0
      %p99 = por %p97, %p98
      %p100 = scmp.ne.s32.totalorder %s92, %s94
      %p101 = scmp.eq.s32.totalorder %s37, 2
      %p102 = por %p100, %p101
      %p103 = scmp.ne.s32.totalorder %s94, %s95
      %p104 = scmp.eq.s32.totalorder %s37, 0
      %p105 = por %p103, %p104
      %p106 = scmp.ne.s32.totalorder %s94, %s95
      %p107 = scmp.eq.s32.totalorder %s38, 2
      %p108 = por %p106, %p107
      %p110 = scmp.ne.s32.totalorder %s95, %s109
      %p111 = scmp.eq.s32.totalorder %s38, 0
      %p112 = por %p110, %p111
      %s114 = sadd.s32 %s113, 1
      %p117 = scmp.eq.s32.totalorder %s32, 2
      %p118 = scmp.ne.s32.totalorder %s113, %s115
      %p119 = scmp.eq.s32.totalorder %s32, 0
      %p120 = por %p118, %p119
      %p121 = scmp.ne.s32.totalorder %s113, %s115
      %p122 = scmp.eq.s32.totalorder %s37, 2
      %p123 = por %p121, %p122
      %p124 = scmp.ne.s32.totalorder %s115, %s116
      %p125 = scmp.eq.s32.totalorder %s37, 0
      %p126 = por %p124, %p125
      %p127 = scmp.ne.s32.totalorder %s115, %s116
      %p128 = scmp.eq.s32.totalorder %s38, 2
      %p129 = por %p127, %p128
      %p131 = scmp.ne.s32.totalorder %s116, %s130
      %p132 = scmp.eq.s32.totalorder %s38, 0
      %p133 = por %p131, %p132
      %s135 = sadd.s32 %s134, 1
      %p138 = scmp.eq.s32.totalorder %s32, 2
      %p139 = scmp.ne.s32.totalorder %s134, %s136
      %p140 = scmp.eq.s32.totalorder %s32, 0
      %p141 = por %p139, %p140
      %p142 = scmp.ne.s32.totalorder %s134, %s136
      %p143 = scmp.eq.s32.totalorder %s37, 2
      %p144 = por %p142, %p143
      %p145 = scmp.ne.s32.totalorder %s136, %s137
      %p146 = scmp.eq.s32.totalorder %s37, 0
      %p147 = por %p145, %p146
      %p148 = scmp.ne.s32.totalorder %s136, %s137
      %p149 = scmp.eq.s32.totalorder %s38, 2
      %p150 = por %p148, %p149
      %p152 = scmp.ne.s32.totalorder %s137, %s151
      %p153 = scmp.eq.s32.totalorder %s38, 0
      %p154 = por %p152, %p153
      %s156 = sadd.s32 %s155, 1
      %p159 = scmp.eq.s32.totalorder %s32, 2
      %p160 = scmp.ne.s32.totalorder %s155, %s157
      %p161 = scmp.eq.s32.totalorder %s32, 0
      %p162 = por %p160, %p161
      %p163 = scmp.ne.s32.totalorder %s155, %s157
      %p164 = scmp.eq.s32.totalorder %s37, 2
      %p165 = por %p163, %p164
      %p166 = scmp.ne.s32.totalorder %s157, %s158
      %p167 = scmp.eq.s32.totalorder %s37, 0
      %p168 = por %p166, %p167
      %p169 = scmp.ne.s32.totalorder %s157, %s158
      %p170 = scmp.eq.s32.totalorder %s38, 2
      %p171 = por %p169, %p170
      %p173 = scmp.ne.s32.totalorder %s158, %s172
      %p174 = scmp.eq.s32.totalorder %s38, 0
      %p175 = por %p173, %p174
      %s177 = sadd.s32 %s176, 1
      %p180 = scmp.eq.s32.totalorder %s32, 2
      %p181 = scmp.ne.s32.totalorder %s176, %s178
      %p182 = scmp.eq.s32.totalorder %s32, 0
      %p183 = por %p181, %p182
      %p184 = scmp.ne.s32.totalorder %s176, %s178
      %p185 = scmp.eq.s32.totalorder %s37, 2
      %p186 = por %p184, %p185
      %p187 = scmp.ne.s32.totalorder %s178, %s179
      %p188 = scmp.eq.s32.totalorder %s37, 0
      %p189 = por %p187, %p188
      %p190 = scmp.ne.s32.totalorder %s178, %s179
      %p191 = scmp.eq.s32.totalorder %s38, 2
      %p192 = por %p190, %p191
      %p194 = scmp.ne.s32.totalorder %s179, %s193
      %p195 = scmp.eq.s32.totalorder %s38, 0
      %p196 = por %p194, %p195
      %s198 = sadd.s32 %s197, 1
      %p201 = scmp.eq.s32.totalorder %s32, 2
      %p202 = scmp.ne.s32.totalorder %s197, %s199
      %p203 = scmp.eq.s32.totalorder %s32, 0
      %p204 = por %p202, %p203
      %p205 = scmp.ne.s32.totalorder %s197, %s199
      %p206 = scmp.eq.s32.totalorder %s37, 2
      %p207 = por %p205, %p206
      %p208 = scmp.ne.s32.totalorder %s199, %s200
      %p209 = scmp.eq.s32.totalorder %s37, 0
      %p210 = por %p208, %p209
      %p211 = scmp.ne.s32.totalorder %s199, %s200
      %p212 = scmp.eq.s32.totalorder %s38, 2
      %p213 = por %p211, %p212
      %p215 = scmp.ne.s32.totalorder %s200, %s214
      %p216 = scmp.eq.s32.totalorder %s38, 0
      %p217 = por %p215, %p216
      %s219 = sadd.s32 %s218, 1
      %p222 = scmp.eq.s32.totalorder %s32, 2
      %p223 = scmp.ne.s32.totalorder %s218, %s220
      %p224 = scmp.eq.s32.totalorder %s32, 0
      %p225 = por %p223, %p224
      %p226 = scmp.ne.s32.totalorder %s218, %s220
      %p227 = scmp.eq.s32.totalorder %s37, 2
      %p228 = por %p226, %p227
      %p229 = scmp.ne.s32.totalorder %s220, %s221
      %p230 = scmp.eq.s32.totalorder %s37, 0
      %p231 = por %p229, %p230
      %p232 = scmp.ne.s32.totalorder %s220, %s221
      %p233 = scmp.eq.s32.totalorder %s38, 2
      %p234 = por %p232, %p233
      %p236 = scmp.ne.s32.totalorder %s221, %s235
      %p237 = scmp.eq.s32.totalorder %s38, 0
      %p238 = por %p236, %p237
      %s240 = sadd.s32 %s239, 1
      %p243 = scmp.eq.s32.totalorder %s32, 2
      %p244 = scmp.ne.s32.totalorder %s239, %s241
      %p245 = scmp.eq.s32.totalorder %s32, 0
      %p246 = por %p244, %p245
      %p247 = scmp.ne.s32.totalorder %s239, %s241
      %p248 = scmp.eq.s32.totalorder %s37, 2
      %p249 = por %p247, %p248
      %p250 = scmp.ne.s32.totalorder %s241, %s242
      %p251 = scmp.eq.s32.totalorder %s37, 0
      %p252 = por %p250, %p251
      %p253 = scmp.ne.s32.totalorder %s241, %s242
      %p254 = scmp.eq.s32.totalorder %s38, 2
      %p255 = por %p253, %p254
      %p257 = scmp.ne.s32.totalorder %s242, %s256
      %p258 = scmp.eq.s32.totalorder %s38, 0
      %p259 = por %p257, %p258
      %s261 = sadd.s32 %s260, 1
      %p264 = scmp.eq.s32.totalorder %s32, 2
      %p265 = scmp.ne.s32.totalorder %s260, %s262
      %p266 = scmp.eq.s32.totalorder %s32, 0
      %p267 = por %p265, %p266
      %p268 = scmp.ne.s32.totalorder %s260, %s262
      %p269 = scmp.eq.s32.totalorder %s37, 2
      %p270 = por %p268, %p269
      %p271 = scmp.ne.s32.totalorder %s262, %s263
      %p272 = scmp.eq.s32.totalorder %s37, 0
      %p273 = por %p271, %p272
      %p274 = scmp.ne.s32.totalorder %s262, %s263
      %p275 = scmp.eq.s32.totalorder %s38, 2
      %p276 = por %p274, %p275
      %p278 = scmp.ne.s32.totalorder %s263, %s277
      %p279 = scmp.eq.s32.totalorder %s38, 0
      %p280 = por %p278, %p279
      %s282 = sadd.s32 %s281, 1
      %p285 = scmp.eq.s32.totalorder %s32, 2
      %p286 = scmp.ne.s32.totalorder %s281, %s283
      %p287 = scmp.eq.s32.totalorder %s32, 0
      %p288 = por %p286, %p287
      %p289 = scmp.ne.s32.totalorder %s281, %s283
      %p290 = scmp.eq.s32.totalorder %s37, 2
      %p291 = por %p289, %p290
      %p292 = scmp.ne.s32.totalorder %s283, %s284
      %p293 = scmp.eq.s32.totalorder %s37, 0
      %p294 = por %p292, %p293
      %p295 = scmp.ne.s32.totalorder %s283, %s284
      %p296 = scmp.eq.s32.totalorder %s38, 2
      %p297 = por %p295, %p296
      %p299 = scmp.ne.s32.totalorder %s284, %s298
      %p300 = scmp.eq.s32.totalorder %s38, 0
      %p301 = por %p299, %p300
      %s303 = sadd.s32 %s302, 1
      %p306 = scmp.eq.s32.totalorder %s32, 2
      %p307 = scmp.ne.s32.totalorder %s302, %s304
      %p308 = scmp.eq.s32.totalorder %s32, 0
      %p309 = por %p307, %p308
      %p310 = scmp.ne.s32.totalorder %s302, %s304
      %p311 = scmp.eq.s32.totalorder %s37, 2
      %p312 = por %p310, %p311
      %p313 = scmp.ne.s32.totalorder %s304, %s305
      %p314 = scmp.eq.s32.totalorder %s37, 0
      %p315 = por %p313, %p314
      %p316 = scmp.ne.s32.totalorder %s304, %s305
      %p317 = scmp.eq.s32.totalorder %s38, 2
      %p318 = por %p316, %p317
      %p320 = scmp.ne.s32.totalorder %s305, %s319
      %p321 = scmp.eq.s32.totalorder %s38, 0
      %p322 = por %p320, %p321
      %s324 = sadd.s32 %s323, 1
      %p327 = scmp.eq.s32.totalorder %s32, 2
      %p328 = scmp.ne.s32.totalorder %s323, %s325
      %p329 = scmp.eq.s32.totalorder %s32, 0
      %p330 = por %p328, %p329
      %p331 = scmp.ne.s32.totalorder %s323, %s325
      %p332 = scmp.eq.s32.totalorder %s37, 2
      %p333 = por %p331, %p332
      %p334 = scmp.ne.s32.totalorder %s325, %s326
      %p335 = scmp.eq.s32.totalorder %s37, 0
      %p336 = por %p334, %p335
      %p337 = scmp.ne.s32.totalorder %s325, %s326
      %p338 = scmp.eq.s32.totalorder %s38, 2
      %p339 = por %p337, %p338
      %p341 = scmp.ne.s32.totalorder %s326, %s340
      %p342 = scmp.eq.s32.totalorder %s38, 0
      %p343 = por %p341, %p342
      %s345 = sadd.s32 %s344, 1
      %p348 = scmp.eq.s32.totalorder %s32, 2
      %p349 = scmp.ne.s32.totalorder %s344, %s346
      %p350 = scmp.eq.s32.totalorder %s32, 0
      %p351 = por %p349, %p350
      %p352 = scmp.ne.s32.totalorder %s344, %s346
      %p353 = scmp.eq.s32.totalorder %s37, 2
      %p354 = por %p352, %p353
      %p355 = scmp.ne.s32.totalorder %s346, %s347
      %p356 = scmp.eq.s32.totalorder %s37, 0
      %p357 = por %p355, %p356
      %p358 = scmp.ne.s32.totalorder %s346, %s347
      %p359 = scmp.eq.s32.totalorder %s38, 2
      %p360 = por %p358, %p359
      %p362 = scmp.ne.s32.totalorder %s347, %s361
      %p363 = scmp.eq.s32.totalorder %s38, 0
      %p364 = por %p362, %p363
      %s366 = sadd.s32 %s365, 1
      %p369 = scmp.eq.s32.totalorder %s32, 2
      %p370 = scmp.ne.s32.totalorder %s365, %s367
      %p371 = scmp.eq.s32.totalorder %s32, 0
      %p372 = por %p370, %p371
      %p373 = scmp.ne.s32.totalorder %s365, %s367
      %p374 = scmp.eq.s32.totalorder %s37, 2
      %p375 = por %p373, %p374
      %p376 = scmp.ne.s32.totalorder %s367, %s368
      %p377 = scmp.eq.s32.totalorder %s37, 0
      %p378 = por %p376, %p377
      %p379 = scmp.ne.s32.totalorder %s367, %s368
      %p380 = scmp.eq.s32.totalorder %s38, 2
      %p381 = por %p379, %p380
      %p383 = scmp.ne.s32.totalorder %s368, %s382
      %p384 = scmp.eq.s32.totalorder %s38, 0
      %p385 = por %p383, %p384
      %s387 = sadd.s32 %s386, 1
      %p390 = scmp.eq.s32.totalorder %s32, 2
      %p391 = scmp.ne.s32.totalorder %s386, %s388
      %p392 = scmp.eq.s32.totalorder %s32, 0
      %p393 = por %p391, %p392
      %p394 = scmp.ne.s32.totalorder %s386, %s388
      %p395 = scmp.eq.s32.totalorder %s37, 2
      %p396 = por %p394, %p395
      %p397 = scmp.ne.s32.totalorder %s388, %s389
      %p398 = scmp.eq.s32.totalorder %s37, 0
      %p399 = por %p397, %p398
      %p400 = scmp.ne.s32.totalorder %s388, %s389
      %p401 = scmp.eq.s32.totalorder %s38, 2
      %p402 = por %p400, %p401
      %p404 = scmp.ne.s32.totalorder %s389, %s403
      %p405 = scmp.eq.s32.totalorder %s38, 0
      %p406 = por %p404, %p405
      %p407 = scmp.le.s32.totalorder 1, %s32
      %p408 = scmp.lt.s32.totalorder %s32, 4
      %p409 = pnand %p407, %p408
      %p410 = pneg %p409
      // Predicated region
      $region9: #{vae_forward.1} parent=5 // pred_check
        _
      $region10: #{vae_forward.1} parent=5 // pred_check_branch
        %412 = sbr.rel (%p409) target = $region12
      $region11: #{vae_forward.1} parent=5 // pred_region
        %s413 = ssub.s32 %s32, 1
        // Predicated region
        $region13: #{vae_forward.1} parent=11 // pred_check
          %p414 = pneg %p105
        $region14: #{vae_forward.1} parent=11 // pred_check_branch
          %416 = sbr.rel (%p414) target = $region16
        $region15: #{vae_forward.1} parent=11 // pred_region
          %s418 = ssub.s32 208, 208
          %419 = vsyncadd [#allocation7], %s418
          %s421 = sshll.u32 [#allocation6], 4
          %s422 = int_to_ptr.vmem [resolvable:$true] %s421
          %424 = dma.hbm_to_vmem [thread:$0]  %s2, 208, %s422, [#allocation7]
        $region16: #{vae_forward.1} parent=11 // pred_fallthru
          _
        // Predicated region
        $region17: #{vae_forward.1} parent=11 // pred_check
          %p425 = pneg %p126
        $region18: #{vae_forward.1} parent=11 // pred_check_branch
          %427 = sbr.rel (%p425) target = $region20
        $region19: #{vae_forward.1} parent=11 // pred_region
          _
        $region20: #{vae_forward.1} parent=11 // pred_fallthru
          _
        // Predicated region
        $region21: #{vae_forward.1} parent=11 // pred_check
          %p428 = pneg %p147
        $region22: #{vae_forward.1} parent=11 // pred_check_branch
          %430 = sbr.rel (%p428) target = $region24
        $region23: #{vae_forward.1} parent=11 // pred_region
          %s432 = ssub.s32 16, 16
          %433 = vsyncadd [#allocation7], %s432
          %s435 = sshll.u32 [#allocation8], 4
          %s436 = int_to_ptr.vmem [resolvable:$true] %s435
          %438 = dma.hbm_to_vmem [thread:$0]  %s4, 16, %s436, [#allocation7]
        $region24: #{vae_forward.1} parent=11 // pred_fallthru
          _
        // Predicated region
        $region25: #{vae_forward.1} parent=11 // pred_check
          %p439 = pneg %p168
        $region26: #{vae_forward.1} parent=11 // pred_check_branch
          %441 = sbr.rel (%p439) target = $region28
        $region27: #{vae_forward.1} parent=11 // pred_region
          _
        $region28: #{vae_forward.1} parent=11 // pred_fallthru
          _
        // Predicated region
        $region29: #{vae_forward.1} parent=11 // pred_check
          %p442 = pneg %p189
        $region30: #{vae_forward.1} parent=11 // pred_check_branch
          %444 = sbr.rel (%p442) target = $region32
        $region31: #{vae_forward.1} parent=11 // pred_region
          %s446 = ssub.s32 16, 16
          %447 = vsyncadd [#allocation10], %s446
          %s449 = sshll.u32 [#allocation9], 4
          %s450 = int_to_ptr.vmem [resolvable:$true] %s449
          %452 = dma.hbm_to_vmem [thread:$0]  %s6, 16, %s450, [#allocation10]
        $region32: #{vae_forward.1} parent=11 // pred_fallthru
          _
        // Predicated region
        $region33: #{vae_forward.1} parent=11 // pred_check
          %p453 = pneg %p210
        $region34: #{vae_forward.1} parent=11 // pred_check_branch
          %455 = sbr.rel (%p453) target = $region36
        $region35: #{vae_forward.1} parent=11 // pred_region
          _
        $region36: #{vae_forward.1} parent=11 // pred_fallthru
          _
        // Predicated region
        $region37: #{vae_forward.1} parent=11 // pred_check
          %p456 = pneg %p231
        $region38: #{vae_forward.1} parent=11 // pred_check_branch
          %458 = sbr.rel (%p456) target = $region40
        $region39: #{vae_forward.1} parent=11 // pred_region
          %s460 = ssub.s32 1664, 1664
          %461 = vsyncadd [#allocation10], %s460
          %s463 = sshll.u32 [#allocation11], 4
          %s464 = int_to_ptr.vmem [resolvable:$true] %s463
          %466 = dma.hbm_to_vmem [thread:$0]  %s8, 1664, %s464, [#allocation10]
        $region40: #{vae_forward.1} parent=11 // pred_fallthru
          _
        // Predicated region
        $region41: #{vae_forward.1} parent=11 // pred_check
          %p467 = pneg %p252
        $region42: #{vae_forward.1} parent=11 // pred_check_branch
          %469 = sbr.rel (%p467) target = $region44
        $region43: #{vae_forward.1} parent=11 // pred_region
          %s471 = ssub.s32 208, 208
          %472 = vsyncadd [#allocation13], %s471
          %s474 = sshll.u32 [#allocation12], 4
          %s475 = int_to_ptr.vmem [resolvable:$true] %s474
          %477 = dma.hbm_to_vmem [thread:$0]  %s9, 208, %s475, [#allocation13]
        $region44: #{vae_forward.1} parent=11 // pred_fallthru
          _
        // Predicated region
        $region45: #{vae_forward.1} parent=11 // pred_check
          %p478 = pneg %p273
        $region46: #{vae_forward.1} parent=11 // pred_check_branch
          %480 = sbr.rel (%p478) target = $region48
        $region47: #{vae_forward.1} parent=11 // pred_region
          %s482 = ssub.s32 13312, 13312
          %483 = vsyncadd [#allocation13], %s482
          %s484 = sshll.u32 [#allocation14], 4
          %s485 = int_to_ptr.vmem [resolvable:$true] %s484
          %490 = dma.hbm_to_vmem [thread:$0]  %s10, 13312, %s485, [#allocation13], 64, 64, 4
        $region48: #{vae_forward.1} parent=11 // pred_fallthru
          _
        // Predicated region
        $region49: #{vae_forward.1} parent=11 // pred_check
          %p491 = pneg %p294
        $region50: #{vae_forward.1} parent=11 // pred_check_branch
          %493 = sbr.rel (%p491) target = $region52
        $region51: #{vae_forward.1} parent=11 // pred_region
          %s495 = ssub.s32 16, 16
          %496 = vsyncadd [#allocation16], %s495
          %s498 = sshll.u32 [#allocation15], 4
          %s499 = int_to_ptr.vmem [resolvable:$true] %s498
          %501 = dma.hbm_to_vmem [thread:$0]  %s11, 16, %s499, [#allocation16]
        $region52: #{vae_forward.1} parent=11 // pred_fallthru
          _
        // Predicated region
        $region53: #{vae_forward.1} parent=11 // pred_check
          %p502 = pneg %p315
        $region54: #{vae_forward.1} parent=11 // pred_check_branch
          %504 = sbr.rel (%p502) target = $region56
        $region55: #{vae_forward.1} parent=11 // pred_region
          _
        $region56: #{vae_forward.1} parent=11 // pred_fallthru
          _
        // Predicated region
        $region57: #{vae_forward.1} parent=11 // pred_check
          %p505 = pneg %p336
        $region58: #{vae_forward.1} parent=11 // pred_check_branch
          %507 = sbr.rel (%p505) target = $region60
        $region59: #{vae_forward.1} parent=11 // pred_region
          %s509 = ssub.s32 16, 16
          %510 = vsyncadd [#allocation16], %s509
          %s512 = sshll.u32 [#allocation17], 4
          %s513 = int_to_ptr.vmem [resolvable:$true] %s512
          %515 = dma.hbm_to_vmem [thread:$0]  %s13, 16, %s513, [#allocation16]
        $region60: #{vae_forward.1} parent=11 // pred_fallthru
          _
      $region12: #{vae_forward.1} parent=5 // pred_fallthru
        _
      %p516 = scmp.lt.s32.totalorder %s32, 3
      // Predicated region
      $region61: #{vae_forward.1} parent=5 // pred_check
        %p517 = pneg %p516
      $region62: #{vae_forward.1} parent=5 // pred_check_branch
        %519 = sbr.rel (%p517) target = $region64
      $region63: #{vae_forward.1} parent=5 // pred_region
        // Predicated region
        $region65: #{vae_forward.1} parent=63 // pred_check
          %p520 = pneg %p52
        $region66: #{vae_forward.1} parent=63 // pred_check_branch
          %522 = sbr.rel (%p520) target = $region68
        $region67: #{vae_forward.1} parent=63 // pred_region
          %s523 = smul.u32 8, %s32
          %p524 = scmp.lt.s32.totalorder %s523, 23
          %s525 = scalar_select %p524, %s523, 23
          %s526 = smul.addr %s525, 2
          %s527 = scalar_lea.vmem %s0, %s526
          %s528 = smul.u32 8, %s32
        $region68: #{vae_forward.1} parent=63 // pred_fallthru
          _
        // Predicated region
        $region69: #{vae_forward.1} parent=63 // pred_check
          %p529 = pneg %p78
        $region70: #{vae_forward.1} parent=63 // pred_check_branch
          %531 = sbr.rel (%p529) target = $region72
        $region71: #{vae_forward.1} parent=63 // pred_region
          %s532 = sand.u32 %s68, 1
          %s533 = scalar_lea.sflag [#allocation4], %s532
          %s534 = sand.u32 %s68, 1
          %s535 = smul.addr %s534, 6656
          %s536 = scalar_lea.vmem [#allocation3], %s535
          %s537 = smul.u32 128, %s32
          %s539 = ssub.s32 106496, 106496
          %540 = vsyncadd %s533, %s539
          %s541 = smul.addr %s537, 13
          %s542 = smul.addr %s541, 64
          %s543 = scalar_lea.hbm %s1, %s542
          %s544 = sshll.u32 %s536, 4
          %s545 = int_to_ptr.vmem [resolvable:$true] %s544
          %550 = dma.hbm_to_vmem [thread:$0]  %s543, 106496, %s545, %s533, 832, 832, 52
        $region72: #{vae_forward.1} parent=63 // pred_fallthru
          _
      $region64: #{vae_forward.1} parent=5 // pred_fallthru
        _
      %p551 = scmp.le.s32.totalorder 1, %s32
      %p552 = scmp.lt.s32.totalorder %s32, 4
      %p553 = pnand %p551, %p552
      %p554 = pneg %p553
      // Predicated region
      $region73: #{vae_forward.1} parent=5 // pred_check
        _
      $region74: #{vae_forward.1} parent=5 // pred_check_branch
        %556 = sbr.rel (%p553) target = $region76
      $region75: #{vae_forward.1} parent=5 // pred_region
        %s557 = ssub.s32 %s32, 1
        %s558 = sand.u32 %s71, 1
        %s559 = scalar_lea.sflag [#allocation4], %s558
        %s560 = sand.u32 %s71, 1
        %s561 = smul.addr %s560, 6656
        %s562 = scalar_lea.vmem [#allocation3], %s561
        // Predicated region
        $region77: #{vae_forward.1} parent=75 // pred_check
          %p563 = pneg %p84
        $region78: #{vae_forward.1} parent=75 // pred_check_branch
          %565 = sbr.rel (%p563) target = $region80
        $region79: #{vae_forward.1} parent=75 // pred_region
          %566 = dma.done %s559, 106496
        $region80: #{vae_forward.1} parent=75 // pred_fallthru
          _
        // Predicated region
        $region81: #{vae_forward.1} parent=75 // pred_check
          %p567 = pneg %p105
        $region82: #{vae_forward.1} parent=75 // pred_check_branch
          %569 = sbr.rel (%p567) target = $region84
        $region83: #{vae_forward.1} parent=75 // pred_region
          %570 = dma.done [#allocation7], 208
        $region84: #{vae_forward.1} parent=75 // pred_fallthru
          _
        // Predicated region
        $region85: #{vae_forward.1} parent=75 // pred_check
          %p571 = pneg %p147
        $region86: #{vae_forward.1} parent=75 // pred_check_branch
          %573 = sbr.rel (%p571) target = $region88
        $region87: #{vae_forward.1} parent=75 // pred_region
          %574 = dma.done [#allocation7], 16
        $region88: #{vae_forward.1} parent=75 // pred_fallthru
          _
        // Predicated region
        $region89: #{vae_forward.1} parent=75 // pred_check
          %p575 = pneg %p189
        $region90: #{vae_forward.1} parent=75 // pred_check_branch
          %577 = sbr.rel (%p575) target = $region92
        $region91: #{vae_forward.1} parent=75 // pred_region
          %578 = dma.done [#allocation10], 16
        $region92: #{vae_forward.1} parent=75 // pred_fallthru
          _
        // Predicated region
        $region93: #{vae_forward.1} parent=75 // pred_check
          %p579 = pneg %p231
        $region94: #{vae_forward.1} parent=75 // pred_check_branch
          %581 = sbr.rel (%p579) target = $region96
        $region95: #{vae_forward.1} parent=75 // pred_region
          %582 = dma.done [#allocation10], 1664
        $region96: #{vae_forward.1} parent=75 // pred_fallthru
          _
        // Predicated region
        $region97: #{vae_forward.1} parent=75 // pred_check
          %p583 = pneg %p252
        $region98: #{vae_forward.1} parent=75 // pred_check_branch
          %585 = sbr.rel (%p583) target = $region100
        $region99: #{vae_forward.1} parent=75 // pred_region
          %586 = dma.done [#allocation13], 208
        $region100: #{vae_forward.1} parent=75 // pred_fallthru
          _
        // Predicated region
        $region101: #{vae_forward.1} parent=75 // pred_check
          %p587 = pneg %p273
        $region102: #{vae_forward.1} parent=75 // pred_check_branch
          %589 = sbr.rel (%p587) target = $region104
        $region103: #{vae_forward.1} parent=75 // pred_region
          %590 = dma.done [#allocation13], 13312
        $region104: #{vae_forward.1} parent=75 // pred_fallthru
          _
        // Predicated region
        $region105: #{vae_forward.1} parent=75 // pred_check
          %p591 = pneg %p294
        $region106: #{vae_forward.1} parent=75 // pred_check_branch
          %593 = sbr.rel (%p591) target = $region108
        $region107: #{vae_forward.1} parent=75 // pred_region
          %594 = dma.done [#allocation16], 16
        $region108: #{vae_forward.1} parent=75 // pred_fallthru
          _
        // Predicated region
        $region109: #{vae_forward.1} parent=75 // pred_check
          %p595 = pneg %p336
        $region110: #{vae_forward.1} parent=75 // pred_check_branch
          %597 = sbr.rel (%p595) target = $region112
        $region111: #{vae_forward.1} parent=75 // pred_region
          %598 = dma.done [#allocation16], 16
        $region112: #{vae_forward.1} parent=75 // pred_fallthru
          _
        %s599 = smul.u32 8, %s37
        %p600 = scmp.lt.s32.totalorder %s599, 23
        %s601 = scalar_select %p600, %s599, 23
        %s602 = smul.addr %s601, 2
        %s603 = scalar_lea.vmem %s0, %s602
        %p604 = pneg %p58
        %p605 = pneg %p55
        %s606 = sand.u32 %s71, 1
        %s607 = scalar_lea.sflag [#allocation4], %s606
        %s608 = sand.u32 %s71, 1
        %s609 = smul.addr %s608, 6656
        %s610 = scalar_lea.vmem [#allocation3], %s609
        %p611 = pneg %p84
        %p612 = pneg %p81
        %p613 = pneg %p105
        %p614 = pneg %p102
        %p615 = pneg %p126
        %p616 = pneg %p123
        %p617 = pneg %p147
        %p618 = pneg %p144
        %p619 = pneg %p168
        %p620 = pneg %p165
        %p621 = pneg %p189
        %p622 = pneg %p186
        %p623 = pneg %p210
        %p624 = pneg %p207
        %p625 = pneg %p231
        %p626 = pneg %p228
        %p627 = pneg %p252
        %p628 = pneg %p249
        %p629 = pneg %p273
        %p630 = pneg %p270
        %p631 = pneg %p294
        %p632 = pneg %p291
        %p633 = pneg %p315
        %p634 = pneg %p312
        %p635 = pneg %p336
        %p636 = pneg %p333
        %p637 = pneg %p357
        %p638 = pneg %p354
        %p639 = pneg %p378
        %p640 = pneg %p375
        %p641 = pneg %p399
        %p642 = pneg %p396
        %s643 = smul.u32 8, %s37
        %p644 = scmp.lt.s32.totalorder %s643, 23
        %s645 = scalar_select %p644, %s643, 23
        %s646 = smul.addr %s645, 2
        %s647 = scalar_lea.vmem %s0, %s646
        %s648 = smul.u32 8, %s37
        %s649 = smul.u32 128, %s37
        %p651 = scmp.eq.s32.totalorder %s37, 0
        // Predicated region
        $region113: #{vae_forward.1} parent=75 // pred_check
          %p652 = pneg %p651
        $region114: #{vae_forward.1} parent=75 // pred_check_branch
          %654 = sbr.rel (%p652) target = $region116
        $region115: #{vae_forward.1} parent=75 // pred_region
          %655 = vst [vmem:[#allocation2] sm:$0xff] 0.0
          %656 = vst [vmem:[#allocation2 + $0x8] sm:$0xff] 0.0
          %657 = vst [vmem:[#allocation2 + $0x10] sm:$0xff] 0.0
          %658 = vst [vmem:[#allocation2 + $0x18] sm:$0x3] 0.0
        $region116: #{vae_forward.1} parent=75 // pred_fallthru
          _
        %v659 = vld [vmem:[#allocation2] sm:$0xff]
        %v660 = vld [vmem:[#allocation2 + $0x8] sm:$0xff]
        %v661 = vld [vmem:[#allocation2 + $0x10] sm:$0xff]
        %v662 = vld [vmem:[#allocation2 + $0x18] sm:$0x3]
        %v663 = vld [vmem:[%s647] sm:$0xff]
        %v664 = vld [vmem:[%s647 + $0x8] sm:$0xff]
        %v667 = vcombine.high %v663, %v663
        %v669 = vunpack.c.l.s4 1983009808
        %v670 = vunpack.c.0.s8 %v669
        %v671 = vlaneseq
        %v672 = vshrl.u32 %v671, 7
        %v673 = vsub.s32 %v670, %v672
        %v674 = vrot.slane %v663, %v673
        %v676 = vunpack.c.l.s4 1983009808
        %v677 = vunpack.c.0.s8 %v676
        %v678 = vlaneseq
        %v679 = vshrl.u32 %v678, 7
        %v680 = vsub.s32 %v677, %v679
        %v681 = vrot.slane %v667, %v680
        %v682 = vcombine.high %v674, %v674
        %v683 = vcombine.high %v681, %v681
        %v684 = vcombine.high %v664, %v664
        %v686 = vunpack.c.l.s4 1983009808
        %v687 = vunpack.c.0.s8 %v686
        %v688 = vlaneseq
        %v689 = vshrl.u32 %v688, 7
        %v690 = vsub.s32 %v687, %v689
        %v691 = vrot.slane %v664, %v690
        %v693 = vunpack.c.l.s4 1983009808
        %v694 = vunpack.c.0.s8 %v693
        %v695 = vlaneseq
        %v696 = vshrl.u32 %v695, 7
        %v697 = vsub.s32 %v694, %v696
        %v698 = vrot.slane %v684, %v697
        %v699 = vcombine.high %v691, %v691
        %v700 = vcombine.high %v698, %v698
        %v709 = vpack.c.bf16 %v674, %v674
        %v710 = vpack.c.bf16 %v682, %v682
        %v711 = vpack.c.bf16 %v681, %v681
        %v712 = vpack.c.bf16 %v683, %v683
        %v713 = vpack.c.bf16 %v691, %v691
        %v714 = vpack.c.bf16 %v699, %v699
        %v715 = vpack.c.bf16 %v698, %v698
        %v716 = vpack.c.bf16 %v700, %v700
        %v717 = vld [vmem:[%s562] sm:$0xff]
        %v718 = vld [vmem:[%s562 + $0x8] sm:$0xff]
        %v719 = vld [vmem:[%s562 + $0x10] sm:$0xff]
        %v720 = vld [vmem:[%s562 + $0x18] sm:$0xff]
        %v721 = vld [vmem:[%s562 + $0x20] sm:$0xff]
        %v722 = vld [vmem:[%s562 + $0x28] sm:$0xff]
        %v723 = vld [vmem:[%s562 + $0x30] sm:$0xf]
        %v724 = vld [vmem:[%s562 + $0x34] sm:$0xff]
        %v725 = vld [vmem:[%s562 + $0x3c] sm:$0xff]
        %v726 = vld [vmem:[%s562 + $0x44] sm:$0xff]
        %v727 = vld [vmem:[%s562 + $0x4c] sm:$0xff]
        %v728 = vld [vmem:[%s562 + $0x54] sm:$0xff]
        %v729 = vld [vmem:[%s562 + $0x5c] sm:$0xff]
        %v730 = vld [vmem:[%s562 + $0x64] sm:$0xf]
        %v731 = vld [vmem:[%s562 + $0x68] sm:$0xff]
        %v732 = vld [vmem:[%s562 + $0x70] sm:$0xff]
        %v733 = vld [vmem:[%s562 + $0x78] sm:$0xff]
        %v734 = vld [vmem:[%s562 + $0x80] sm:$0xff]
        %v735 = vld [vmem:[%s562 + $0x88] sm:$0xff]
        %v736 = vld [vmem:[%s562 + $0x90] sm:$0xff]
        %v737 = vld [vmem:[%s562 + $0x98] sm:$0xf]
        %v738 = vld [vmem:[%s562 + $0x9c] sm:$0xff]
        %v739 = vld [vmem:[%s562 + $0xa4] sm:$0xff]
        %v740 = vld [vmem:[%s562 + $0xac] sm:$0xff]
        %v741 = vld [vmem:[%s562 + $0xb4] sm:$0xff]
        %v742 = vld [vmem:[%s562 + $0xbc] sm:$0xff]
        %v743 = vld [vmem:[%s562 + $0xc4] sm:$0xff]
        %v744 = vld [vmem:[%s562 + $0xcc] sm:$0xf]
        %v745 = vld [vmem:[%s562 + $0xd0] sm:$0xff]
        %v746 = vld [vmem:[%s562 + $0xd8] sm:$0xff]
        %v747 = vld [vmem:[%s562 + $0xe0] sm:$0xff]
        %v748 = vld [vmem:[%s562 + $0xe8] sm:$0xff]
        %v749 = vld [vmem:[%s562 + $0xf0] sm:$0xff]
        %v750 = vld [vmem:[%s562 + $0xf8] sm:$0xff]
        %v751 = vld [vmem:[%s562 + $0x100] sm:$0xf]
        %v752 = vld [vmem:[%s562 + $0x104] sm:$0xff]
        %v753 = vld [vmem:[%s562 + $0x10c] sm:$0xff]
        %v754 = vld [vmem:[%s562 + $0x114] sm:$0xff]
        %v755 = vld [vmem:[%s562 + $0x11c] sm:$0xff]
        %v756 = vld [vmem:[%s562 + $0x124] sm:$0xff]
        %v757 = vld [vmem:[%s562 + $0x12c] sm:$0xff]
        %v758 = vld [vmem:[%s562 + $0x134] sm:$0xf]
        %v759 = vld [vmem:[%s562 + $0x138] sm:$0xff]
        %v760 = vld [vmem:[%s562 + $0x140] sm:$0xff]
        %v761 = vld [vmem:[%s562 + $0x148] sm:$0xff]
        %v762 = vld [vmem:[%s562 + $0x150] sm:$0xff]
        %v763 = vld [vmem:[%s562 + $0x158] sm:$0xff]
        %v764 = vld [vmem:[%s562 + $0x160] sm:$0xff]
        %v765 = vld [vmem:[%s562 + $0x168] sm:$0xf]
        %v766 = vld [vmem:[%s562 + $0x16c] sm:$0xff]
        %v767 = vld [vmem:[%s562 + $0x174] sm:$0xff]
        %v768 = vld [vmem:[%s562 + $0x17c] sm:$0xff]
        %v769 = vld [vmem:[%s562 + $0x184] sm:$0xff]
        %v770 = vld [vmem:[%s562 + $0x18c] sm:$0xff]
        %v771 = vld [vmem:[%s562 + $0x194] sm:$0xff]
        %v772 = vld [vmem:[%s562 + $0x19c] sm:$0xf]
        %v773 = vld [vmem:[%s562 + $0x1a0] sm:$0xff]
        %v774 = vld [vmem:[%s562 + $0x1a8] sm:$0xff]
        %v775 = vld [vmem:[%s562 + $0x1b0] sm:$0xff]
        %v776 = vld [vmem:[%s562 + $0x1b8] sm:$0xff]
        %v777 = vld [vmem:[%s562 + $0x1c0] sm:$0xff]
        %v778 = vld [vmem:[%s562 + $0x1c8] sm:$0xff]
        %v779 = vld [vmem:[%s562 + $0x1d0] sm:$0xf]
        %v780 = vld [vmem:[%s562 + $0x1d4] sm:$0xff]
        %v781 = vld [vmem:[%s562 + $0x1dc] sm:$0xff]
        %v782 = vld [vmem:[%s562 + $0x1e4] sm:$0xff]
        %v783 = vld [vmem:[%s562 + $0x1ec] sm:$0xff]
        %v784 = vld [vmem:[%s562 + $0x1f4] sm:$0xff]
        %v785 = vld [vmem:[%s562 + $0x1fc] sm:$0xff]
        %v786 = vld [vmem:[%s562 + $0x204] sm:$0xf]
        %v787 = vld [vmem:[%s562 + $0x208] sm:$0xff]
        %v788 = vld [vmem:[%s562 + $0x210] sm:$0xff]
        %v789 = vld [vmem:[%s562 + $0x218] sm:$0xff]
        %v790 = vld [vmem:[%s562 + $0x220] sm:$0xff]
        %v791 = vld [vmem:[%s562 + $0x228] sm:$0xff]
        %v792 = vld [vmem:[%s562 + $0x230] sm:$0xff]
        %v793 = vld [vmem:[%s562 + $0x238] sm:$0xf]
        %v794 = vld [vmem:[%s562 + $0x23c] sm:$0xff]
        %v795 = vld [vmem:[%s562 + $0x244] sm:$0xff]
        %v796 = vld [vmem:[%s562 + $0x24c] sm:$0xff]
        %v797 = vld [vmem:[%s562 + $0x254] sm:$0xff]
        %v798 = vld [vmem:[%s562 + $0x25c] sm:$0xff]
        %v799 = vld [vmem:[%s562 + $0x264] sm:$0xff]
        %v800 = vld [vmem:[%s562 + $0x26c] sm:$0xf]
        %v801 = vld [vmem:[%s562 + $0x270] sm:$0xff]
        %v802 = vld [vmem:[%s562 + $0x278] sm:$0xff]
        %v803 = vld [vmem:[%s562 + $0x280] sm:$0xff]
        %v804 = vld [vmem:[%s562 + $0x288] sm:$0xff]
        %v805 = vld [vmem:[%s562 + $0x290] sm:$0xff]
        %v806 = vld [vmem:[%s562 + $0x298] sm:$0xff]
        %v807 = vld [vmem:[%s562 + $0x2a0] sm:$0xf]
        %v808 = vld [vmem:[%s562 + $0x2a4] sm:$0xff]
        %v809 = vld [vmem:[%s562 + $0x2ac] sm:$0xff]
        %v810 = vld [vmem:[%s562 + $0x2b4] sm:$0xff]
        %v811 = vld [vmem:[%s562 + $0x2bc] sm:$0xff]
        %v812 = vld [vmem:[%s562 + $0x2c4] sm:$0xff]
        %v813 = vld [vmem:[%s562 + $0x2cc] sm:$0xff]
        %v814 = vld [vmem:[%s562 + $0x2d4] sm:$0xf]
        %v815 = vld [vmem:[%s562 + $0x2d8] sm:$0xff]
        %v816 = vld [vmem:[%s562 + $0x2e0] sm:$0xff]
        %v817 = vld [vmem:[%s562 + $0x2e8] sm:$0xff]
        %v818 = vld [vmem:[%s562 + $0x2f0] sm:$0xff]
        %v819 = vld [vmem:[%s562 + $0x2f8] sm:$0xff]
        %v820 = vld [vmem:[%s562 + $0x300] sm:$0xff]
        %v821 = vld [vmem:[%s562 + $0x308] sm:$0xf]
        %v822 = vld [vmem:[%s562 + $0x30c] sm:$0xff]
        %v823 = vld [vmem:[%s562 + $0x314] sm:$0xff]
        %v824 = vld [vmem:[%s562 + $0x31c] sm:$0xff]
        %v825 = vld [vmem:[%s562 + $0x324] sm:$0xff]
        %v826 = vld [vmem:[%s562 + $0x32c] sm:$0xff]
        %v827 = vld [vmem:[%s562 + $0x334] sm:$0xff]
        %v828 = vld [vmem:[%s562 + $0x33c] sm:$0xf]
        %v829 = vld [vmem:[%s562 + $0x340] sm:$0xff]
        %v830 = vld [vmem:[%s562 + $0x348] sm:$0xff]
        %v831 = vld [vmem:[%s562 + $0x350] sm:$0xff]
        %v832 = vld [vmem:[%s562 + $0x358] sm:$0xff]
        %v833 = vld [vmem:[%s562 + $0x360] sm:$0xff]
        %v834 = vld [vmem:[%s562 + $0x368] sm:$0xff]
        %v835 = vld [vmem:[%s562 + $0x370] sm:$0xf]
        %v836 = vld [vmem:[%s562 + $0x374] sm:$0xff]
        %v837 = vld [vmem:[%s562 + $0x37c] sm:$0xff]
        %v838 = vld [vmem:[%s562 + $0x384] sm:$0xff]
        %v839 = vld [vmem:[%s562 + $0x38c] sm:$0xff]
        %v840 = vld [vmem:[%s562 + $0x394] sm:$0xff]
        %v841 = vld [vmem:[%s562 + $0x39c] sm:$0xff]
        %v842 = vld [vmem:[%s562 + $0x3a4] sm:$0xf]
        %v843 = vld [vmem:[%s562 + $0x3a8] sm:$0xff]
        %v844 = vld [vmem:[%s562 + $0x3b0] sm:$0xff]
        %v845 = vld [vmem:[%s562 + $0x3b8] sm:$0xff]
        %v846 = vld [vmem:[%s562 + $0x3c0] sm:$0xff]
        %v847 = vld [vmem:[%s562 + $0x3c8] sm:$0xff]
        %v848 = vld [vmem:[%s562 + $0x3d0] sm:$0xff]
        %v849 = vld [vmem:[%s562 + $0x3d8] sm:$0xf]
        %v850 = vld [vmem:[%s562 + $0x3dc] sm:$0xff]
        %v851 = vld [vmem:[%s562 + $0x3e4] sm:$0xff]
        %v852 = vld [vmem:[%s562 + $0x3ec] sm:$0xff]
        %v853 = vld [vmem:[%s562 + $0x3f4] sm:$0xff]
        %v854 = vld [vmem:[%s562 + $0x3fc] sm:$0xff]
        %v855 = vld [vmem:[%s562 + $0x404] sm:$0xff]
        %v856 = vld [vmem:[%s562 + $0x40c] sm:$0xf]
        %v857 = vld [vmem:[%s562 + $0x410] sm:$0xff]
        %v858 = vld [vmem:[%s562 + $0x418] sm:$0xff]
        %v859 = vld [vmem:[%s562 + $0x420] sm:$0xff]
        %v860 = vld [vmem:[%s562 + $0x428] sm:$0xff]
        %v861 = vld [vmem:[%s562 + $0x430] sm:$0xff]
        %v862 = vld [vmem:[%s562 + $0x438] sm:$0xff]
        %v863 = vld [vmem:[%s562 + $0x440] sm:$0xf]
        %v864 = vld [vmem:[%s562 + $0x444] sm:$0xff]
        %v865 = vld [vmem:[%s562 + $0x44c] sm:$0xff]
        %v866 = vld [vmem:[%s562 + $0x454] sm:$0xff]
        %v867 = vld [vmem:[%s562 + $0x45c] sm:$0xff]
        %v868 = vld [vmem:[%s562 + $0x464] sm:$0xff]
        %v869 = vld [vmem:[%s562 + $0x46c] sm:$0xff]
        %v870 = vld [vmem:[%s562 + $0x474] sm:$0xf]
        %v871 = vld [vmem:[%s562 + $0x478] sm:$0xff]
        %v872 = vld [vmem:[%s562 + $0x480] sm:$0xff]
        %v873 = vld [vmem:[%s562 + $0x488] sm:$0xff]
        %v874 = vld [vmem:[%s562 + $0x490] sm:$0xff]
        %v875 = vld [vmem:[%s562 + $0x498] sm:$0xff]
        %v876 = vld [vmem:[%s562 + $0x4a0] sm:$0xff]
        %v877 = vld [vmem:[%s562 + $0x4a8] sm:$0xf]
        %v878 = vld [vmem:[%s562 + $0x4ac] sm:$0xff]
        %v879 = vld [vmem:[%s562 + $0x4b4] sm:$0xff]
        %v880 = vld [vmem:[%s562 + $0x4bc] sm:$0xff]
        %v881 = vld [vmem:[%s562 + $0x4c4] sm:$0xff]
        %v882 = vld [vmem:[%s562 + $0x4cc] sm:$0xff]
        %v883 = vld [vmem:[%s562 + $0x4d4] sm:$0xff]
        %v884 = vld [vmem:[%s562 + $0x4dc] sm:$0xf]
        %v885 = vld [vmem:[%s562 + $0x4e0] sm:$0xff]
        %v886 = vld [vmem:[%s562 + $0x4e8] sm:$0xff]
        %v887 = vld [vmem:[%s562 + $0x4f0] sm:$0xff]
        %v888 = vld [vmem:[%s562 + $0x4f8] sm:$0xff]
        %v889 = vld [vmem:[%s562 + $0x500] sm:$0xff]
        %v890 = vld [vmem:[%s562 + $0x508] sm:$0xff]
        %v891 = vld [vmem:[%s562 + $0x510] sm:$0xf]
        %v892 = vld [vmem:[%s562 + $0x514] sm:$0xff]
        %v893 = vld [vmem:[%s562 + $0x51c] sm:$0xff]
        %v894 = vld [vmem:[%s562 + $0x524] sm:$0xff]
        %v895 = vld [vmem:[%s562 + $0x52c] sm:$0xff]
        %v896 = vld [vmem:[%s562 + $0x534] sm:$0xff]
        %v897 = vld [vmem:[%s562 + $0x53c] sm:$0xff]
        %v898 = vld [vmem:[%s562 + $0x544] sm:$0xf]
        %v899 = vld [vmem:[%s562 + $0x548] sm:$0xff]
        %v900 = vld [vmem:[%s562 + $0x550] sm:$0xff]
        %v901 = vld [vmem:[%s562 + $0x558] sm:$0xff]
        %v902 = vld [vmem:[%s562 + $0x560] sm:$0xff]
        %v903 = vld [vmem:[%s562 + $0x568] sm:$0xff]
        %v904 = vld [vmem:[%s562 + $0x570] sm:$0xff]
        %v905 = vld [vmem:[%s562 + $0x578] sm:$0xf]
        %v906 = vld [vmem:[%s562 + $0x57c] sm:$0xff]
        %v907 = vld [vmem:[%s562 + $0x584] sm:$0xff]
        %v908 = vld [vmem:[%s562 + $0x58c] sm:$0xff]
        %v909 = vld [vmem:[%s562 + $0x594] sm:$0xff]
        %v910 = vld [vmem:[%s562 + $0x59c] sm:$0xff]
        %v911 = vld [vmem:[%s562 + $0x5a4] sm:$0xff]
        %v912 = vld [vmem:[%s562 + $0x5ac] sm:$0xf]
        %v913 = vld [vmem:[%s562 + $0x5b0] sm:$0xff]
        %v914 = vld [vmem:[%s562 + $0x5b8] sm:$0xff]
        %v915 = vld [vmem:[%s562 + $0x5c0] sm:$0xff]
        %v916 = vld [vmem:[%s562 + $0x5c8] sm:$0xff]
        %v917 = vld [vmem:[%s562 + $0x5d0] sm:$0xff]
        %v918 = vld [vmem:[%s562 + $0x5d8] sm:$0xff]
        %v919 = vld [vmem:[%s562 + $0x5e0] sm:$0xf]
        %v920 = vld [vmem:[%s562 + $0x5e4] sm:$0xff]
        %v921 = vld [vmem:[%s562 + $0x5ec] sm:$0xff]
        %v922 = vld [vmem:[%s562 + $0x5f4] sm:$0xff]
        %v923 = vld [vmem:[%s562 + $0x5fc] sm:$0xff]
        %v924 = vld [vmem:[%s562 + $0x604] sm:$0xff]
        %v925 = vld [vmem:[%s562 + $0x60c] sm:$0xff]
        %v926 = vld [vmem:[%s562 + $0x614] sm:$0xf]
        %v927 = vld [vmem:[%s562 + $0x618] sm:$0xff]
        %v928 = vld [vmem:[%s562 + $0x620] sm:$0xff]
        %v929 = vld [vmem:[%s562 + $0x628] sm:$0xff]
        %v930 = vld [vmem:[%s562 + $0x630] sm:$0xff]
        %v931 = vld [vmem:[%s562 + $0x638] sm:$0xff]
        %v932 = vld [vmem:[%s562 + $0x640] sm:$0xff]
        %v933 = vld [vmem:[%s562 + $0x648] sm:$0xf]
        %v934 = vld [vmem:[%s562 + $0x64c] sm:$0xff]
        %v935 = vld [vmem:[%s562 + $0x654] sm:$0xff]
        %v936 = vld [vmem:[%s562 + $0x65c] sm:$0xff]
        %v937 = vld [vmem:[%s562 + $0x664] sm:$0xff]
        %v938 = vld [vmem:[%s562 + $0x66c] sm:$0xff]
        %v939 = vld [vmem:[%s562 + $0x674] sm:$0xff]
        %v940 = vld [vmem:[%s562 + $0x67c] sm:$0xf]
        %v941 = vld [vmem:[%s562 + $0x680] sm:$0xff]
        %v942 = vld [vmem:[%s562 + $0x688] sm:$0xff]
        %v943 = vld [vmem:[%s562 + $0x690] sm:$0xff]
        %v944 = vld [vmem:[%s562 + $0x698] sm:$0xff]
        %v945 = vld [vmem:[%s562 + $0x6a0] sm:$0xff]
        %v946 = vld [vmem:[%s562 + $0x6a8] sm:$0xff]
        %v947 = vld [vmem:[%s562 + $0x6b0] sm:$0xf]
        %v948 = vld [vmem:[%s562 + $0x6b4] sm:$0xff]
        %v949 = vld [vmem:[%s562 + $0x6bc] sm:$0xff]
        %v950 = vld [vmem:[%s562 + $0x6c4] sm:$0xff]
        %v951 = vld [vmem:[%s562 + $0x6cc] sm:$0xff]
        %v952 = vld [vmem:[%s562 + $0x6d4] sm:$0xff]
        %v953 = vld [vmem:[%s562 + $0x6dc] sm:$0xff]
        %v954 = vld [vmem:[%s562 + $0x6e4] sm:$0xf]
        %v955 = vld [vmem:[%s562 + $0x6e8] sm:$0xff]
        %v956 = vld [vmem:[%s562 + $0x6f0] sm:$0xff]
        %v957 = vld [vmem:[%s562 + $0x6f8] sm:$0xff]
        %v958 = vld [vmem:[%s562 + $0x700] sm:$0xff]
        %v959 = vld [vmem:[%s562 + $0x708] sm:$0xff]
        %v960 = vld [vmem:[%s562 + $0x710] sm:$0xff]
        %v961 = vld [vmem:[%s562 + $0x718] sm:$0xf]
        %v962 = vld [vmem:[%s562 + $0x71c] sm:$0xff]
        %v963 = vld [vmem:[%s562 + $0x724] sm:$0xff]
        %v964 = vld [vmem:[%s562 + $0x72c] sm:$0xff]
        %v965 = vld [vmem:[%s562 + $0x734] sm:$0xff]
        %v966 = vld [vmem:[%s562 + $0x73c] sm:$0xff]
        %v967 = vld [vmem:[%s562 + $0x744] sm:$0xff]
        %v968 = vld [vmem:[%s562 + $0x74c] sm:$0xf]
        %v969 = vld [vmem:[%s562 + $0x750] sm:$0xff]
        %v970 = vld [vmem:[%s562 + $0x758] sm:$0xff]
        %v971 = vld [vmem:[%s562 + $0x760] sm:$0xff]
        %v972 = vld [vmem:[%s562 + $0x768] sm:$0xff]
        %v973 = vld [vmem:[%s562 + $0x770] sm:$0xff]
        %v974 = vld [vmem:[%s562 + $0x778] sm:$0xff]
        %v975 = vld [vmem:[%s562 + $0x780] sm:$0xf]
        %v976 = vld [vmem:[%s562 + $0x784] sm:$0xff]
        %v977 = vld [vmem:[%s562 + $0x78c] sm:$0xff]
        %v978 = vld [vmem:[%s562 + $0x794] sm:$0xff]
        %v979 = vld [vmem:[%s562 + $0x79c] sm:$0xff]
        %v980 = vld [vmem:[%s562 + $0x7a4] sm:$0xff]
        %v981 = vld [vmem:[%s562 + $0x7ac] sm:$0xff]
        %v982 = vld [vmem:[%s562 + $0x7b4] sm:$0xf]
        %v983 = vld [vmem:[%s562 + $0x7b8] sm:$0xff]
        %v984 = vld [vmem:[%s562 + $0x7c0] sm:$0xff]
        %v985 = vld [vmem:[%s562 + $0x7c8] sm:$0xff]
        %v986 = vld [vmem:[%s562 + $0x7d0] sm:$0xff]
        %v987 = vld [vmem:[%s562 + $0x7d8] sm:$0xff]
        %v988 = vld [vmem:[%s562 + $0x7e0] sm:$0xff]
        %v989 = vld [vmem:[%s562 + $0x7e8] sm:$0xf]
        %v990 = vld [vmem:[%s562 + $0x7ec] sm:$0xff]
        %v991 = vld [vmem:[%s562 + $0x7f4] sm:$0xff]
        %v992 = vld [vmem:[%s562 + $0x7fc] sm:$0xff]
        %v993 = vld [vmem:[%s562 + $0x804] sm:$0xff]
        %v994 = vld [vmem:[%s562 + $0x80c] sm:$0xff]
        %v995 = vld [vmem:[%s562 + $0x814] sm:$0xff]
        %v996 = vld [vmem:[%s562 + $0x81c] sm:$0xf]
        %v997 = vld [vmem:[%s562 + $0x820] sm:$0xff]
        %v998 = vld [vmem:[%s562 + $0x828] sm:$0xff]
        %v999 = vld [vmem:[%s562 + $0x830] sm:$0xff]
        %v1000 = vld [vmem:[%s562 + $0x838] sm:$0xff]
        %v1001 = vld [vmem:[%s562 + $0x840] sm:$0xff]
        %v1002 = vld [vmem:[%s562 + $0x848] sm:$0xff]
        %v1003 = vld [vmem:[%s562 + $0x850] sm:$0xf]
        %v1004 = vld [vmem:[%s562 + $0x854] sm:$0xff]
        %v1005 = vld [vmem:[%s562 + $0x85c] sm:$0xff]
        %v1006 = vld [vmem:[%s562 + $0x864] sm:$0xff]
        %v1007 = vld [vmem:[%s562 + $0x86c] sm:$0xff]
        %v1008 = vld [vmem:[%s562 + $0x874] sm:$0xff]
        %v1009 = vld [vmem:[%s562 + $0x87c] sm:$0xff]
        %v1010 = vld [vmem:[%s562 + $0x884] sm:$0xf]
        %v1011 = vld [vmem:[%s562 + $0x888] sm:$0xff]
        %v1012 = vld [vmem:[%s562 + $0x890] sm:$0xff]
        %v1013 = vld [vmem:[%s562 + $0x898] sm:$0xff]
        %v1014 = vld [vmem:[%s562 + $0x8a0] sm:$0xff]
        %v1015 = vld [vmem:[%s562 + $0x8a8] sm:$0xff]
        %v1016 = vld [vmem:[%s562 + $0x8b0] sm:$0xff]
        %v1017 = vld [vmem:[%s562 + $0x8b8] sm:$0xf]
        %v1018 = vld [vmem:[%s562 + $0x8bc] sm:$0xff]
        %v1019 = vld [vmem:[%s562 + $0x8c4] sm:$0xff]
        %v1020 = vld [vmem:[%s562 + $0x8cc] sm:$0xff]
        %v1021 = vld [vmem:[%s562 + $0x8d4] sm:$0xff]
        %v1022 = vld [vmem:[%s562 + $0x8dc] sm:$0xff]
        %v1023 = vld [vmem:[%s562 + $0x8e4] sm:$0xff]
        %v1024 = vld [vmem:[%s562 + $0x8ec] sm:$0xf]
        %v1025 = vld [vmem:[%s562 + $0x8f0] sm:$0xff]
        %v1026 = vld [vmem:[%s562 + $0x8f8] sm:$0xff]
        %v1027 = vld [vmem:[%s562 + $0x900] sm:$0xff]
        %v1028 = vld [vmem:[%s562 + $0x908] sm:$0xff]
        %v1029 = vld [vmem:[%s562 + $0x910] sm:$0xff]
        %v1030 = vld [vmem:[%s562 + $0x918] sm:$0xff]
        %v1031 = vld [vmem:[%s562 + $0x920] sm:$0xf]
        %v1032 = vld [vmem:[%s562 + $0x924] sm:$0xff]
        %v1033 = vld [vmem:[%s562 + $0x92c] sm:$0xff]
        %v1034 = vld [vmem:[%s562 + $0x934] sm:$0xff]
        %v1035 = vld [vmem:[%s562 + $0x93c] sm:$0xff]
        %v1036 = vld [vmem:[%s562 + $0x944] sm:$0xff]
        %v1037 = vld [vmem:[%s562 + $0x94c] sm:$0xff]
        %v1038 = vld [vmem:[%s562 + $0x954] sm:$0xf]
        %v1039 = vld [vmem:[%s562 + $0x958] sm:$0xff]
        %v1040 = vld [vmem:[%s562 + $0x960] sm:$0xff]
        %v1041 = vld [vmem:[%s562 + $0x968] sm:$0xff]
        %v1042 = vld [vmem:[%s562 + $0x970] sm:$0xff]
        %v1043 = vld [vmem:[%s562 + $0x978] sm:$0xff]
        %v1044 = vld [vmem:[%s562 + $0x980] sm:$0xff]
        %v1045 = vld [vmem:[%s562 + $0x988] sm:$0xf]
        %v1046 = vld [vmem:[%s562 + $0x98c] sm:$0xff]
        %v1047 = vld [vmem:[%s562 + $0x994] sm:$0xff]
        %v1048 = vld [vmem:[%s562 + $0x99c] sm:$0xff]
        %v1049 = vld [vmem:[%s562 + $0x9a4] sm:$0xff]
        %v1050 = vld [vmem:[%s562 + $0x9ac] sm:$0xff]
        %v1051 = vld [vmem:[%s562 + $0x9b4] sm:$0xff]
        %v1052 = vld [vmem:[%s562 + $0x9bc] sm:$0xf]
        %v1053 = vld [vmem:[%s562 + $0x9c0] sm:$0xff]
        %v1054 = vld [vmem:[%s562 + $0x9c8] sm:$0xff]
        %v1055 = vld [vmem:[%s562 + $0x9d0] sm:$0xff]
        %v1056 = vld [vmem:[%s562 + $0x9d8] sm:$0xff]
        %v1057 = vld [vmem:[%s562 + $0x9e0] sm:$0xff]
        %v1058 = vld [vmem:[%s562 + $0x9e8] sm:$0xff]
        %v1059 = vld [vmem:[%s562 + $0x9f0] sm:$0xf]
        %v1060 = vld [vmem:[%s562 + $0x9f4] sm:$0xff]
        %v1061 = vld [vmem:[%s562 + $0x9fc] sm:$0xff]
        %v1062 = vld [vmem:[%s562 + $0xa04] sm:$0xff]
        %v1063 = vld [vmem:[%s562 + $0xa0c] sm:$0xff]
        %v1064 = vld [vmem:[%s562 + $0xa14] sm:$0xff]
        %v1065 = vld [vmem:[%s562 + $0xa1c] sm:$0xff]
        %v1066 = vld [vmem:[%s562 + $0xa24] sm:$0xf]
        %v1067 = vld [vmem:[%s562 + $0xa28] sm:$0xff]
        %v1068 = vld [vmem:[%s562 + $0xa30] sm:$0xff]
        %v1069 = vld [vmem:[%s562 + $0xa38] sm:$0xff]
        %v1070 = vld [vmem:[%s562 + $0xa40] sm:$0xff]
        %v1071 = vld [vmem:[%s562 + $0xa48] sm:$0xff]
        %v1072 = vld [vmem:[%s562 + $0xa50] sm:$0xff]
        %v1073 = vld [vmem:[%s562 + $0xa58] sm:$0xf]
        %v1074 = vld [vmem:[%s562 + $0xa5c] sm:$0xff]
        %v1075 = vld [vmem:[%s562 + $0xa64] sm:$0xff]
        %v1076 = vld [vmem:[%s562 + $0xa6c] sm:$0xff]
        %v1077 = vld [vmem:[%s562 + $0xa74] sm:$0xff]
        %v1078 = vld [vmem:[%s562 + $0xa7c] sm:$0xff]
        %v1079 = vld [vmem:[%s562 + $0xa84] sm:$0xff]
        %v1080 = vld [vmem:[%s562 + $0xa8c] sm:$0xf]
        %v1081 = vld [vmem:[%s562 + $0xa90] sm:$0xff]
        %v1082 = vld [vmem:[%s562 + $0xa98] sm:$0xff]
        %v1083 = vld [vmem:[%s562 + $0xaa0] sm:$0xff]
        %v1084 = vld [vmem:[%s562 + $0xaa8] sm:$0xff]
        %v1085 = vld [vmem:[%s562 + $0xab0] sm:$0xff]
        %v1086 = vld [vmem:[%s562 + $0xab8] sm:$0xff]
        %v1087 = vld [vmem:[%s562 + $0xac0] sm:$0xf]
        %v1088 = vld [vmem:[%s562 + $0xac4] sm:$0xff]
        %v1089 = vld [vmem:[%s562 + $0xacc] sm:$0xff]
        %v1090 = vld [vmem:[%s562 + $0xad4] sm:$0xff]
        %v1091 = vld [vmem:[%s562 + $0xadc] sm:$0xff]
        %v1092 = vld [vmem:[%s562 + $0xae4] sm:$0xff]
        %v1093 = vld [vmem:[%s562 + $0xaec] sm:$0xff]
        %v1094 = vld [vmem:[%s562 + $0xaf4] sm:$0xf]
        %v1095 = vld [vmem:[%s562 + $0xaf8] sm:$0xff]
        %v1096 = vld [vmem:[%s562 + $0xb00] sm:$0xff]
        %v1097 = vld [vmem:[%s562 + $0xb08] sm:$0xff]
        %v1098 = vld [vmem:[%s562 + $0xb10] sm:$0xff]
        %v1099 = vld [vmem:[%s562 + $0xb18] sm:$0xff]
        %v1100 = vld [vmem:[%s562 + $0xb20] sm:$0xff]
        %v1101 = vld [vmem:[%s562 + $0xb28] sm:$0xf]
        %v1102 = vld [vmem:[%s562 + $0xb2c] sm:$0xff]
        %v1103 = vld [vmem:[%s562 + $0xb34] sm:$0xff]
        %v1104 = vld [vmem:[%s562 + $0xb3c] sm:$0xff]
        %v1105 = vld [vmem:[%s562 + $0xb44] sm:$0xff]
        %v1106 = vld [vmem:[%s562 + $0xb4c] sm:$0xff]
        %v1107 = vld [vmem:[%s562 + $0xb54] sm:$0xff]
        %v1108 = vld [vmem:[%s562 + $0xb5c] sm:$0xf]
        %v1109 = vld [vmem:[%s562 + $0xb60] sm:$0xff]
        %v1110 = vld [vmem:[%s562 + $0xb68] sm:$0xff]
        %v1111 = vld [vmem:[%s562 + $0xb70] sm:$0xff]
        %v1112 = vld [vmem:[%s562 + $0xb78] sm:$0xff]
        %v1113 = vld [vmem:[%s562 + $0xb80] sm:$0xff]
        %v1114 = vld [vmem:[%s562 + $0xb88] sm:$0xff]
        %v1115 = vld [vmem:[%s562 + $0xb90] sm:$0xf]
        %v1116 = vld [vmem:[%s562 + $0xb94] sm:$0xff]
        %v1117 = vld [vmem:[%s562 + $0xb9c] sm:$0xff]
        %v1118 = vld [vmem:[%s562 + $0xba4] sm:$0xff]
        %v1119 = vld [vmem:[%s562 + $0xbac] sm:$0xff]
        %v1120 = vld [vmem:[%s562 + $0xbb4] sm:$0xff]
        %v1121 = vld [vmem:[%s562 + $0xbbc] sm:$0xff]
        %v1122 = vld [vmem:[%s562 + $0xbc4] sm:$0xf]
        %v1123 = vld [vmem:[%s562 + $0xbc8] sm:$0xff]
        %v1124 = vld [vmem:[%s562 + $0xbd0] sm:$0xff]
        %v1125 = vld [vmem:[%s562 + $0xbd8] sm:$0xff]
        %v1126 = vld [vmem:[%s562 + $0xbe0] sm:$0xff]
        %v1127 = vld [vmem:[%s562 + $0xbe8] sm:$0xff]
        %v1128 = vld [vmem:[%s562 + $0xbf0] sm:$0xff]
        %v1129 = vld [vmem:[%s562 + $0xbf8] sm:$0xf]
        %v1130 = vld [vmem:[%s562 + $0xbfc] sm:$0xff]
        %v1131 = vld [vmem:[%s562 + $0xc04] sm:$0xff]
        %v1132 = vld [vmem:[%s562 + $0xc0c] sm:$0xff]
        %v1133 = vld [vmem:[%s562 + $0xc14] sm:$0xff]
        %v1134 = vld [vmem:[%s562 + $0xc1c] sm:$0xff]
        %v1135 = vld [vmem:[%s562 + $0xc24] sm:$0xff]
        %v1136 = vld [vmem:[%s562 + $0xc2c] sm:$0xf]
        %v1137 = vld [vmem:[%s562 + $0xc30] sm:$0xff]
        %v1138 = vld [vmem:[%s562 + $0xc38] sm:$0xff]
        %v1139 = vld [vmem:[%s562 + $0xc40] sm:$0xff]
        %v1140 = vld [vmem:[%s562 + $0xc48] sm:$0xff]
        %v1141 = vld [vmem:[%s562 + $0xc50] sm:$0xff]
        %v1142 = vld [vmem:[%s562 + $0xc58] sm:$0xff]
        %v1143 = vld [vmem:[%s562 + $0xc60] sm:$0xf]
        %v1144 = vld [vmem:[%s562 + $0xc64] sm:$0xff]
        %v1145 = vld [vmem:[%s562 + $0xc6c] sm:$0xff]
        %v1146 = vld [vmem:[%s562 + $0xc74] sm:$0xff]
        %v1147 = vld [vmem:[%s562 + $0xc7c] sm:$0xff]
        %v1148 = vld [vmem:[%s562 + $0xc84] sm:$0xff]
        %v1149 = vld [vmem:[%s562 + $0xc8c] sm:$0xff]
        %v1150 = vld [vmem:[%s562 + $0xc94] sm:$0xf]
        %v1151 = vld [vmem:[%s562 + $0xc98] sm:$0xff]
        %v1152 = vld [vmem:[%s562 + $0xca0] sm:$0xff]
        %v1153 = vld [vmem:[%s562 + $0xca8] sm:$0xff]
        %v1154 = vld [vmem:[%s562 + $0xcb0] sm:$0xff]
        %v1155 = vld [vmem:[%s562 + $0xcb8] sm:$0xff]
        %v1156 = vld [vmem:[%s562 + $0xcc0] sm:$0xff]
        %v1157 = vld [vmem:[%s562 + $0xcc8] sm:$0xf]
        %v1158 = vld [vmem:[%s562 + $0xccc] sm:$0xff]
        %v1159 = vld [vmem:[%s562 + $0xcd4] sm:$0xff]
        %v1160 = vld [vmem:[%s562 + $0xcdc] sm:$0xff]
        %v1161 = vld [vmem:[%s562 + $0xce4] sm:$0xff]
        %v1162 = vld [vmem:[%s562 + $0xcec] sm:$0xff]
        %v1163 = vld [vmem:[%s562 + $0xcf4] sm:$0xff]
        %v1164 = vld [vmem:[%s562 + $0xcfc] sm:$0xf]
        %v1165 = vld [vmem:[%s562 + $0xd00] sm:$0xff]
        %v1166 = vld [vmem:[%s562 + $0xd08] sm:$0xff]
        %v1167 = vld [vmem:[%s562 + $0xd10] sm:$0xff]
        %v1168 = vld [vmem:[%s562 + $0xd18] sm:$0xff]
        %v1169 = vld [vmem:[%s562 + $0xd20] sm:$0xff]
        %v1170 = vld [vmem:[%s562 + $0xd28] sm:$0xff]
        %v1171 = vld [vmem:[%s562 + $0xd30] sm:$0xf]
        %v1172 = vld [vmem:[%s562 + $0xd34] sm:$0xff]
        %v1173 = vld [vmem:[%s562 + $0xd3c] sm:$0xff]
        %v1174 = vld [vmem:[%s562 + $0xd44] sm:$0xff]
        %v1175 = vld [vmem:[%s562 + $0xd4c] sm:$0xff]
        %v1176 = vld [vmem:[%s562 + $0xd54] sm:$0xff]
        %v1177 = vld [vmem:[%s562 + $0xd5c] sm:$0xff]
        %v1178 = vld [vmem:[%s562 + $0xd64] sm:$0xf]
        %v1179 = vld [vmem:[%s562 + $0xd68] sm:$0xff]
        %v1180 = vld [vmem:[%s562 + $0xd70] sm:$0xff]
        %v1181 = vld [vmem:[%s562 + $0xd78] sm:$0xff]
        %v1182 = vld [vmem:[%s562 + $0xd80] sm:$0xff]
        %v1183 = vld [vmem:[%s562 + $0xd88] sm:$0xff]
        %v1184 = vld [vmem:[%s562 + $0xd90] sm:$0xff]
        %v1185 = vld [vmem:[%s562 + $0xd98] sm:$0xf]
        %v1186 = vld [vmem:[%s562 + $0xd9c] sm:$0xff]
        %v1187 = vld [vmem:[%s562 + $0xda4] sm:$0xff]
        %v1188 = vld [vmem:[%s562 + $0xdac] sm:$0xff]
        %v1189 = vld [vmem:[%s562 + $0xdb4] sm:$0xff]
        %v1190 = vld [vmem:[%s562 + $0xdbc] sm:$0xff]
        %v1191 = vld [vmem:[%s562 + $0xdc4] sm:$0xff]
        %v1192 = vld [vmem:[%s562 + $0xdcc] sm:$0xf]
        %v1193 = vld [vmem:[%s562 + $0xdd0] sm:$0xff]
        %v1194 = vld [vmem:[%s562 + $0xdd8] sm:$0xff]
        %v1195 = vld [vmem:[%s562 + $0xde0] sm:$0xff]
        %v1196 = vld [vmem:[%s562 + $0xde8] sm:$0xff]
        %v1197 = vld [vmem:[%s562 + $0xdf0] sm:$0xff]
        %v1198 = vld [vmem:[%s562 + $0xdf8] sm:$0xff]
        %v1199 = vld [vmem:[%s562 + $0xe00] sm:$0xf]
        %v1200 = vld [vmem:[%s562 + $0xe04] sm:$0xff]
        %v1201 = vld [vmem:[%s562 + $0xe0c] sm:$0xff]
        %v1202 = vld [vmem:[%s562 + $0xe14] sm:$0xff]
        %v1203 = vld [vmem:[%s562 + $0xe1c] sm:$0xff]
        %v1204 = vld [vmem:[%s562 + $0xe24] sm:$0xff]
        %v1205 = vld [vmem:[%s562 + $0xe2c] sm:$0xff]
        %v1206 = vld [vmem:[%s562 + $0xe34] sm:$0xf]
        %v1207 = vld [vmem:[%s562 + $0xe38] sm:$0xff]
        %v1208 = vld [vmem:[%s562 + $0xe40] sm:$0xff]
        %v1209 = vld [vmem:[%s562 + $0xe48] sm:$0xff]
        %v1210 = vld [vmem:[%s562 + $0xe50] sm:$0xff]
        %v1211 = vld [vmem:[%s562 + $0xe58] sm:$0xff]
        %v1212 = vld [vmem:[%s562 + $0xe60] sm:$0xff]
        %v1213 = vld [vmem:[%s562 + $0xe68] sm:$0xf]
        %v1214 = vld [vmem:[%s562 + $0xe6c] sm:$0xff]
        %v1215 = vld [vmem:[%s562 + $0xe74] sm:$0xff]
        %v1216 = vld [vmem:[%s562 + $0xe7c] sm:$0xff]
        %v1217 = vld [vmem:[%s562 + $0xe84] sm:$0xff]
        %v1218 = vld [vmem:[%s562 + $0xe8c] sm:$0xff]
        %v1219 = vld [vmem:[%s562 + $0xe94] sm:$0xff]
        %v1220 = vld [vmem:[%s562 + $0xe9c] sm:$0xf]
        %v1221 = vld [vmem:[%s562 + $0xea0] sm:$0xff]
        %v1222 = vld [vmem:[%s562 + $0xea8] sm:$0xff]
        %v1223 = vld [vmem:[%s562 + $0xeb0] sm:$0xff]
        %v1224 = vld [vmem:[%s562 + $0xeb8] sm:$0xff]
        %v1225 = vld [vmem:[%s562 + $0xec0] sm:$0xff]
        %v1226 = vld [vmem:[%s562 + $0xec8] sm:$0xff]
        %v1227 = vld [vmem:[%s562 + $0xed0] sm:$0xf]
        %v1228 = vld [vmem:[%s562 + $0xed4] sm:$0xff]
        %v1229 = vld [vmem:[%s562 + $0xedc] sm:$0xff]
        %v1230 = vld [vmem:[%s562 + $0xee4] sm:$0xff]
        %v1231 = vld [vmem:[%s562 + $0xeec] sm:$0xff]
        %v1232 = vld [vmem:[%s562 + $0xef4] sm:$0xff]
        %v1233 = vld [vmem:[%s562 + $0xefc] sm:$0xff]
        %v1234 = vld [vmem:[%s562 + $0xf04] sm:$0xf]
        %v1235 = vld [vmem:[%s562 + $0xf08] sm:$0xff]
        %v1236 = vld [vmem:[%s562 + $0xf10] sm:$0xff]
        %v1237 = vld [vmem:[%s562 + $0xf18] sm:$0xff]
        %v1238 = vld [vmem:[%s562 + $0xf20] sm:$0xff]
        %v1239 = vld [vmem:[%s562 + $0xf28] sm:$0xff]
        %v1240 = vld [vmem:[%s562 + $0xf30] sm:$0xff]
        %v1241 = vld [vmem:[%s562 + $0xf38] sm:$0xf]
        %v1242 = vld [vmem:[%s562 + $0xf3c] sm:$0xff]
        %v1243 = vld [vmem:[%s562 + $0xf44] sm:$0xff]
        %v1244 = vld [vmem:[%s562 + $0xf4c] sm:$0xff]
        %v1245 = vld [vmem:[%s562 + $0xf54] sm:$0xff]
        %v1246 = vld [vmem:[%s562 + $0xf5c] sm:$0xff]
        %v1247 = vld [vmem:[%s562 + $0xf64] sm:$0xff]
        %v1248 = vld [vmem:[%s562 + $0xf6c] sm:$0xf]
        %v1249 = vld [vmem:[%s562 + $0xf70] sm:$0xff]
        %v1250 = vld [vmem:[%s562 + $0xf78] sm:$0xff]
        %v1251 = vld [vmem:[%s562 + $0xf80] sm:$0xff]
        %v1252 = vld [vmem:[%s562 + $0xf88] sm:$0xff]
        %v1253 = vld [vmem:[%s562 + $0xf90] sm:$0xff]
        %v1254 = vld [vmem:[%s562 + $0xf98] sm:$0xff]
        %v1255 = vld [vmem:[%s562 + $0xfa0] sm:$0xf]
        %v1256 = vld [vmem:[%s562 + $0xfa4] sm:$0xff]
        %v1257 = vld [vmem:[%s562 + $0xfac] sm:$0xff]
        %v1258 = vld [vmem:[%s562 + $0xfb4] sm:$0xff]
        %v1259 = vld [vmem:[%s562 + $0xfbc] sm:$0xff]
        %v1260 = vld [vmem:[%s562 + $0xfc4] sm:$0xff]
        %v1261 = vld [vmem:[%s562 + $0xfcc] sm:$0xff]
        %v1262 = vld [vmem:[%s562 + $0xfd4] sm:$0xf]
        %v1263 = vld [vmem:[%s562 + $0xfd8] sm:$0xff]
        %v1264 = vld [vmem:[%s562 + $0xfe0] sm:$0xff]
        %v1265 = vld [vmem:[%s562 + $0xfe8] sm:$0xff]
        %v1266 = vld [vmem:[%s562 + $0xff0] sm:$0xff]
        %v1267 = vld [vmem:[%s562 + $0xff8] sm:$0xff]
        %v1268 = vld [vmem:[%s562 + $0x1000] sm:$0xff]
        %v1269 = vld [vmem:[%s562 + $0x1008] sm:$0xf]
        %v1270 = vld [vmem:[%s562 + $0x100c] sm:$0xff]
        %v1271 = vld [vmem:[%s562 + $0x1014] sm:$0xff]
        %v1272 = vld [vmem:[%s562 + $0x101c] sm:$0xff]
        %v1273 = vld [vmem:[%s562 + $0x1024] sm:$0xff]
        %v1274 = vld [vmem:[%s562 + $0x102c] sm:$0xff]
        %v1275 = vld [vmem:[%s562 + $0x1034] sm:$0xff]
        %v1276 = vld [vmem:[%s562 + $0x103c] sm:$0xf]
        %v1277 = vld [vmem:[%s562 + $0x1040] sm:$0xff]
        %v1278 = vld [vmem:[%s562 + $0x1048] sm:$0xff]
        %v1279 = vld [vmem:[%s562 + $0x1050] sm:$0xff]
        %v1280 = vld [vmem:[%s562 + $0x1058] sm:$0xff]
        %v1281 = vld [vmem:[%s562 + $0x1060] sm:$0xff]
        %v1282 = vld [vmem:[%s562 + $0x1068] sm:$0xff]
        %v1283 = vld [vmem:[%s562 + $0x1070] sm:$0xf]
        %v1284 = vld [vmem:[%s562 + $0x1074] sm:$0xff]
        %v1285 = vld [vmem:[%s562 + $0x107c] sm:$0xff]
        %v1286 = vld [vmem:[%s562 + $0x1084] sm:$0xff]
        %v1287 = vld [vmem:[%s562 + $0x108c] sm:$0xff]
        %v1288 = vld [vmem:[%s562 + $0x1094] sm:$0xff]
        %v1289 = vld [vmem:[%s562 + $0x109c] sm:$0xff]
        %v1290 = vld [vmem:[%s562 + $0x10a4] sm:$0xf]
        %v1291 = vld [vmem:[%s562 + $0x10a8] sm:$0xff]
        %v1292 = vld [vmem:[%s562 + $0x10b0] sm:$0xff]
        %v1293 = vld [vmem:[%s562 + $0x10b8] sm:$0xff]
        %v1294 = vld [vmem:[%s562 + $0x10c0] sm:$0xff]
        %v1295 = vld [vmem:[%s562 + $0x10c8] sm:$0xff]
        %v1296 = vld [vmem:[%s562 + $0x10d0] sm:$0xff]
        %v1297 = vld [vmem:[%s562 + $0x10d8] sm:$0xf]
        %v1298 = vld [vmem:[%s562 + $0x10dc] sm:$0xff]
        %v1299 = vld [vmem:[%s562 + $0x10e4] sm:$0xff]
        %v1300 = vld [vmem:[%s562 + $0x10ec] sm:$0xff]
        %v1301 = vld [vmem:[%s562 + $0x10f4] sm:$0xff]
        %v1302 = vld [vmem:[%s562 + $0x10fc] sm:$0xff]
        %v1303 = vld [vmem:[%s562 + $0x1104] sm:$0xff]
        %v1304 = vld [vmem:[%s562 + $0x110c] sm:$0xf]
        %v1305 = vld [vmem:[%s562 + $0x1110] sm:$0xff]
        %v1306 = vld [vmem:[%s562 + $0x1118] sm:$0xff]
        %v1307 = vld [vmem:[%s562 + $0x1120] sm:$0xff]
        %v1308 = vld [vmem:[%s562 + $0x1128] sm:$0xff]
        %v1309 = vld [vmem:[%s562 + $0x1130] sm:$0xff]
        %v1310 = vld [vmem:[%s562 + $0x1138] sm:$0xff]
        %v1311 = vld [vmem:[%s562 + $0x1140] sm:$0xf]
        %v1312 = vld [vmem:[%s562 + $0x1144] sm:$0xff]
        %v1313 = vld [vmem:[%s562 + $0x114c] sm:$0xff]
        %v1314 = vld [vmem:[%s562 + $0x1154] sm:$0xff]
        %v1315 = vld [vmem:[%s562 + $0x115c] sm:$0xff]
        %v1316 = vld [vmem:[%s562 + $0x1164] sm:$0xff]
        %v1317 = vld [vmem:[%s562 + $0x116c] sm:$0xff]
        %v1318 = vld [vmem:[%s562 + $0x1174] sm:$0xf]
        %v1319 = vld [vmem:[%s562 + $0x1178] sm:$0xff]
        %v1320 = vld [vmem:[%s562 + $0x1180] sm:$0xff]
        %v1321 = vld [vmem:[%s562 + $0x1188] sm:$0xff]
        %v1322 = vld [vmem:[%s562 + $0x1190] sm:$0xff]
        %v1323 = vld [vmem:[%s562 + $0x1198] sm:$0xff]
        %v1324 = vld [vmem:[%s562 + $0x11a0] sm:$0xff]
        %v1325 = vld [vmem:[%s562 + $0x11a8] sm:$0xf]
        %v1326 = vld [vmem:[%s562 + $0x11ac] sm:$0xff]
        %v1327 = vld [vmem:[%s562 + $0x11b4] sm:$0xff]
        %v1328 = vld [vmem:[%s562 + $0x11bc] sm:$0xff]
        %v1329 = vld [vmem:[%s562 + $0x11c4] sm:$0xff]
        %v1330 = vld [vmem:[%s562 + $0x11cc] sm:$0xff]
        %v1331 = vld [vmem:[%s562 + $0x11d4] sm:$0xff]
        %v1332 = vld [vmem:[%s562 + $0x11dc] sm:$0xf]
        %v1333 = vld [vmem:[%s562 + $0x11e0] sm:$0xff]
        %v1334 = vld [vmem:[%s562 + $0x11e8] sm:$0xff]
        %v1335 = vld [vmem:[%s562 + $0x11f0] sm:$0xff]
        %v1336 = vld [vmem:[%s562 + $0x11f8] sm:$0xff]
        %v1337 = vld [vmem:[%s562 + $0x1200] sm:$0xff]
        %v1338 = vld [vmem:[%s562 + $0x1208] sm:$0xff]
        %v1339 = vld [vmem:[%s562 + $0x1210] sm:$0xf]
        %v1340 = vld [vmem:[%s562 + $0x1214] sm:$0xff]
        %v1341 = vld [vmem:[%s562 + $0x121c] sm:$0xff]
        %v1342 = vld [vmem:[%s562 + $0x1224] sm:$0xff]
        %v1343 = vld [vmem:[%s562 + $0x122c] sm:$0xff]
        %v1344 = vld [vmem:[%s562 + $0x1234] sm:$0xff]
        %v1345 = vld [vmem:[%s562 + $0x123c] sm:$0xff]
        %v1346 = vld [vmem:[%s562 + $0x1244] sm:$0xf]
        %v1347 = vld [vmem:[%s562 + $0x1248] sm:$0xff]
        %v1348 = vld [vmem:[%s562 + $0x1250] sm:$0xff]
        %v1349 = vld [vmem:[%s562 + $0x1258] sm:$0xff]
        %v1350 = vld [vmem:[%s562 + $0x1260] sm:$0xff]
        %v1351 = vld [vmem:[%s562 + $0x1268] sm:$0xff]
        %v1352 = vld [vmem:[%s562 + $0x1270] sm:$0xff]
        %v1353 = vld [vmem:[%s562 + $0x1278] sm:$0xf]
        %v1354 = vld [vmem:[%s562 + $0x127c] sm:$0xff]
        %v1355 = vld [vmem:[%s562 + $0x1284] sm:$0xff]
        %v1356 = vld [vmem:[%s562 + $0x128c] sm:$0xff]
        %v1357 = vld [vmem:[%s562 + $0x1294] sm:$0xff]
        %v1358 = vld [vmem:[%s562 + $0x129c] sm:$0xff]
        %v1359 = vld [vmem:[%s562 + $0x12a4] sm:$0xff]
        %v1360 = vld [vmem:[%s562 + $0x12ac] sm:$0xf]
        %v1361 = vld [vmem:[%s562 + $0x12b0] sm:$0xff]
        %v1362 = vld [vmem:[%s562 + $0x12b8] sm:$0xff]
        %v1363 = vld [vmem:[%s562 + $0x12c0] sm:$0xff]
        %v1364 = vld [vmem:[%s562 + $0x12c8] sm:$0xff]
        %v1365 = vld [vmem:[%s562 + $0x12d0] sm:$0xff]
        %v1366 = vld [vmem:[%s562 + $0x12d8] sm:$0xff]
        %v1367 = vld [vmem:[%s562 + $0x12e0] sm:$0xf]
        %v1368 = vld [vmem:[%s562 + $0x12e4] sm:$0xff]
        %v1369 = vld [vmem:[%s562 + $0x12ec] sm:$0xff]
        %v1370 = vld [vmem:[%s562 + $0x12f4] sm:$0xff]
        %v1371 = vld [vmem:[%s562 + $0x12fc] sm:$0xff]
        %v1372 = vld [vmem:[%s562 + $0x1304] sm:$0xff]
        %v1373 = vld [vmem:[%s562 + $0x130c] sm:$0xff]
        %v1374 = vld [vmem:[%s562 + $0x1314] sm:$0xf]
        %v1375 = vld [vmem:[%s562 + $0x1318] sm:$0xff]
        %v1376 = vld [vmem:[%s562 + $0x1320] sm:$0xff]
        %v1377 = vld [vmem:[%s562 + $0x1328] sm:$0xff]
        %v1378 = vld [vmem:[%s562 + $0x1330] sm:$0xff]
        %v1379 = vld [vmem:[%s562 + $0x1338] sm:$0xff]
        %v1380 = vld [vmem:[%s562 + $0x1340] sm:$0xff]
        %v1381 = vld [vmem:[%s562 + $0x1348] sm:$0xf]
        %v1382 = vld [vmem:[%s562 + $0x134c] sm:$0xff]
        %v1383 = vld [vmem:[%s562 + $0x1354] sm:$0xff]
        %v1384 = vld [vmem:[%s562 + $0x135c] sm:$0xff]
        %v1385 = vld [vmem:[%s562 + $0x1364] sm:$0xff]
        %v1386 = vld [vmem:[%s562 + $0x136c] sm:$0xff]
        %v1387 = vld [vmem:[%s562 + $0x1374] sm:$0xff]
        %v1388 = vld [vmem:[%s562 + $0x137c] sm:$0xf]
        %v1389 = vld [vmem:[%s562 + $0x1380] sm:$0xff]
        %v1390 = vld [vmem:[%s562 + $0x1388] sm:$0xff]
        %v1391 = vld [vmem:[%s562 + $0x1390] sm:$0xff]
        %v1392 = vld [vmem:[%s562 + $0x1398] sm:$0xff]
        %v1393 = vld [vmem:[%s562 + $0x13a0] sm:$0xff]
        %v1394 = vld [vmem:[%s562 + $0x13a8] sm:$0xff]
        %v1395 = vld [vmem:[%s562 + $0x13b0] sm:$0xf]
        %v1396 = vld [vmem:[%s562 + $0x13b4] sm:$0xff]
        %v1397 = vld [vmem:[%s562 + $0x13bc] sm:$0xff]
        %v1398 = vld [vmem:[%s562 + $0x13c4] sm:$0xff]
        %v1399 = vld [vmem:[%s562 + $0x13cc] sm:$0xff]
        %v1400 = vld [vmem:[%s562 + $0x13d4] sm:$0xff]
        %v1401 = vld [vmem:[%s562 + $0x13dc] sm:$0xff]
        %v1402 = vld [vmem:[%s562 + $0x13e4] sm:$0xf]
        %v1403 = vld [vmem:[%s562 + $0x13e8] sm:$0xff]
        %v1404 = vld [vmem:[%s562 + $0x13f0] sm:$0xff]
        %v1405 = vld [vmem:[%s562 + $0x13f8] sm:$0xff]
        %v1406 = vld [vmem:[%s562 + $0x1400] sm:$0xff]
        %v1407 = vld [vmem:[%s562 + $0x1408] sm:$0xff]
        %v1408 = vld [vmem:[%s562 + $0x1410] sm:$0xff]
        %v1409 = vld [vmem:[%s562 + $0x1418] sm:$0xf]
        %v1410 = vld [vmem:[%s562 + $0x141c] sm:$0xff]
        %v1411 = vld [vmem:[%s562 + $0x1424] sm:$0xff]
        %v1412 = vld [vmem:[%s562 + $0x142c] sm:$0xff]
        %v1413 = vld [vmem:[%s562 + $0x1434] sm:$0xff]
        %v1414 = vld [vmem:[%s562 + $0x143c] sm:$0xff]
        %v1415 = vld [vmem:[%s562 + $0x1444] sm:$0xff]
        %v1416 = vld [vmem:[%s562 + $0x144c] sm:$0xf]
        %v1417 = vld [vmem:[%s562 + $0x1450] sm:$0xff]
        %v1418 = vld [vmem:[%s562 + $0x1458] sm:$0xff]
        %v1419 = vld [vmem:[%s562 + $0x1460] sm:$0xff]
        %v1420 = vld [vmem:[%s562 + $0x1468] sm:$0xff]
        %v1421 = vld [vmem:[%s562 + $0x1470] sm:$0xff]
        %v1422 = vld [vmem:[%s562 + $0x1478] sm:$0xff]
        %v1423 = vld [vmem:[%s562 + $0x1480] sm:$0xf]
        %v1424 = vld [vmem:[%s562 + $0x1484] sm:$0xff]
        %v1425 = vld [vmem:[%s562 + $0x148c] sm:$0xff]
        %v1426 = vld [vmem:[%s562 + $0x1494] sm:$0xff]
        %v1427 = vld [vmem:[%s562 + $0x149c] sm:$0xff]
        %v1428 = vld [vmem:[%s562 + $0x14a4] sm:$0xff]
        %v1429 = vld [vmem:[%s562 + $0x14ac] sm:$0xff]
        %v1430 = vld [vmem:[%s562 + $0x14b4] sm:$0xf]
        %v1431 = vld [vmem:[%s562 + $0x14b8] sm:$0xff]
        %v1432 = vld [vmem:[%s562 + $0x14c0] sm:$0xff]
        %v1433 = vld [vmem:[%s562 + $0x14c8] sm:$0xff]
        %v1434 = vld [vmem:[%s562 + $0x14d0] sm:$0xff]
        %v1435 = vld [vmem:[%s562 + $0x14d8] sm:$0xff]
        %v1436 = vld [vmem:[%s562 + $0x14e0] sm:$0xff]
        %v1437 = vld [vmem:[%s562 + $0x14e8] sm:$0xf]
        %v1438 = vld [vmem:[%s562 + $0x14ec] sm:$0xff]
        %v1439 = vld [vmem:[%s562 + $0x14f4] sm:$0xff]
        %v1440 = vld [vmem:[%s562 + $0x14fc] sm:$0xff]
        %v1441 = vld [vmem:[%s562 + $0x1504] sm:$0xff]
        %v1442 = vld [vmem:[%s562 + $0x150c] sm:$0xff]
        %v1443 = vld [vmem:[%s562 + $0x1514] sm:$0xff]
        %v1444 = vld [vmem:[%s562 + $0x151c] sm:$0xf]
        %v1445 = vld [vmem:[%s562 + $0x1520] sm:$0xff]
        %v1446 = vld [vmem:[%s562 + $0x1528] sm:$0xff]
        %v1447 = vld [vmem:[%s562 + $0x1530] sm:$0xff]
        %v1448 = vld [vmem:[%s562 + $0x1538] sm:$0xff]
        %v1449 = vld [vmem:[%s562 + $0x1540] sm:$0xff]
        %v1450 = vld [vmem:[%s562 + $0x1548] sm:$0xff]
        %v1451 = vld [vmem:[%s562 + $0x1550] sm:$0xf]
        %v1452 = vld [vmem:[%s562 + $0x1554] sm:$0xff]
        %v1453 = vld [vmem:[%s562 + $0x155c] sm:$0xff]
        %v1454 = vld [vmem:[%s562 + $0x1564] sm:$0xff]
        %v1455 = vld [vmem:[%s562 + $0x156c] sm:$0xff]
        %v1456 = vld [vmem:[%s562 + $0x1574] sm:$0xff]
        %v1457 = vld [vmem:[%s562 + $0x157c] sm:$0xff]
        %v1458 = vld [vmem:[%s562 + $0x1584] sm:$0xf]
        %v1459 = vld [vmem:[%s562 + $0x1588] sm:$0xff]
        %v1460 = vld [vmem:[%s562 + $0x1590] sm:$0xff]
        %v1461 = vld [vmem:[%s562 + $0x1598] sm:$0xff]
        %v1462 = vld [vmem:[%s562 + $0x15a0] sm:$0xff]
        %v1463 = vld [vmem:[%s562 + $0x15a8] sm:$0xff]
        %v1464 = vld [vmem:[%s562 + $0x15b0] sm:$0xff]
        %v1465 = vld [vmem:[%s562 + $0x15b8] sm:$0xf]
        %v1466 = vld [vmem:[%s562 + $0x15bc] sm:$0xff]
        %v1467 = vld [vmem:[%s562 + $0x15c4] sm:$0xff]
        %v1468 = vld [vmem:[%s562 + $0x15cc] sm:$0xff]
        %v1469 = vld [vmem:[%s562 + $0x15d4] sm:$0xff]
        %v1470 = vld [vmem:[%s562 + $0x15dc] sm:$0xff]
        %v1471 = vld [vmem:[%s562 + $0x15e4] sm:$0xff]
        %v1472 = vld [vmem:[%s562 + $0x15ec] sm:$0xf]
        %v1473 = vld [vmem:[%s562 + $0x15f0] sm:$0xff]
        %v1474 = vld [vmem:[%s562 + $0x15f8] sm:$0xff]
        %v1475 = vld [vmem:[%s562 + $0x1600] sm:$0xff]
        %v1476 = vld [vmem:[%s562 + $0x1608] sm:$0xff]
        %v1477 = vld [vmem:[%s562 + $0x1610] sm:$0xff]
        %v1478 = vld [vmem:[%s562 + $0x1618] sm:$0xff]
        %v1479 = vld [vmem:[%s562 + $0x1620] sm:$0xf]
        %v1480 = vld [vmem:[%s562 + $0x1624] sm:$0xff]
        %v1481 = vld [vmem:[%s562 + $0x162c] sm:$0xff]
        %v1482 = vld [vmem:[%s562 + $0x1634] sm:$0xff]
        %v1483 = vld [vmem:[%s562 + $0x163c] sm:$0xff]
        %v1484 = vld [vmem:[%s562 + $0x1644] sm:$0xff]
        %v1485 = vld [vmem:[%s562 + $0x164c] sm:$0xff]
        %v1486 = vld [vmem:[%s562 + $0x1654] sm:$0xf]
        %v1487 = vld [vmem:[%s562 + $0x1658] sm:$0xff]
        %v1488 = vld [vmem:[%s562 + $0x1660] sm:$0xff]
        %v1489 = vld [vmem:[%s562 + $0x1668] sm:$0xff]
        %v1490 = vld [vmem:[%s562 + $0x1670] sm:$0xff]
        %v1491 = vld [vmem:[%s562 + $0x1678] sm:$0xff]
        %v1492 = vld [vmem:[%s562 + $0x1680] sm:$0xff]
        %v1493 = vld [vmem:[%s562 + $0x1688] sm:$0xf]
        %v1494 = vld [vmem:[%s562 + $0x168c] sm:$0xff]
        %v1495 = vld [vmem:[%s562 + $0x1694] sm:$0xff]
        %v1496 = vld [vmem:[%s562 + $0x169c] sm:$0xff]
        %v1497 = vld [vmem:[%s562 + $0x16a4] sm:$0xff]
        %v1498 = vld [vmem:[%s562 + $0x16ac] sm:$0xff]
        %v1499 = vld [vmem:[%s562 + $0x16b4] sm:$0xff]
        %v1500 = vld [vmem:[%s562 + $0x16bc] sm:$0xf]
        %v1501 = vld [vmem:[%s562 + $0x16c0] sm:$0xff]
        %v1502 = vld [vmem:[%s562 + $0x16c8] sm:$0xff]
        %v1503 = vld [vmem:[%s562 + $0x16d0] sm:$0xff]
        %v1504 = vld [vmem:[%s562 + $0x16d8] sm:$0xff]
        %v1505 = vld [vmem:[%s562 + $0x16e0] sm:$0xff]
        %v1506 = vld [vmem:[%s562 + $0x16e8] sm:$0xff]
        %v1507 = vld [vmem:[%s562 + $0x16f0] sm:$0xf]
        %v1508 = vld [vmem:[%s562 + $0x16f4] sm:$0xff]
        %v1509 = vld [vmem:[%s562 + $0x16fc] sm:$0xff]
        %v1510 = vld [vmem:[%s562 + $0x1704] sm:$0xff]
        %v1511 = vld [vmem:[%s562 + $0x170c] sm:$0xff]
        %v1512 = vld [vmem:[%s562 + $0x1714] sm:$0xff]
        %v1513 = vld [vmem:[%s562 + $0x171c] sm:$0xff]
        %v1514 = vld [vmem:[%s562 + $0x1724] sm:$0xf]
        %v1515 = vld [vmem:[%s562 + $0x1728] sm:$0xff]
        %v1516 = vld [vmem:[%s562 + $0x1730] sm:$0xff]
        %v1517 = vld [vmem:[%s562 + $0x1738] sm:$0xff]
        %v1518 = vld [vmem:[%s562 + $0x1740] sm:$0xff]
        %v1519 = vld [vmem:[%s562 + $0x1748] sm:$0xff]
        %v1520 = vld [vmem:[%s562 + $0x1750] sm:$0xff]
        %v1521 = vld [vmem:[%s562 + $0x1758] sm:$0xf]
        %v1522 = vld [vmem:[%s562 + $0x175c] sm:$0xff]
        %v1523 = vld [vmem:[%s562 + $0x1764] sm:$0xff]
        %v1524 = vld [vmem:[%s562 + $0x176c] sm:$0xff]
        %v1525 = vld [vmem:[%s562 + $0x1774] sm:$0xff]
        %v1526 = vld [vmem:[%s562 + $0x177c] sm:$0xff]
        %v1527 = vld [vmem:[%s562 + $0x1784] sm:$0xff]
        %v1528 = vld [vmem:[%s562 + $0x178c] sm:$0xf]
        %v1529 = vld [vmem:[%s562 + $0x1790] sm:$0xff]
        %v1530 = vld [vmem:[%s562 + $0x1798] sm:$0xff]
        %v1531 = vld [vmem:[%s562 + $0x17a0] sm:$0xff]
        %v1532 = vld [vmem:[%s562 + $0x17a8] sm:$0xff]
        %v1533 = vld [vmem:[%s562 + $0x17b0] sm:$0xff]
        %v1534 = vld [vmem:[%s562 + $0x17b8] sm:$0xff]
        %v1535 = vld [vmem:[%s562 + $0x17c0] sm:$0xf]
        %v1536 = vld [vmem:[%s562 + $0x17c4] sm:$0xff]
        %v1537 = vld [vmem:[%s562 + $0x17cc] sm:$0xff]
        %v1538 = vld [vmem:[%s562 + $0x17d4] sm:$0xff]
        %v1539 = vld [vmem:[%s562 + $0x17dc] sm:$0xff]
        %v1540 = vld [vmem:[%s562 + $0x17e4] sm:$0xff]
        %v1541 = vld [vmem:[%s562 + $0x17ec] sm:$0xff]
        %v1542 = vld [vmem:[%s562 + $0x17f4] sm:$0xf]
        %v1543 = vld [vmem:[%s562 + $0x17f8] sm:$0xff]
        %v1544 = vld [vmem:[%s562 + $0x1800] sm:$0xff]
        %v1545 = vld [vmem:[%s562 + $0x1808] sm:$0xff]
        %v1546 = vld [vmem:[%s562 + $0x1810] sm:$0xff]
        %v1547 = vld [vmem:[%s562 + $0x1818] sm:$0xff]
        %v1548 = vld [vmem:[%s562 + $0x1820] sm:$0xff]
        %v1549 = vld [vmem:[%s562 + $0x1828] sm:$0xf]
        %v1550 = vld [vmem:[%s562 + $0x182c] sm:$0xff]
        %v1551 = vld [vmem:[%s562 + $0x1834] sm:$0xff]
        %v1552 = vld [vmem:[%s562 + $0x183c] sm:$0xff]
        %v1553 = vld [vmem:[%s562 + $0x1844] sm:$0xff]
        %v1554 = vld [vmem:[%s562 + $0x184c] sm:$0xff]
        %v1555 = vld [vmem:[%s562 + $0x1854] sm:$0xff]
        %v1556 = vld [vmem:[%s562 + $0x185c] sm:$0xf]
        %v1557 = vld [vmem:[%s562 + $0x1860] sm:$0xff]
        %v1558 = vld [vmem:[%s562 + $0x1868] sm:$0xff]
        %v1559 = vld [vmem:[%s562 + $0x1870] sm:$0xff]
        %v1560 = vld [vmem:[%s562 + $0x1878] sm:$0xff]
        %v1561 = vld [vmem:[%s562 + $0x1880] sm:$0xff]
        %v1562 = vld [vmem:[%s562 + $0x1888] sm:$0xff]
        %v1563 = vld [vmem:[%s562 + $0x1890] sm:$0xf]
        %v1564 = vld [vmem:[%s562 + $0x1894] sm:$0xff]
        %v1565 = vld [vmem:[%s562 + $0x189c] sm:$0xff]
        %v1566 = vld [vmem:[%s562 + $0x18a4] sm:$0xff]
        %v1567 = vld [vmem:[%s562 + $0x18ac] sm:$0xff]
        %v1568 = vld [vmem:[%s562 + $0x18b4] sm:$0xff]
        %v1569 = vld [vmem:[%s562 + $0x18bc] sm:$0xff]
        %v1570 = vld [vmem:[%s562 + $0x18c4] sm:$0xf]
        %v1571 = vld [vmem:[%s562 + $0x18c8] sm:$0xff]
        %v1572 = vld [vmem:[%s562 + $0x18d0] sm:$0xff]
        %v1573 = vld [vmem:[%s562 + $0x18d8] sm:$0xff]
        %v1574 = vld [vmem:[%s562 + $0x18e0] sm:$0xff]
        %v1575 = vld [vmem:[%s562 + $0x18e8] sm:$0xff]
        %v1576 = vld [vmem:[%s562 + $0x18f0] sm:$0xff]
        %v1577 = vld [vmem:[%s562 + $0x18f8] sm:$0xf]
        %v1578 = vld [vmem:[%s562 + $0x18fc] sm:$0xff]
        %v1579 = vld [vmem:[%s562 + $0x1904] sm:$0xff]
        %v1580 = vld [vmem:[%s562 + $0x190c] sm:$0xff]
        %v1581 = vld [vmem:[%s562 + $0x1914] sm:$0xff]
        %v1582 = vld [vmem:[%s562 + $0x191c] sm:$0xff]
        %v1583 = vld [vmem:[%s562 + $0x1924] sm:$0xff]
        %v1584 = vld [vmem:[%s562 + $0x192c] sm:$0xf]
        %v1585 = vld [vmem:[%s562 + $0x1930] sm:$0xff]
        %v1586 = vld [vmem:[%s562 + $0x1938] sm:$0xff]
        %v1587 = vld [vmem:[%s562 + $0x1940] sm:$0xff]
        %v1588 = vld [vmem:[%s562 + $0x1948] sm:$0xff]
        %v1589 = vld [vmem:[%s562 + $0x1950] sm:$0xff]
        %v1590 = vld [vmem:[%s562 + $0x1958] sm:$0xff]
        %v1591 = vld [vmem:[%s562 + $0x1960] sm:$0xf]
        %v1592 = vld [vmem:[%s562 + $0x1964] sm:$0xff]
        %v1593 = vld [vmem:[%s562 + $0x196c] sm:$0xff]
        %v1594 = vld [vmem:[%s562 + $0x1974] sm:$0xff]
        %v1595 = vld [vmem:[%s562 + $0x197c] sm:$0xff]
        %v1596 = vld [vmem:[%s562 + $0x1984] sm:$0xff]
        %v1597 = vld [vmem:[%s562 + $0x198c] sm:$0xff]
        %v1598 = vld [vmem:[%s562 + $0x1994] sm:$0xf]
        %v1599 = vld [vmem:[%s562 + $0x1998] sm:$0xff]
        %v1600 = vld [vmem:[%s562 + $0x19a0] sm:$0xff]
        %v1601 = vld [vmem:[%s562 + $0x19a8] sm:$0xff]
        %v1602 = vld [vmem:[%s562 + $0x19b0] sm:$0xff]
        %v1603 = vld [vmem:[%s562 + $0x19b8] sm:$0xff]
        %v1604 = vld [vmem:[%s562 + $0x19c0] sm:$0xff]
        %v1605 = vld [vmem:[%s562 + $0x19c8] sm:$0xf]
        %v1606 = vld [vmem:[%s562 + $0x19cc] sm:$0xff]
        %v1607 = vld [vmem:[%s562 + $0x19d4] sm:$0xff]
        %v1608 = vld [vmem:[%s562 + $0x19dc] sm:$0xff]
        %v1609 = vld [vmem:[%s562 + $0x19e4] sm:$0xff]
        %v1610 = vld [vmem:[%s562 + $0x19ec] sm:$0xff]
        %v1611 = vld [vmem:[%s562 + $0x19f4] sm:$0xff]
        %v1612 = vld [vmem:[%s562 + $0x19fc] sm:$0xf]
        %v2509 = vunpack.c.l.b16 %v717
        %v2510 = vunpack.c.h.b16 %v717
        %v2511 = vunpack.c.l.b16 %v718
        %v2512 = vunpack.c.h.b16 %v718
        %v2513 = vunpack.c.l.b16 %v719
        %v2514 = vunpack.c.h.b16 %v719
        %v2515 = vunpack.c.l.b16 %v720
        %v2516 = vunpack.c.h.b16 %v720
        %v2517 = vunpack.c.l.b16 %v721
        %v2518 = vunpack.c.h.b16 %v721
        %v2519 = vunpack.c.l.b16 %v722
        %v2520 = vunpack.c.h.b16 %v722
        %v2521 = vunpack.c.l.b16 %v723
        %v2522 = vunpack.c.l.b16 %v724
        %v2523 = vunpack.c.h.b16 %v724
        %v2524 = vunpack.c.l.b16 %v725
        %v2525 = vunpack.c.h.b16 %v725
        %v2526 = vunpack.c.l.b16 %v726
        %v2527 = vunpack.c.h.b16 %v726
        %v2528 = vunpack.c.l.b16 %v727
        %v2529 = vunpack.c.h.b16 %v727
        %v2530 = vunpack.c.l.b16 %v728
        %v2531 = vunpack.c.h.b16 %v728
        %v2532 = vunpack.c.l.b16 %v729
        %v2533 = vunpack.c.h.b16 %v729
        %v2534 = vunpack.c.l.b16 %v730
        %v2535 = vunpack.c.l.b16 %v731
        %v2536 = vunpack.c.h.b16 %v731
        %v2537 = vunpack.c.l.b16 %v732
        %v2538 = vunpack.c.h.b16 %v732
        %v2539 = vunpack.c.l.b16 %v733
        %v2540 = vunpack.c.h.b16 %v733
        %v2541 = vunpack.c.l.b16 %v734
        %v2542 = vunpack.c.h.b16 %v734
        %v2543 = vunpack.c.l.b16 %v735
        %v2544 = vunpack.c.h.b16 %v735
        %v2545 = vunpack.c.l.b16 %v736
        %v2546 = vunpack.c.h.b16 %v736
        %v2547 = vunpack.c.l.b16 %v737
        %v2548 = vunpack.c.l.b16 %v738
        %v2549 = vunpack.c.h.b16 %v738
        %v2550 = vunpack.c.l.b16 %v739
        %v2551 = vunpack.c.h.b16 %v739
        %v2552 = vunpack.c.l.b16 %v740
        %v2553 = vunpack.c.h.b16 %v740
        %v2554 = vunpack.c.l.b16 %v741
        %v2555 = vunpack.c.h.b16 %v741
        %v2556 = vunpack.c.l.b16 %v742
        %v2557 = vunpack.c.h.b16 %v742
        %v2558 = vunpack.c.l.b16 %v743
        %v2559 = vunpack.c.h.b16 %v743
        %v2560 = vunpack.c.l.b16 %v744
        %v2561 = vunpack.c.l.b16 %v745
        %v2562 = vunpack.c.h.b16 %v745
        %v2563 = vunpack.c.l.b16 %v746
        %v2564 = vunpack.c.h.b16 %v746
        %v2565 = vunpack.c.l.b16 %v747
        %v2566 = vunpack.c.h.b16 %v747
        %v2567 = vunpack.c.l.b16 %v748
        %v2568 = vunpack.c.h.b16 %v748
        %v2569 = vunpack.c.l.b16 %v749
        %v2570 = vunpack.c.h.b16 %v749
        %v2571 = vunpack.c.l.b16 %v750
        %v2572 = vunpack.c.h.b16 %v750
        %v2573 = vunpack.c.l.b16 %v751
        %v2574 = vunpack.c.l.b16 %v752
        %v2575 = vunpack.c.h.b16 %v752
        %v2576 = vunpack.c.l.b16 %v753
        %v2577 = vunpack.c.h.b16 %v753
        %v2578 = vunpack.c.l.b16 %v754
        %v2579 = vunpack.c.h.b16 %v754
        %v2580 = vunpack.c.l.b16 %v755
        %v2581 = vunpack.c.h.b16 %v755
        %v2582 = vunpack.c.l.b16 %v756
        %v2583 = vunpack.c.h.b16 %v756
        %v2584 = vunpack.c.l.b16 %v757
        %v2585 = vunpack.c.h.b16 %v757
        %v2586 = vunpack.c.l.b16 %v758
        %v2587 = vunpack.c.l.b16 %v759
        %v2588 = vunpack.c.h.b16 %v759
        %v2589 = vunpack.c.l.b16 %v760
        %v2590 = vunpack.c.h.b16 %v760
        %v2591 = vunpack.c.l.b16 %v761
        %v2592 = vunpack.c.h.b16 %v761
        %v2593 = vunpack.c.l.b16 %v762
        %v2594 = vunpack.c.h.b16 %v762
        %v2595 = vunpack.c.l.b16 %v763
        %v2596 = vunpack.c.h.b16 %v763
        %v2597 = vunpack.c.l.b16 %v764
        %v2598 = vunpack.c.h.b16 %v764
        %v2599 = vunpack.c.l.b16 %v765
        %v2600 = vunpack.c.l.b16 %v766
        %v2601 = vunpack.c.h.b16 %v766
        %v2602 = vunpack.c.l.b16 %v767
        %v2603 = vunpack.c.h.b16 %v767
        %v2604 = vunpack.c.l.b16 %v768
        %v2605 = vunpack.c.h.b16 %v768
        %v2606 = vunpack.c.l.b16 %v769
        %v2607 = vunpack.c.h.b16 %v769
        %v2608 = vunpack.c.l.b16 %v770
        %v2609 = vunpack.c.h.b16 %v770
        %v2610 = vunpack.c.l.b16 %v771
        %v2611 = vunpack.c.h.b16 %v771
        %v2612 = vunpack.c.l.b16 %v772
        %v2613 = vunpack.c.l.b16 %v773
        %v2614 = vunpack.c.h.b16 %v773
        %v2615 = vunpack.c.l.b16 %v774
        %v2616 = vunpack.c.h.b16 %v774
        %v2617 = vunpack.c.l.b16 %v775
        %v2618 = vunpack.c.h.b16 %v775
        %v2619 = vunpack.c.l.b16 %v776
        %v2620 = vunpack.c.h.b16 %v776
        %v2621 = vunpack.c.l.b16 %v777
        %v2622 = vunpack.c.h.b16 %v777
        %v2623 = vunpack.c.l.b16 %v778
        %v2624 = vunpack.c.h.b16 %v778
        %v2625 = vunpack.c.l.b16 %v779
        %v2626 = vunpack.c.l.b16 %v780
        %v2627 = vunpack.c.h.b16 %v780
        %v2628 = vunpack.c.l.b16 %v781
        %v2629 = vunpack.c.h.b16 %v781
        %v2630 = vunpack.c.l.b16 %v782
        %v2631 = vunpack.c.h.b16 %v782
        %v2632 = vunpack.c.l.b16 %v783
        %v2633 = vunpack.c.h.b16 %v783
        %v2634 = vunpack.c.l.b16 %v784
        %v2635 = vunpack.c.h.b16 %v784
        %v2636 = vunpack.c.l.b16 %v785
        %v2637 = vunpack.c.h.b16 %v785
        %v2638 = vunpack.c.l.b16 %v786
        %v2639 = vunpack.c.l.b16 %v787
        %v2640 = vunpack.c.h.b16 %v787
        %v2641 = vunpack.c.l.b16 %v788
        %v2642 = vunpack.c.h.b16 %v788
        %v2643 = vunpack.c.l.b16 %v789
        %v2644 = vunpack.c.h.b16 %v789
        %v2645 = vunpack.c.l.b16 %v790
        %v2646 = vunpack.c.h.b16 %v790
        %v2647 = vunpack.c.l.b16 %v791
        %v2648 = vunpack.c.h.b16 %v791
        %v2649 = vunpack.c.l.b16 %v792
        %v2650 = vunpack.c.h.b16 %v792
        %v2651 = vunpack.c.l.b16 %v793
        %v2652 = vunpack.c.l.b16 %v794
        %v2653 = vunpack.c.h.b16 %v794
        %v2654 = vunpack.c.l.b16 %v795
        %v2655 = vunpack.c.h.b16 %v795
        %v2656 = vunpack.c.l.b16 %v796
        %v2657 = vunpack.c.h.b16 %v796
        %v2658 = vunpack.c.l.b16 %v797
        %v2659 = vunpack.c.h.b16 %v797
        %v2660 = vunpack.c.l.b16 %v798
        %v2661 = vunpack.c.h.b16 %v798
        %v2662 = vunpack.c.l.b16 %v799
        %v2663 = vunpack.c.h.b16 %v799
        %v2664 = vunpack.c.l.b16 %v800
        %v2665 = vunpack.c.l.b16 %v801
        %v2666 = vunpack.c.h.b16 %v801
        %v2667 = vunpack.c.l.b16 %v802
        %v2668 = vunpack.c.h.b16 %v802
        %v2669 = vunpack.c.l.b16 %v803
        %v2670 = vunpack.c.h.b16 %v803
        %v2671 = vunpack.c.l.b16 %v804
        %v2672 = vunpack.c.h.b16 %v804
        %v2673 = vunpack.c.l.b16 %v805
        %v2674 = vunpack.c.h.b16 %v805
        %v2675 = vunpack.c.l.b16 %v806
        %v2676 = vunpack.c.h.b16 %v806
        %v2677 = vunpack.c.l.b16 %v807
        %v2678 = vunpack.c.l.b16 %v808
        %v2679 = vunpack.c.h.b16 %v808
        %v2680 = vunpack.c.l.b16 %v809
        %v2681 = vunpack.c.h.b16 %v809
        %v2682 = vunpack.c.l.b16 %v810
        %v2683 = vunpack.c.h.b16 %v810
        %v2684 = vunpack.c.l.b16 %v811
        %v2685 = vunpack.c.h.b16 %v811
        %v2686 = vunpack.c.l.b16 %v812
        %v2687 = vunpack.c.h.b16 %v812
        %v2688 = vunpack.c.l.b16 %v813
        %v2689 = vunpack.c.h.b16 %v813
        %v2690 = vunpack.c.l.b16 %v814
        %v2691 = vunpack.c.l.b16 %v815
        %v2692 = vunpack.c.h.b16 %v815
        %v2693 = vunpack.c.l.b16 %v816
        %v2694 = vunpack.c.h.b16 %v816
        %v2695 = vunpack.c.l.b16 %v817
        %v2696 = vunpack.c.h.b16 %v817
        %v2697 = vunpack.c.l.b16 %v818
        %v2698 = vunpack.c.h.b16 %v818
        %v2699 = vunpack.c.l.b16 %v819
        %v2700 = vunpack.c.h.b16 %v819
        %v2701 = vunpack.c.l.b16 %v820
        %v2702 = vunpack.c.h.b16 %v820
        %v2703 = vunpack.c.l.b16 %v821
        %v2704 = vunpack.c.l.b16 %v822
        %v2705 = vunpack.c.h.b16 %v822
        %v2706 = vunpack.c.l.b16 %v823
        %v2707 = vunpack.c.h.b16 %v823
        %v2708 = vunpack.c.l.b16 %v824
        %v2709 = vunpack.c.h.b16 %v824
        %v2710 = vunpack.c.l.b16 %v825
        %v2711 = vunpack.c.h.b16 %v825
        %v2712 = vunpack.c.l.b16 %v826
        %v2713 = vunpack.c.h.b16 %v826
        %v2714 = vunpack.c.l.b16 %v827
        %v2715 = vunpack.c.h.b16 %v827
        %v2716 = vunpack.c.l.b16 %v828
        %v2717 = vunpack.c.l.b16 %v829
        %v2718 = vunpack.c.h.b16 %v829
        %v2719 = vunpack.c.l.b16 %v830
        %v2720 = vunpack.c.h.b16 %v830
        %v2721 = vunpack.c.l.b16 %v831
        %v2722 = vunpack.c.h.b16 %v831
        %v2723 = vunpack.c.l.b16 %v832
        %v2724 = vunpack.c.h.b16 %v832
        %v2725 = vunpack.c.l.b16 %v833
        %v2726 = vunpack.c.h.b16 %v833
        %v2727 = vunpack.c.l.b16 %v834
        %v2728 = vunpack.c.h.b16 %v834
        %v2729 = vunpack.c.l.b16 %v835
        %v2730 = vunpack.c.l.b16 %v836
        %v2731 = vunpack.c.h.b16 %v836
        %v2732 = vunpack.c.l.b16 %v837
        %v2733 = vunpack.c.h.b16 %v837
        %v2734 = vunpack.c.l.b16 %v838
        %v2735 = vunpack.c.h.b16 %v838
        %v2736 = vunpack.c.l.b16 %v839
        %v2737 = vunpack.c.h.b16 %v839
        %v2738 = vunpack.c.l.b16 %v840
        %v2739 = vunpack.c.h.b16 %v840
        %v2740 = vunpack.c.l.b16 %v841
        %v2741 = vunpack.c.h.b16 %v841
        %v2742 = vunpack.c.l.b16 %v842
        %v2743 = vunpack.c.l.b16 %v843
        %v2744 = vunpack.c.h.b16 %v843
        %v2745 = vunpack.c.l.b16 %v844
        %v2746 = vunpack.c.h.b16 %v844
        %v2747 = vunpack.c.l.b16 %v845
        %v2748 = vunpack.c.h.b16 %v845
        %v2749 = vunpack.c.l.b16 %v846
        %v2750 = vunpack.c.h.b16 %v846
        %v2751 = vunpack.c.l.b16 %v847
        %v2752 = vunpack.c.h.b16 %v847
        %v2753 = vunpack.c.l.b16 %v848
        %v2754 = vunpack.c.h.b16 %v848
        %v2755 = vunpack.c.l.b16 %v849
        %v2756 = vunpack.c.l.b16 %v850
        %v2757 = vunpack.c.h.b16 %v850
        %v2758 = vunpack.c.l.b16 %v851
        %v2759 = vunpack.c.h.b16 %v851
        %v2760 = vunpack.c.l.b16 %v852
        %v2761 = vunpack.c.h.b16 %v852
        %v2762 = vunpack.c.l.b16 %v853
        %v2763 = vunpack.c.h.b16 %v853
        %v2764 = vunpack.c.l.b16 %v854
        %v2765 = vunpack.c.h.b16 %v854
        %v2766 = vunpack.c.l.b16 %v855
        %v2767 = vunpack.c.h.b16 %v855
        %v2768 = vunpack.c.l.b16 %v856
        %v2769 = vunpack.c.l.b16 %v857
        %v2770 = vunpack.c.h.b16 %v857
        %v2771 = vunpack.c.l.b16 %v858
        %v2772 = vunpack.c.h.b16 %v858
        %v2773 = vunpack.c.l.b16 %v859
        %v2774 = vunpack.c.h.b16 %v859
        %v2775 = vunpack.c.l.b16 %v860
        %v2776 = vunpack.c.h.b16 %v860
        %v2777 = vunpack.c.l.b16 %v861
        %v2778 = vunpack.c.h.b16 %v861
        %v2779 = vunpack.c.l.b16 %v862
        %v2780 = vunpack.c.h.b16 %v862
        %v2781 = vunpack.c.l.b16 %v863
        %v2782 = vunpack.c.l.b16 %v864
        %v2783 = vunpack.c.h.b16 %v864
        %v2784 = vunpack.c.l.b16 %v865
        %v2785 = vunpack.c.h.b16 %v865
        %v2786 = vunpack.c.l.b16 %v866
        %v2787 = vunpack.c.h.b16 %v866
        %v2788 = vunpack.c.l.b16 %v867
        %v2789 = vunpack.c.h.b16 %v867
        %v2790 = vunpack.c.l.b16 %v868
        %v2791 = vunpack.c.h.b16 %v868
        %v2792 = vunpack.c.l.b16 %v869
        %v2793 = vunpack.c.h.b16 %v869
        %v2794 = vunpack.c.l.b16 %v870
        %v2795 = vunpack.c.l.b16 %v871
        %v2796 = vunpack.c.h.b16 %v871
        %v2797 = vunpack.c.l.b16 %v872
        %v2798 = vunpack.c.h.b16 %v872
        %v2799 = vunpack.c.l.b16 %v873
        %v2800 = vunpack.c.h.b16 %v873
        %v2801 = vunpack.c.l.b16 %v874
        %v2802 = vunpack.c.h.b16 %v874
        %v2803 = vunpack.c.l.b16 %v875
        %v2804 = vunpack.c.h.b16 %v875
        %v2805 = vunpack.c.l.b16 %v876
        %v2806 = vunpack.c.h.b16 %v876
        %v2807 = vunpack.c.l.b16 %v877
        %v2808 = vunpack.c.l.b16 %v878
        %v2809 = vunpack.c.h.b16 %v878
        %v2810 = vunpack.c.l.b16 %v879
        %v2811 = vunpack.c.h.b16 %v879
        %v2812 = vunpack.c.l.b16 %v880
        %v2813 = vunpack.c.h.b16 %v880
        %v2814 = vunpack.c.l.b16 %v881
        %v2815 = vunpack.c.h.b16 %v881
        %v2816 = vunpack.c.l.b16 %v882
        %v2817 = vunpack.c.h.b16 %v882
        %v2818 = vunpack.c.l.b16 %v883
        %v2819 = vunpack.c.h.b16 %v883
        %v2820 = vunpack.c.l.b16 %v884
        %v2821 = vunpack.c.l.b16 %v885
        %v2822 = vunpack.c.h.b16 %v885
        %v2823 = vunpack.c.l.b16 %v886
        %v2824 = vunpack.c.h.b16 %v886
        %v2825 = vunpack.c.l.b16 %v887
        %v2826 = vunpack.c.h.b16 %v887
        %v2827 = vunpack.c.l.b16 %v888
        %v2828 = vunpack.c.h.b16 %v888
        %v2829 = vunpack.c.l.b16 %v889
        %v2830 = vunpack.c.h.b16 %v889
        %v2831 = vunpack.c.l.b16 %v890
        %v2832 = vunpack.c.h.b16 %v890
        %v2833 = vunpack.c.l.b16 %v891
        %v2834 = vunpack.c.l.b16 %v892
        %v2835 = vunpack.c.h.b16 %v892
        %v2836 = vunpack.c.l.b16 %v893
        %v2837 = vunpack.c.h.b16 %v893
        %v2838 = vunpack.c.l.b16 %v894
        %v2839 = vunpack.c.h.b16 %v894
        %v2840 = vunpack.c.l.b16 %v895
        %v2841 = vunpack.c.h.b16 %v895
        %v2842 = vunpack.c.l.b16 %v896
        %v2843 = vunpack.c.h.b16 %v896
        %v2844 = vunpack.c.l.b16 %v897
        %v2845 = vunpack.c.h.b16 %v897
        %v2846 = vunpack.c.l.b16 %v898
        %v2847 = vunpack.c.l.b16 %v899
        %v2848 = vunpack.c.h.b16 %v899
        %v2849 = vunpack.c.l.b16 %v900
        %v2850 = vunpack.c.h.b16 %v900
        %v2851 = vunpack.c.l.b16 %v901
        %v2852 = vunpack.c.h.b16 %v901
        %v2853 = vunpack.c.l.b16 %v902
        %v2854 = vunpack.c.h.b16 %v902
        %v2855 = vunpack.c.l.b16 %v903
        %v2856 = vunpack.c.h.b16 %v903
        %v2857 = vunpack.c.l.b16 %v904
        %v2858 = vunpack.c.h.b16 %v904
        %v2859 = vunpack.c.l.b16 %v905
        %v2860 = vunpack.c.l.b16 %v906
        %v2861 = vunpack.c.h.b16 %v906
        %v2862 = vunpack.c.l.b16 %v907
        %v2863 = vunpack.c.h.b16 %v907
        %v2864 = vunpack.c.l.b16 %v908
        %v2865 = vunpack.c.h.b16 %v908
        %v2866 = vunpack.c.l.b16 %v909
        %v2867 = vunpack.c.h.b16 %v909
        %v2868 = vunpack.c.l.b16 %v910
        %v2869 = vunpack.c.h.b16 %v910
        %v2870 = vunpack.c.l.b16 %v911
        %v2871 = vunpack.c.h.b16 %v911
        %v2872 = vunpack.c.l.b16 %v912
        %v2873 = vunpack.c.l.b16 %v913
        %v2874 = vunpack.c.h.b16 %v913
        %v2875 = vunpack.c.l.b16 %v914
        %v2876 = vunpack.c.h.b16 %v914
        %v2877 = vunpack.c.l.b16 %v915
        %v2878 = vunpack.c.h.b16 %v915
        %v2879 = vunpack.c.l.b16 %v916
        %v2880 = vunpack.c.h.b16 %v916
        %v2881 = vunpack.c.l.b16 %v917
        %v2882 = vunpack.c.h.b16 %v917
        %v2883 = vunpack.c.l.b16 %v918
        %v2884 = vunpack.c.h.b16 %v918
        %v2885 = vunpack.c.l.b16 %v919
        %v2886 = vunpack.c.l.b16 %v920
        %v2887 = vunpack.c.h.b16 %v920
        %v2888 = vunpack.c.l.b16 %v921
        %v2889 = vunpack.c.h.b16 %v921
        %v2890 = vunpack.c.l.b16 %v922
        %v2891 = vunpack.c.h.b16 %v922
        %v2892 = vunpack.c.l.b16 %v923
        %v2893 = vunpack.c.h.b16 %v923
        %v2894 = vunpack.c.l.b16 %v924
        %v2895 = vunpack.c.h.b16 %v924
        %v2896 = vunpack.c.l.b16 %v925
        %v2897 = vunpack.c.h.b16 %v925
        %v2898 = vunpack.c.l.b16 %v926
        %v2899 = vunpack.c.l.b16 %v927
        %v2900 = vunpack.c.h.b16 %v927
        %v2901 = vunpack.c.l.b16 %v928
        %v2902 = vunpack.c.h.b16 %v928
        %v2903 = vunpack.c.l.b16 %v929
        %v2904 = vunpack.c.h.b16 %v929
        %v2905 = vunpack.c.l.b16 %v930
        %v2906 = vunpack.c.h.b16 %v930
        %v2907 = vunpack.c.l.b16 %v931
        %v2908 = vunpack.c.h.b16 %v931
        %v2909 = vunpack.c.l.b16 %v932
        %v2910 = vunpack.c.h.b16 %v932
        %v2911 = vunpack.c.l.b16 %v933
        %v2912 = vunpack.c.l.b16 %v934
        %v2913 = vunpack.c.h.b16 %v934
        %v2914 = vunpack.c.l.b16 %v935
        %v2915 = vunpack.c.h.b16 %v935
        %v2916 = vunpack.c.l.b16 %v936
        %v2917 = vunpack.c.h.b16 %v936
        %v2918 = vunpack.c.l.b16 %v937
        %v2919 = vunpack.c.h.b16 %v937
        %v2920 = vunpack.c.l.b16 %v938
        %v2921 = vunpack.c.h.b16 %v938
        %v2922 = vunpack.c.l.b16 %v939
        %v2923 = vunpack.c.h.b16 %v939
        %v2924 = vunpack.c.l.b16 %v940
        %v2925 = vunpack.c.l.b16 %v941
        %v2926 = vunpack.c.h.b16 %v941
        %v2927 = vunpack.c.l.b16 %v942
        %v2928 = vunpack.c.h.b16 %v942
        %v2929 = vunpack.c.l.b16 %v943
        %v2930 = vunpack.c.h.b16 %v943
        %v2931 = vunpack.c.l.b16 %v944
        %v2932 = vunpack.c.h.b16 %v944
        %v2933 = vunpack.c.l.b16 %v945
        %v2934 = vunpack.c.h.b16 %v945
        %v2935 = vunpack.c.l.b16 %v946
        %v2936 = vunpack.c.h.b16 %v946
        %v2937 = vunpack.c.l.b16 %v947
        %v2938 = vunpack.c.l.b16 %v948
        %v2939 = vunpack.c.h.b16 %v948
        %v2940 = vunpack.c.l.b16 %v949
        %v2941 = vunpack.c.h.b16 %v949
        %v2942 = vunpack.c.l.b16 %v950
        %v2943 = vunpack.c.h.b16 %v950
        %v2944 = vunpack.c.l.b16 %v951
        %v2945 = vunpack.c.h.b16 %v951
        %v2946 = vunpack.c.l.b16 %v952
        %v2947 = vunpack.c.h.b16 %v952
        %v2948 = vunpack.c.l.b16 %v953
        %v2949 = vunpack.c.h.b16 %v953
        %v2950 = vunpack.c.l.b16 %v954
        %v2951 = vunpack.c.l.b16 %v955
        %v2952 = vunpack.c.h.b16 %v955
        %v2953 = vunpack.c.l.b16 %v956
        %v2954 = vunpack.c.h.b16 %v956
        %v2955 = vunpack.c.l.b16 %v957
        %v2956 = vunpack.c.h.b16 %v957
        %v2957 = vunpack.c.l.b16 %v958
        %v2958 = vunpack.c.h.b16 %v958
        %v2959 = vunpack.c.l.b16 %v959
        %v2960 = vunpack.c.h.b16 %v959
        %v2961 = vunpack.c.l.b16 %v960
        %v2962 = vunpack.c.h.b16 %v960
        %v2963 = vunpack.c.l.b16 %v961
        %v2964 = vunpack.c.l.b16 %v962
        %v2965 = vunpack.c.h.b16 %v962
        %v2966 = vunpack.c.l.b16 %v963
        %v2967 = vunpack.c.h.b16 %v963
        %v2968 = vunpack.c.l.b16 %v964
        %v2969 = vunpack.c.h.b16 %v964
        %v2970 = vunpack.c.l.b16 %v965
        %v2971 = vunpack.c.h.b16 %v965
        %v2972 = vunpack.c.l.b16 %v966
        %v2973 = vunpack.c.h.b16 %v966
        %v2974 = vunpack.c.l.b16 %v967
        %v2975 = vunpack.c.h.b16 %v967
        %v2976 = vunpack.c.l.b16 %v968
        %v2977 = vunpack.c.l.b16 %v969
        %v2978 = vunpack.c.h.b16 %v969
        %v2979 = vunpack.c.l.b16 %v970
        %v2980 = vunpack.c.h.b16 %v970
        %v2981 = vunpack.c.l.b16 %v971
        %v2982 = vunpack.c.h.b16 %v971
        %v2983 = vunpack.c.l.b16 %v972
        %v2984 = vunpack.c.h.b16 %v972
        %v2985 = vunpack.c.l.b16 %v973
        %v2986 = vunpack.c.h.b16 %v973
        %v2987 = vunpack.c.l.b16 %v974
        %v2988 = vunpack.c.h.b16 %v974
        %v2989 = vunpack.c.l.b16 %v975
        %v2990 = vunpack.c.l.b16 %v976
        %v2991 = vunpack.c.h.b16 %v976
        %v2992 = vunpack.c.l.b16 %v977
        %v2993 = vunpack.c.h.b16 %v977
        %v2994 = vunpack.c.l.b16 %v978
        %v2995 = vunpack.c.h.b16 %v978
        %v2996 = vunpack.c.l.b16 %v979
        %v2997 = vunpack.c.h.b16 %v979
        %v2998 = vunpack.c.l.b16 %v980
        %v2999 = vunpack.c.h.b16 %v980
        %v3000 = vunpack.c.l.b16 %v981
        %v3001 = vunpack.c.h.b16 %v981
        %v3002 = vunpack.c.l.b16 %v982
        %v3003 = vunpack.c.l.b16 %v983
        %v3004 = vunpack.c.h.b16 %v983
        %v3005 = vunpack.c.l.b16 %v984
        %v3006 = vunpack.c.h.b16 %v984
        %v3007 = vunpack.c.l.b16 %v985
        %v3008 = vunpack.c.h.b16 %v985
        %v3009 = vunpack.c.l.b16 %v986
        %v3010 = vunpack.c.h.b16 %v986
        %v3011 = vunpack.c.l.b16 %v987
        %v3012 = vunpack.c.h.b16 %v987
        %v3013 = vunpack.c.l.b16 %v988
        %v3014 = vunpack.c.h.b16 %v988
        %v3015 = vunpack.c.l.b16 %v989
        %v3016 = vunpack.c.l.b16 %v990
        %v3017 = vunpack.c.h.b16 %v990
        %v3018 = vunpack.c.l.b16 %v991
        %v3019 = vunpack.c.h.b16 %v991
        %v3020 = vunpack.c.l.b16 %v992
        %v3021 = vunpack.c.h.b16 %v992
        %v3022 = vunpack.c.l.b16 %v993
        %v3023 = vunpack.c.h.b16 %v993
        %v3024 = vunpack.c.l.b16 %v994
        %v3025 = vunpack.c.h.b16 %v994
        %v3026 = vunpack.c.l.b16 %v995
        %v3027 = vunpack.c.h.b16 %v995
        %v3028 = vunpack.c.l.b16 %v996
        %v3029 = vunpack.c.l.b16 %v997
        %v3030 = vunpack.c.h.b16 %v997
        %v3031 = vunpack.c.l.b16 %v998
        %v3032 = vunpack.c.h.b16 %v998
        %v3033 = vunpack.c.l.b16 %v999
        %v3034 = vunpack.c.h.b16 %v999
        %v3035 = vunpack.c.l.b16 %v1000
        %v3036 = vunpack.c.h.b16 %v1000
        %v3037 = vunpack.c.l.b16 %v1001
        %v3038 = vunpack.c.h.b16 %v1001
        %v3039 = vunpack.c.l.b16 %v1002
        %v3040 = vunpack.c.h.b16 %v1002
        %v3041 = vunpack.c.l.b16 %v1003
        %v3042 = vunpack.c.l.b16 %v1004
        %v3043 = vunpack.c.h.b16 %v1004
        %v3044 = vunpack.c.l.b16 %v1005
        %v3045 = vunpack.c.h.b16 %v1005
        %v3046 = vunpack.c.l.b16 %v1006
        %v3047 = vunpack.c.h.b16 %v1006
        %v3048 = vunpack.c.l.b16 %v1007
        %v3049 = vunpack.c.h.b16 %v1007
        %v3050 = vunpack.c.l.b16 %v1008
        %v3051 = vunpack.c.h.b16 %v1008
        %v3052 = vunpack.c.l.b16 %v1009
        %v3053 = vunpack.c.h.b16 %v1009
        %v3054 = vunpack.c.l.b16 %v1010
        %v3055 = vunpack.c.l.b16 %v1011
        %v3056 = vunpack.c.h.b16 %v1011
        %v3057 = vunpack.c.l.b16 %v1012
        %v3058 = vunpack.c.h.b16 %v1012
        %v3059 = vunpack.c.l.b16 %v1013
        %v3060 = vunpack.c.h.b16 %v1013
        %v3061 = vunpack.c.l.b16 %v1014
        %v3062 = vunpack.c.h.b16 %v1014
        %v3063 = vunpack.c.l.b16 %v1015
        %v3064 = vunpack.c.h.b16 %v1015
        %v3065 = vunpack.c.l.b16 %v1016
        %v3066 = vunpack.c.h.b16 %v1016
        %v3067 = vunpack.c.l.b16 %v1017
        %v3068 = vunpack.c.l.b16 %v1018
        %v3069 = vunpack.c.h.b16 %v1018
        %v3070 = vunpack.c.l.b16 %v1019
        %v3071 = vunpack.c.h.b16 %v1019
        %v3072 = vunpack.c.l.b16 %v1020
        %v3073 = vunpack.c.h.b16 %v1020
        %v3074 = vunpack.c.l.b16 %v1021
        %v3075 = vunpack.c.h.b16 %v1021
        %v3076 = vunpack.c.l.b16 %v1022
        %v3077 = vunpack.c.h.b16 %v1022
        %v3078 = vunpack.c.l.b16 %v1023
        %v3079 = vunpack.c.h.b16 %v1023
        %v3080 = vunpack.c.l.b16 %v1024
        %v3081 = vunpack.c.l.b16 %v1025
        %v3082 = vunpack.c.h.b16 %v1025
        %v3083 = vunpack.c.l.b16 %v1026
        %v3084 = vunpack.c.h.b16 %v1026
        %v3085 = vunpack.c.l.b16 %v1027
        %v3086 = vunpack.c.h.b16 %v1027
        %v3087 = vunpack.c.l.b16 %v1028
        %v3088 = vunpack.c.h.b16 %v1028
        %v3089 = vunpack.c.l.b16 %v1029
        %v3090 = vunpack.c.h.b16 %v1029
        %v3091 = vunpack.c.l.b16 %v1030
        %v3092 = vunpack.c.h.b16 %v1030
        %v3093 = vunpack.c.l.b16 %v1031
        %v3094 = vunpack.c.l.b16 %v1032
        %v3095 = vunpack.c.h.b16 %v1032
        %v3096 = vunpack.c.l.b16 %v1033
        %v3097 = vunpack.c.h.b16 %v1033
        %v3098 = vunpack.c.l.b16 %v1034
        %v3099 = vunpack.c.h.b16 %v1034
        %v3100 = vunpack.c.l.b16 %v1035
        %v3101 = vunpack.c.h.b16 %v1035
        %v3102 = vunpack.c.l.b16 %v1036
        %v3103 = vunpack.c.h.b16 %v1036
        %v3104 = vunpack.c.l.b16 %v1037
        %v3105 = vunpack.c.h.b16 %v1037
        %v3106 = vunpack.c.l.b16 %v1038
        %v3107 = vunpack.c.l.b16 %v1039
        %v3108 = vunpack.c.h.b16 %v1039
        %v3109 = vunpack.c.l.b16 %v1040
        %v3110 = vunpack.c.h.b16 %v1040
        %v3111 = vunpack.c.l.b16 %v1041
        %v3112 = vunpack.c.h.b16 %v1041
        %v3113 = vunpack.c.l.b16 %v1042
        %v3114 = vunpack.c.h.b16 %v1042
        %v3115 = vunpack.c.l.b16 %v1043
        %v3116 = vunpack.c.h.b16 %v1043
        %v3117 = vunpack.c.l.b16 %v1044
        %v3118 = vunpack.c.h.b16 %v1044
        %v3119 = vunpack.c.l.b16 %v1045
        %v3120 = vunpack.c.l.b16 %v1046
        %v3121 = vunpack.c.h.b16 %v1046
        %v3122 = vunpack.c.l.b16 %v1047
        %v3123 = vunpack.c.h.b16 %v1047
        %v3124 = vunpack.c.l.b16 %v1048
        %v3125 = vunpack.c.h.b16 %v1048
        %v3126 = vunpack.c.l.b16 %v1049
        %v3127 = vunpack.c.h.b16 %v1049
        %v3128 = vunpack.c.l.b16 %v1050
        %v3129 = vunpack.c.h.b16 %v1050
        %v3130 = vunpack.c.l.b16 %v1051
        %v3131 = vunpack.c.h.b16 %v1051
        %v3132 = vunpack.c.l.b16 %v1052
        %v3133 = vunpack.c.l.b16 %v1053
        %v3134 = vunpack.c.h.b16 %v1053
        %v3135 = vunpack.c.l.b16 %v1054
        %v3136 = vunpack.c.h.b16 %v1054
        %v3137 = vunpack.c.l.b16 %v1055
        %v3138 = vunpack.c.h.b16 %v1055
        %v3139 = vunpack.c.l.b16 %v1056
        %v3140 = vunpack.c.h.b16 %v1056
        %v3141 = vunpack.c.l.b16 %v1057
        %v3142 = vunpack.c.h.b16 %v1057
        %v3143 = vunpack.c.l.b16 %v1058
        %v3144 = vunpack.c.h.b16 %v1058
        %v3145 = vunpack.c.l.b16 %v1059
        %v3146 = vunpack.c.l.b16 %v1060
        %v3147 = vunpack.c.h.b16 %v1060
        %v3148 = vunpack.c.l.b16 %v1061
        %v3149 = vunpack.c.h.b16 %v1061
        %v3150 = vunpack.c.l.b16 %v1062
        %v3151 = vunpack.c.h.b16 %v1062
        %v3152 = vunpack.c.l.b16 %v1063
        %v3153 = vunpack.c.h.b16 %v1063
        %v3154 = vunpack.c.l.b16 %v1064
        %v3155 = vunpack.c.h.b16 %v1064
        %v3156 = vunpack.c.l.b16 %v1065
        %v3157 = vunpack.c.h.b16 %v1065
        %v3158 = vunpack.c.l.b16 %v1066
        %v3159 = vunpack.c.l.b16 %v1067
        %v3160 = vunpack.c.h.b16 %v1067
        %v3161 = vunpack.c.l.b16 %v1068
        %v3162 = vunpack.c.h.b16 %v1068
        %v3163 = vunpack.c.l.b16 %v1069
        %v3164 = vunpack.c.h.b16 %v1069
        %v3165 = vunpack.c.l.b16 %v1070
        %v3166 = vunpack.c.h.b16 %v1070
        %v3167 = vunpack.c.l.b16 %v1071
        %v3168 = vunpack.c.h.b16 %v1071
        %v3169 = vunpack.c.l.b16 %v1072
        %v3170 = vunpack.c.h.b16 %v1072
        %v3171 = vunpack.c.l.b16 %v1073
        %v3172 = vunpack.c.l.b16 %v1074
        %v3173 = vunpack.c.h.b16 %v1074
        %v3174 = vunpack.c.l.b16 %v1075
        %v3175 = vunpack.c.h.b16 %v1075
        %v3176 = vunpack.c.l.b16 %v1076
        %v3177 = vunpack.c.h.b16 %v1076
        %v3178 = vunpack.c.l.b16 %v1077
        %v3179 = vunpack.c.h.b16 %v1077
        %v3180 = vunpack.c.l.b16 %v1078
        %v3181 = vunpack.c.h.b16 %v1078
        %v3182 = vunpack.c.l.b16 %v1079
        %v3183 = vunpack.c.h.b16 %v1079
        %v3184 = vunpack.c.l.b16 %v1080
        %v3185 = vunpack.c.l.b16 %v1081
        %v3186 = vunpack.c.h.b16 %v1081
        %v3187 = vunpack.c.l.b16 %v1082
        %v3188 = vunpack.c.h.b16 %v1082
        %v3189 = vunpack.c.l.b16 %v1083
        %v3190 = vunpack.c.h.b16 %v1083
        %v3191 = vunpack.c.l.b16 %v1084
        %v3192 = vunpack.c.h.b16 %v1084
        %v3193 = vunpack.c.l.b16 %v1085
        %v3194 = vunpack.c.h.b16 %v1085
        %v3195 = vunpack.c.l.b16 %v1086
        %v3196 = vunpack.c.h.b16 %v1086
        %v3197 = vunpack.c.l.b16 %v1087
        %v3198 = vunpack.c.l.b16 %v1088
        %v3199 = vunpack.c.h.b16 %v1088
        %v3200 = vunpack.c.l.b16 %v1089
        %v3201 = vunpack.c.h.b16 %v1089
        %v3202 = vunpack.c.l.b16 %v1090
        %v3203 = vunpack.c.h.b16 %v1090
        %v3204 = vunpack.c.l.b16 %v1091
        %v3205 = vunpack.c.h.b16 %v1091
        %v3206 = vunpack.c.l.b16 %v1092
        %v3207 = vunpack.c.h.b16 %v1092
        %v3208 = vunpack.c.l.b16 %v1093
        %v3209 = vunpack.c.h.b16 %v1093
        %v3210 = vunpack.c.l.b16 %v1094
        %v3211 = vunpack.c.l.b16 %v1095
        %v3212 = vunpack.c.h.b16 %v1095
        %v3213 = vunpack.c.l.b16 %v1096
        %v3214 = vunpack.c.h.b16 %v1096
        %v3215 = vunpack.c.l.b16 %v1097
        %v3216 = vunpack.c.h.b16 %v1097
        %v3217 = vunpack.c.l.b16 %v1098
        %v3218 = vunpack.c.h.b16 %v1098
        %v3219 = vunpack.c.l.b16 %v1099
        %v3220 = vunpack.c.h.b16 %v1099
        %v3221 = vunpack.c.l.b16 %v1100
        %v3222 = vunpack.c.h.b16 %v1100
        %v3223 = vunpack.c.l.b16 %v1101
        %v3224 = vunpack.c.l.b16 %v1102
        %v3225 = vunpack.c.h.b16 %v1102
        %v3226 = vunpack.c.l.b16 %v1103
        %v3227 = vunpack.c.h.b16 %v1103
        %v3228 = vunpack.c.l.b16 %v1104
        %v3229 = vunpack.c.h.b16 %v1104
        %v3230 = vunpack.c.l.b16 %v1105
        %v3231 = vunpack.c.h.b16 %v1105
        %v3232 = vunpack.c.l.b16 %v1106
        %v3233 = vunpack.c.h.b16 %v1106
        %v3234 = vunpack.c.l.b16 %v1107
        %v3235 = vunpack.c.h.b16 %v1107
        %v3236 = vunpack.c.l.b16 %v1108
        %v3237 = vunpack.c.l.b16 %v1109
        %v3238 = vunpack.c.h.b16 %v1109
        %v3239 = vunpack.c.l.b16 %v1110
        %v3240 = vunpack.c.h.b16 %v1110
        %v3241 = vunpack.c.l.b16 %v1111
        %v3242 = vunpack.c.h.b16 %v1111
        %v3243 = vunpack.c.l.b16 %v1112
        %v3244 = vunpack.c.h.b16 %v1112
        %v3245 = vunpack.c.l.b16 %v1113
        %v3246 = vunpack.c.h.b16 %v1113
        %v3247 = vunpack.c.l.b16 %v1114
        %v3248 = vunpack.c.h.b16 %v1114
        %v3249 = vunpack.c.l.b16 %v1115
        %v3250 = vunpack.c.l.b16 %v1116
        %v3251 = vunpack.c.h.b16 %v1116
        %v3252 = vunpack.c.l.b16 %v1117
        %v3253 = vunpack.c.h.b16 %v1117
        %v3254 = vunpack.c.l.b16 %v1118
        %v3255 = vunpack.c.h.b16 %v1118
        %v3256 = vunpack.c.l.b16 %v1119
        %v3257 = vunpack.c.h.b16 %v1119
        %v3258 = vunpack.c.l.b16 %v1120
        %v3259 = vunpack.c.h.b16 %v1120
        %v3260 = vunpack.c.l.b16 %v1121
        %v3261 = vunpack.c.h.b16 %v1121
        %v3262 = vunpack.c.l.b16 %v1122
        %v3263 = vunpack.c.l.b16 %v1123
        %v3264 = vunpack.c.h.b16 %v1123
        %v3265 = vunpack.c.l.b16 %v1124
        %v3266 = vunpack.c.h.b16 %v1124
        %v3267 = vunpack.c.l.b16 %v1125
        %v3268 = vunpack.c.h.b16 %v1125
        %v3269 = vunpack.c.l.b16 %v1126
        %v3270 = vunpack.c.h.b16 %v1126
        %v3271 = vunpack.c.l.b16 %v1127
        %v3272 = vunpack.c.h.b16 %v1127
        %v3273 = vunpack.c.l.b16 %v1128
        %v3274 = vunpack.c.h.b16 %v1128
        %v3275 = vunpack.c.l.b16 %v1129
        %v3276 = vunpack.c.l.b16 %v1130
        %v3277 = vunpack.c.h.b16 %v1130
        %v3278 = vunpack.c.l.b16 %v1131
        %v3279 = vunpack.c.h.b16 %v1131
        %v3280 = vunpack.c.l.b16 %v1132
        %v3281 = vunpack.c.h.b16 %v1132
        %v3282 = vunpack.c.l.b16 %v1133
        %v3283 = vunpack.c.h.b16 %v1133
        %v3284 = vunpack.c.l.b16 %v1134
        %v3285 = vunpack.c.h.b16 %v1134
        %v3286 = vunpack.c.l.b16 %v1135
        %v3287 = vunpack.c.h.b16 %v1135
        %v3288 = vunpack.c.l.b16 %v1136
        %v3289 = vunpack.c.l.b16 %v1137
        %v3290 = vunpack.c.h.b16 %v1137
        %v3291 = vunpack.c.l.b16 %v1138
        %v3292 = vunpack.c.h.b16 %v1138
        %v3293 = vunpack.c.l.b16 %v1139
        %v3294 = vunpack.c.h.b16 %v1139
        %v3295 = vunpack.c.l.b16 %v1140
        %v3296 = vunpack.c.h.b16 %v1140
        %v3297 = vunpack.c.l.b16 %v1141
        %v3298 = vunpack.c.h.b16 %v1141
        %v3299 = vunpack.c.l.b16 %v1142
        %v3300 = vunpack.c.h.b16 %v1142
        %v3301 = vunpack.c.l.b16 %v1143
        %v3302 = vunpack.c.l.b16 %v1144
        %v3303 = vunpack.c.h.b16 %v1144
        %v3304 = vunpack.c.l.b16 %v1145
        %v3305 = vunpack.c.h.b16 %v1145
        %v3306 = vunpack.c.l.b16 %v1146
        %v3307 = vunpack.c.h.b16 %v1146
        %v3308 = vunpack.c.l.b16 %v1147
        %v3309 = vunpack.c.h.b16 %v1147
        %v3310 = vunpack.c.l.b16 %v1148
        %v3311 = vunpack.c.h.b16 %v1148
        %v3312 = vunpack.c.l.b16 %v1149
        %v3313 = vunpack.c.h.b16 %v1149
        %v3314 = vunpack.c.l.b16 %v1150
        %v3315 = vunpack.c.l.b16 %v1151
        %v3316 = vunpack.c.h.b16 %v1151
        %v3317 = vunpack.c.l.b16 %v1152
        %v3318 = vunpack.c.h.b16 %v1152
        %v3319 = vunpack.c.l.b16 %v1153
        %v3320 = vunpack.c.h.b16 %v1153
        %v3321 = vunpack.c.l.b16 %v1154
        %v3322 = vunpack.c.h.b16 %v1154
        %v3323 = vunpack.c.l.b16 %v1155
        %v3324 = vunpack.c.h.b16 %v1155
        %v3325 = vunpack.c.l.b16 %v1156
        %v3326 = vunpack.c.h.b16 %v1156
        %v3327 = vunpack.c.l.b16 %v1157
        %v3328 = vunpack.c.l.b16 %v1158
        %v3329 = vunpack.c.h.b16 %v1158
        %v3330 = vunpack.c.l.b16 %v1159
        %v3331 = vunpack.c.h.b16 %v1159
        %v3332 = vunpack.c.l.b16 %v1160
        %v3333 = vunpack.c.h.b16 %v1160
        %v3334 = vunpack.c.l.b16 %v1161
        %v3335 = vunpack.c.h.b16 %v1161
        %v3336 = vunpack.c.l.b16 %v1162
        %v3337 = vunpack.c.h.b16 %v1162
        %v3338 = vunpack.c.l.b16 %v1163
        %v3339 = vunpack.c.h.b16 %v1163
        %v3340 = vunpack.c.l.b16 %v1164
        %v3341 = vunpack.c.l.b16 %v1165
        %v3342 = vunpack.c.h.b16 %v1165
        %v3343 = vunpack.c.l.b16 %v1166
        %v3344 = vunpack.c.h.b16 %v1166
        %v3345 = vunpack.c.l.b16 %v1167
        %v3346 = vunpack.c.h.b16 %v1167
        %v3347 = vunpack.c.l.b16 %v1168
        %v3348 = vunpack.c.h.b16 %v1168
        %v3349 = vunpack.c.l.b16 %v1169
        %v3350 = vunpack.c.h.b16 %v1169
        %v3351 = vunpack.c.l.b16 %v1170
        %v3352 = vunpack.c.h.b16 %v1170
        %v3353 = vunpack.c.l.b16 %v1171
        %v3354 = vunpack.c.l.b16 %v1172
        %v3355 = vunpack.c.h.b16 %v1172
        %v3356 = vunpack.c.l.b16 %v1173
        %v3357 = vunpack.c.h.b16 %v1173
        %v3358 = vunpack.c.l.b16 %v1174
        %v3359 = vunpack.c.h.b16 %v1174
        %v3360 = vunpack.c.l.b16 %v1175
        %v3361 = vunpack.c.h.b16 %v1175
        %v3362 = vunpack.c.l.b16 %v1176
        %v3363 = vunpack.c.h.b16 %v1176
        %v3364 = vunpack.c.l.b16 %v1177
        %v3365 = vunpack.c.h.b16 %v1177
        %v3366 = vunpack.c.l.b16 %v1178
        %v3367 = vunpack.c.l.b16 %v1179
        %v3368 = vunpack.c.h.b16 %v1179
        %v3369 = vunpack.c.l.b16 %v1180
        %v3370 = vunpack.c.h.b16 %v1180
        %v3371 = vunpack.c.l.b16 %v1181
        %v3372 = vunpack.c.h.b16 %v1181
        %v3373 = vunpack.c.l.b16 %v1182
        %v3374 = vunpack.c.h.b16 %v1182
        %v3375 = vunpack.c.l.b16 %v1183
        %v3376 = vunpack.c.h.b16 %v1183
        %v3377 = vunpack.c.l.b16 %v1184
        %v3378 = vunpack.c.h.b16 %v1184
        %v3379 = vunpack.c.l.b16 %v1185
        %v3380 = vunpack.c.l.b16 %v1186
        %v3381 = vunpack.c.h.b16 %v1186
        %v3382 = vunpack.c.l.b16 %v1187
        %v3383 = vunpack.c.h.b16 %v1187
        %v3384 = vunpack.c.l.b16 %v1188
        %v3385 = vunpack.c.h.b16 %v1188
        %v3386 = vunpack.c.l.b16 %v1189
        %v3387 = vunpack.c.h.b16 %v1189
        %v3388 = vunpack.c.l.b16 %v1190
        %v3389 = vunpack.c.h.b16 %v1190
        %v3390 = vunpack.c.l.b16 %v1191
        %v3391 = vunpack.c.h.b16 %v1191
        %v3392 = vunpack.c.l.b16 %v1192
        %v3393 = vunpack.c.l.b16 %v1193
        %v3394 = vunpack.c.h.b16 %v1193
        %v3395 = vunpack.c.l.b16 %v1194
        %v3396 = vunpack.c.h.b16 %v1194
        %v3397 = vunpack.c.l.b16 %v1195
        %v3398 = vunpack.c.h.b16 %v1195
        %v3399 = vunpack.c.l.b16 %v1196
        %v3400 = vunpack.c.h.b16 %v1196
        %v3401 = vunpack.c.l.b16 %v1197
        %v3402 = vunpack.c.h.b16 %v1197
        %v3403 = vunpack.c.l.b16 %v1198
        %v3404 = vunpack.c.h.b16 %v1198
        %v3405 = vunpack.c.l.b16 %v1199
        %v3406 = vunpack.c.l.b16 %v1200
        %v3407 = vunpack.c.h.b16 %v1200
        %v3408 = vunpack.c.l.b16 %v1201
        %v3409 = vunpack.c.h.b16 %v1201
        %v3410 = vunpack.c.l.b16 %v1202
        %v3411 = vunpack.c.h.b16 %v1202
        %v3412 = vunpack.c.l.b16 %v1203
        %v3413 = vunpack.c.h.b16 %v1203
        %v3414 = vunpack.c.l.b16 %v1204
        %v3415 = vunpack.c.h.b16 %v1204
        %v3416 = vunpack.c.l.b16 %v1205
        %v3417 = vunpack.c.h.b16 %v1205
        %v3418 = vunpack.c.l.b16 %v1206
        %v3419 = vunpack.c.l.b16 %v1207
        %v3420 = vunpack.c.h.b16 %v1207
        %v3421 = vunpack.c.l.b16 %v1208
        %v3422 = vunpack.c.h.b16 %v1208
        %v3423 = vunpack.c.l.b16 %v1209
        %v3424 = vunpack.c.h.b16 %v1209
        %v3425 = vunpack.c.l.b16 %v1210
        %v3426 = vunpack.c.h.b16 %v1210
        %v3427 = vunpack.c.l.b16 %v1211
        %v3428 = vunpack.c.h.b16 %v1211
        %v3429 = vunpack.c.l.b16 %v1212
        %v3430 = vunpack.c.h.b16 %v1212
        %v3431 = vunpack.c.l.b16 %v1213
        %v3432 = vunpack.c.l.b16 %v1214
        %v3433 = vunpack.c.h.b16 %v1214
        %v3434 = vunpack.c.l.b16 %v1215
        %v3435 = vunpack.c.h.b16 %v1215
        %v3436 = vunpack.c.l.b16 %v1216
        %v3437 = vunpack.c.h.b16 %v1216
        %v3438 = vunpack.c.l.b16 %v1217
        %v3439 = vunpack.c.h.b16 %v1217
        %v3440 = vunpack.c.l.b16 %v1218
        %v3441 = vunpack.c.h.b16 %v1218
        %v3442 = vunpack.c.l.b16 %v1219
        %v3443 = vunpack.c.h.b16 %v1219
        %v3444 = vunpack.c.l.b16 %v1220
        %v3445 = vunpack.c.l.b16 %v1221
        %v3446 = vunpack.c.h.b16 %v1221
        %v3447 = vunpack.c.l.b16 %v1222
        %v3448 = vunpack.c.h.b16 %v1222
        %v3449 = vunpack.c.l.b16 %v1223
        %v3450 = vunpack.c.h.b16 %v1223
        %v3451 = vunpack.c.l.b16 %v1224
        %v3452 = vunpack.c.h.b16 %v1224
        %v3453 = vunpack.c.l.b16 %v1225
        %v3454 = vunpack.c.h.b16 %v1225
        %v3455 = vunpack.c.l.b16 %v1226
        %v3456 = vunpack.c.h.b16 %v1226
        %v3457 = vunpack.c.l.b16 %v1227
        %v3458 = vunpack.c.l.b16 %v1228
        %v3459 = vunpack.c.h.b16 %v1228
        %v3460 = vunpack.c.l.b16 %v1229
        %v3461 = vunpack.c.h.b16 %v1229
        %v3462 = vunpack.c.l.b16 %v1230
        %v3463 = vunpack.c.h.b16 %v1230
        %v3464 = vunpack.c.l.b16 %v1231
        %v3465 = vunpack.c.h.b16 %v1231
        %v3466 = vunpack.c.l.b16 %v1232
        %v3467 = vunpack.c.h.b16 %v1232
        %v3468 = vunpack.c.l.b16 %v1233
        %v3469 = vunpack.c.h.b16 %v1233
        %v3470 = vunpack.c.l.b16 %v1234
        %v3471 = vunpack.c.l.b16 %v1235
        %v3472 = vunpack.c.h.b16 %v1235
        %v3473 = vunpack.c.l.b16 %v1236
        %v3474 = vunpack.c.h.b16 %v1236
        %v3475 = vunpack.c.l.b16 %v1237
        %v3476 = vunpack.c.h.b16 %v1237
        %v3477 = vunpack.c.l.b16 %v1238
        %v3478 = vunpack.c.h.b16 %v1238
        %v3479 = vunpack.c.l.b16 %v1239
        %v3480 = vunpack.c.h.b16 %v1239
        %v3481 = vunpack.c.l.b16 %v1240
        %v3482 = vunpack.c.h.b16 %v1240
        %v3483 = vunpack.c.l.b16 %v1241
        %v3484 = vunpack.c.l.b16 %v1242
        %v3485 = vunpack.c.h.b16 %v1242
        %v3486 = vunpack.c.l.b16 %v1243
        %v3487 = vunpack.c.h.b16 %v1243
        %v3488 = vunpack.c.l.b16 %v1244
        %v3489 = vunpack.c.h.b16 %v1244
        %v3490 = vunpack.c.l.b16 %v1245
        %v3491 = vunpack.c.h.b16 %v1245
        %v3492 = vunpack.c.l.b16 %v1246
        %v3493 = vunpack.c.h.b16 %v1246
        %v3494 = vunpack.c.l.b16 %v1247
        %v3495 = vunpack.c.h.b16 %v1247
        %v3496 = vunpack.c.l.b16 %v1248
        %v3497 = vunpack.c.l.b16 %v1249
        %v3498 = vunpack.c.h.b16 %v1249
        %v3499 = vunpack.c.l.b16 %v1250
        %v3500 = vunpack.c.h.b16 %v1250
        %v3501 = vunpack.c.l.b16 %v1251
        %v3502 = vunpack.c.h.b16 %v1251
        %v3503 = vunpack.c.l.b16 %v1252
        %v3504 = vunpack.c.h.b16 %v1252
        %v3505 = vunpack.c.l.b16 %v1253
        %v3506 = vunpack.c.h.b16 %v1253
        %v3507 = vunpack.c.l.b16 %v1254
        %v3508 = vunpack.c.h.b16 %v1254
        %v3509 = vunpack.c.l.b16 %v1255
        %v3510 = vunpack.c.l.b16 %v1256
        %v3511 = vunpack.c.h.b16 %v1256
        %v3512 = vunpack.c.l.b16 %v1257
        %v3513 = vunpack.c.h.b16 %v1257
        %v3514 = vunpack.c.l.b16 %v1258
        %v3515 = vunpack.c.h.b16 %v1258
        %v3516 = vunpack.c.l.b16 %v1259
        %v3517 = vunpack.c.h.b16 %v1259
        %v3518 = vunpack.c.l.b16 %v1260
        %v3519 = vunpack.c.h.b16 %v1260
        %v3520 = vunpack.c.l.b16 %v1261
        %v3521 = vunpack.c.h.b16 %v1261
        %v3522 = vunpack.c.l.b16 %v1262
        %v3523 = vunpack.c.l.b16 %v1263
        %v3524 = vunpack.c.h.b16 %v1263
        %v3525 = vunpack.c.l.b16 %v1264
        %v3526 = vunpack.c.h.b16 %v1264
        %v3527 = vunpack.c.l.b16 %v1265
        %v3528 = vunpack.c.h.b16 %v1265
        %v3529 = vunpack.c.l.b16 %v1266
        %v3530 = vunpack.c.h.b16 %v1266
        %v3531 = vunpack.c.l.b16 %v1267
        %v3532 = vunpack.c.h.b16 %v1267
        %v3533 = vunpack.c.l.b16 %v1268
        %v3534 = vunpack.c.h.b16 %v1268
        %v3535 = vunpack.c.l.b16 %v1269
        %v3536 = vunpack.c.l.b16 %v1270
        %v3537 = vunpack.c.h.b16 %v1270
        %v3538 = vunpack.c.l.b16 %v1271
        %v3539 = vunpack.c.h.b16 %v1271
        %v3540 = vunpack.c.l.b16 %v1272
        %v3541 = vunpack.c.h.b16 %v1272
        %v3542 = vunpack.c.l.b16 %v1273
        %v3543 = vunpack.c.h.b16 %v1273
        %v3544 = vunpack.c.l.b16 %v1274
        %v3545 = vunpack.c.h.b16 %v1274
        %v3546 = vunpack.c.l.b16 %v1275
        %v3547 = vunpack.c.h.b16 %v1275
        %v3548 = vunpack.c.l.b16 %v1276
        %v3549 = vunpack.c.l.b16 %v1277
        %v3550 = vunpack.c.h.b16 %v1277
        %v3551 = vunpack.c.l.b16 %v1278
        %v3552 = vunpack.c.h.b16 %v1278
        %v3553 = vunpack.c.l.b16 %v1279
        %v3554 = vunpack.c.h.b16 %v1279
        %v3555 = vunpack.c.l.b16 %v1280
        %v3556 = vunpack.c.h.b16 %v1280
        %v3557 = vunpack.c.l.b16 %v1281
        %v3558 = vunpack.c.h.b16 %v1281
        %v3559 = vunpack.c.l.b16 %v1282
        %v3560 = vunpack.c.h.b16 %v1282
        %v3561 = vunpack.c.l.b16 %v1283
        %v3562 = vunpack.c.l.b16 %v1284
        %v3563 = vunpack.c.h.b16 %v1284
        %v3564 = vunpack.c.l.b16 %v1285
        %v3565 = vunpack.c.h.b16 %v1285
        %v3566 = vunpack.c.l.b16 %v1286
        %v3567 = vunpack.c.h.b16 %v1286
        %v3568 = vunpack.c.l.b16 %v1287
        %v3569 = vunpack.c.h.b16 %v1287
        %v3570 = vunpack.c.l.b16 %v1288
        %v3571 = vunpack.c.h.b16 %v1288
        %v3572 = vunpack.c.l.b16 %v1289
        %v3573 = vunpack.c.h.b16 %v1289
        %v3574 = vunpack.c.l.b16 %v1290
        %v3575 = vunpack.c.l.b16 %v1291
        %v3576 = vunpack.c.h.b16 %v1291
        %v3577 = vunpack.c.l.b16 %v1292
        %v3578 = vunpack.c.h.b16 %v1292
        %v3579 = vunpack.c.l.b16 %v1293
        %v3580 = vunpack.c.h.b16 %v1293
        %v3581 = vunpack.c.l.b16 %v1294
        %v3582 = vunpack.c.h.b16 %v1294
        %v3583 = vunpack.c.l.b16 %v1295
        %v3584 = vunpack.c.h.b16 %v1295
        %v3585 = vunpack.c.l.b16 %v1296
        %v3586 = vunpack.c.h.b16 %v1296
        %v3587 = vunpack.c.l.b16 %v1297
        %v3588 = vunpack.c.l.b16 %v1298
        %v3589 = vunpack.c.h.b16 %v1298
        %v3590 = vunpack.c.l.b16 %v1299
        %v3591 = vunpack.c.h.b16 %v1299
        %v3592 = vunpack.c.l.b16 %v1300
        %v3593 = vunpack.c.h.b16 %v1300
        %v3594 = vunpack.c.l.b16 %v1301
        %v3595 = vunpack.c.h.b16 %v1301
        %v3596 = vunpack.c.l.b16 %v1302
        %v3597 = vunpack.c.h.b16 %v1302
        %v3598 = vunpack.c.l.b16 %v1303
        %v3599 = vunpack.c.h.b16 %v1303
        %v3600 = vunpack.c.l.b16 %v1304
        %v3601 = vunpack.c.l.b16 %v1305
        %v3602 = vunpack.c.h.b16 %v1305
        %v3603 = vunpack.c.l.b16 %v1306
        %v3604 = vunpack.c.h.b16 %v1306
        %v3605 = vunpack.c.l.b16 %v1307
        %v3606 = vunpack.c.h.b16 %v1307
        %v3607 = vunpack.c.l.b16 %v1308
        %v3608 = vunpack.c.h.b16 %v1308
        %v3609 = vunpack.c.l.b16 %v1309
        %v3610 = vunpack.c.h.b16 %v1309
        %v3611 = vunpack.c.l.b16 %v1310
        %v3612 = vunpack.c.h.b16 %v1310
        %v3613 = vunpack.c.l.b16 %v1311
        %v3614 = vunpack.c.l.b16 %v1312
        %v3615 = vunpack.c.h.b16 %v1312
        %v3616 = vunpack.c.l.b16 %v1313
        %v3617 = vunpack.c.h.b16 %v1313
        %v3618 = vunpack.c.l.b16 %v1314
        %v3619 = vunpack.c.h.b16 %v1314
        %v3620 = vunpack.c.l.b16 %v1315
        %v3621 = vunpack.c.h.b16 %v1315
        %v3622 = vunpack.c.l.b16 %v1316
        %v3623 = vunpack.c.h.b16 %v1316
        %v3624 = vunpack.c.l.b16 %v1317
        %v3625 = vunpack.c.h.b16 %v1317
        %v3626 = vunpack.c.l.b16 %v1318
        %v3627 = vunpack.c.l.b16 %v1319
        %v3628 = vunpack.c.h.b16 %v1319
        %v3629 = vunpack.c.l.b16 %v1320
        %v3630 = vunpack.c.h.b16 %v1320
        %v3631 = vunpack.c.l.b16 %v1321
        %v3632 = vunpack.c.h.b16 %v1321
        %v3633 = vunpack.c.l.b16 %v1322
        %v3634 = vunpack.c.h.b16 %v1322
        %v3635 = vunpack.c.l.b16 %v1323
        %v3636 = vunpack.c.h.b16 %v1323
        %v3637 = vunpack.c.l.b16 %v1324
        %v3638 = vunpack.c.h.b16 %v1324
        %v3639 = vunpack.c.l.b16 %v1325
        %v3640 = vunpack.c.l.b16 %v1326
        %v3641 = vunpack.c.h.b16 %v1326
        %v3642 = vunpack.c.l.b16 %v1327
        %v3643 = vunpack.c.h.b16 %v1327
        %v3644 = vunpack.c.l.b16 %v1328
        %v3645 = vunpack.c.h.b16 %v1328
        %v3646 = vunpack.c.l.b16 %v1329
        %v3647 = vunpack.c.h.b16 %v1329
        %v3648 = vunpack.c.l.b16 %v1330
        %v3649 = vunpack.c.h.b16 %v1330
        %v3650 = vunpack.c.l.b16 %v1331
        %v3651 = vunpack.c.h.b16 %v1331
        %v3652 = vunpack.c.l.b16 %v1332
        %v3653 = vunpack.c.l.b16 %v1333
        %v3654 = vunpack.c.h.b16 %v1333
        %v3655 = vunpack.c.l.b16 %v1334
        %v3656 = vunpack.c.h.b16 %v1334
        %v3657 = vunpack.c.l.b16 %v1335
        %v3658 = vunpack.c.h.b16 %v1335
        %v3659 = vunpack.c.l.b16 %v1336
        %v3660 = vunpack.c.h.b16 %v1336
        %v3661 = vunpack.c.l.b16 %v1337
        %v3662 = vunpack.c.h.b16 %v1337
        %v3663 = vunpack.c.l.b16 %v1338
        %v3664 = vunpack.c.h.b16 %v1338
        %v3665 = vunpack.c.l.b16 %v1339
        %v3666 = vunpack.c.l.b16 %v1340
        %v3667 = vunpack.c.h.b16 %v1340
        %v3668 = vunpack.c.l.b16 %v1341
        %v3669 = vunpack.c.h.b16 %v1341
        %v3670 = vunpack.c.l.b16 %v1342
        %v3671 = vunpack.c.h.b16 %v1342
        %v3672 = vunpack.c.l.b16 %v1343
        %v3673 = vunpack.c.h.b16 %v1343
        %v3674 = vunpack.c.l.b16 %v1344
        %v3675 = vunpack.c.h.b16 %v1344
        %v3676 = vunpack.c.l.b16 %v1345
        %v3677 = vunpack.c.h.b16 %v1345
        %v3678 = vunpack.c.l.b16 %v1346
        %v3679 = vunpack.c.l.b16 %v1347
        %v3680 = vunpack.c.h.b16 %v1347
        %v3681 = vunpack.c.l.b16 %v1348
        %v3682 = vunpack.c.h.b16 %v1348
        %v3683 = vunpack.c.l.b16 %v1349
        %v3684 = vunpack.c.h.b16 %v1349
        %v3685 = vunpack.c.l.b16 %v1350
        %v3686 = vunpack.c.h.b16 %v1350
        %v3687 = vunpack.c.l.b16 %v1351
        %v3688 = vunpack.c.h.b16 %v1351
        %v3689 = vunpack.c.l.b16 %v1352
        %v3690 = vunpack.c.h.b16 %v1352
        %v3691 = vunpack.c.l.b16 %v1353
        %v3692 = vunpack.c.l.b16 %v1354
        %v3693 = vunpack.c.h.b16 %v1354
        %v3694 = vunpack.c.l.b16 %v1355
        %v3695 = vunpack.c.h.b16 %v1355
        %v3696 = vunpack.c.l.b16 %v1356
        %v3697 = vunpack.c.h.b16 %v1356
        %v3698 = vunpack.c.l.b16 %v1357
        %v3699 = vunpack.c.h.b16 %v1357
        %v3700 = vunpack.c.l.b16 %v1358
        %v3701 = vunpack.c.h.b16 %v1358
        %v3702 = vunpack.c.l.b16 %v1359
        %v3703 = vunpack.c.h.b16 %v1359
        %v3704 = vunpack.c.l.b16 %v1360
        %v3705 = vunpack.c.l.b16 %v1361
        %v3706 = vunpack.c.h.b16 %v1361
        %v3707 = vunpack.c.l.b16 %v1362
        %v3708 = vunpack.c.h.b16 %v1362
        %v3709 = vunpack.c.l.b16 %v1363
        %v3710 = vunpack.c.h.b16 %v1363
        %v3711 = vunpack.c.l.b16 %v1364
        %v3712 = vunpack.c.h.b16 %v1364
        %v3713 = vunpack.c.l.b16 %v1365
        %v3714 = vunpack.c.h.b16 %v1365
        %v3715 = vunpack.c.l.b16 %v1366
        %v3716 = vunpack.c.h.b16 %v1366
        %v3717 = vunpack.c.l.b16 %v1367
        %v3718 = vunpack.c.l.b16 %v1368
        %v3719 = vunpack.c.h.b16 %v1368
        %v3720 = vunpack.c.l.b16 %v1369
        %v3721 = vunpack.c.h.b16 %v1369
        %v3722 = vunpack.c.l.b16 %v1370
        %v3723 = vunpack.c.h.b16 %v1370
        %v3724 = vunpack.c.l.b16 %v1371
        %v3725 = vunpack.c.h.b16 %v1371
        %v3726 = vunpack.c.l.b16 %v1372
        %v3727 = vunpack.c.h.b16 %v1372
        %v3728 = vunpack.c.l.b16 %v1373
        %v3729 = vunpack.c.h.b16 %v1373
        %v3730 = vunpack.c.l.b16 %v1374
        %v3731 = vunpack.c.l.b16 %v1375
        %v3732 = vunpack.c.h.b16 %v1375
        %v3733 = vunpack.c.l.b16 %v1376
        %v3734 = vunpack.c.h.b16 %v1376
        %v3735 = vunpack.c.l.b16 %v1377
        %v3736 = vunpack.c.h.b16 %v1377
        %v3737 = vunpack.c.l.b16 %v1378
        %v3738 = vunpack.c.h.b16 %v1378
        %v3739 = vunpack.c.l.b16 %v1379
        %v3740 = vunpack.c.h.b16 %v1379
        %v3741 = vunpack.c.l.b16 %v1380
        %v3742 = vunpack.c.h.b16 %v1380
        %v3743 = vunpack.c.l.b16 %v1381
        %v3744 = vunpack.c.l.b16 %v1382
        %v3745 = vunpack.c.h.b16 %v1382
        %v3746 = vunpack.c.l.b16 %v1383
        %v3747 = vunpack.c.h.b16 %v1383
        %v3748 = vunpack.c.l.b16 %v1384
        %v3749 = vunpack.c.h.b16 %v1384
        %v3750 = vunpack.c.l.b16 %v1385
        %v3751 = vunpack.c.h.b16 %v1385
        %v3752 = vunpack.c.l.b16 %v1386
        %v3753 = vunpack.c.h.b16 %v1386
        %v3754 = vunpack.c.l.b16 %v1387
        %v3755 = vunpack.c.h.b16 %v1387
        %v3756 = vunpack.c.l.b16 %v1388
        %v3757 = vunpack.c.l.b16 %v1389
        %v3758 = vunpack.c.h.b16 %v1389
        %v3759 = vunpack.c.l.b16 %v1390
        %v3760 = vunpack.c.h.b16 %v1390
        %v3761 = vunpack.c.l.b16 %v1391
        %v3762 = vunpack.c.h.b16 %v1391
        %v3763 = vunpack.c.l.b16 %v1392
        %v3764 = vunpack.c.h.b16 %v1392
        %v3765 = vunpack.c.l.b16 %v1393
        %v3766 = vunpack.c.h.b16 %v1393
        %v3767 = vunpack.c.l.b16 %v1394
        %v3768 = vunpack.c.h.b16 %v1394
        %v3769 = vunpack.c.l.b16 %v1395
        %v3770 = vunpack.c.l.b16 %v1396
        %v3771 = vunpack.c.h.b16 %v1396
        %v3772 = vunpack.c.l.b16 %v1397
        %v3773 = vunpack.c.h.b16 %v1397
        %v3774 = vunpack.c.l.b16 %v1398
        %v3775 = vunpack.c.h.b16 %v1398
        %v3776 = vunpack.c.l.b16 %v1399
        %v3777 = vunpack.c.h.b16 %v1399
        %v3778 = vunpack.c.l.b16 %v1400
        %v3779 = vunpack.c.h.b16 %v1400
        %v3780 = vunpack.c.l.b16 %v1401
        %v3781 = vunpack.c.h.b16 %v1401
        %v3782 = vunpack.c.l.b16 %v1402
        %v3783 = vunpack.c.l.b16 %v1403
        %v3784 = vunpack.c.h.b16 %v1403
        %v3785 = vunpack.c.l.b16 %v1404
        %v3786 = vunpack.c.h.b16 %v1404
        %v3787 = vunpack.c.l.b16 %v1405
        %v3788 = vunpack.c.h.b16 %v1405
        %v3789 = vunpack.c.l.b16 %v1406
        %v3790 = vunpack.c.h.b16 %v1406
        %v3791 = vunpack.c.l.b16 %v1407
        %v3792 = vunpack.c.h.b16 %v1407
        %v3793 = vunpack.c.l.b16 %v1408
        %v3794 = vunpack.c.h.b16 %v1408
        %v3795 = vunpack.c.l.b16 %v1409
        %v3796 = vunpack.c.l.b16 %v1410
        %v3797 = vunpack.c.h.b16 %v1410
        %v3798 = vunpack.c.l.b16 %v1411
        %v3799 = vunpack.c.h.b16 %v1411
        %v3800 = vunpack.c.l.b16 %v1412
        %v3801 = vunpack.c.h.b16 %v1412
        %v3802 = vunpack.c.l.b16 %v1413
        %v3803 = vunpack.c.h.b16 %v1413
        %v3804 = vunpack.c.l.b16 %v1414
        %v3805 = vunpack.c.h.b16 %v1414
        %v3806 = vunpack.c.l.b16 %v1415
        %v3807 = vunpack.c.h.b16 %v1415
        %v3808 = vunpack.c.l.b16 %v1416
        %v3809 = vunpack.c.l.b16 %v1417
        %v3810 = vunpack.c.h.b16 %v1417
        %v3811 = vunpack.c.l.b16 %v1418
        %v3812 = vunpack.c.h.b16 %v1418
        %v3813 = vunpack.c.l.b16 %v1419
        %v3814 = vunpack.c.h.b16 %v1419
        %v3815 = vunpack.c.l.b16 %v1420
        %v3816 = vunpack.c.h.b16 %v1420
        %v3817 = vunpack.c.l.b16 %v1421
        %v3818 = vunpack.c.h.b16 %v1421
        %v3819 = vunpack.c.l.b16 %v1422
        %v3820 = vunpack.c.h.b16 %v1422
        %v3821 = vunpack.c.l.b16 %v1423
        %v3822 = vunpack.c.l.b16 %v1424
        %v3823 = vunpack.c.h.b16 %v1424
        %v3824 = vunpack.c.l.b16 %v1425
        %v3825 = vunpack.c.h.b16 %v1425
        %v3826 = vunpack.c.l.b16 %v1426
        %v3827 = vunpack.c.h.b16 %v1426
        %v3828 = vunpack.c.l.b16 %v1427
        %v3829 = vunpack.c.h.b16 %v1427
        %v3830 = vunpack.c.l.b16 %v1428
        %v3831 = vunpack.c.h.b16 %v1428
        %v3832 = vunpack.c.l.b16 %v1429
        %v3833 = vunpack.c.h.b16 %v1429
        %v3834 = vunpack.c.l.b16 %v1430
        %v3835 = vunpack.c.l.b16 %v1431
        %v3836 = vunpack.c.h.b16 %v1431
        %v3837 = vunpack.c.l.b16 %v1432
        %v3838 = vunpack.c.h.b16 %v1432
        %v3839 = vunpack.c.l.b16 %v1433
        %v3840 = vunpack.c.h.b16 %v1433
        %v3841 = vunpack.c.l.b16 %v1434
        %v3842 = vunpack.c.h.b16 %v1434
        %v3843 = vunpack.c.l.b16 %v1435
        %v3844 = vunpack.c.h.b16 %v1435
        %v3845 = vunpack.c.l.b16 %v1436
        %v3846 = vunpack.c.h.b16 %v1436
        %v3847 = vunpack.c.l.b16 %v1437
        %v3848 = vunpack.c.l.b16 %v1438
        %v3849 = vunpack.c.h.b16 %v1438
        %v3850 = vunpack.c.l.b16 %v1439
        %v3851 = vunpack.c.h.b16 %v1439
        %v3852 = vunpack.c.l.b16 %v1440
        %v3853 = vunpack.c.h.b16 %v1440
        %v3854 = vunpack.c.l.b16 %v1441
        %v3855 = vunpack.c.h.b16 %v1441
        %v3856 = vunpack.c.l.b16 %v1442
        %v3857 = vunpack.c.h.b16 %v1442
        %v3858 = vunpack.c.l.b16 %v1443
        %v3859 = vunpack.c.h.b16 %v1443
        %v3860 = vunpack.c.l.b16 %v1444
        %v3861 = vunpack.c.l.b16 %v1445
        %v3862 = vunpack.c.h.b16 %v1445
        %v3863 = vunpack.c.l.b16 %v1446
        %v3864 = vunpack.c.h.b16 %v1446
        %v3865 = vunpack.c.l.b16 %v1447
        %v3866 = vunpack.c.h.b16 %v1447
        %v3867 = vunpack.c.l.b16 %v1448
        %v3868 = vunpack.c.h.b16 %v1448
        %v3869 = vunpack.c.l.b16 %v1449
        %v3870 = vunpack.c.h.b16 %v1449
        %v3871 = vunpack.c.l.b16 %v1450
        %v3872 = vunpack.c.h.b16 %v1450
        %v3873 = vunpack.c.l.b16 %v1451
        %v3874 = vunpack.c.l.b16 %v1452
        %v3875 = vunpack.c.h.b16 %v1452
        %v3876 = vunpack.c.l.b16 %v1453
        %v3877 = vunpack.c.h.b16 %v1453
        %v3878 = vunpack.c.l.b16 %v1454
        %v3879 = vunpack.c.h.b16 %v1454
        %v3880 = vunpack.c.l.b16 %v1455
        %v3881 = vunpack.c.h.b16 %v1455
        %v3882 = vunpack.c.l.b16 %v1456
        %v3883 = vunpack.c.h.b16 %v1456
        %v3884 = vunpack.c.l.b16 %v1457
        %v3885 = vunpack.c.h.b16 %v1457
        %v3886 = vunpack.c.l.b16 %v1458
        %v3887 = vunpack.c.l.b16 %v1459
        %v3888 = vunpack.c.h.b16 %v1459
        %v3889 = vunpack.c.l.b16 %v1460
        %v3890 = vunpack.c.h.b16 %v1460
        %v3891 = vunpack.c.l.b16 %v1461
        %v3892 = vunpack.c.h.b16 %v1461
        %v3893 = vunpack.c.l.b16 %v1462
        %v3894 = vunpack.c.h.b16 %v1462
        %v3895 = vunpack.c.l.b16 %v1463
        %v3896 = vunpack.c.h.b16 %v1463
        %v3897 = vunpack.c.l.b16 %v1464
        %v3898 = vunpack.c.h.b16 %v1464
        %v3899 = vunpack.c.l.b16 %v1465
        %v3900 = vunpack.c.l.b16 %v1466
        %v3901 = vunpack.c.h.b16 %v1466
        %v3902 = vunpack.c.l.b16 %v1467
        %v3903 = vunpack.c.h.b16 %v1467
        %v3904 = vunpack.c.l.b16 %v1468
        %v3905 = vunpack.c.h.b16 %v1468
        %v3906 = vunpack.c.l.b16 %v1469
        %v3907 = vunpack.c.h.b16 %v1469
        %v3908 = vunpack.c.l.b16 %v1470
        %v3909 = vunpack.c.h.b16 %v1470
        %v3910 = vunpack.c.l.b16 %v1471
        %v3911 = vunpack.c.h.b16 %v1471
        %v3912 = vunpack.c.l.b16 %v1472
        %v3913 = vunpack.c.l.b16 %v1473
        %v3914 = vunpack.c.h.b16 %v1473
        %v3915 = vunpack.c.l.b16 %v1474
        %v3916 = vunpack.c.h.b16 %v1474
        %v3917 = vunpack.c.l.b16 %v1475
        %v3918 = vunpack.c.h.b16 %v1475
        %v3919 = vunpack.c.l.b16 %v1476
        %v3920 = vunpack.c.h.b16 %v1476
        %v3921 = vunpack.c.l.b16 %v1477
        %v3922 = vunpack.c.h.b16 %v1477
        %v3923 = vunpack.c.l.b16 %v1478
        %v3924 = vunpack.c.h.b16 %v1478
        %v3925 = vunpack.c.l.b16 %v1479
        %v3926 = vunpack.c.l.b16 %v1480
        %v3927 = vunpack.c.h.b16 %v1480
        %v3928 = vunpack.c.l.b16 %v1481
        %v3929 = vunpack.c.h.b16 %v1481
        %v3930 = vunpack.c.l.b16 %v1482
        %v3931 = vunpack.c.h.b16 %v1482
        %v3932 = vunpack.c.l.b16 %v1483
        %v3933 = vunpack.c.h.b16 %v1483
        %v3934 = vunpack.c.l.b16 %v1484
        %v3935 = vunpack.c.h.b16 %v1484
        %v3936 = vunpack.c.l.b16 %v1485
        %v3937 = vunpack.c.h.b16 %v1485
        %v3938 = vunpack.c.l.b16 %v1486
        %v3939 = vunpack.c.l.b16 %v1487
        %v3940 = vunpack.c.h.b16 %v1487
        %v3941 = vunpack.c.l.b16 %v1488
        %v3942 = vunpack.c.h.b16 %v1488
        %v3943 = vunpack.c.l.b16 %v1489
        %v3944 = vunpack.c.h.b16 %v1489
        %v3945 = vunpack.c.l.b16 %v1490
        %v3946 = vunpack.c.h.b16 %v1490
        %v3947 = vunpack.c.l.b16 %v1491
        %v3948 = vunpack.c.h.b16 %v1491
        %v3949 = vunpack.c.l.b16 %v1492
        %v3950 = vunpack.c.h.b16 %v1492
        %v3951 = vunpack.c.l.b16 %v1493
        %v3952 = vunpack.c.l.b16 %v1494
        %v3953 = vunpack.c.h.b16 %v1494
        %v3954 = vunpack.c.l.b16 %v1495
        %v3955 = vunpack.c.h.b16 %v1495
        %v3956 = vunpack.c.l.b16 %v1496
        %v3957 = vunpack.c.h.b16 %v1496
        %v3958 = vunpack.c.l.b16 %v1497
        %v3959 = vunpack.c.h.b16 %v1497
        %v3960 = vunpack.c.l.b16 %v1498
        %v3961 = vunpack.c.h.b16 %v1498
        %v3962 = vunpack.c.l.b16 %v1499
        %v3963 = vunpack.c.h.b16 %v1499
        %v3964 = vunpack.c.l.b16 %v1500
        %v3965 = vunpack.c.l.b16 %v1501
        %v3966 = vunpack.c.h.b16 %v1501
        %v3967 = vunpack.c.l.b16 %v1502
        %v3968 = vunpack.c.h.b16 %v1502
        %v3969 = vunpack.c.l.b16 %v1503
        %v3970 = vunpack.c.h.b16 %v1503
        %v3971 = vunpack.c.l.b16 %v1504
        %v3972 = vunpack.c.h.b16 %v1504
        %v3973 = vunpack.c.l.b16 %v1505
        %v3974 = vunpack.c.h.b16 %v1505
        %v3975 = vunpack.c.l.b16 %v1506
        %v3976 = vunpack.c.h.b16 %v1506
        %v3977 = vunpack.c.l.b16 %v1507
        %v3978 = vunpack.c.l.b16 %v1508
        %v3979 = vunpack.c.h.b16 %v1508
        %v3980 = vunpack.c.l.b16 %v1509
        %v3981 = vunpack.c.h.b16 %v1509
        %v3982 = vunpack.c.l.b16 %v1510
        %v3983 = vunpack.c.h.b16 %v1510
        %v3984 = vunpack.c.l.b16 %v1511
        %v3985 = vunpack.c.h.b16 %v1511
        %v3986 = vunpack.c.l.b16 %v1512
        %v3987 = vunpack.c.h.b16 %v1512
        %v3988 = vunpack.c.l.b16 %v1513
        %v3989 = vunpack.c.h.b16 %v1513
        %v3990 = vunpack.c.l.b16 %v1514
        %v3991 = vunpack.c.l.b16 %v1515
        %v3992 = vunpack.c.h.b16 %v1515
        %v3993 = vunpack.c.l.b16 %v1516
        %v3994 = vunpack.c.h.b16 %v1516
        %v3995 = vunpack.c.l.b16 %v1517
        %v3996 = vunpack.c.h.b16 %v1517
        %v3997 = vunpack.c.l.b16 %v1518
        %v3998 = vunpack.c.h.b16 %v1518
        %v3999 = vunpack.c.l.b16 %v1519
        %v4000 = vunpack.c.h.b16 %v1519
        %v4001 = vunpack.c.l.b16 %v1520
        %v4002 = vunpack.c.h.b16 %v1520
        %v4003 = vunpack.c.l.b16 %v1521
        %v4004 = vunpack.c.l.b16 %v1522
        %v4005 = vunpack.c.h.b16 %v1522
        %v4006 = vunpack.c.l.b16 %v1523
        %v4007 = vunpack.c.h.b16 %v1523
        %v4008 = vunpack.c.l.b16 %v1524
        %v4009 = vunpack.c.h.b16 %v1524
        %v4010 = vunpack.c.l.b16 %v1525
        %v4011 = vunpack.c.h.b16 %v1525
        %v4012 = vunpack.c.l.b16 %v1526
        %v4013 = vunpack.c.h.b16 %v1526
        %v4014 = vunpack.c.l.b16 %v1527
        %v4015 = vunpack.c.h.b16 %v1527
        %v4016 = vunpack.c.l.b16 %v1528
        %v4017 = vunpack.c.l.b16 %v1529
        %v4018 = vunpack.c.h.b16 %v1529
        %v4019 = vunpack.c.l.b16 %v1530
        %v4020 = vunpack.c.h.b16 %v1530
        %v4021 = vunpack.c.l.b16 %v1531
        %v4022 = vunpack.c.h.b16 %v1531
        %v4023 = vunpack.c.l.b16 %v1532
        %v4024 = vunpack.c.h.b16 %v1532
        %v4025 = vunpack.c.l.b16 %v1533
        %v4026 = vunpack.c.h.b16 %v1533
        %v4027 = vunpack.c.l.b16 %v1534
        %v4028 = vunpack.c.h.b16 %v1534
        %v4029 = vunpack.c.l.b16 %v1535
        %v4030 = vunpack.c.l.b16 %v1536
        %v4031 = vunpack.c.h.b16 %v1536
        %v4032 = vunpack.c.l.b16 %v1537
        %v4033 = vunpack.c.h.b16 %v1537
        %v4034 = vunpack.c.l.b16 %v1538
        %v4035 = vunpack.c.h.b16 %v1538
        %v4036 = vunpack.c.l.b16 %v1539
        %v4037 = vunpack.c.h.b16 %v1539
        %v4038 = vunpack.c.l.b16 %v1540
        %v4039 = vunpack.c.h.b16 %v1540
        %v4040 = vunpack.c.l.b16 %v1541
        %v4041 = vunpack.c.h.b16 %v1541
        %v4042 = vunpack.c.l.b16 %v1542
        %v4043 = vunpack.c.l.b16 %v1543
        %v4044 = vunpack.c.h.b16 %v1543
        %v4045 = vunpack.c.l.b16 %v1544
        %v4046 = vunpack.c.h.b16 %v1544
        %v4047 = vunpack.c.l.b16 %v1545
        %v4048 = vunpack.c.h.b16 %v1545
        %v4049 = vunpack.c.l.b16 %v1546
        %v4050 = vunpack.c.h.b16 %v1546
        %v4051 = vunpack.c.l.b16 %v1547
        %v4052 = vunpack.c.h.b16 %v1547
        %v4053 = vunpack.c.l.b16 %v1548
        %v4054 = vunpack.c.h.b16 %v1548
        %v4055 = vunpack.c.l.b16 %v1549
        %v4056 = vunpack.c.l.b16 %v1550
        %v4057 = vunpack.c.h.b16 %v1550
        %v4058 = vunpack.c.l.b16 %v1551
        %v4059 = vunpack.c.h.b16 %v1551
        %v4060 = vunpack.c.l.b16 %v1552
        %v4061 = vunpack.c.h.b16 %v1552
        %v4062 = vunpack.c.l.b16 %v1553
        %v4063 = vunpack.c.h.b16 %v1553
        %v4064 = vunpack.c.l.b16 %v1554
        %v4065 = vunpack.c.h.b16 %v1554
        %v4066 = vunpack.c.l.b16 %v1555
        %v4067 = vunpack.c.h.b16 %v1555
        %v4068 = vunpack.c.l.b16 %v1556
        %v4069 = vunpack.c.l.b16 %v1557
        %v4070 = vunpack.c.h.b16 %v1557
        %v4071 = vunpack.c.l.b16 %v1558
        %v4072 = vunpack.c.h.b16 %v1558
        %v4073 = vunpack.c.l.b16 %v1559
        %v4074 = vunpack.c.h.b16 %v1559
        %v4075 = vunpack.c.l.b16 %v1560
        %v4076 = vunpack.c.h.b16 %v1560
        %v4077 = vunpack.c.l.b16 %v1561
        %v4078 = vunpack.c.h.b16 %v1561
        %v4079 = vunpack.c.l.b16 %v1562
        %v4080 = vunpack.c.h.b16 %v1562
        %v4081 = vunpack.c.l.b16 %v1563
        %v4082 = vunpack.c.l.b16 %v1564
        %v4083 = vunpack.c.h.b16 %v1564
        %v4084 = vunpack.c.l.b16 %v1565
        %v4085 = vunpack.c.h.b16 %v1565
        %v4086 = vunpack.c.l.b16 %v1566
        %v4087 = vunpack.c.h.b16 %v1566
        %v4088 = vunpack.c.l.b16 %v1567
        %v4089 = vunpack.c.h.b16 %v1567
        %v4090 = vunpack.c.l.b16 %v1568
        %v4091 = vunpack.c.h.b16 %v1568
        %v4092 = vunpack.c.l.b16 %v1569
        %v4093 = vunpack.c.h.b16 %v1569
        %v4094 = vunpack.c.l.b16 %v1570
        %v4095 = vunpack.c.l.b16 %v1571
        %v4096 = vunpack.c.h.b16 %v1571
        %v4097 = vunpack.c.l.b16 %v1572
        %v4098 = vunpack.c.h.b16 %v1572
        %v4099 = vunpack.c.l.b16 %v1573
        %v4100 = vunpack.c.h.b16 %v1573
        %v4101 = vunpack.c.l.b16 %v1574
        %v4102 = vunpack.c.h.b16 %v1574
        %v4103 = vunpack.c.l.b16 %v1575
        %v4104 = vunpack.c.h.b16 %v1575
        %v4105 = vunpack.c.l.b16 %v1576
        %v4106 = vunpack.c.h.b16 %v1576
        %v4107 = vunpack.c.l.b16 %v1577
        %v4108 = vunpack.c.l.b16 %v1578
        %v4109 = vunpack.c.h.b16 %v1578
        %v4110 = vunpack.c.l.b16 %v1579
        %v4111 = vunpack.c.h.b16 %v1579
        %v4112 = vunpack.c.l.b16 %v1580
        %v4113 = vunpack.c.h.b16 %v1580
        %v4114 = vunpack.c.l.b16 %v1581
        %v4115 = vunpack.c.h.b16 %v1581
        %v4116 = vunpack.c.l.b16 %v1582
        %v4117 = vunpack.c.h.b16 %v1582
        %v4118 = vunpack.c.l.b16 %v1583
        %v4119 = vunpack.c.h.b16 %v1583
        %v4120 = vunpack.c.l.b16 %v1584
        %v4121 = vunpack.c.l.b16 %v1585
        %v4122 = vunpack.c.h.b16 %v1585
        %v4123 = vunpack.c.l.b16 %v1586
        %v4124 = vunpack.c.h.b16 %v1586
        %v4125 = vunpack.c.l.b16 %v1587
        %v4126 = vunpack.c.h.b16 %v1587
        %v4127 = vunpack.c.l.b16 %v1588
        %v4128 = vunpack.c.h.b16 %v1588
        %v4129 = vunpack.c.l.b16 %v1589
        %v4130 = vunpack.c.h.b16 %v1589
        %v4131 = vunpack.c.l.b16 %v1590
        %v4132 = vunpack.c.h.b16 %v1590
        %v4133 = vunpack.c.l.b16 %v1591
        %v4134 = vunpack.c.l.b16 %v1592
        %v4135 = vunpack.c.h.b16 %v1592
        %v4136 = vunpack.c.l.b16 %v1593
        %v4137 = vunpack.c.h.b16 %v1593
        %v4138 = vunpack.c.l.b16 %v1594
        %v4139 = vunpack.c.h.b16 %v1594
        %v4140 = vunpack.c.l.b16 %v1595
        %v4141 = vunpack.c.h.b16 %v1595
        %v4142 = vunpack.c.l.b16 %v1596
        %v4143 = vunpack.c.h.b16 %v1596
        %v4144 = vunpack.c.l.b16 %v1597
        %v4145 = vunpack.c.h.b16 %v1597
        %v4146 = vunpack.c.l.b16 %v1598
        %v4147 = vunpack.c.l.b16 %v1599
        %v4148 = vunpack.c.h.b16 %v1599
        %v4149 = vunpack.c.l.b16 %v1600
        %v4150 = vunpack.c.h.b16 %v1600
        %v4151 = vunpack.c.l.b16 %v1601
        %v4152 = vunpack.c.h.b16 %v1601
        %v4153 = vunpack.c.l.b16 %v1602
        %v4154 = vunpack.c.h.b16 %v1602
        %v4155 = vunpack.c.l.b16 %v1603
        %v4156 = vunpack.c.h.b16 %v1603
        %v4157 = vunpack.c.l.b16 %v1604
        %v4158 = vunpack.c.h.b16 %v1604
        %v4159 = vunpack.c.l.b16 %v1605
        %v4160 = vunpack.c.l.b16 %v1606
        %v4161 = vunpack.c.h.b16 %v1606
        %v4162 = vunpack.c.l.b16 %v1607
        %v4163 = vunpack.c.h.b16 %v1607
        %v4164 = vunpack.c.l.b16 %v1608
        %v4165 = vunpack.c.h.b16 %v1608
        %v4166 = vunpack.c.l.b16 %v1609
        %v4167 = vunpack.c.h.b16 %v1609
        %v4168 = vunpack.c.l.b16 %v1610
        %v4169 = vunpack.c.h.b16 %v1610
        %v4170 = vunpack.c.l.b16 %v1611
        %v4171 = vunpack.c.h.b16 %v1611
        %v4172 = vunpack.c.l.b16 %v1612
        %v4173 = vpack.c.b16 %v2522, %v2509
        %v4174 = vpack.c.b16 %v2523, %v2510
        %v4175 = vpack.c.b16 %v2524, %v2511
        %v4176 = vpack.c.b16 %v2525, %v2512
        %v4177 = vpack.c.b16 %v2526, %v2513
        %v4178 = vpack.c.b16 %v2527, %v2514
        %v4179 = vpack.c.b16 %v2528, %v2515
        %v4180 = vpack.c.b16 %v2529, %v2516
        %v4181 = vpack.c.b16 %v2530, %v2517
        %v4182 = vpack.c.b16 %v2531, %v2518
        %v4183 = vpack.c.b16 %v2532, %v2519
        %v4184 = vpack.c.b16 %v2533, %v2520
        %v4185 = vpack.c.b16 %v2534, %v2521
        %v4186 = vpack.c.b16 %v2548, %v2535
        %v4187 = vpack.c.b16 %v2549, %v2536
        %v4188 = vpack.c.b16 %v2550, %v2537
        %v4189 = vpack.c.b16 %v2551, %v2538
        %v4190 = vpack.c.b16 %v2552, %v2539
        %v4191 = vpack.c.b16 %v2553, %v2540
        %v4192 = vpack.c.b16 %v2554, %v2541
        %v4193 = vpack.c.b16 %v2555, %v2542
        %v4194 = vpack.c.b16 %v2556, %v2543
        %v4195 = vpack.c.b16 %v2557, %v2544
        %v4196 = vpack.c.b16 %v2558, %v2545
        %v4197 = vpack.c.b16 %v2559, %v2546
        %v4198 = vpack.c.b16 %v2560, %v2547
        %v4199 = vpack.c.b16 %v2574, %v2561
        %v4200 = vpack.c.b16 %v2575, %v2562
        %v4201 = vpack.c.b16 %v2576, %v2563
        %v4202 = vpack.c.b16 %v2577, %v2564
        %v4203 = vpack.c.b16 %v2578, %v2565
        %v4204 = vpack.c.b16 %v2579, %v2566
        %v4205 = vpack.c.b16 %v2580, %v2567
        %v4206 = vpack.c.b16 %v2581, %v2568
        %v4207 = vpack.c.b16 %v2582, %v2569
        %v4208 = vpack.c.b16 %v2583, %v2570
        %v4209 = vpack.c.b16 %v2584, %v2571
        %v4210 = vpack.c.b16 %v2585, %v2572
        %v4211 = vpack.c.b16 %v2586, %v2573
        %v4212 = vpack.c.b16 %v2600, %v2587
        %v4213 = vpack.c.b16 %v2601, %v2588
        %v4214 = vpack.c.b16 %v2602, %v2589
        %v4215 = vpack.c.b16 %v2603, %v2590
        %v4216 = vpack.c.b16 %v2604, %v2591
        %v4217 = vpack.c.b16 %v2605, %v2592
        %v4218 = vpack.c.b16 %v2606, %v2593
        %v4219 = vpack.c.b16 %v2607, %v2594
        %v4220 = vpack.c.b16 %v2608, %v2595
        %v4221 = vpack.c.b16 %v2609, %v2596
        %v4222 = vpack.c.b16 %v2610, %v2597
        %v4223 = vpack.c.b16 %v2611, %v2598
        %v4224 = vpack.c.b16 %v2612, %v2599
        %v4225 = vpack.c.b16 %v2626, %v2613
        %v4226 = vpack.c.b16 %v2627, %v2614
        %v4227 = vpack.c.b16 %v2628, %v2615
        %v4228 = vpack.c.b16 %v2629, %v2616
        %v4229 = vpack.c.b16 %v2630, %v2617
        %v4230 = vpack.c.b16 %v2631, %v2618
        %v4231 = vpack.c.b16 %v2632, %v2619
        %v4232 = vpack.c.b16 %v2633, %v2620
        %v4233 = vpack.c.b16 %v2634, %v2621
        %v4234 = vpack.c.b16 %v2635, %v2622
        %v4235 = vpack.c.b16 %v2636, %v2623
        %v4236 = vpack.c.b16 %v2637, %v2624
        %v4237 = vpack.c.b16 %v2638, %v2625
        %v4238 = vpack.c.b16 %v2652, %v2639
        %v4239 = vpack.c.b16 %v2653, %v2640
        %v4240 = vpack.c.b16 %v2654, %v2641
        %v4241 = vpack.c.b16 %v2655, %v2642
        %v4242 = vpack.c.b16 %v2656, %v2643
        %v4243 = vpack.c.b16 %v2657, %v2644
        %v4244 = vpack.c.b16 %v2658, %v2645
        %v4245 = vpack.c.b16 %v2659, %v2646
        %v4246 = vpack.c.b16 %v2660, %v2647
        %v4247 = vpack.c.b16 %v2661, %v2648
        %v4248 = vpack.c.b16 %v2662, %v2649
        %v4249 = vpack.c.b16 %v2663, %v2650
        %v4250 = vpack.c.b16 %v2664, %v2651
        %v4251 = vpack.c.b16 %v2678, %v2665
        %v4252 = vpack.c.b16 %v2679, %v2666
        %v4253 = vpack.c.b16 %v2680, %v2667
        %v4254 = vpack.c.b16 %v2681, %v2668
        %v4255 = vpack.c.b16 %v2682, %v2669
        %v4256 = vpack.c.b16 %v2683, %v2670
        %v4257 = vpack.c.b16 %v2684, %v2671
        %v4258 = vpack.c.b16 %v2685, %v2672
        %v4259 = vpack.c.b16 %v2686, %v2673
        %v4260 = vpack.c.b16 %v2687, %v2674
        %v4261 = vpack.c.b16 %v2688, %v2675
        %v4262 = vpack.c.b16 %v2689, %v2676
        %v4263 = vpack.c.b16 %v2690, %v2677
        %v4264 = vpack.c.b16 %v2704, %v2691
        %v4265 = vpack.c.b16 %v2705, %v2692
        %v4266 = vpack.c.b16 %v2706, %v2693
        %v4267 = vpack.c.b16 %v2707, %v2694
        %v4268 = vpack.c.b16 %v2708, %v2695
        %v4269 = vpack.c.b16 %v2709, %v2696
        %v4270 = vpack.c.b16 %v2710, %v2697
        %v4271 = vpack.c.b16 %v2711, %v2698
        %v4272 = vpack.c.b16 %v2712, %v2699
        %v4273 = vpack.c.b16 %v2713, %v2700
        %v4274 = vpack.c.b16 %v2714, %v2701
        %v4275 = vpack.c.b16 %v2715, %v2702
        %v4276 = vpack.c.b16 %v2716, %v2703
        %v4277 = vpack.c.b16 %v2730, %v2717
        %v4278 = vpack.c.b16 %v2731, %v2718
        %v4279 = vpack.c.b16 %v2732, %v2719
        %v4280 = vpack.c.b16 %v2733, %v2720
        %v4281 = vpack.c.b16 %v2734, %v2721
        %v4282 = vpack.c.b16 %v2735, %v2722
        %v4283 = vpack.c.b16 %v2736, %v2723
        %v4284 = vpack.c.b16 %v2737, %v2724
        %v4285 = vpack.c.b16 %v2738, %v2725
        %v4286 = vpack.c.b16 %v2739, %v2726
        %v4287 = vpack.c.b16 %v2740, %v2727
        %v4288 = vpack.c.b16 %v2741, %v2728
        %v4289 = vpack.c.b16 %v2742, %v2729
        %v4290 = vpack.c.b16 %v2756, %v2743
        %v4291 = vpack.c.b16 %v2757, %v2744
        %v4292 = vpack.c.b16 %v2758, %v2745
        %v4293 = vpack.c.b16 %v2759, %v2746
        %v4294 = vpack.c.b16 %v2760, %v2747
        %v4295 = vpack.c.b16 %v2761, %v2748
        %v4296 = vpack.c.b16 %v2762, %v2749
        %v4297 = vpack.c.b16 %v2763, %v2750
        %v4298 = vpack.c.b16 %v2764, %v2751
        %v4299 = vpack.c.b16 %v2765, %v2752
        %v4300 = vpack.c.b16 %v2766, %v2753
        %v4301 = vpack.c.b16 %v2767, %v2754
        %v4302 = vpack.c.b16 %v2768, %v2755
        %v4303 = vpack.c.b16 %v2782, %v2769
        %v4304 = vpack.c.b16 %v2783, %v2770
        %v4305 = vpack.c.b16 %v2784, %v2771
        %v4306 = vpack.c.b16 %v2785, %v2772
        %v4307 = vpack.c.b16 %v2786, %v2773
        %v4308 = vpack.c.b16 %v2787, %v2774
        %v4309 = vpack.c.b16 %v2788, %v2775
        %v4310 = vpack.c.b16 %v2789, %v2776
        %v4311 = vpack.c.b16 %v2790, %v2777
        %v4312 = vpack.c.b16 %v2791, %v2778
        %v4313 = vpack.c.b16 %v2792, %v2779
        %v4314 = vpack.c.b16 %v2793, %v2780
        %v4315 = vpack.c.b16 %v2794, %v2781
        %v4316 = vpack.c.b16 %v2808, %v2795
        %v4317 = vpack.c.b16 %v2809, %v2796
        %v4318 = vpack.c.b16 %v2810, %v2797
        %v4319 = vpack.c.b16 %v2811, %v2798
        %v4320 = vpack.c.b16 %v2812, %v2799
        %v4321 = vpack.c.b16 %v2813, %v2800
        %v4322 = vpack.c.b16 %v2814, %v2801
        %v4323 = vpack.c.b16 %v2815, %v2802
        %v4324 = vpack.c.b16 %v2816, %v2803
        %v4325 = vpack.c.b16 %v2817, %v2804
        %v4326 = vpack.c.b16 %v2818, %v2805
        %v4327 = vpack.c.b16 %v2819, %v2806
        %v4328 = vpack.c.b16 %v2820, %v2807
        %v4329 = vpack.c.b16 %v2834, %v2821
        %v4330 = vpack.c.b16 %v2835, %v2822
        %v4331 = vpack.c.b16 %v2836, %v2823
        %v4332 = vpack.c.b16 %v2837, %v2824
        %v4333 = vpack.c.b16 %v2838, %v2825
        %v4334 = vpack.c.b16 %v2839, %v2826
        %v4335 = vpack.c.b16 %v2840, %v2827
        %v4336 = vpack.c.b16 %v2841, %v2828
        %v4337 = vpack.c.b16 %v2842, %v2829
        %v4338 = vpack.c.b16 %v2843, %v2830
        %v4339 = vpack.c.b16 %v2844, %v2831
        %v4340 = vpack.c.b16 %v2845, %v2832
        %v4341 = vpack.c.b16 %v2846, %v2833
        %v4342 = vpack.c.b16 %v2860, %v2847
        %v4343 = vpack.c.b16 %v2861, %v2848
        %v4344 = vpack.c.b16 %v2862, %v2849
        %v4345 = vpack.c.b16 %v2863, %v2850
        %v4346 = vpack.c.b16 %v2864, %v2851
        %v4347 = vpack.c.b16 %v2865, %v2852
        %v4348 = vpack.c.b16 %v2866, %v2853
        %v4349 = vpack.c.b16 %v2867, %v2854
        %v4350 = vpack.c.b16 %v2868, %v2855
        %v4351 = vpack.c.b16 %v2869, %v2856
        %v4352 = vpack.c.b16 %v2870, %v2857
        %v4353 = vpack.c.b16 %v2871, %v2858
        %v4354 = vpack.c.b16 %v2872, %v2859
        %v4355 = vpack.c.b16 %v2886, %v2873
        %v4356 = vpack.c.b16 %v2887, %v2874
        %v4357 = vpack.c.b16 %v2888, %v2875
        %v4358 = vpack.c.b16 %v2889, %v2876
        %v4359 = vpack.c.b16 %v2890, %v2877
        %v4360 = vpack.c.b16 %v2891, %v2878
        %v4361 = vpack.c.b16 %v2892, %v2879
        %v4362 = vpack.c.b16 %v2893, %v2880
        %v4363 = vpack.c.b16 %v2894, %v2881
        %v4364 = vpack.c.b16 %v2895, %v2882
        %v4365 = vpack.c.b16 %v2896, %v2883
        %v4366 = vpack.c.b16 %v2897, %v2884
        %v4367 = vpack.c.b16 %v2898, %v2885
        %v4368 = vpack.c.b16 %v2912, %v2899
        %v4369 = vpack.c.b16 %v2913, %v2900
        %v4370 = vpack.c.b16 %v2914, %v2901
        %v4371 = vpack.c.b16 %v2915, %v2902
        %v4372 = vpack.c.b16 %v2916, %v2903
        %v4373 = vpack.c.b16 %v2917, %v2904
        %v4374 = vpack.c.b16 %v2918, %v2905
        %v4375 = vpack.c.b16 %v2919, %v2906
        %v4376 = vpack.c.b16 %v2920, %v2907
        %v4377 = vpack.c.b16 %v2921, %v2908
        %v4378 = vpack.c.b16 %v2922, %v2909
        %v4379 = vpack.c.b16 %v2923, %v2910
        %v4380 = vpack.c.b16 %v2924, %v2911
        %v4381 = vpack.c.b16 %v2938, %v2925
        %v4382 = vpack.c.b16 %v2939, %v2926
        %v4383 = vpack.c.b16 %v2940, %v2927
        %v4384 = vpack.c.b16 %v2941, %v2928
        %v4385 = vpack.c.b16 %v2942, %v2929
        %v4386 = vpack.c.b16 %v2943, %v2930
        %v4387 = vpack.c.b16 %v2944, %v2931
        %v4388 = vpack.c.b16 %v2945, %v2932
        %v4389 = vpack.c.b16 %v2946, %v2933
        %v4390 = vpack.c.b16 %v2947, %v2934
        %v4391 = vpack.c.b16 %v2948, %v2935
        %v4392 = vpack.c.b16 %v2949, %v2936
        %v4393 = vpack.c.b16 %v2950, %v2937
        %v4394 = vpack.c.b16 %v2964, %v2951
        %v4395 = vpack.c.b16 %v2965, %v2952
        %v4396 = vpack.c.b16 %v2966, %v2953
        %v4397 = vpack.c.b16 %v2967, %v2954
        %v4398 = vpack.c.b16 %v2968, %v2955
        %v4399 = vpack.c.b16 %v2969, %v2956
        %v4400 = vpack.c.b16 %v2970, %v2957
        %v4401 = vpack.c.b16 %v2971, %v2958
        %v4402 = vpack.c.b16 %v2972, %v2959
        %v4403 = vpack.c.b16 %v2973, %v2960
        %v4404 = vpack.c.b16 %v2974, %v2961
        %v4405 = vpack.c.b16 %v2975, %v2962
        %v4406 = vpack.c.b16 %v2976, %v2963
        %v4407 = vpack.c.b16 %v2990, %v2977
        %v4408 = vpack.c.b16 %v2991, %v2978
        %v4409 = vpack.c.b16 %v2992, %v2979
        %v4410 = vpack.c.b16 %v2993, %v2980
        %v4411 = vpack.c.b16 %v2994, %v2981
        %v4412 = vpack.c.b16 %v2995, %v2982
        %v4413 = vpack.c.b16 %v2996, %v2983
        %v4414 = vpack.c.b16 %v2997, %v2984
        %v4415 = vpack.c.b16 %v2998, %v2985
        %v4416 = vpack.c.b16 %v2999, %v2986
        %v4417 = vpack.c.b16 %v3000, %v2987
        %v4418 = vpack.c.b16 %v3001, %v2988
        %v4419 = vpack.c.b16 %v3002, %v2989
        %v4420 = vpack.c.b16 %v3016, %v3003
        %v4421 = vpack.c.b16 %v3017, %v3004
        %v4422 = vpack.c.b16 %v3018, %v3005
        %v4423 = vpack.c.b16 %v3019, %v3006
        %v4424 = vpack.c.b16 %v3020, %v3007
        %v4425 = vpack.c.b16 %v3021, %v3008
        %v4426 = vpack.c.b16 %v3022, %v3009
        %v4427 = vpack.c.b16 %v3023, %v3010
        %v4428 = vpack.c.b16 %v3024, %v3011
        %v4429 = vpack.c.b16 %v3025, %v3012
        %v4430 = vpack.c.b16 %v3026, %v3013
        %v4431 = vpack.c.b16 %v3027, %v3014
        %v4432 = vpack.c.b16 %v3028, %v3015
        %v4433 = vpack.c.b16 %v3042, %v3029
        %v4434 = vpack.c.b16 %v3043, %v3030
        %v4435 = vpack.c.b16 %v3044, %v3031
        %v4436 = vpack.c.b16 %v3045, %v3032
        %v4437 = vpack.c.b16 %v3046, %v3033
        %v4438 = vpack.c.b16 %v3047, %v3034
        %v4439 = vpack.c.b16 %v3048, %v3035
        %v4440 = vpack.c.b16 %v3049, %v3036
        %v4441 = vpack.c.b16 %v3050, %v3037
        %v4442 = vpack.c.b16 %v3051, %v3038
        %v4443 = vpack.c.b16 %v3052, %v3039
        %v4444 = vpack.c.b16 %v3053, %v3040
        %v4445 = vpack.c.b16 %v3054, %v3041
        %v4446 = vpack.c.b16 %v3068, %v3055
        %v4447 = vpack.c.b16 %v3069, %v3056
        %v4448 = vpack.c.b16 %v3070, %v3057
        %v4449 = vpack.c.b16 %v3071, %v3058
        %v4450 = vpack.c.b16 %v3072, %v3059
        %v4451 = vpack.c.b16 %v3073, %v3060
        %v4452 = vpack.c.b16 %v3074, %v3061
        %v4453 = vpack.c.b16 %v3075, %v3062
        %v4454 = vpack.c.b16 %v3076, %v3063
        %v4455 = vpack.c.b16 %v3077, %v3064
        %v4456 = vpack.c.b16 %v3078, %v3065
        %v4457 = vpack.c.b16 %v3079, %v3066
        %v4458 = vpack.c.b16 %v3080, %v3067
        %v4459 = vpack.c.b16 %v3094, %v3081
        %v4460 = vpack.c.b16 %v3095, %v3082
        %v4461 = vpack.c.b16 %v3096, %v3083
        %v4462 = vpack.c.b16 %v3097, %v3084
        %v4463 = vpack.c.b16 %v3098, %v3085
        %v4464 = vpack.c.b16 %v3099, %v3086
        %v4465 = vpack.c.b16 %v3100, %v3087
        %v4466 = vpack.c.b16 %v3101, %v3088
        %v4467 = vpack.c.b16 %v3102, %v3089
        %v4468 = vpack.c.b16 %v3103, %v3090
        %v4469 = vpack.c.b16 %v3104, %v3091
        %v4470 = vpack.c.b16 %v3105, %v3092
        %v4471 = vpack.c.b16 %v3106, %v3093
        %v4472 = vpack.c.b16 %v3120, %v3107
        %v4473 = vpack.c.b16 %v3121, %v3108
        %v4474 = vpack.c.b16 %v3122, %v3109
        %v4475 = vpack.c.b16 %v3123, %v3110
        %v4476 = vpack.c.b16 %v3124, %v3111
        %v4477 = vpack.c.b16 %v3125, %v3112
        %v4478 = vpack.c.b16 %v3126, %v3113
        %v4479 = vpack.c.b16 %v3127, %v3114
        %v4480 = vpack.c.b16 %v3128, %v3115
        %v4481 = vpack.c.b16 %v3129, %v3116
        %v4482 = vpack.c.b16 %v3130, %v3117
        %v4483 = vpack.c.b16 %v3131, %v3118
        %v4484 = vpack.c.b16 %v3132, %v3119
        %v4485 = vpack.c.b16 %v3146, %v3133
        %v4486 = vpack.c.b16 %v3147, %v3134
        %v4487 = vpack.c.b16 %v3148, %v3135
        %v4488 = vpack.c.b16 %v3149, %v3136
        %v4489 = vpack.c.b16 %v3150, %v3137
        %v4490 = vpack.c.b16 %v3151, %v3138
        %v4491 = vpack.c.b16 %v3152, %v3139
        %v4492 = vpack.c.b16 %v3153, %v3140
        %v4493 = vpack.c.b16 %v3154, %v3141
        %v4494 = vpack.c.b16 %v3155, %v3142
        %v4495 = vpack.c.b16 %v3156, %v3143
        %v4496 = vpack.c.b16 %v3157, %v3144
        %v4497 = vpack.c.b16 %v3158, %v3145
        %v4498 = vpack.c.b16 %v3172, %v3159
        %v4499 = vpack.c.b16 %v3173, %v3160
        %v4500 = vpack.c.b16 %v3174, %v3161
        %v4501 = vpack.c.b16 %v3175, %v3162
        %v4502 = vpack.c.b16 %v3176, %v3163
        %v4503 = vpack.c.b16 %v3177, %v3164
        %v4504 = vpack.c.b16 %v3178, %v3165
        %v4505 = vpack.c.b16 %v3179, %v3166
        %v4506 = vpack.c.b16 %v3180, %v3167
        %v4507 = vpack.c.b16 %v3181, %v3168
        %v4508 = vpack.c.b16 %v3182, %v3169
        %v4509 = vpack.c.b16 %v3183, %v3170
        %v4510 = vpack.c.b16 %v3184, %v3171
        %v4511 = vpack.c.b16 %v3198, %v3185
        %v4512 = vpack.c.b16 %v3199, %v3186
        %v4513 = vpack.c.b16 %v3200, %v3187
        %v4514 = vpack.c.b16 %v3201, %v3188
        %v4515 = vpack.c.b16 %v3202, %v3189
        %v4516 = vpack.c.b16 %v3203, %v3190
        %v4517 = vpack.c.b16 %v3204, %v3191
        %v4518 = vpack.c.b16 %v3205, %v3192
        %v4519 = vpack.c.b16 %v3206, %v3193
        %v4520 = vpack.c.b16 %v3207, %v3194
        %v4521 = vpack.c.b16 %v3208, %v3195
        %v4522 = vpack.c.b16 %v3209, %v3196
        %v4523 = vpack.c.b16 %v3210, %v3197
        %v4524 = vpack.c.b16 %v3224, %v3211
        %v4525 = vpack.c.b16 %v3225, %v3212
        %v4526 = vpack.c.b16 %v3226, %v3213
        %v4527 = vpack.c.b16 %v3227, %v3214
        %v4528 = vpack.c.b16 %v3228, %v3215
        %v4529 = vpack.c.b16 %v3229, %v3216
        %v4530 = vpack.c.b16 %v3230, %v3217
        %v4531 = vpack.c.b16 %v3231, %v3218
        %v4532 = vpack.c.b16 %v3232, %v3219
        %v4533 = vpack.c.b16 %v3233, %v3220
        %v4534 = vpack.c.b16 %v3234, %v3221
        %v4535 = vpack.c.b16 %v3235, %v3222
        %v4536 = vpack.c.b16 %v3236, %v3223
        %v4537 = vpack.c.b16 %v3250, %v3237
        %v4538 = vpack.c.b16 %v3251, %v3238
        %v4539 = vpack.c.b16 %v3252, %v3239
        %v4540 = vpack.c.b16 %v3253, %v3240
        %v4541 = vpack.c.b16 %v3254, %v3241
        %v4542 = vpack.c.b16 %v3255, %v3242
        %v4543 = vpack.c.b16 %v3256, %v3243
        %v4544 = vpack.c.b16 %v3257, %v3244
        %v4545 = vpack.c.b16 %v3258, %v3245
        %v4546 = vpack.c.b16 %v3259, %v3246
        %v4547 = vpack.c.b16 %v3260, %v3247
        %v4548 = vpack.c.b16 %v3261, %v3248
        %v4549 = vpack.c.b16 %v3262, %v3249
        %v4550 = vpack.c.b16 %v3276, %v3263
        %v4551 = vpack.c.b16 %v3277, %v3264
        %v4552 = vpack.c.b16 %v3278, %v3265
        %v4553 = vpack.c.b16 %v3279, %v3266
        %v4554 = vpack.c.b16 %v3280, %v3267
        %v4555 = vpack.c.b16 %v3281, %v3268
        %v4556 = vpack.c.b16 %v3282, %v3269
        %v4557 = vpack.c.b16 %v3283, %v3270
        %v4558 = vpack.c.b16 %v3284, %v3271
        %v4559 = vpack.c.b16 %v3285, %v3272
        %v4560 = vpack.c.b16 %v3286, %v3273
        %v4561 = vpack.c.b16 %v3287, %v3274
        %v4562 = vpack.c.b16 %v3288, %v3275
        %v4563 = vpack.c.b16 %v3302, %v3289
        %v4564 = vpack.c.b16 %v3303, %v3290
        %v4565 = vpack.c.b16 %v3304, %v3291
        %v4566 = vpack.c.b16 %v3305, %v3292
        %v4567 = vpack.c.b16 %v3306, %v3293
        %v4568 = vpack.c.b16 %v3307, %v3294
        %v4569 = vpack.c.b16 %v3308, %v3295
        %v4570 = vpack.c.b16 %v3309, %v3296
        %v4571 = vpack.c.b16 %v3310, %v3297
        %v4572 = vpack.c.b16 %v3311, %v3298
        %v4573 = vpack.c.b16 %v3312, %v3299
        %v4574 = vpack.c.b16 %v3313, %v3300
        %v4575 = vpack.c.b16 %v3314, %v3301
        %v4576 = vpack.c.b16 %v3328, %v3315
        %v4577 = vpack.c.b16 %v3329, %v3316
        %v4578 = vpack.c.b16 %v3330, %v3317
        %v4579 = vpack.c.b16 %v3331, %v3318
        %v4580 = vpack.c.b16 %v3332, %v3319
        %v4581 = vpack.c.b16 %v3333, %v3320
        %v4582 = vpack.c.b16 %v3334, %v3321
        %v4583 = vpack.c.b16 %v3335, %v3322
        %v4584 = vpack.c.b16 %v3336, %v3323
        %v4585 = vpack.c.b16 %v3337, %v3324
        %v4586 = vpack.c.b16 %v3338, %v3325
        %v4587 = vpack.c.b16 %v3339, %v3326
        %v4588 = vpack.c.b16 %v3340, %v3327
        %v4589 = vpack.c.b16 %v3354, %v3341
        %v4590 = vpack.c.b16 %v3355, %v3342
        %v4591 = vpack.c.b16 %v3356, %v3343
        %v4592 = vpack.c.b16 %v3357, %v3344
        %v4593 = vpack.c.b16 %v3358, %v3345
        %v4594 = vpack.c.b16 %v3359, %v3346
        %v4595 = vpack.c.b16 %v3360, %v3347
        %v4596 = vpack.c.b16 %v3361, %v3348
        %v4597 = vpack.c.b16 %v3362, %v3349
        %v4598 = vpack.c.b16 %v3363, %v3350
        %v4599 = vpack.c.b16 %v3364, %v3351
        %v4600 = vpack.c.b16 %v3365, %v3352
        %v4601 = vpack.c.b16 %v3366, %v3353
        %v4602 = vpack.c.b16 %v3380, %v3367
        %v4603 = vpack.c.b16 %v3381, %v3368
        %v4604 = vpack.c.b16 %v3382, %v3369
        %v4605 = vpack.c.b16 %v3383, %v3370
        %v4606 = vpack.c.b16 %v3384, %v3371
        %v4607 = vpack.c.b16 %v3385, %v3372
        %v4608 = vpack.c.b16 %v3386, %v3373
        %v4609 = vpack.c.b16 %v3387, %v3374
        %v4610 = vpack.c.b16 %v3388, %v3375
        %v4611 = vpack.c.b16 %v3389, %v3376
        %v4612 = vpack.c.b16 %v3390, %v3377
        %v4613 = vpack.c.b16 %v3391, %v3378
        %v4614 = vpack.c.b16 %v3392, %v3379
        %v4615 = vpack.c.b16 %v3406, %v3393
        %v4616 = vpack.c.b16 %v3407, %v3394
        %v4617 = vpack.c.b16 %v3408, %v3395
        %v4618 = vpack.c.b16 %v3409, %v3396
        %v4619 = vpack.c.b16 %v3410, %v3397
        %v4620 = vpack.c.b16 %v3411, %v3398
        %v4621 = vpack.c.b16 %v3412, %v3399
        %v4622 = vpack.c.b16 %v3413, %v3400
        %v4623 = vpack.c.b16 %v3414, %v3401
        %v4624 = vpack.c.b16 %v3415, %v3402
        %v4625 = vpack.c.b16 %v3416, %v3403
        %v4626 = vpack.c.b16 %v3417, %v3404
        %v4627 = vpack.c.b16 %v3418, %v3405
        %v4628 = vpack.c.b16 %v3432, %v3419
        %v4629 = vpack.c.b16 %v3433, %v3420
        %v4630 = vpack.c.b16 %v3434, %v3421
        %v4631 = vpack.c.b16 %v3435, %v3422
        %v4632 = vpack.c.b16 %v3436, %v3423
        %v4633 = vpack.c.b16 %v3437, %v3424
        %v4634 = vpack.c.b16 %v3438, %v3425
        %v4635 = vpack.c.b16 %v3439, %v3426
        %v4636 = vpack.c.b16 %v3440, %v3427
        %v4637 = vpack.c.b16 %v3441, %v3428
        %v4638 = vpack.c.b16 %v3442, %v3429
        %v4639 = vpack.c.b16 %v3443, %v3430
        %v4640 = vpack.c.b16 %v3444, %v3431
        %v4641 = vpack.c.b16 %v3458, %v3445
        %v4642 = vpack.c.b16 %v3459, %v3446
        %v4643 = vpack.c.b16 %v3460, %v3447
        %v4644 = vpack.c.b16 %v3461, %v3448
        %v4645 = vpack.c.b16 %v3462, %v3449
        %v4646 = vpack.c.b16 %v3463, %v3450
        %v4647 = vpack.c.b16 %v3464, %v3451
        %v4648 = vpack.c.b16 %v3465, %v3452
        %v4649 = vpack.c.b16 %v3466, %v3453
        %v4650 = vpack.c.b16 %v3467, %v3454
        %v4651 = vpack.c.b16 %v3468, %v3455
        %v4652 = vpack.c.b16 %v3469, %v3456
        %v4653 = vpack.c.b16 %v3470, %v3457
        %v4654 = vpack.c.b16 %v3484, %v3471
        %v4655 = vpack.c.b16 %v3485, %v3472
        %v4656 = vpack.c.b16 %v3486, %v3473
        %v4657 = vpack.c.b16 %v3487, %v3474
        %v4658 = vpack.c.b16 %v3488, %v3475
        %v4659 = vpack.c.b16 %v3489, %v3476
        %v4660 = vpack.c.b16 %v3490, %v3477
        %v4661 = vpack.c.b16 %v3491, %v3478
        %v4662 = vpack.c.b16 %v3492, %v3479
        %v4663 = vpack.c.b16 %v3493, %v3480
        %v4664 = vpack.c.b16 %v3494, %v3481
        %v4665 = vpack.c.b16 %v3495, %v3482
        %v4666 = vpack.c.b16 %v3496, %v3483
        %v4667 = vpack.c.b16 %v3510, %v3497
        %v4668 = vpack.c.b16 %v3511, %v3498
        %v4669 = vpack.c.b16 %v3512, %v3499
        %v4670 = vpack.c.b16 %v3513, %v3500
        %v4671 = vpack.c.b16 %v3514, %v3501
        %v4672 = vpack.c.b16 %v3515, %v3502
        %v4673 = vpack.c.b16 %v3516, %v3503
        %v4674 = vpack.c.b16 %v3517, %v3504
        %v4675 = vpack.c.b16 %v3518, %v3505
        %v4676 = vpack.c.b16 %v3519, %v3506
        %v4677 = vpack.c.b16 %v3520, %v3507
        %v4678 = vpack.c.b16 %v3521, %v3508
        %v4679 = vpack.c.b16 %v3522, %v3509
        %v4680 = vpack.c.b16 %v3536, %v3523
        %v4681 = vpack.c.b16 %v3537, %v3524
        %v4682 = vpack.c.b16 %v3538, %v3525
        %v4683 = vpack.c.b16 %v3539, %v3526
        %v4684 = vpack.c.b16 %v3540, %v3527
        %v4685 = vpack.c.b16 %v3541, %v3528
        %v4686 = vpack.c.b16 %v3542, %v3529
        %v4687 = vpack.c.b16 %v3543, %v3530
        %v4688 = vpack.c.b16 %v3544, %v3531
        %v4689 = vpack.c.b16 %v3545, %v3532
        %v4690 = vpack.c.b16 %v3546, %v3533
        %v4691 = vpack.c.b16 %v3547, %v3534
        %v4692 = vpack.c.b16 %v3548, %v3535
        %v4693 = vpack.c.b16 %v3562, %v3549
        %v4694 = vpack.c.b16 %v3563, %v3550
        %v4695 = vpack.c.b16 %v3564, %v3551
        %v4696 = vpack.c.b16 %v3565, %v3552
        %v4697 = vpack.c.b16 %v3566, %v3553
        %v4698 = vpack.c.b16 %v3567, %v3554
        %v4699 = vpack.c.b16 %v3568, %v3555
        %v4700 = vpack.c.b16 %v3569, %v3556
        %v4701 = vpack.c.b16 %v3570, %v3557
        %v4702 = vpack.c.b16 %v3571, %v3558
        %v4703 = vpack.c.b16 %v3572, %v3559
        %v4704 = vpack.c.b16 %v3573, %v3560
        %v4705 = vpack.c.b16 %v3574, %v3561
        %v4706 = vpack.c.b16 %v3588, %v3575
        %v4707 = vpack.c.b16 %v3589, %v3576
        %v4708 = vpack.c.b16 %v3590, %v3577
        %v4709 = vpack.c.b16 %v3591, %v3578
        %v4710 = vpack.c.b16 %v3592, %v3579
        %v4711 = vpack.c.b16 %v3593, %v3580
        %v4712 = vpack.c.b16 %v3594, %v3581
        %v4713 = vpack.c.b16 %v3595, %v3582
        %v4714 = vpack.c.b16 %v3596, %v3583
        %v4715 = vpack.c.b16 %v3597, %v3584
        %v4716 = vpack.c.b16 %v3598, %v3585
        %v4717 = vpack.c.b16 %v3599, %v3586
        %v4718 = vpack.c.b16 %v3600, %v3587
        %v4719 = vpack.c.b16 %v3614, %v3601
        %v4720 = vpack.c.b16 %v3615, %v3602
        %v4721 = vpack.c.b16 %v3616, %v3603
        %v4722 = vpack.c.b16 %v3617, %v3604
        %v4723 = vpack.c.b16 %v3618, %v3605
        %v4724 = vpack.c.b16 %v3619, %v3606
        %v4725 = vpack.c.b16 %v3620, %v3607
        %v4726 = vpack.c.b16 %v3621, %v3608
        %v4727 = vpack.c.b16 %v3622, %v3609
        %v4728 = vpack.c.b16 %v3623, %v3610
        %v4729 = vpack.c.b16 %v3624, %v3611
        %v4730 = vpack.c.b16 %v3625, %v3612
        %v4731 = vpack.c.b16 %v3626, %v3613
        %v4732 = vpack.c.b16 %v3640, %v3627
        %v4733 = vpack.c.b16 %v3641, %v3628
        %v4734 = vpack.c.b16 %v3642, %v3629
        %v4735 = vpack.c.b16 %v3643, %v3630
        %v4736 = vpack.c.b16 %v3644, %v3631
        %v4737 = vpack.c.b16 %v3645, %v3632
        %v4738 = vpack.c.b16 %v3646, %v3633
        %v4739 = vpack.c.b16 %v3647, %v3634
        %v4740 = vpack.c.b16 %v3648, %v3635
        %v4741 = vpack.c.b16 %v3649, %v3636
        %v4742 = vpack.c.b16 %v3650, %v3637
        %v4743 = vpack.c.b16 %v3651, %v3638
        %v4744 = vpack.c.b16 %v3652, %v3639
        %v4745 = vpack.c.b16 %v3666, %v3653
        %v4746 = vpack.c.b16 %v3667, %v3654
        %v4747 = vpack.c.b16 %v3668, %v3655
        %v4748 = vpack.c.b16 %v3669, %v3656
        %v4749 = vpack.c.b16 %v3670, %v3657
        %v4750 = vpack.c.b16 %v3671, %v3658
        %v4751 = vpack.c.b16 %v3672, %v3659
        %v4752 = vpack.c.b16 %v3673, %v3660
        %v4753 = vpack.c.b16 %v3674, %v3661
        %v4754 = vpack.c.b16 %v3675, %v3662
        %v4755 = vpack.c.b16 %v3676, %v3663
        %v4756 = vpack.c.b16 %v3677, %v3664
        %v4757 = vpack.c.b16 %v3678, %v3665
        %v4758 = vpack.c.b16 %v3692, %v3679
        %v4759 = vpack.c.b16 %v3693, %v3680
        %v4760 = vpack.c.b16 %v3694, %v3681
        %v4761 = vpack.c.b16 %v3695, %v3682
        %v4762 = vpack.c.b16 %v3696, %v3683
        %v4763 = vpack.c.b16 %v3697, %v3684
        %v4764 = vpack.c.b16 %v3698, %v3685
        %v4765 = vpack.c.b16 %v3699, %v3686
        %v4766 = vpack.c.b16 %v3700, %v3687
        %v4767 = vpack.c.b16 %v3701, %v3688
        %v4768 = vpack.c.b16 %v3702, %v3689
        %v4769 = vpack.c.b16 %v3703, %v3690
        %v4770 = vpack.c.b16 %v3704, %v3691
        %v4771 = vpack.c.b16 %v3718, %v3705
        %v4772 = vpack.c.b16 %v3719, %v3706
        %v4773 = vpack.c.b16 %v3720, %v3707
        %v4774 = vpack.c.b16 %v3721, %v3708
        %v4775 = vpack.c.b16 %v3722, %v3709
        %v4776 = vpack.c.b16 %v3723, %v3710
        %v4777 = vpack.c.b16 %v3724, %v3711
        %v4778 = vpack.c.b16 %v3725, %v3712
        %v4779 = vpack.c.b16 %v3726, %v3713
        %v4780 = vpack.c.b16 %v3727, %v3714
        %v4781 = vpack.c.b16 %v3728, %v3715
        %v4782 = vpack.c.b16 %v3729, %v3716
        %v4783 = vpack.c.b16 %v3730, %v3717
        %v4784 = vpack.c.b16 %v3744, %v3731
        %v4785 = vpack.c.b16 %v3745, %v3732
        %v4786 = vpack.c.b16 %v3746, %v3733
        %v4787 = vpack.c.b16 %v3747, %v3734
        %v4788 = vpack.c.b16 %v3748, %v3735
        %v4789 = vpack.c.b16 %v3749, %v3736
        %v4790 = vpack.c.b16 %v3750, %v3737
        %v4791 = vpack.c.b16 %v3751, %v3738
        %v4792 = vpack.c.b16 %v3752, %v3739
        %v4793 = vpack.c.b16 %v3753, %v3740
        %v4794 = vpack.c.b16 %v3754, %v3741
        %v4795 = vpack.c.b16 %v3755, %v3742
        %v4796 = vpack.c.b16 %v3756, %v3743
        %v4797 = vpack.c.b16 %v3770, %v3757
        %v4798 = vpack.c.b16 %v3771, %v3758
        %v4799 = vpack.c.b16 %v3772, %v3759
        %v4800 = vpack.c.b16 %v3773, %v3760
        %v4801 = vpack.c.b16 %v3774, %v3761
        %v4802 = vpack.c.b16 %v3775, %v3762
        %v4803 = vpack.c.b16 %v3776, %v3763
        %v4804 = vpack.c.b16 %v3777, %v3764
        %v4805 = vpack.c.b16 %v3778, %v3765
        %v4806 = vpack.c.b16 %v3779, %v3766
        %v4807 = vpack.c.b16 %v3780, %v3767
        %v4808 = vpack.c.b16 %v3781, %v3768
        %v4809 = vpack.c.b16 %v3782, %v3769
        %v4810 = vpack.c.b16 %v3796, %v3783
        %v4811 = vpack.c.b16 %v3797, %v3784
        %v4812 = vpack.c.b16 %v3798, %v3785
        %v4813 = vpack.c.b16 %v3799, %v3786
        %v4814 = vpack.c.b16 %v3800, %v3787
        %v4815 = vpack.c.b16 %v3801, %v3788
        %v4816 = vpack.c.b16 %v3802, %v3789
        %v4817 = vpack.c.b16 %v3803, %v3790
        %v4818 = vpack.c.b16 %v3804, %v3791
        %v4819 = vpack.c.b16 %v3805, %v3792
        %v4820 = vpack.c.b16 %v3806, %v3793
        %v4821 = vpack.c.b16 %v3807, %v3794
        %v4822 = vpack.c.b16 %v3808, %v3795
        %v4823 = vpack.c.b16 %v3822, %v3809
        %v4824 = vpack.c.b16 %v3823, %v3810
        %v4825 = vpack.c.b16 %v3824, %v3811
        %v4826 = vpack.c.b16 %v3825, %v3812
        %v4827 = vpack.c.b16 %v3826, %v3813
        %v4828 = vpack.c.b16 %v3827, %v3814
        %v4829 = vpack.c.b16 %v3828, %v3815
        %v4830 = vpack.c.b16 %v3829, %v3816
        %v4831 = vpack.c.b16 %v3830, %v3817
        %v4832 = vpack.c.b16 %v3831, %v3818
        %v4833 = vpack.c.b16 %v3832, %v3819
        %v4834 = vpack.c.b16 %v3833, %v3820
        %v4835 = vpack.c.b16 %v3834, %v3821
        %v4836 = vpack.c.b16 %v3848, %v3835
        %v4837 = vpack.c.b16 %v3849, %v3836
        %v4838 = vpack.c.b16 %v3850, %v3837
        %v4839 = vpack.c.b16 %v3851, %v3838
        %v4840 = vpack.c.b16 %v3852, %v3839
        %v4841 = vpack.c.b16 %v3853, %v3840
        %v4842 = vpack.c.b16 %v3854, %v3841
        %v4843 = vpack.c.b16 %v3855, %v3842
        %v4844 = vpack.c.b16 %v3856, %v3843
        %v4845 = vpack.c.b16 %v3857, %v3844
        %v4846 = vpack.c.b16 %v3858, %v3845
        %v4847 = vpack.c.b16 %v3859, %v3846
        %v4848 = vpack.c.b16 %v3860, %v3847
        %v4849 = vpack.c.b16 %v3874, %v3861
        %v4850 = vpack.c.b16 %v3875, %v3862
        %v4851 = vpack.c.b16 %v3876, %v3863
        %v4852 = vpack.c.b16 %v3877, %v3864
        %v4853 = vpack.c.b16 %v3878, %v3865
        %v4854 = vpack.c.b16 %v3879, %v3866
        %v4855 = vpack.c.b16 %v3880, %v3867
        %v4856 = vpack.c.b16 %v3881, %v3868
        %v4857 = vpack.c.b16 %v3882, %v3869
        %v4858 = vpack.c.b16 %v3883, %v3870
        %v4859 = vpack.c.b16 %v3884, %v3871
        %v4860 = vpack.c.b16 %v3885, %v3872
        %v4861 = vpack.c.b16 %v3886, %v3873
        %v4862 = vpack.c.b16 %v3900, %v3887
        %v4863 = vpack.c.b16 %v3901, %v3888
        %v4864 = vpack.c.b16 %v3902, %v3889
        %v4865 = vpack.c.b16 %v3903, %v3890
        %v4866 = vpack.c.b16 %v3904, %v3891
        %v4867 = vpack.c.b16 %v3905, %v3892
        %v4868 = vpack.c.b16 %v3906, %v3893
        %v4869 = vpack.c.b16 %v3907, %v3894
        %v4870 = vpack.c.b16 %v3908, %v3895
        %v4871 = vpack.c.b16 %v3909, %v3896
        %v4872 = vpack.c.b16 %v3910, %v3897
        %v4873 = vpack.c.b16 %v3911, %v3898
        %v4874 = vpack.c.b16 %v3912, %v3899
        %v4875 = vpack.c.b16 %v3926, %v3913
        %v4876 = vpack.c.b16 %v3927, %v3914
        %v4877 = vpack.c.b16 %v3928, %v3915
        %v4878 = vpack.c.b16 %v3929, %v3916
        %v4879 = vpack.c.b16 %v3930, %v3917
        %v4880 = vpack.c.b16 %v3931, %v3918
        %v4881 = vpack.c.b16 %v3932, %v3919
        %v4882 = vpack.c.b16 %v3933, %v3920
        %v4883 = vpack.c.b16 %v3934, %v3921
        %v4884 = vpack.c.b16 %v3935, %v3922
        %v4885 = vpack.c.b16 %v3936, %v3923
        %v4886 = vpack.c.b16 %v3937, %v3924
        %v4887 = vpack.c.b16 %v3938, %v3925
        %v4888 = vpack.c.b16 %v3952, %v3939
        %v4889 = vpack.c.b16 %v3953, %v3940
        %v4890 = vpack.c.b16 %v3954, %v3941
        %v4891 = vpack.c.b16 %v3955, %v3942
        %v4892 = vpack.c.b16 %v3956, %v3943
        %v4893 = vpack.c.b16 %v3957, %v3944
        %v4894 = vpack.c.b16 %v3958, %v3945
        %v4895 = vpack.c.b16 %v3959, %v3946
        %v4896 = vpack.c.b16 %v3960, %v3947
        %v4897 = vpack.c.b16 %v3961, %v3948
        %v4898 = vpack.c.b16 %v3962, %v3949
        %v4899 = vpack.c.b16 %v3963, %v3950
        %v4900 = vpack.c.b16 %v3964, %v3951
        %v4901 = vpack.c.b16 %v3978, %v3965
        %v4902 = vpack.c.b16 %v3979, %v3966
        %v4903 = vpack.c.b16 %v3980, %v3967
        %v4904 = vpack.c.b16 %v3981, %v3968
        %v4905 = vpack.c.b16 %v3982, %v3969
        %v4906 = vpack.c.b16 %v3983, %v3970
        %v4907 = vpack.c.b16 %v3984, %v3971
        %v4908 = vpack.c.b16 %v3985, %v3972
        %v4909 = vpack.c.b16 %v3986, %v3973
        %v4910 = vpack.c.b16 %v3987, %v3974
        %v4911 = vpack.c.b16 %v3988, %v3975
        %v4912 = vpack.c.b16 %v3989, %v3976
        %v4913 = vpack.c.b16 %v3990, %v3977
        %v4914 = vpack.c.b16 %v4004, %v3991
        %v4915 = vpack.c.b16 %v4005, %v3992
        %v4916 = vpack.c.b16 %v4006, %v3993
        %v4917 = vpack.c.b16 %v4007, %v3994
        %v4918 = vpack.c.b16 %v4008, %v3995
        %v4919 = vpack.c.b16 %v4009, %v3996
        %v4920 = vpack.c.b16 %v4010, %v3997
        %v4921 = vpack.c.b16 %v4011, %v3998
        %v4922 = vpack.c.b16 %v4012, %v3999
        %v4923 = vpack.c.b16 %v4013, %v4000
        %v4924 = vpack.c.b16 %v4014, %v4001
        %v4925 = vpack.c.b16 %v4015, %v4002
        %v4926 = vpack.c.b16 %v4016, %v4003
        %v4927 = vpack.c.b16 %v4030, %v4017
        %v4928 = vpack.c.b16 %v4031, %v4018
        %v4929 = vpack.c.b16 %v4032, %v4019
        %v4930 = vpack.c.b16 %v4033, %v4020
        %v4931 = vpack.c.b16 %v4034, %v4021
        %v4932 = vpack.c.b16 %v4035, %v4022
        %v4933 = vpack.c.b16 %v4036, %v4023
        %v4934 = vpack.c.b16 %v4037, %v4024
        %v4935 = vpack.c.b16 %v4038, %v4025
        %v4936 = vpack.c.b16 %v4039, %v4026
        %v4937 = vpack.c.b16 %v4040, %v4027
        %v4938 = vpack.c.b16 %v4041, %v4028
        %v4939 = vpack.c.b16 %v4042, %v4029
        %v4940 = vpack.c.b16 %v4056, %v4043
        %v4941 = vpack.c.b16 %v4057, %v4044
        %v4942 = vpack.c.b16 %v4058, %v4045
        %v4943 = vpack.c.b16 %v4059, %v4046
        %v4944 = vpack.c.b16 %v4060, %v4047
        %v4945 = vpack.c.b16 %v4061, %v4048
        %v4946 = vpack.c.b16 %v4062, %v4049
        %v4947 = vpack.c.b16 %v4063, %v4050
        %v4948 = vpack.c.b16 %v4064, %v4051
        %v4949 = vpack.c.b16 %v4065, %v4052
        %v4950 = vpack.c.b16 %v4066, %v4053
        %v4951 = vpack.c.b16 %v4067, %v4054
        %v4952 = vpack.c.b16 %v4068, %v4055
        %v4953 = vpack.c.b16 %v4082, %v4069
        %v4954 = vpack.c.b16 %v4083, %v4070
        %v4955 = vpack.c.b16 %v4084, %v4071
        %v4956 = vpack.c.b16 %v4085, %v4072
        %v4957 = vpack.c.b16 %v4086, %v4073
        %v4958 = vpack.c.b16 %v4087, %v4074
        %v4959 = vpack.c.b16 %v4088, %v4075
        %v4960 = vpack.c.b16 %v4089, %v4076
        %v4961 = vpack.c.b16 %v4090, %v4077
        %v4962 = vpack.c.b16 %v4091, %v4078
        %v4963 = vpack.c.b16 %v4092, %v4079
        %v4964 = vpack.c.b16 %v4093, %v4080
        %v4965 = vpack.c.b16 %v4094, %v4081
        %v4966 = vpack.c.b16 %v4108, %v4095
        %v4967 = vpack.c.b16 %v4109, %v4096
        %v4968 = vpack.c.b16 %v4110, %v4097
        %v4969 = vpack.c.b16 %v4111, %v4098
        %v4970 = vpack.c.b16 %v4112, %v4099
        %v4971 = vpack.c.b16 %v4113, %v4100
        %v4972 = vpack.c.b16 %v4114, %v4101
        %v4973 = vpack.c.b16 %v4115, %v4102
        %v4974 = vpack.c.b16 %v4116, %v4103
        %v4975 = vpack.c.b16 %v4117, %v4104
        %v4976 = vpack.c.b16 %v4118, %v4105
        %v4977 = vpack.c.b16 %v4119, %v4106
        %v4978 = vpack.c.b16 %v4120, %v4107
        %v4979 = vpack.c.b16 %v4134, %v4121
        %v4980 = vpack.c.b16 %v4135, %v4122
        %v4981 = vpack.c.b16 %v4136, %v4123
        %v4982 = vpack.c.b16 %v4137, %v4124
        %v4983 = vpack.c.b16 %v4138, %v4125
        %v4984 = vpack.c.b16 %v4139, %v4126
        %v4985 = vpack.c.b16 %v4140, %v4127
        %v4986 = vpack.c.b16 %v4141, %v4128
        %v4987 = vpack.c.b16 %v4142, %v4129
        %v4988 = vpack.c.b16 %v4143, %v4130
        %v4989 = vpack.c.b16 %v4144, %v4131
        %v4990 = vpack.c.b16 %v4145, %v4132
        %v4991 = vpack.c.b16 %v4146, %v4133
        %v4992 = vpack.c.b16 %v4160, %v4147
        %v4993 = vpack.c.b16 %v4161, %v4148
        %v4994 = vpack.c.b16 %v4162, %v4149
        %v4995 = vpack.c.b16 %v4163, %v4150
        %v4996 = vpack.c.b16 %v4164, %v4151
        %v4997 = vpack.c.b16 %v4165, %v4152
        %v4998 = vpack.c.b16 %v4166, %v4153
        %v4999 = vpack.c.b16 %v4167, %v4154
        %v5000 = vpack.c.b16 %v4168, %v4155
        %v5001 = vpack.c.b16 %v4169, %v4156
        %v5002 = vpack.c.b16 %v4170, %v4157
        %v5003 = vpack.c.b16 %v4171, %v4158
        %v5004 = vpack.c.b16 %v4172, %v4159
        %5837 = vmatprep.subr.bf16.mxu0 %v4265
        %5838 = vmatpush1.bf16.msra.mxu0 %v4264
        %5839 = vmatprep.subr.bf16.mxu0 %v4252
        %5840 = vmatpush1.bf16.msra.mxu0 %v4251
        %5841 = vmatprep.subr.bf16.mxu0 %v4239
        %5842 = vmatpush1.bf16.msra.mxu0 %v4238
        %5843 = vmatprep.subr.bf16.mxu0 %v4226
        %5844 = vmatpush1.bf16.msra.mxu0 %v4225
        %5845 = vmatprep.subr.bf16.mxu0 %v4213
        %5846 = vmatpush1.bf16.msra.mxu0 %v4212
        %5847 = vmatprep.subr.bf16.mxu0 %v4200
        %5848 = vmatpush1.bf16.msra.mxu0 %v4199
        %5849 = vmatprep.subr.bf16.mxu0 %v4187
        %5850 = vmatpush1.bf16.msra.mxu0 %v4186
        %5851 = vmatprep.subr.bf16.mxu0 %v4174
        %5852 = vmatpush1.bf16.msra.mxu0 %v4173
        %5853 = vmatprep.subr.bf16.mxu0 %v4369
        %5854 = vmatpush2.bf16.msra.mxu0 %v4368
        %5855 = vmatprep.subr.bf16.mxu0 %v4356
        %5856 = vmatpush2.bf16.msra.mxu0 %v4355
        %5857 = vmatprep.subr.bf16.mxu0 %v4343
        %5858 = vmatpush2.bf16.msra.mxu0 %v4342
        %5859 = vmatprep.subr.bf16.mxu0 %v4330
        %5860 = vmatpush2.bf16.msra.mxu0 %v4329
        %5861 = vmatprep.subr.bf16.mxu0 %v4317
        %5862 = vmatpush2.bf16.msra.mxu0 %v4316
        %5863 = vmatprep.subr.bf16.mxu0 %v4304
        %5864 = vmatpush2.bf16.msra.mxu0 %v4303
        %5865 = vmatprep.subr.bf16.mxu0 %v4291
        %5866 = vmatpush2.bf16.msra.mxu0 %v4290
        %5867 = vmatprep.subr.bf16.mxu0 %v4278
        %5868 = vmatpush2.bf16.msra.mxu0 %v4277
        %5869 = vmatprep.mubr.bf16.mxu0 %v710
        %5870 = vmatmul.mubr.bf16.gmra.mxu0 %v709
        %v5871 = vpop.f32.mrf.mxu0
        %v5872 = vadd.f32 0.0, %v5871
        %v5873 = vpop.f32.mrf.mxu0
        %v5874 = vadd.f32 0.0, %v5873
        %v5875 = vpop.f32.mrf.mxu0
        %v5876 = vpop.f32.mrf.mxu0
        %5877 = vdwg.mxu0
        %5878 = vmatprep.subr.bf16.mxu0 %v4473
        %5879 = vmatpush1.bf16.msra.mxu0 %v4472
        %5880 = vmatprep.subr.bf16.mxu0 %v4460
        %5881 = vmatpush1.bf16.msra.mxu0 %v4459
        %5882 = vmatprep.subr.bf16.mxu0 %v4447
        %5883 = vmatpush1.bf16.msra.mxu0 %v4446
        %5884 = vmatprep.subr.bf16.mxu0 %v4434
        %5885 = vmatpush1.bf16.msra.mxu0 %v4433
        %5886 = vmatprep.subr.bf16.mxu0 %v4421
        %5887 = vmatpush1.bf16.msra.mxu0 %v4420
        %5888 = vmatprep.subr.bf16.mxu0 %v4408
        %5889 = vmatpush1.bf16.msra.mxu0 %v4407
        %5890 = vmatprep.subr.bf16.mxu0 %v4395
        %5891 = vmatpush1.bf16.msra.mxu0 %v4394
        %5892 = vmatprep.subr.bf16.mxu0 %v4382
        %5893 = vmatpush1.bf16.msra.mxu0 %v4381
        %5894 = vmatprep.subr.bf16.mxu0 %v4577
        %5895 = vmatpush2.bf16.msra.mxu0 %v4576
        %5896 = vmatprep.subr.bf16.mxu0 %v4564
        %5897 = vmatpush2.bf16.msra.mxu0 %v4563
        %5898 = vmatprep.subr.bf16.mxu0 %v4551
        %5899 = vmatpush2.bf16.msra.mxu0 %v4550
        %5900 = vmatprep.subr.bf16.mxu0 %v4538
        %5901 = vmatpush2.bf16.msra.mxu0 %v4537
        %5902 = vmatprep.subr.bf16.mxu0 %v4525
        %5903 = vmatpush2.bf16.msra.mxu0 %v4524
        %5904 = vmatprep.subr.bf16.mxu0 %v4512
        %5905 = vmatpush2.bf16.msra.mxu0 %v4511
        %5906 = vmatprep.subr.bf16.mxu0 %v4499
        %5907 = vmatpush2.bf16.msra.mxu0 %v4498
        %5908 = vmatprep.subr.bf16.mxu0 %v4486
        %5909 = vmatpush2.bf16.msra.mxu0 %v4485
        %5910 = vmatprep.mubr.bf16.mxu0 %v712
        %5911 = vmatmul.mubr.bf16.gmra.mxu0 %v711
        %v5912 = vpop.f32.mrf.mxu0
        %v5913 = vadd.f32 %v5872, %v5912
        %v5914 = vpop.f32.mrf.mxu0
        %v5915 = vadd.f32 %v5874, %v5914
        %v5916 = vpop.f32.mrf.mxu0
        %v5917 = vpop.f32.mrf.mxu0
        %5918 = vdwg.mxu0
        %5919 = vmatprep.subr.bf16.mxu0 %v4681
        %5920 = vmatpush1.bf16.msra.mxu0 %v4680
        %5921 = vmatprep.subr.bf16.mxu0 %v4668
        %5922 = vmatpush1.bf16.msra.mxu0 %v4667
        %5923 = vmatprep.subr.bf16.mxu0 %v4655
        %5924 = vmatpush1.bf16.msra.mxu0 %v4654
        %5925 = vmatprep.subr.bf16.mxu0 %v4642
        %5926 = vmatpush1.bf16.msra.mxu0 %v4641
        %5927 = vmatprep.subr.bf16.mxu0 %v4629
        %5928 = vmatpush1.bf16.msra.mxu0 %v4628
        %5929 = vmatprep.subr.bf16.mxu0 %v4616
        %5930 = vmatpush1.bf16.msra.mxu0 %v4615
        %5931 = vmatprep.subr.bf16.mxu0 %v4603
        %5932 = vmatpush1.bf16.msra.mxu0 %v4602
        %5933 = vmatprep.subr.bf16.mxu0 %v4590
        %5934 = vmatpush1.bf16.msra.mxu0 %v4589
        %5935 = vmatprep.subr.bf16.mxu0 %v4785
        %5936 = vmatpush2.bf16.msra.mxu0 %v4784
        %5937 = vmatprep.subr.bf16.mxu0 %v4772
        %5938 = vmatpush2.bf16.msra.mxu0 %v4771
        %5939 = vmatprep.subr.bf16.mxu0 %v4759
        %5940 = vmatpush2.bf16.msra.mxu0 %v4758
        %5941 = vmatprep.subr.bf16.mxu0 %v4746
        %5942 = vmatpush2.bf16.msra.mxu0 %v4745
        %5943 = vmatprep.subr.bf16.mxu0 %v4733
        %5944 = vmatpush2.bf16.msra.mxu0 %v4732
        %5945 = vmatprep.subr.bf16.mxu0 %v4720
        %5946 = vmatpush2.bf16.msra.mxu0 %v4719
        %5947 = vmatprep.subr.bf16.mxu0 %v4707
        %5948 = vmatpush2.bf16.msra.mxu0 %v4706
        %5949 = vmatprep.subr.bf16.mxu0 %v4694
        %5950 = vmatpush2.bf16.msra.mxu0 %v4693
        %5951 = vmatprep.mubr.bf16.mxu0 %v714
        %5952 = vmatmul.mubr.bf16.gmra.mxu0 %v713
        %v5953 = vpop.f32.mrf.mxu0
        %v5954 = vadd.f32 %v5913, %v5953
        %v5955 = vpop.f32.mrf.mxu0
        %v5956 = vadd.f32 %v5915, %v5955
        %v5957 = vpop.f32.mrf.mxu0
        %v5958 = vpop.f32.mrf.mxu0
        %5959 = vdwg.mxu0
        %5960 = vmatprep.subr.bf16.mxu0 %v4889
        %5961 = vmatpush1.bf16.msra.mxu0 %v4888
        %5962 = vmatprep.subr.bf16.mxu0 %v4876
        %5963 = vmatpush1.bf16.msra.mxu0 %v4875
        %5964 = vmatprep.subr.bf16.mxu0 %v4863
        %5965 = vmatpush1.bf16.msra.mxu0 %v4862
        %5966 = vmatprep.subr.bf16.mxu0 %v4850
        %5967 = vmatpush1.bf16.msra.mxu0 %v4849
        %5968 = vmatprep.subr.bf16.mxu0 %v4837
        %5969 = vmatpush1.bf16.msra.mxu0 %v4836
        %5970 = vmatprep.subr.bf16.mxu0 %v4824
        %5971 = vmatpush1.bf16.msra.mxu0 %v4823
        %5972 = vmatprep.subr.bf16.mxu0 %v4811
        %5973 = vmatpush1.bf16.msra.mxu0 %v4810
        %5974 = vmatprep.subr.bf16.mxu0 %v4798
        %5975 = vmatpush1.bf16.msra.mxu0 %v4797
        %5976 = vmatprep.subr.bf16.mxu0 %v4993
        %5977 = vmatpush2.bf16.msra.mxu0 %v4992
        %5978 = vmatprep.subr.bf16.mxu0 %v4980
        %5979 = vmatpush2.bf16.msra.mxu0 %v4979
        %5980 = vmatprep.subr.bf16.mxu0 %v4967
        %5981 = vmatpush2.bf16.msra.mxu0 %v4966
        %5982 = vmatprep.subr.bf16.mxu0 %v4954
        %5983 = vmatpush2.bf16.msra.mxu0 %v4953
        %5984 = vmatprep.subr.bf16.mxu0 %v4941
        %5985 = vmatpush2.bf16.msra.mxu0 %v4940
        %5986 = vmatprep.subr.bf16.mxu0 %v4928
        %5987 = vmatpush2.bf16.msra.mxu0 %v4927
        %5988 = vmatprep.subr.bf16.mxu0 %v4915
        %5989 = vmatpush2.bf16.msra.mxu0 %v4914
        %5990 = vmatprep.subr.bf16.mxu0 %v4902
        %5991 = vmatpush2.bf16.msra.mxu0 %v4901
        %5992 = vmatprep.mubr.bf16.mxu0 %v716
        %5993 = vmatmul.mubr.bf16.gmra.mxu0 %v715
        %v5994 = vpop.f32.mrf.mxu0
        %v5995 = vadd.f32 %v5954, %v5994
        %v5996 = vpop.f32.mrf.mxu0
        %v5997 = vadd.f32 %v5956, %v5996
        %v5998 = vpop.f32.mrf.mxu0
        %v5999 = vpop.f32.mrf.mxu0
        %6000 = vdwg.mxu0
        %6001 = vmatprep.subr.bf16.mxu0 %v4267
        %6002 = vmatpush1.bf16.msra.mxu0 %v4266
        %6003 = vmatprep.subr.bf16.mxu0 %v4254
        %6004 = vmatpush1.bf16.msra.mxu0 %v4253
        %6005 = vmatprep.subr.bf16.mxu0 %v4241
        %6006 = vmatpush1.bf16.msra.mxu0 %v4240
        %6007 = vmatprep.subr.bf16.mxu0 %v4228
        %6008 = vmatpush1.bf16.msra.mxu0 %v4227
        %6009 = vmatprep.subr.bf16.mxu0 %v4215
        %6010 = vmatpush1.bf16.msra.mxu0 %v4214
        %6011 = vmatprep.subr.bf16.mxu0 %v4202
        %6012 = vmatpush1.bf16.msra.mxu0 %v4201
        %6013 = vmatprep.subr.bf16.mxu0 %v4189
        %6014 = vmatpush1.bf16.msra.mxu0 %v4188
        %6015 = vmatprep.subr.bf16.mxu0 %v4176
        %6016 = vmatpush1.bf16.msra.mxu0 %v4175
        %6017 = vmatprep.subr.bf16.mxu0 %v4371
        %6018 = vmatpush2.bf16.msra.mxu0 %v4370
        %6019 = vmatprep.subr.bf16.mxu0 %v4358
        %6020 = vmatpush2.bf16.msra.mxu0 %v4357
        %6021 = vmatprep.subr.bf16.mxu0 %v4345
        %6022 = vmatpush2.bf16.msra.mxu0 %v4344
        %6023 = vmatprep.subr.bf16.mxu0 %v4332
        %6024 = vmatpush2.bf16.msra.mxu0 %v4331
        %6025 = vmatprep.subr.bf16.mxu0 %v4319
        %6026 = vmatpush2.bf16.msra.mxu0 %v4318
        %6027 = vmatprep.subr.bf16.mxu0 %v4306
        %6028 = vmatpush2.bf16.msra.mxu0 %v4305
        %6029 = vmatprep.subr.bf16.mxu0 %v4293
        %6030 = vmatpush2.bf16.msra.mxu0 %v4292
        %6031 = vmatprep.subr.bf16.mxu0 %v4280
        %6032 = vmatpush2.bf16.msra.mxu0 %v4279
        %6033 = vmatprep.mubr.bf16.mxu0 %v710
        %6034 = vmatmul.mubr.bf16.gmra.mxu0 %v709
        %v6035 = vpop.f32.mrf.mxu0
        %v6036 = vadd.f32 0.0, %v6035
        %v6037 = vpop.f32.mrf.mxu0
        %v6038 = vadd.f32 0.0, %v6037
        %v6039 = vpop.f32.mrf.mxu0
        %v6040 = vpop.f32.mrf.mxu0
        %6041 = vdwg.mxu0
        %6042 = vmatprep.subr.bf16.mxu0 %v4475
        %6043 = vmatpush1.bf16.msra.mxu0 %v4474
        %6044 = vmatprep.subr.bf16.mxu0 %v4462
        %6045 = vmatpush1.bf16.msra.mxu0 %v4461
        %6046 = vmatprep.subr.bf16.mxu0 %v4449
        %6047 = vmatpush1.bf16.msra.mxu0 %v4448
        %6048 = vmatprep.subr.bf16.mxu0 %v4436
        %6049 = vmatpush1.bf16.msra.mxu0 %v4435
        %6050 = vmatprep.subr.bf16.mxu0 %v4423
        %6051 = vmatpush1.bf16.msra.mxu0 %v4422
        %6052 = vmatprep.subr.bf16.mxu0 %v4410
        %6053 = vmatpush1.bf16.msra.mxu0 %v4409
        %6054 = vmatprep.subr.bf16.mxu0 %v4397
        %6055 = vmatpush1.bf16.msra.mxu0 %v4396
        %6056 = vmatprep.subr.bf16.mxu0 %v4384
        %6057 = vmatpush1.bf16.msra.mxu0 %v4383
        %6058 = vmatprep.subr.bf16.mxu0 %v4579
        %6059 = vmatpush2.bf16.msra.mxu0 %v4578
        %6060 = vmatprep.subr.bf16.mxu0 %v4566
        %6061 = vmatpush2.bf16.msra.mxu0 %v4565
        %6062 = vmatprep.subr.bf16.mxu0 %v4553
        %6063 = vmatpush2.bf16.msra.mxu0 %v4552
        %6064 = vmatprep.subr.bf16.mxu0 %v4540
        %6065 = vmatpush2.bf16.msra.mxu0 %v4539
        %6066 = vmatprep.subr.bf16.mxu0 %v4527
        %6067 = vmatpush2.bf16.msra.mxu0 %v4526
        %6068 = vmatprep.subr.bf16.mxu0 %v4514
        %6069 = vmatpush2.bf16.msra.mxu0 %v4513
        %6070 = vmatprep.subr.bf16.mxu0 %v4501
        %6071 = vmatpush2.bf16.msra.mxu0 %v4500
        %6072 = vmatprep.subr.bf16.mxu0 %v4488
        %6073 = vmatpush2.bf16.msra.mxu0 %v4487
        %6074 = vmatprep.mubr.bf16.mxu0 %v712
        %6075 = vmatmul.mubr.bf16.gmra.mxu0 %v711
        %v6076 = vpop.f32.mrf.mxu0
        %v6077 = vadd.f32 %v6036, %v6076
        %v6078 = vpop.f32.mrf.mxu0
        %v6079 = vadd.f32 %v6038, %v6078
        %v6080 = vpop.f32.mrf.mxu0
        %v6081 = vpop.f32.mrf.mxu0
        %6082 = vdwg.mxu0
        %6083 = vmatprep.subr.bf16.mxu0 %v4683
        %6084 = vmatpush1.bf16.msra.mxu0 %v4682
        %6085 = vmatprep.subr.bf16.mxu0 %v4670
        %6086 = vmatpush1.bf16.msra.mxu0 %v4669
        %6087 = vmatprep.subr.bf16.mxu0 %v4657
        %6088 = vmatpush1.bf16.msra.mxu0 %v4656
        %6089 = vmatprep.subr.bf16.mxu0 %v4644
        %6090 = vmatpush1.bf16.msra.mxu0 %v4643
        %6091 = vmatprep.subr.bf16.mxu0 %v4631
        %6092 = vmatpush1.bf16.msra.mxu0 %v4630
        %6093 = vmatprep.subr.bf16.mxu0 %v4618
        %6094 = vmatpush1.bf16.msra.mxu0 %v4617
        %6095 = vmatprep.subr.bf16.mxu0 %v4605
        %6096 = vmatpush1.bf16.msra.mxu0 %v4604
        %6097 = vmatprep.subr.bf16.mxu0 %v4592
        %6098 = vmatpush1.bf16.msra.mxu0 %v4591
        %6099 = vmatprep.subr.bf16.mxu0 %v4787
        %6100 = vmatpush2.bf16.msra.mxu0 %v4786
        %6101 = vmatprep.subr.bf16.mxu0 %v4774
        %6102 = vmatpush2.bf16.msra.mxu0 %v4773
        %6103 = vmatprep.subr.bf16.mxu0 %v4761
        %6104 = vmatpush2.bf16.msra.mxu0 %v4760
        %6105 = vmatprep.subr.bf16.mxu0 %v4748
        %6106 = vmatpush2.bf16.msra.mxu0 %v4747
        %6107 = vmatprep.subr.bf16.mxu0 %v4735
        %6108 = vmatpush2.bf16.msra.mxu0 %v4734
        %6109 = vmatprep.subr.bf16.mxu0 %v4722
        %6110 = vmatpush2.bf16.msra.mxu0 %v4721
        %6111 = vmatprep.subr.bf16.mxu0 %v4709
        %6112 = vmatpush2.bf16.msra.mxu0 %v4708
        %6113 = vmatprep.subr.bf16.mxu0 %v4696
        %6114 = vmatpush2.bf16.msra.mxu0 %v4695
        %6115 = vmatprep.mubr.bf16.mxu0 %v714
        %6116 = vmatmul.mubr.bf16.gmra.mxu0 %v713
        %v6117 = vpop.f32.mrf.mxu0
        %v6118 = vadd.f32 %v6077, %v6117
        %v6119 = vpop.f32.mrf.mxu0
        %v6120 = vadd.f32 %v6079, %v6119
        %v6121 = vpop.f32.mrf.mxu0
        %v6122 = vpop.f32.mrf.mxu0
        %6123 = vdwg.mxu0
        %6124 = vmatprep.subr.bf16.mxu0 %v4891
        %6125 = vmatpush1.bf16.msra.mxu0 %v4890
        %6126 = vmatprep.subr.bf16.mxu0 %v4878
        %6127 = vmatpush1.bf16.msra.mxu0 %v4877
        %6128 = vmatprep.subr.bf16.mxu0 %v4865
        %6129 = vmatpush1.bf16.msra.mxu0 %v4864
        %6130 = vmatprep.subr.bf16.mxu0 %v4852
        %6131 = vmatpush1.bf16.msra.mxu0 %v4851
        %6132 = vmatprep.subr.bf16.mxu0 %v4839
        %6133 = vmatpush1.bf16.msra.mxu0 %v4838
        %6134 = vmatprep.subr.bf16.mxu0 %v4826
        %6135 = vmatpush1.bf16.msra.mxu0 %v4825
        %6136 = vmatprep.subr.bf16.mxu0 %v4813
        %6137 = vmatpush1.bf16.msra.mxu0 %v4812
        %6138 = vmatprep.subr.bf16.mxu0 %v4800
        %6139 = vmatpush1.bf16.msra.mxu0 %v4799
        %6140 = vmatprep.subr.bf16.mxu0 %v4995
        %6141 = vmatpush2.bf16.msra.mxu0 %v4994
        %6142 = vmatprep.subr.bf16.mxu0 %v4982
        %6143 = vmatpush2.bf16.msra.mxu0 %v4981
        %6144 = vmatprep.subr.bf16.mxu0 %v4969
        %6145 = vmatpush2.bf16.msra.mxu0 %v4968
        %6146 = vmatprep.subr.bf16.mxu0 %v4956
        %6147 = vmatpush2.bf16.msra.mxu0 %v4955
        %6148 = vmatprep.subr.bf16.mxu0 %v4943
        %6149 = vmatpush2.bf16.msra.mxu0 %v4942
        %6150 = vmatprep.subr.bf16.mxu0 %v4930
        %6151 = vmatpush2.bf16.msra.mxu0 %v4929
        %6152 = vmatprep.subr.bf16.mxu0 %v4917
        %6153 = vmatpush2.bf16.msra.mxu0 %v4916
        %6154 = vmatprep.subr.bf16.mxu0 %v4904
        %6155 = vmatpush2.bf16.msra.mxu0 %v4903
        %6156 = vmatprep.mubr.bf16.mxu0 %v716
        %6157 = vmatmul.mubr.bf16.gmra.mxu0 %v715
        %v6158 = vpop.f32.mrf.mxu0
        %v6159 = vadd.f32 %v6118, %v6158
        %v6160 = vpop.f32.mrf.mxu0
        %v6161 = vadd.f32 %v6120, %v6160
        %v6162 = vpop.f32.mrf.mxu0
        %v6163 = vpop.f32.mrf.mxu0
        %6164 = vdwg.mxu0
        %6165 = vmatprep.subr.bf16.mxu0 %v4269
        %6166 = vmatpush1.bf16.msra.mxu0 %v4268
        %6167 = vmatprep.subr.bf16.mxu0 %v4256
        %6168 = vmatpush1.bf16.msra.mxu0 %v4255
        %6169 = vmatprep.subr.bf16.mxu0 %v4243
        %6170 = vmatpush1.bf16.msra.mxu0 %v4242
        %6171 = vmatprep.subr.bf16.mxu0 %v4230
        %6172 = vmatpush1.bf16.msra.mxu0 %v4229
        %6173 = vmatprep.subr.bf16.mxu0 %v4217
        %6174 = vmatpush1.bf16.msra.mxu0 %v4216
        %6175 = vmatprep.subr.bf16.mxu0 %v4204
        %6176 = vmatpush1.bf16.msra.mxu0 %v4203
        %6177 = vmatprep.subr.bf16.mxu0 %v4191
        %6178 = vmatpush1.bf16.msra.mxu0 %v4190
        %6179 = vmatprep.subr.bf16.mxu0 %v4178
        %6180 = vmatpush1.bf16.msra.mxu0 %v4177
        %6181 = vmatprep.subr.bf16.mxu0 %v4373
        %6182 = vmatpush2.bf16.msra.mxu0 %v4372
        %6183 = vmatprep.subr.bf16.mxu0 %v4360
        %6184 = vmatpush2.bf16.msra.mxu0 %v4359
        %6185 = vmatprep.subr.bf16.mxu0 %v4347
        %6186 = vmatpush2.bf16.msra.mxu0 %v4346
        %6187 = vmatprep.subr.bf16.mxu0 %v4334
        %6188 = vmatpush2.bf16.msra.mxu0 %v4333
        %6189 = vmatprep.subr.bf16.mxu0 %v4321
        %6190 = vmatpush2.bf16.msra.mxu0 %v4320
        %6191 = vmatprep.subr.bf16.mxu0 %v4308
        %6192 = vmatpush2.bf16.msra.mxu0 %v4307
        %6193 = vmatprep.subr.bf16.mxu0 %v4295
        %6194 = vmatpush2.bf16.msra.mxu0 %v4294
        %6195 = vmatprep.subr.bf16.mxu0 %v4282
        %6196 = vmatpush2.bf16.msra.mxu0 %v4281
        %6197 = vmatprep.mubr.bf16.mxu0 %v710
        %6198 = vmatmul.mubr.bf16.gmra.mxu0 %v709
        %v6199 = vpop.f32.mrf.mxu0
        %v6200 = vadd.f32 0.0, %v6199
        %v6201 = vpop.f32.mrf.mxu0
        %v6202 = vadd.f32 0.0, %v6201
        %v6203 = vpop.f32.mrf.mxu0
        %v6204 = vpop.f32.mrf.mxu0
        %6205 = vdwg.mxu0
        %6206 = vmatprep.subr.bf16.mxu0 %v4477
        %6207 = vmatpush1.bf16.msra.mxu0 %v4476
        %6208 = vmatprep.subr.bf16.mxu0 %v4464
        %6209 = vmatpush1.bf16.msra.mxu0 %v4463
        %6210 = vmatprep.subr.bf16.mxu0 %v4451
        %6211 = vmatpush1.bf16.msra.mxu0 %v4450
        %6212 = vmatprep.subr.bf16.mxu0 %v4438
        %6213 = vmatpush1.bf16.msra.mxu0 %v4437
        %6214 = vmatprep.subr.bf16.mxu0 %v4425
        %6215 = vmatpush1.bf16.msra.mxu0 %v4424
        %6216 = vmatprep.subr.bf16.mxu0 %v4412
        %6217 = vmatpush1.bf16.msra.mxu0 %v4411
        %6218 = vmatprep.subr.bf16.mxu0 %v4399
        %6219 = vmatpush1.bf16.msra.mxu0 %v4398
        %6220 = vmatprep.subr.bf16.mxu0 %v4386
        %6221 = vmatpush1.bf16.msra.mxu0 %v4385
        %6222 = vmatprep.subr.bf16.mxu0 %v4581
        %6223 = vmatpush2.bf16.msra.mxu0 %v4580
        %6224 = vmatprep.subr.bf16.mxu0 %v4568
        %6225 = vmatpush2.bf16.msra.mxu0 %v4567
        %6226 = vmatprep.subr.bf16.mxu0 %v4555
        %6227 = vmatpush2.bf16.msra.mxu0 %v4554
        %6228 = vmatprep.subr.bf16.mxu0 %v4542
        %6229 = vmatpush2.bf16.msra.mxu0 %v4541
        %6230 = vmatprep.subr.bf16.mxu0 %v4529
        %6231 = vmatpush2.bf16.msra.mxu0 %v4528
        %6232 = vmatprep.subr.bf16.mxu0 %v4516
        %6233 = vmatpush2.bf16.msra.mxu0 %v4515
        %6234 = vmatprep.subr.bf16.mxu0 %v4503
        %6235 = vmatpush2.bf16.msra.mxu0 %v4502
        %6236 = vmatprep.subr.bf16.mxu0 %v4490
        %6237 = vmatpush2.bf16.msra.mxu0 %v4489
        %6238 = vmatprep.mubr.bf16.mxu0 %v712
        %6239 = vmatmul.mubr.bf16.gmra.mxu0 %v711
        %v6240 = vpop.f32.mrf.mxu0
        %v6241 = vadd.f32 %v6200, %v6240
        %v6242 = vpop.f32.mrf.mxu0
        %v6243 = vadd.f32 %v6202, %v6242
        %v6244 = vpop.f32.mrf.mxu0
        %v6245 = vpop.f32.mrf.mxu0
        %6246 = vdwg.mxu0
        %6247 = vmatprep.subr.bf16.mxu0 %v4685
        %6248 = vmatpush1.bf16.msra.mxu0 %v4684
        %6249 = vmatprep.subr.bf16.mxu0 %v4672
        %6250 = vmatpush1.bf16.msra.mxu0 %v4671
        %6251 = vmatprep.subr.bf16.mxu0 %v4659
        %6252 = vmatpush1.bf16.msra.mxu0 %v4658
        %6253 = vmatprep.subr.bf16.mxu0 %v4646
        %6254 = vmatpush1.bf16.msra.mxu0 %v4645
        %6255 = vmatprep.subr.bf16.mxu0 %v4633
        %6256 = vmatpush1.bf16.msra.mxu0 %v4632
        %6257 = vmatprep.subr.bf16.mxu0 %v4620
        %6258 = vmatpush1.bf16.msra.mxu0 %v4619
        %6259 = vmatprep.subr.bf16.mxu0 %v4607
        %6260 = vmatpush1.bf16.msra.mxu0 %v4606
        %6261 = vmatprep.subr.bf16.mxu0 %v4594
        %6262 = vmatpush1.bf16.msra.mxu0 %v4593
        %6263 = vmatprep.subr.bf16.mxu0 %v4789
        %6264 = vmatpush2.bf16.msra.mxu0 %v4788
        %6265 = vmatprep.subr.bf16.mxu0 %v4776
        %6266 = vmatpush2.bf16.msra.mxu0 %v4775
        %6267 = vmatprep.subr.bf16.mxu0 %v4763
        %6268 = vmatpush2.bf16.msra.mxu0 %v4762
        %6269 = vmatprep.subr.bf16.mxu0 %v4750
        %6270 = vmatpush2.bf16.msra.mxu0 %v4749
        %6271 = vmatprep.subr.bf16.mxu0 %v4737
        %6272 = vmatpush2.bf16.msra.mxu0 %v4736
        %6273 = vmatprep.subr.bf16.mxu0 %v4724
        %6274 = vmatpush2.bf16.msra.mxu0 %v4723
        %6275 = vmatprep.subr.bf16.mxu0 %v4711
        %6276 = vmatpush2.bf16.msra.mxu0 %v4710
        %6277 = vmatprep.subr.bf16.mxu0 %v4698
        %6278 = vmatpush2.bf16.msra.mxu0 %v4697
        %6279 = vmatprep.mubr.bf16.mxu0 %v714
        %6280 = vmatmul.mubr.bf16.gmra.mxu0 %v713
        %v6281 = vpop.f32.mrf.mxu0
        %v6282 = vadd.f32 %v6241, %v6281
        %v6283 = vpop.f32.mrf.mxu0
        %v6284 = vadd.f32 %v6243, %v6283
        %v6285 = vpop.f32.mrf.mxu0
        %v6286 = vpop.f32.mrf.mxu0
        %6287 = vdwg.mxu0
        %6288 = vmatprep.subr.bf16.mxu0 %v4893
        %6289 = vmatpush1.bf16.msra.mxu0 %v4892
        %6290 = vmatprep.subr.bf16.mxu0 %v4880
        %6291 = vmatpush1.bf16.msra.mxu0 %v4879
        %6292 = vmatprep.subr.bf16.mxu0 %v4867
        %6293 = vmatpush1.bf16.msra.mxu0 %v4866
        %6294 = vmatprep.subr.bf16.mxu0 %v4854
        %6295 = vmatpush1.bf16.msra.mxu0 %v4853
        %6296 = vmatprep.subr.bf16.mxu0 %v4841
        %6297 = vmatpush1.bf16.msra.mxu0 %v4840
        %6298 = vmatprep.subr.bf16.mxu0 %v4828
        %6299 = vmatpush1.bf16.msra.mxu0 %v4827
        %6300 = vmatprep.subr.bf16.mxu0 %v4815
        %6301 = vmatpush1.bf16.msra.mxu0 %v4814
        %6302 = vmatprep.subr.bf16.mxu0 %v4802
        %6303 = vmatpush1.bf16.msra.mxu0 %v4801
        %6304 = vmatprep.subr.bf16.mxu0 %v4997
        %6305 = vmatpush2.bf16.msra.mxu0 %v4996
        %6306 = vmatprep.subr.bf16.mxu0 %v4984
        %6307 = vmatpush2.bf16.msra.mxu0 %v4983
        %6308 = vmatprep.subr.bf16.mxu0 %v4971
        %6309 = vmatpush2.bf16.msra.mxu0 %v4970
        %6310 = vmatprep.subr.bf16.mxu0 %v4958
        %6311 = vmatpush2.bf16.msra.mxu0 %v4957
        %6312 = vmatprep.subr.bf16.mxu0 %v4945
        %6313 = vmatpush2.bf16.msra.mxu0 %v4944
        %6314 = vmatprep.subr.bf16.mxu0 %v4932
        %6315 = vmatpush2.bf16.msra.mxu0 %v4931
        %6316 = vmatprep.subr.bf16.mxu0 %v4919
        %6317 = vmatpush2.bf16.msra.mxu0 %v4918
        %6318 = vmatprep.subr.bf16.mxu0 %v4906
        %6319 = vmatpush2.bf16.msra.mxu0 %v4905
        %6320 = vmatprep.mubr.bf16.mxu0 %v716
        %6321 = vmatmul.mubr.bf16.gmra.mxu0 %v715
        %v6322 = vpop.f32.mrf.mxu0
        %v6323 = vadd.f32 %v6282, %v6322
        %v6324 = vpop.f32.mrf.mxu0
        %v6325 = vadd.f32 %v6284, %v6324
        %v6326 = vpop.f32.mrf.mxu0
        %v6327 = vpop.f32.mrf.mxu0
        %6328 = vdwg.mxu0
        %6329 = vmatprep.subr.bf16.mxu0 %v4271
        %6330 = vmatpush1.bf16.msra.mxu0 %v4270
        %6331 = vmatprep.subr.bf16.mxu0 %v4258
        %6332 = vmatpush1.bf16.msra.mxu0 %v4257
        %6333 = vmatprep.subr.bf16.mxu0 %v4245
        %6334 = vmatpush1.bf16.msra.mxu0 %v4244
        %6335 = vmatprep.subr.bf16.mxu0 %v4232
        %6336 = vmatpush1.bf16.msra.mxu0 %v4231
        %6337 = vmatprep.subr.bf16.mxu0 %v4219
        %6338 = vmatpush1.bf16.msra.mxu0 %v4218
        %6339 = vmatprep.subr.bf16.mxu0 %v4206
        %6340 = vmatpush1.bf16.msra.mxu0 %v4205
        %6341 = vmatprep.subr.bf16.mxu0 %v4193
        %6342 = vmatpush1.bf16.msra.mxu0 %v4192
        %6343 = vmatprep.subr.bf16.mxu0 %v4180
        %6344 = vmatpush1.bf16.msra.mxu0 %v4179
        %6345 = vmatprep.subr.bf16.mxu0 %v4375
        %6346 = vmatpush2.bf16.msra.mxu0 %v4374
        %6347 = vmatprep.subr.bf16.mxu0 %v4362
        %6348 = vmatpush2.bf16.msra.mxu0 %v4361
        %6349 = vmatprep.subr.bf16.mxu0 %v4349
        %6350 = vmatpush2.bf16.msra.mxu0 %v4348
        %6351 = vmatprep.subr.bf16.mxu0 %v4336
        %6352 = vmatpush2.bf16.msra.mxu0 %v4335
        %6353 = vmatprep.subr.bf16.mxu0 %v4323
        %6354 = vmatpush2.bf16.msra.mxu0 %v4322
        %6355 = vmatprep.subr.bf16.mxu0 %v4310
        %6356 = vmatpush2.bf16.msra.mxu0 %v4309
        %6357 = vmatprep.subr.bf16.mxu0 %v4297
        %6358 = vmatpush2.bf16.msra.mxu0 %v4296
        %6359 = vmatprep.subr.bf16.mxu0 %v4284
        %6360 = vmatpush2.bf16.msra.mxu0 %v4283
        %6361 = vmatprep.mubr.bf16.mxu0 %v710
        %6362 = vmatmul.mubr.bf16.gmra.mxu0 %v709
        %v6363 = vpop.f32.mrf.mxu0
        %v6364 = vadd.f32 0.0, %v6363
        %v6365 = vpop.f32.mrf.mxu0
        %v6366 = vadd.f32 0.0, %v6365
        %v6367 = vpop.f32.mrf.mxu0
        %v6368 = vpop.f32.mrf.mxu0
        %6369 = vdwg.mxu0
        %6370 = vmatprep.subr.bf16.mxu0 %v4479
        %6371 = vmatpush1.bf16.msra.mxu0 %v4478
        %6372 = vmatprep.subr.bf16.mxu0 %v4466
        %6373 = vmatpush1.bf16.msra.mxu0 %v4465
        %6374 = vmatprep.subr.bf16.mxu0 %v4453
        %6375 = vmatpush1.bf16.msra.mxu0 %v4452
        %6376 = vmatprep.subr.bf16.mxu0 %v4440
        %6377 = vmatpush1.bf16.msra.mxu0 %v4439
        %6378 = vmatprep.subr.bf16.mxu0 %v4427
        %6379 = vmatpush1.bf16.msra.mxu0 %v4426
        %6380 = vmatprep.subr.bf16.mxu0 %v4414
        %6381 = vmatpush1.bf16.msra.mxu0 %v4413
        %6382 = vmatprep.subr.bf16.mxu0 %v4401
        %6383 = vmatpush1.bf16.msra.mxu0 %v4400
        %6384 = vmatprep.subr.bf16.mxu0 %v4388
        %6385 = vmatpush1.bf16.msra.mxu0 %v4387
        %6386 = vmatprep.subr.bf16.mxu0 %v4583
        %6387 = vmatpush2.bf16.msra.mxu0 %v4582
        %6388 = vmatprep.subr.bf16.mxu0 %v4570
        %6389 = vmatpush2.bf16.msra.mxu0 %v4569
        %6390 = vmatprep.subr.bf16.mxu0 %v4557
        %6391 = vmatpush2.bf16.msra.mxu0 %v4556
        %6392 = vmatprep.subr.bf16.mxu0 %v4544
        %6393 = vmatpush2.bf16.msra.mxu0 %v4543
        %6394 = vmatprep.subr.bf16.mxu0 %v4531
        %6395 = vmatpush2.bf16.msra.mxu0 %v4530
        %6396 = vmatprep.subr.bf16.mxu0 %v4518
        %6397 = vmatpush2.bf16.msra.mxu0 %v4517
        %6398 = vmatprep.subr.bf16.mxu0 %v4505
        %6399 = vmatpush2.bf16.msra.mxu0 %v4504
        %6400 = vmatprep.subr.bf16.mxu0 %v4492
        %6401 = vmatpush2.bf16.msra.mxu0 %v4491
        %6402 = vmatprep.mubr.bf16.mxu0 %v712
        %6403 = vmatmul.mubr.bf16.gmra.mxu0 %v711
        %v6404 = vpop.f32.mrf.mxu0
        %v6405 = vadd.f32 %v6364, %v6404
        %v6406 = vpop.f32.mrf.mxu0
        %v6407 = vadd.f32 %v6366, %v6406
        %v6408 = vpop.f32.mrf.mxu0
        %v6409 = vpop.f32.mrf.mxu0
        %6410 = vdwg.mxu0
        %6411 = vmatprep.subr.bf16.mxu0 %v4687
        %6412 = vmatpush1.bf16.msra.mxu0 %v4686
        %6413 = vmatprep.subr.bf16.mxu0 %v4674
        %6414 = vmatpush1.bf16.msra.mxu0 %v4673
        %6415 = vmatprep.subr.bf16.mxu0 %v4661
        %6416 = vmatpush1.bf16.msra.mxu0 %v4660
        %6417 = vmatprep.subr.bf16.mxu0 %v4648
        %6418 = vmatpush1.bf16.msra.mxu0 %v4647
        %6419 = vmatprep.subr.bf16.mxu0 %v4635
        %6420 = vmatpush1.bf16.msra.mxu0 %v4634
        %6421 = vmatprep.subr.bf16.mxu0 %v4622
        %6422 = vmatpush1.bf16.msra.mxu0 %v4621
        %6423 = vmatprep.subr.bf16.mxu0 %v4609
        %6424 = vmatpush1.bf16.msra.mxu0 %v4608
        %6425 = vmatprep.subr.bf16.mxu0 %v4596
        %6426 = vmatpush1.bf16.msra.mxu0 %v4595
        %6427 = vmatprep.subr.bf16.mxu0 %v4791
        %6428 = vmatpush2.bf16.msra.mxu0 %v4790
        %6429 = vmatprep.subr.bf16.mxu0 %v4778
        %6430 = vmatpush2.bf16.msra.mxu0 %v4777
        %6431 = vmatprep.subr.bf16.mxu0 %v4765
        %6432 = vmatpush2.bf16.msra.mxu0 %v4764
        %6433 = vmatprep.subr.bf16.mxu0 %v4752
        %6434 = vmatpush2.bf16.msra.mxu0 %v4751
        %6435 = vmatprep.subr.bf16.mxu0 %v4739
        %6436 = vmatpush2.bf16.msra.mxu0 %v4738
        %6437 = vmatprep.subr.bf16.mxu0 %v4726
        %6438 = vmatpush2.bf16.msra.mxu0 %v4725
        %6439 = vmatprep.subr.bf16.mxu0 %v4713
        %6440 = vmatpush2.bf16.msra.mxu0 %v4712
        %6441 = vmatprep.subr.bf16.mxu0 %v4700
        %6442 = vmatpush2.bf16.msra.mxu0 %v4699
        %6443 = vmatprep.mubr.bf16.mxu0 %v714
        %6444 = vmatmul.mubr.bf16.gmra.mxu0 %v713
        %v6445 = vpop.f32.mrf.mxu0
        %v6446 = vadd.f32 %v6405, %v6445
        %v6447 = vpop.f32.mrf.mxu0
        %v6448 = vadd.f32 %v6407, %v6447
        %v6449 = vpop.f32.mrf.mxu0
        %v6450 = vpop.f32.mrf.mxu0
        %6451 = vdwg.mxu0
        %6452 = vmatprep.subr.bf16.mxu0 %v4895
        %6453 = vmatpush1.bf16.msra.mxu0 %v4894
        %6454 = vmatprep.subr.bf16.mxu0 %v4882
        %6455 = vmatpush1.bf16.msra.mxu0 %v4881
        %6456 = vmatprep.subr.bf16.mxu0 %v4869
        %6457 = vmatpush1.bf16.msra.mxu0 %v4868
        %6458 = vmatprep.subr.bf16.mxu0 %v4856
        %6459 = vmatpush1.bf16.msra.mxu0 %v4855
        %6460 = vmatprep.subr.bf16.mxu0 %v4843
        %6461 = vmatpush1.bf16.msra.mxu0 %v4842
        %6462 = vmatprep.subr.bf16.mxu0 %v4830
        %6463 = vmatpush1.bf16.msra.mxu0 %v4829
        %6464 = vmatprep.subr.bf16.mxu0 %v4817
        %6465 = vmatpush1.bf16.msra.mxu0 %v4816
        %6466 = vmatprep.subr.bf16.mxu0 %v4804
        %6467 = vmatpush1.bf16.msra.mxu0 %v4803
        %6468 = vmatprep.subr.bf16.mxu0 %v4999
        %6469 = vmatpush2.bf16.msra.mxu0 %v4998
        %6470 = vmatprep.subr.bf16.mxu0 %v4986
        %6471 = vmatpush2.bf16.msra.mxu0 %v4985
        %6472 = vmatprep.subr.bf16.mxu0 %v4973
        %6473 = vmatpush2.bf16.msra.mxu0 %v4972
        %6474 = vmatprep.subr.bf16.mxu0 %v4960
        %6475 = vmatpush2.bf16.msra.mxu0 %v4959
        %6476 = vmatprep.subr.bf16.mxu0 %v4947
        %6477 = vmatpush2.bf16.msra.mxu0 %v4946
        %6478 = vmatprep.subr.bf16.mxu0 %v4934
        %6479 = vmatpush2.bf16.msra.mxu0 %v4933
        %6480 = vmatprep.subr.bf16.mxu0 %v4921
        %6481 = vmatpush2.bf16.msra.mxu0 %v4920
        %6482 = vmatprep.subr.bf16.mxu0 %v4908
        %6483 = vmatpush2.bf16.msra.mxu0 %v4907
        %6484 = vmatprep.mubr.bf16.mxu0 %v716
        %6485 = vmatmul.mubr.bf16.gmra.mxu0 %v715
        %v6486 = vpop.f32.mrf.mxu0
        %v6487 = vadd.f32 %v6446, %v6486
        %v6488 = vpop.f32.mrf.mxu0
        %v6489 = vadd.f32 %v6448, %v6488
        %v6490 = vpop.f32.mrf.mxu0
        %v6491 = vpop.f32.mrf.mxu0
        %6492 = vdwg.mxu0
        %6493 = vmatprep.subr.bf16.mxu0 %v4273
        %6494 = vmatpush1.bf16.msra.mxu0 %v4272
        %6495 = vmatprep.subr.bf16.mxu0 %v4260
        %6496 = vmatpush1.bf16.msra.mxu0 %v4259
        %6497 = vmatprep.subr.bf16.mxu0 %v4247
        %6498 = vmatpush1.bf16.msra.mxu0 %v4246
        %6499 = vmatprep.subr.bf16.mxu0 %v4234
        %6500 = vmatpush1.bf16.msra.mxu0 %v4233
        %6501 = vmatprep.subr.bf16.mxu0 %v4221
        %6502 = vmatpush1.bf16.msra.mxu0 %v4220
        %6503 = vmatprep.subr.bf16.mxu0 %v4208
        %6504 = vmatpush1.bf16.msra.mxu0 %v4207
        %6505 = vmatprep.subr.bf16.mxu0 %v4195
        %6506 = vmatpush1.bf16.msra.mxu0 %v4194
        %6507 = vmatprep.subr.bf16.mxu0 %v4182
        %6508 = vmatpush1.bf16.msra.mxu0 %v4181
        %6509 = vmatprep.subr.bf16.mxu0 %v4377
        %6510 = vmatpush2.bf16.msra.mxu0 %v4376
        %6511 = vmatprep.subr.bf16.mxu0 %v4364
        %6512 = vmatpush2.bf16.msra.mxu0 %v4363
        %6513 = vmatprep.subr.bf16.mxu0 %v4351
        %6514 = vmatpush2.bf16.msra.mxu0 %v4350
        %6515 = vmatprep.subr.bf16.mxu0 %v4338
        %6516 = vmatpush2.bf16.msra.mxu0 %v4337
        %6517 = vmatprep.subr.bf16.mxu0 %v4325
        %6518 = vmatpush2.bf16.msra.mxu0 %v4324
        %6519 = vmatprep.subr.bf16.mxu0 %v4312
        %6520 = vmatpush2.bf16.msra.mxu0 %v4311
        %6521 = vmatprep.subr.bf16.mxu0 %v4299
        %6522 = vmatpush2.bf16.msra.mxu0 %v4298
        %6523 = vmatprep.subr.bf16.mxu0 %v4286
        %6524 = vmatpush2.bf16.msra.mxu0 %v4285
        %6525 = vmatprep.mubr.bf16.mxu0 %v710
        %6526 = vmatmul.mubr.bf16.gmra.mxu0 %v709
        %v6527 = vpop.f32.mrf.mxu0
        %v6528 = vadd.f32 0.0, %v6527
        %v6529 = vpop.f32.mrf.mxu0
        %v6530 = vadd.f32 0.0, %v6529
        %v6531 = vpop.f32.mrf.mxu0
        %v6532 = vpop.f32.mrf.mxu0
        %6533 = vdwg.mxu0
        %6534 = vmatprep.subr.bf16.mxu0 %v4481
        %6535 = vmatpush1.bf16.msra.mxu0 %v4480
        %6536 = vmatprep.subr.bf16.mxu0 %v4468
        %6537 = vmatpush1.bf16.msra.mxu0 %v4467
        %6538 = vmatprep.subr.bf16.mxu0 %v4455
        %6539 = vmatpush1.bf16.msra.mxu0 %v4454
        %6540 = vmatprep.subr.bf16.mxu0 %v4442
        %6541 = vmatpush1.bf16.msra.mxu0 %v4441
        %6542 = vmatprep.subr.bf16.mxu0 %v4429
        %6543 = vmatpush1.bf16.msra.mxu0 %v4428
        %6544 = vmatprep.subr.bf16.mxu0 %v4416
        %6545 = vmatpush1.bf16.msra.mxu0 %v4415
        %6546 = vmatprep.subr.bf16.mxu0 %v4403
        %6547 = vmatpush1.bf16.msra.mxu0 %v4402
        %6548 = vmatprep.subr.bf16.mxu0 %v4390
        %6549 = vmatpush1.bf16.msra.mxu0 %v4389
        %6550 = vmatprep.subr.bf16.mxu0 %v4585
        %6551 = vmatpush2.bf16.msra.mxu0 %v4584
        %6552 = vmatprep.subr.bf16.mxu0 %v4572
        %6553 = vmatpush2.bf16.msra.mxu0 %v4571
        %6554 = vmatprep.subr.bf16.mxu0 %v4559
        %6555 = vmatpush2.bf16.msra.mxu0 %v4558
        %6556 = vmatprep.subr.bf16.mxu0 %v4546
        %6557 = vmatpush2.bf16.msra.mxu0 %v4545
        %6558 = vmatprep.subr.bf16.mxu0 %v4533
        %6559 = vmatpush2.bf16.msra.mxu0 %v4532
        %6560 = vmatprep.subr.bf16.mxu0 %v4520
        %6561 = vmatpush2.bf16.msra.mxu0 %v4519
        %6562 = vmatprep.subr.bf16.mxu0 %v4507
        %6563 = vmatpush2.bf16.msra.mxu0 %v4506
        %6564 = vmatprep.subr.bf16.mxu0 %v4494
        %6565 = vmatpush2.bf16.msra.mxu0 %v4493
        %6566 = vmatprep.mubr.bf16.mxu0 %v712
        %6567 = vmatmul.mubr.bf16.gmra.mxu0 %v711
        %v6568 = vpop.f32.mrf.mxu0
        %v6569 = vadd.f32 %v6528, %v6568
        %v6570 = vpop.f32.mrf.mxu0
        %v6571 = vadd.f32 %v6530, %v6570
        %v6572 = vpop.f32.mrf.mxu0
        %v6573 = vpop.f32.mrf.mxu0
        %6574 = vdwg.mxu0
        %6575 = vmatprep.subr.bf16.mxu0 %v4689
        %6576 = vmatpush1.bf16.msra.mxu0 %v4688
        %6577 = vmatprep.subr.bf16.mxu0 %v4676
        %6578 = vmatpush1.bf16.msra.mxu0 %v4675
        %6579 = vmatprep.subr.bf16.mxu0 %v4663
        %6580 = vmatpush1.bf16.msra.mxu0 %v4662
        %6581 = vmatprep.subr.bf16.mxu0 %v4650
        %6582 = vmatpush1.bf16.msra.mxu0 %v4649
        %6583 = vmatprep.subr.bf16.mxu0 %v4637
        %6584 = vmatpush1.bf16.msra.mxu0 %v4636
        %6585 = vmatprep.subr.bf16.mxu0 %v4624
        %6586 = vmatpush1.bf16.msra.mxu0 %v4623
        %6587 = vmatprep.subr.bf16.mxu0 %v4611
        %6588 = vmatpush1.bf16.msra.mxu0 %v4610
        %6589 = vmatprep.subr.bf16.mxu0 %v4598
        %6590 = vmatpush1.bf16.msra.mxu0 %v4597
        %6591 = vmatprep.subr.bf16.mxu0 %v4793
        %6592 = vmatpush2.bf16.msra.mxu0 %v4792
        %6593 = vmatprep.subr.bf16.mxu0 %v4780
        %6594 = vmatpush2.bf16.msra.mxu0 %v4779
        %6595 = vmatprep.subr.bf16.mxu0 %v4767
        %6596 = vmatpush2.bf16.msra.mxu0 %v4766
        %6597 = vmatprep.subr.bf16.mxu0 %v4754
        %6598 = vmatpush2.bf16.msra.mxu0 %v4753
        %6599 = vmatprep.subr.bf16.mxu0 %v4741
        %6600 = vmatpush2.bf16.msra.mxu0 %v4740
        %6601 = vmatprep.subr.bf16.mxu0 %v4728
        %6602 = vmatpush2.bf16.msra.mxu0 %v4727
        %6603 = vmatprep.subr.bf16.mxu0 %v4715
        %6604 = vmatpush2.bf16.msra.mxu0 %v4714
        %6605 = vmatprep.subr.bf16.mxu0 %v4702
        %6606 = vmatpush2.bf16.msra.mxu0 %v4701
        %6607 = vmatprep.mubr.bf16.mxu0 %v714
        %6608 = vmatmul.mubr.bf16.gmra.mxu0 %v713
        %v6609 = vpop.f32.mrf.mxu0
        %v6610 = vadd.f32 %v6569, %v6609
        %v6611 = vpop.f32.mrf.mxu0
        %v6612 = vadd.f32 %v6571, %v6611
        %v6613 = vpop.f32.mrf.mxu0
        %v6614 = vpop.f32.mrf.mxu0
        %6615 = vdwg.mxu0
        %6616 = vmatprep.subr.bf16.mxu0 %v4897
        %6617 = vmatpush1.bf16.msra.mxu0 %v4896
        %6618 = vmatprep.subr.bf16.mxu0 %v4884
        %6619 = vmatpush1.bf16.msra.mxu0 %v4883
        %6620 = vmatprep.subr.bf16.mxu0 %v4871
        %6621 = vmatpush1.bf16.msra.mxu0 %v4870
        %6622 = vmatprep.subr.bf16.mxu0 %v4858
        %6623 = vmatpush1.bf16.msra.mxu0 %v4857
        %6624 = vmatprep.subr.bf16.mxu0 %v4845
        %6625 = vmatpush1.bf16.msra.mxu0 %v4844
        %6626 = vmatprep.subr.bf16.mxu0 %v4832
        %6627 = vmatpush1.bf16.msra.mxu0 %v4831
        %6628 = vmatprep.subr.bf16.mxu0 %v4819
        %6629 = vmatpush1.bf16.msra.mxu0 %v4818
        %6630 = vmatprep.subr.bf16.mxu0 %v4806
        %6631 = vmatpush1.bf16.msra.mxu0 %v4805
        %6632 = vmatprep.subr.bf16.mxu0 %v5001
        %6633 = vmatpush2.bf16.msra.mxu0 %v5000
        %6634 = vmatprep.subr.bf16.mxu0 %v4988
        %6635 = vmatpush2.bf16.msra.mxu0 %v4987
        %6636 = vmatprep.subr.bf16.mxu0 %v4975
        %6637 = vmatpush2.bf16.msra.mxu0 %v4974
        %6638 = vmatprep.subr.bf16.mxu0 %v4962
        %6639 = vmatpush2.bf16.msra.mxu0 %v4961
        %6640 = vmatprep.subr.bf16.mxu0 %v4949
        %6641 = vmatpush2.bf16.msra.mxu0 %v4948
        %6642 = vmatprep.subr.bf16.mxu0 %v4936
        %6643 = vmatpush2.bf16.msra.mxu0 %v4935
        %6644 = vmatprep.subr.bf16.mxu0 %v4923
        %6645 = vmatpush2.bf16.msra.mxu0 %v4922
        %6646 = vmatprep.subr.bf16.mxu0 %v4910
        %6647 = vmatpush2.bf16.msra.mxu0 %v4909
        %6648 = vmatprep.mubr.bf16.mxu0 %v716
        %6649 = vmatmul.mubr.bf16.gmra.mxu0 %v715
        %v6650 = vpop.f32.mrf.mxu0
        %v6651 = vadd.f32 %v6610, %v6650
        %v6652 = vpop.f32.mrf.mxu0
        %v6653 = vadd.f32 %v6612, %v6652
        %v6654 = vpop.f32.mrf.mxu0
        %v6655 = vpop.f32.mrf.mxu0
        %6656 = vdwg.mxu0
        %6657 = vmatprep.subr.bf16.mxu0 %v4275
        %6658 = vmatpush1.bf16.msra.mxu0 %v4274
        %6659 = vmatprep.subr.bf16.mxu0 %v4262
        %6660 = vmatpush1.bf16.msra.mxu0 %v4261
        %6661 = vmatprep.subr.bf16.mxu0 %v4249
        %6662 = vmatpush1.bf16.msra.mxu0 %v4248
        %6663 = vmatprep.subr.bf16.mxu0 %v4236
        %6664 = vmatpush1.bf16.msra.mxu0 %v4235
        %6665 = vmatprep.subr.bf16.mxu0 %v4223
        %6666 = vmatpush1.bf16.msra.mxu0 %v4222
        %6667 = vmatprep.subr.bf16.mxu0 %v4210
        %6668 = vmatpush1.bf16.msra.mxu0 %v4209
        %6669 = vmatprep.subr.bf16.mxu0 %v4197
        %6670 = vmatpush1.bf16.msra.mxu0 %v4196
        %6671 = vmatprep.subr.bf16.mxu0 %v4184
        %6672 = vmatpush1.bf16.msra.mxu0 %v4183
        %6673 = vmatprep.subr.bf16.mxu0 %v4379
        %6674 = vmatpush2.bf16.msra.mxu0 %v4378
        %6675 = vmatprep.subr.bf16.mxu0 %v4366
        %6676 = vmatpush2.bf16.msra.mxu0 %v4365
        %6677 = vmatprep.subr.bf16.mxu0 %v4353
        %6678 = vmatpush2.bf16.msra.mxu0 %v4352
        %6679 = vmatprep.subr.bf16.mxu0 %v4340
        %6680 = vmatpush2.bf16.msra.mxu0 %v4339
        %6681 = vmatprep.subr.bf16.mxu0 %v4327
        %6682 = vmatpush2.bf16.msra.mxu0 %v4326
        %6683 = vmatprep.subr.bf16.mxu0 %v4314
        %6684 = vmatpush2.bf16.msra.mxu0 %v4313
        %6685 = vmatprep.subr.bf16.mxu0 %v4301
        %6686 = vmatpush2.bf16.msra.mxu0 %v4300
        %6687 = vmatprep.subr.bf16.mxu0 %v4288
        %6688 = vmatpush2.bf16.msra.mxu0 %v4287
        %6689 = vmatprep.mubr.bf16.mxu0 %v710
        %6690 = vmatmul.mubr.bf16.gmra.mxu0 %v709
        %v6691 = vpop.f32.mrf.mxu0
        %v6692 = vadd.f32 0.0, %v6691
        %v6693 = vpop.f32.mrf.mxu0
        %v6694 = vadd.f32 0.0, %v6693
        %v6695 = vpop.f32.mrf.mxu0
        %v6696 = vpop.f32.mrf.mxu0
        %6697 = vdwg.mxu0
        %6698 = vmatprep.subr.bf16.mxu0 %v4483
        %6699 = vmatpush1.bf16.msra.mxu0 %v4482
        %6700 = vmatprep.subr.bf16.mxu0 %v4470
        %6701 = vmatpush1.bf16.msra.mxu0 %v4469
        %6702 = vmatprep.subr.bf16.mxu0 %v4457
        %6703 = vmatpush1.bf16.msra.mxu0 %v4456
        %6704 = vmatprep.subr.bf16.mxu0 %v4444
        %6705 = vmatpush1.bf16.msra.mxu0 %v4443
        %6706 = vmatprep.subr.bf16.mxu0 %v4431
        %6707 = vmatpush1.bf16.msra.mxu0 %v4430
        %6708 = vmatprep.subr.bf16.mxu0 %v4418
        %6709 = vmatpush1.bf16.msra.mxu0 %v4417
        %6710 = vmatprep.subr.bf16.mxu0 %v4405
        %6711 = vmatpush1.bf16.msra.mxu0 %v4404
        %6712 = vmatprep.subr.bf16.mxu0 %v4392
        %6713 = vmatpush1.bf16.msra.mxu0 %v4391
        %6714 = vmatprep.subr.bf16.mxu0 %v4587
        %6715 = vmatpush2.bf16.msra.mxu0 %v4586
        %6716 = vmatprep.subr.bf16.mxu0 %v4574
        %6717 = vmatpush2.bf16.msra.mxu0 %v4573
        %6718 = vmatprep.subr.bf16.mxu0 %v4561
        %6719 = vmatpush2.bf16.msra.mxu0 %v4560
        %6720 = vmatprep.subr.bf16.mxu0 %v4548
        %6721 = vmatpush2.bf16.msra.mxu0 %v4547
        %6722 = vmatprep.subr.bf16.mxu0 %v4535
        %6723 = vmatpush2.bf16.msra.mxu0 %v4534
        %6724 = vmatprep.subr.bf16.mxu0 %v4522
        %6725 = vmatpush2.bf16.msra.mxu0 %v4521
        %6726 = vmatprep.subr.bf16.mxu0 %v4509
        %6727 = vmatpush2.bf16.msra.mxu0 %v4508
        %6728 = vmatprep.subr.bf16.mxu0 %v4496
        %6729 = vmatpush2.bf16.msra.mxu0 %v4495
        %6730 = vmatprep.mubr.bf16.mxu0 %v712
        %6731 = vmatmul.mubr.bf16.gmra.mxu0 %v711
        %v6732 = vpop.f32.mrf.mxu0
        %v6733 = vadd.f32 %v6692, %v6732
        %v6734 = vpop.f32.mrf.mxu0
        %v6735 = vadd.f32 %v6694, %v6734
        %v6736 = vpop.f32.mrf.mxu0
        %v6737 = vpop.f32.mrf.mxu0
        %6738 = vdwg.mxu0
        %6739 = vmatprep.subr.bf16.mxu0 %v4691
        %6740 = vmatpush1.bf16.msra.mxu0 %v4690
        %6741 = vmatprep.subr.bf16.mxu0 %v4678
        %6742 = vmatpush1.bf16.msra.mxu0 %v4677
        %6743 = vmatprep.subr.bf16.mxu0 %v4665
        %6744 = vmatpush1.bf16.msra.mxu0 %v4664
        %6745 = vmatprep.subr.bf16.mxu0 %v4652
        %6746 = vmatpush1.bf16.msra.mxu0 %v4651
        %6747 = vmatprep.subr.bf16.mxu0 %v4639
        %6748 = vmatpush1.bf16.msra.mxu0 %v4638
        %6749 = vmatprep.subr.bf16.mxu0 %v4626
        %6750 = vmatpush1.bf16.msra.mxu0 %v4625
        %6751 = vmatprep.subr.bf16.mxu0 %v4613
        %6752 = vmatpush1.bf16.msra.mxu0 %v4612
        %6753 = vmatprep.subr.bf16.mxu0 %v4600
        %6754 = vmatpush1.bf16.msra.mxu0 %v4599
        %6755 = vmatprep.subr.bf16.mxu0 %v4795
        %6756 = vmatpush2.bf16.msra.mxu0 %v4794
        %6757 = vmatprep.subr.bf16.mxu0 %v4782
        %6758 = vmatpush2.bf16.msra.mxu0 %v4781
        %6759 = vmatprep.subr.bf16.mxu0 %v4769
        %6760 = vmatpush2.bf16.msra.mxu0 %v4768
        %6761 = vmatprep.subr.bf16.mxu0 %v4756
        %6762 = vmatpush2.bf16.msra.mxu0 %v4755
        %6763 = vmatprep.subr.bf16.mxu0 %v4743
        %6764 = vmatpush2.bf16.msra.mxu0 %v4742
        %6765 = vmatprep.subr.bf16.mxu0 %v4730
        %6766 = vmatpush2.bf16.msra.mxu0 %v4729
        %6767 = vmatprep.subr.bf16.mxu0 %v4717
        %6768 = vmatpush2.bf16.msra.mxu0 %v4716
        %6769 = vmatprep.subr.bf16.mxu0 %v4704
        %6770 = vmatpush2.bf16.msra.mxu0 %v4703
        %6771 = vmatprep.mubr.bf16.mxu0 %v714
        %6772 = vmatmul.mubr.bf16.gmra.mxu0 %v713
        %v6773 = vpop.f32.mrf.mxu0
        %v6774 = vadd.f32 %v6733, %v6773
        %v6775 = vpop.f32.mrf.mxu0
        %v6776 = vadd.f32 %v6735, %v6775
        %v6777 = vpop.f32.mrf.mxu0
        %v6778 = vpop.f32.mrf.mxu0
        %6779 = vdwg.mxu0
        %6780 = vmatprep.subr.bf16.mxu0 %v4899
        %6781 = vmatpush1.bf16.msra.mxu0 %v4898
        %6782 = vmatprep.subr.bf16.mxu0 %v4886
        %6783 = vmatpush1.bf16.msra.mxu0 %v4885
        %6784 = vmatprep.subr.bf16.mxu0 %v4873
        %6785 = vmatpush1.bf16.msra.mxu0 %v4872
        %6786 = vmatprep.subr.bf16.mxu0 %v4860
        %6787 = vmatpush1.bf16.msra.mxu0 %v4859
        %6788 = vmatprep.subr.bf16.mxu0 %v4847
        %6789 = vmatpush1.bf16.msra.mxu0 %v4846
        %6790 = vmatprep.subr.bf16.mxu0 %v4834
        %6791 = vmatpush1.bf16.msra.mxu0 %v4833
        %6792 = vmatprep.subr.bf16.mxu0 %v4821
        %6793 = vmatpush1.bf16.msra.mxu0 %v4820
        %6794 = vmatprep.subr.bf16.mxu0 %v4808
        %6795 = vmatpush1.bf16.msra.mxu0 %v4807
        %6796 = vmatprep.subr.bf16.mxu0 %v5003
        %6797 = vmatpush2.bf16.msra.mxu0 %v5002
        %6798 = vmatprep.subr.bf16.mxu0 %v4990
        %6799 = vmatpush2.bf16.msra.mxu0 %v4989
        %6800 = vmatprep.subr.bf16.mxu0 %v4977
        %6801 = vmatpush2.bf16.msra.mxu0 %v4976
        %6802 = vmatprep.subr.bf16.mxu0 %v4964
        %6803 = vmatpush2.bf16.msra.mxu0 %v4963
        %6804 = vmatprep.subr.bf16.mxu0 %v4951
        %6805 = vmatpush2.bf16.msra.mxu0 %v4950
        %6806 = vmatprep.subr.bf16.mxu0 %v4938
        %6807 = vmatpush2.bf16.msra.mxu0 %v4937
        %6808 = vmatprep.subr.bf16.mxu0 %v4925
        %6809 = vmatpush2.bf16.msra.mxu0 %v4924
        %6810 = vmatprep.subr.bf16.mxu0 %v4912
        %6811 = vmatpush2.bf16.msra.mxu0 %v4911
        %6812 = vmatprep.mubr.bf16.mxu0 %v716
        %6813 = vmatmul.mubr.bf16.gmra.mxu0 %v715
        %v6814 = vpop.f32.mrf.mxu0
        %v6815 = vadd.f32 %v6774, %v6814
        %v6816 = vpop.f32.mrf.mxu0
        %v6817 = vadd.f32 %v6776, %v6816
        %v6818 = vpop.f32.mrf.mxu0
        %v6819 = vpop.f32.mrf.mxu0
        %6820 = vdwg.mxu0
        %6821 = vmatprep.subr.bf16.mxu0 0
        %6822 = vmatpush1.bf16.msra.mxu0 %v4276
        %6823 = vmatprep.subr.bf16.mxu0 0
        %6824 = vmatpush1.bf16.msra.mxu0 %v4263
        %6825 = vmatprep.subr.bf16.mxu0 0
        %6826 = vmatpush1.bf16.msra.mxu0 %v4250
        %6827 = vmatprep.subr.bf16.mxu0 0
        %6828 = vmatpush1.bf16.msra.mxu0 %v4237
        %6829 = vmatprep.subr.bf16.mxu0 0
        %6830 = vmatpush1.bf16.msra.mxu0 %v4224
        %6831 = vmatprep.subr.bf16.mxu0 0
        %6832 = vmatpush1.bf16.msra.mxu0 %v4211
        %6833 = vmatprep.subr.bf16.mxu0 0
        %6834 = vmatpush1.bf16.msra.mxu0 %v4198
        %6835 = vmatprep.subr.bf16.mxu0 0
        %6836 = vmatpush1.bf16.msra.mxu0 %v4185
        %6837 = vmatprep.subr.bf16.mxu0 0
        %6838 = vmatpush2.bf16.msra.mxu0 %v4380
        %6839 = vmatprep.subr.bf16.mxu0 0
        %6840 = vmatpush2.bf16.msra.mxu0 %v4367
        %6841 = vmatprep.subr.bf16.mxu0 0
        %6842 = vmatpush2.bf16.msra.mxu0 %v4354
        %6843 = vmatprep.subr.bf16.mxu0 0
        %6844 = vmatpush2.bf16.msra.mxu0 %v4341
        %6845 = vmatprep.subr.bf16.mxu0 0
        %6846 = vmatpush2.bf16.msra.mxu0 %v4328
        %6847 = vmatprep.subr.bf16.mxu0 0
        %6848 = vmatpush2.bf16.msra.mxu0 %v4315
        %6849 = vmatprep.subr.bf16.mxu0 0
        %6850 = vmatpush2.bf16.msra.mxu0 %v4302
        %6851 = vmatprep.subr.bf16.mxu0 0
        %6852 = vmatpush2.bf16.msra.mxu0 %v4289
        %6853 = vmatprep.mubr.bf16.mxu0 %v710
        %6854 = vmatmul.mubr.bf16.gmra.mxu0 %v709
        %v6855 = vpop.f32.mrf.mxu0
        %v6856 = vadd.f32 0.0, %v6855
        %v6857 = vpop.f32.mrf.mxu0
        %v6858 = vpop.f32.mrf.mxu0
        %v6859 = vpop.f32.mrf.mxu0
        %6860 = vdwg.mxu0
        %6861 = vmatprep.subr.bf16.mxu0 0
        %6862 = vmatpush1.bf16.msra.mxu0 %v4484
        %6863 = vmatprep.subr.bf16.mxu0 0
        %6864 = vmatpush1.bf16.msra.mxu0 %v4471
        %6865 = vmatprep.subr.bf16.mxu0 0
        %6866 = vmatpush1.bf16.msra.mxu0 %v4458
        %6867 = vmatprep.subr.bf16.mxu0 0
        %6868 = vmatpush1.bf16.msra.mxu0 %v4445
        %6869 = vmatprep.subr.bf16.mxu0 0
        %6870 = vmatpush1.bf16.msra.mxu0 %v4432
        %6871 = vmatprep.subr.bf16.mxu0 0
        %6872 = vmatpush1.bf16.msra.mxu0 %v4419
        %6873 = vmatprep.subr.bf16.mxu0 0
        %6874 = vmatpush1.bf16.msra.mxu0 %v4406
        %6875 = vmatprep.subr.bf16.mxu0 0
        %6876 = vmatpush1.bf16.msra.mxu0 %v4393
        %6877 = vmatprep.subr.bf16.mxu0 0
        %6878 = vmatpush2.bf16.msra.mxu0 %v4588
        %6879 = vmatprep.subr.bf16.mxu0 0
        %6880 = vmatpush2.bf16.msra.mxu0 %v4575
        %6881 = vmatprep.subr.bf16.mxu0 0
        %6882 = vmatpush2.bf16.msra.mxu0 %v4562
        %6883 = vmatprep.subr.bf16.mxu0 0
        %6884 = vmatpush2.bf16.msra.mxu0 %v4549
        %6885 = vmatprep.subr.bf16.mxu0 0
        %6886 = vmatpush2.bf16.msra.mxu0 %v4536
        %6887 = vmatprep.subr.bf16.mxu0 0
        %6888 = vmatpush2.bf16.msra.mxu0 %v4523
        %6889 = vmatprep.subr.bf16.mxu0 0
        %6890 = vmatpush2.bf16.msra.mxu0 %v4510
        %6891 = vmatprep.subr.bf16.mxu0 0
        %6892 = vmatpush2.bf16.msra.mxu0 %v4497
        %6893 = vmatprep.mubr.bf16.mxu0 %v712
        %6894 = vmatmul.mubr.bf16.gmra.mxu0 %v711
        %v6895 = vpop.f32.mrf.mxu0
        %v6896 = vadd.f32 %v6856, %v6895
        %v6897 = vpop.f32.mrf.mxu0
        %v6898 = vpop.f32.mrf.mxu0
        %v6899 = vpop.f32.mrf.mxu0
        %6900 = vdwg.mxu0
        %6901 = vmatprep.subr.bf16.mxu0 0
        %6902 = vmatpush1.bf16.msra.mxu0 %v4692
        %6903 = vmatprep.subr.bf16.mxu0 0
        %6904 = vmatpush1.bf16.msra.mxu0 %v4679
        %6905 = vmatprep.subr.bf16.mxu0 0
        %6906 = vmatpush1.bf16.msra.mxu0 %v4666
        %6907 = vmatprep.subr.bf16.mxu0 0
        %6908 = vmatpush1.bf16.msra.mxu0 %v4653
        %6909 = vmatprep.subr.bf16.mxu0 0
        %6910 = vmatpush1.bf16.msra.mxu0 %v4640
        %6911 = vmatprep.subr.bf16.mxu0 0
        %6912 = vmatpush1.bf16.msra.mxu0 %v4627
        %6913 = vmatprep.subr.bf16.mxu0 0
        %6914 = vmatpush1.bf16.msra.mxu0 %v4614
        %6915 = vmatprep.subr.bf16.mxu0 0
        %6916 = vmatpush1.bf16.msra.mxu0 %v4601
        %6917 = vmatprep.subr.bf16.mxu0 0
        %6918 = vmatpush2.bf16.msra.mxu0 %v4796
        %6919 = vmatprep.subr.bf16.mxu0 0
        %6920 = vmatpush2.bf16.msra.mxu0 %v4783
        %6921 = vmatprep.subr.bf16.mxu0 0
        %6922 = vmatpush2.bf16.msra.mxu0 %v4770
        %6923 = vmatprep.subr.bf16.mxu0 0
        %6924 = vmatpush2.bf16.msra.mxu0 %v4757
        %6925 = vmatprep.subr.bf16.mxu0 0
        %6926 = vmatpush2.bf16.msra.mxu0 %v4744
        %6927 = vmatprep.subr.bf16.mxu0 0
        %6928 = vmatpush2.bf16.msra.mxu0 %v4731
        %6929 = vmatprep.subr.bf16.mxu0 0
        %6930 = vmatpush2.bf16.msra.mxu0 %v4718
        %6931 = vmatprep.subr.bf16.mxu0 0
        %6932 = vmatpush2.bf16.msra.mxu0 %v4705
        %6933 = vmatprep.mubr.bf16.mxu0 %v714
        %6934 = vmatmul.mubr.bf16.gmra.mxu0 %v713
        %v6935 = vpop.f32.mrf.mxu0
        %v6936 = vadd.f32 %v6896, %v6935
        %v6937 = vpop.f32.mrf.mxu0
        %v6938 = vpop.f32.mrf.mxu0
        %v6939 = vpop.f32.mrf.mxu0
        %6940 = vdwg.mxu0
        %6941 = vmatprep.subr.bf16.mxu0 0
        %6942 = vmatpush1.bf16.msra.mxu0 %v4900
        %6943 = vmatprep.subr.bf16.mxu0 0
        %6944 = vmatpush1.bf16.msra.mxu0 %v4887
        %6945 = vmatprep.subr.bf16.mxu0 0
        %6946 = vmatpush1.bf16.msra.mxu0 %v4874
        %6947 = vmatprep.subr.bf16.mxu0 0
        %6948 = vmatpush1.bf16.msra.mxu0 %v4861
        %6949 = vmatprep.subr.bf16.mxu0 0
        %6950 = vmatpush1.bf16.msra.mxu0 %v4848
        %6951 = vmatprep.subr.bf16.mxu0 0
        %6952 = vmatpush1.bf16.msra.mxu0 %v4835
        %6953 = vmatprep.subr.bf16.mxu0 0
        %6954 = vmatpush1.bf16.msra.mxu0 %v4822
        %6955 = vmatprep.subr.bf16.mxu0 0
        %6956 = vmatpush1.bf16.msra.mxu0 %v4809
        %6957 = vmatprep.subr.bf16.mxu0 0
        %6958 = vmatpush2.bf16.msra.mxu0 %v5004
        %6959 = vmatprep.subr.bf16.mxu0 0
        %6960 = vmatpush2.bf16.msra.mxu0 %v4991
        %6961 = vmatprep.subr.bf16.mxu0 0
        %6962 = vmatpush2.bf16.msra.mxu0 %v4978
        %6963 = vmatprep.subr.bf16.mxu0 0
        %6964 = vmatpush2.bf16.msra.mxu0 %v4965
        %6965 = vmatprep.subr.bf16.mxu0 0
        %6966 = vmatpush2.bf16.msra.mxu0 %v4952
        %6967 = vmatprep.subr.bf16.mxu0 0
        %6968 = vmatpush2.bf16.msra.mxu0 %v4939
        %6969 = vmatprep.subr.bf16.mxu0 0
        %6970 = vmatpush2.bf16.msra.mxu0 %v4926
        %6971 = vmatprep.subr.bf16.mxu0 0
        %6972 = vmatpush2.bf16.msra.mxu0 %v4913
        %6973 = vmatprep.mubr.bf16.mxu0 %v716
        %6974 = vmatmul.mubr.bf16.gmra.mxu0 %v715
        %v6975 = vpop.f32.mrf.mxu0
        %v6976 = vadd.f32 %v6936, %v6975
        %v6977 = vpop.f32.mrf.mxu0
        %v6978 = vpop.f32.mrf.mxu0
        %v6979 = vpop.f32.mrf.mxu0
        %6980 = vdwg.mxu0
        %v6994 = vcombine.low %v5995, %v5997
        %v6995 = vcombine.low %v6159, %v6161
        %v6997 = vunpack.c.l.s4 1983009808
        %v6998 = vunpack.c.0.s8 %v6997
        %v6999 = vlaneseq
        %v7000 = vshrl.u32 %v6999, 7
        %v7001 = vsub.s32 %v6998, %v7000
        %v7002 = vrot.slane %v6994, %v7001
        %v7004 = vunpack.c.l.s4 1983009808
        %v7005 = vunpack.c.0.s8 %v7004
        %v7006 = vlaneseq
        %v7007 = vshrl.u32 %v7006, 7
        %v7008 = vsub.s32 %v7005, %v7007
        %v7009 = vrot.slane %v6995, %v7008
        %v7010 = vcombine.low %v7002, %v7009
        %v7011 = vcombine.low %v6323, %v6325
        %v7012 = vcombine.low %v6487, %v6489
        %v7014 = vunpack.c.l.s4 1983009808
        %v7015 = vunpack.c.0.s8 %v7014
        %v7016 = vlaneseq
        %v7017 = vshrl.u32 %v7016, 7
        %v7018 = vsub.s32 %v7015, %v7017
        %v7019 = vrot.slane %v7011, %v7018
        %v7021 = vunpack.c.l.s4 1983009808
        %v7022 = vunpack.c.0.s8 %v7021
        %v7023 = vlaneseq
        %v7024 = vshrl.u32 %v7023, 7
        %v7025 = vsub.s32 %v7022, %v7024
        %v7026 = vrot.slane %v7012, %v7025
        %v7027 = vcombine.low %v7019, %v7026
        %v7028 = vcombine.low %v6651, %v6653
        %v7029 = vcombine.low %v6815, %v6817
        %v7031 = vunpack.c.l.s4 1983009808
        %v7032 = vunpack.c.0.s8 %v7031
        %v7033 = vlaneseq
        %v7034 = vshrl.u32 %v7033, 7
        %v7035 = vsub.s32 %v7032, %v7034
        %v7036 = vrot.slane %v7028, %v7035
        %v7038 = vunpack.c.l.s4 1983009808
        %v7039 = vunpack.c.0.s8 %v7038
        %v7040 = vlaneseq
        %v7041 = vshrl.u32 %v7040, 7
        %v7042 = vsub.s32 %v7039, %v7041
        %v7043 = vrot.slane %v7029, %v7042
        %v7044 = vcombine.low %v7036, %v7043
        %v7046 = vunpack.c.l.s4 1983009808
        %v7047 = vunpack.c.0.s8 %v7046
        %v7048 = vlaneseq
        %v7049 = vshrl.u32 %v7048, 7
        %v7050 = vsub.s32 %v7047, %v7049
        %v7051 = vrot.slane %v6976, %v7050
        %v7056 = vadd.f32 %v659, %v7010
        %v7057 = vadd.f32 %v660, %v7027
        %v7058 = vadd.f32 %v661, %v7044
        %v7059 = vadd.f32 %v662, %v7051
        %7060 = vst [vmem:[#allocation2] sm:$0xff] %v7056
        %7061 = vst [vmem:[#allocation2 + $0x8] sm:$0xff] %v7057
        %7062 = vst [vmem:[#allocation2 + $0x10] sm:$0xff] %v7058
        %7063 = vst [vmem:[#allocation2 + $0x18] sm:$0x3] %v7059
        %p7064 = scmp.eq.s32.totalorder %s37, 2
        // Predicated region
        $region117: #{vae_forward.1} parent=75 // pred_check
          %p7065 = pneg %p7064
        $region118: #{vae_forward.1} parent=75 // pred_check_branch
          %7067 = sbr.rel (%p7065) target = $region120
        $region119: #{vae_forward.1} parent=75 // pred_region
          %v7068 = vld [vmem:[#allocation2] sm:$0xff]
          %v7069 = vld [vmem:[#allocation2 + $0x8] sm:$0xff]
          %v7070 = vld [vmem:[#allocation2 + $0x10] sm:$0xff]
          %v7071 = vld [vmem:[#allocation2 + $0x18] sm:$0x3]
          %v7072 = vld [vmem:[#allocation6] sm:$0xff]
          %v7073 = vld [vmem:[#allocation6 + $0x8] sm:$0x1f]
          %v7076 = vlaneseq
          %v7077 = vshrl.u32 %v7076, 7
          %v7078 = vsub.s32 0, %v7077
          %v7079 = vrot.slane %v7072, %v7078
          %v7080 = vlaneseq
          %v7081 = vshrl.u32 %v7080, 7
          %v7082 = vsub.s32 1, %v7081
          %v7083 = vrot.slane %v7072, %v7082
          %v7084 = vlaneseq
          %v7085 = vshrl.u32 %v7084, 7
          %v7086 = vsub.s32 2, %v7085
          %v7087 = vrot.slane %v7072, %v7086
          %v7088 = vlaneseq
          %v7089 = vshrl.u32 %v7088, 7
          %v7090 = vsub.s32 3, %v7089
          %v7091 = vrot.slane %v7072, %v7090
          %v7092 = vlaneseq
          %v7093 = vshrl.u32 %v7092, 7
          %v7094 = vsub.s32 4, %v7093
          %v7095 = vrot.slane %v7072, %v7094
          %v7096 = vlaneseq
          %v7097 = vshrl.u32 %v7096, 7
          %v7098 = vsub.s32 5, %v7097
          %v7099 = vrot.slane %v7072, %v7098
          %v7100 = vlaneseq
          %v7101 = vshrl.u32 %v7100, 7
          %v7102 = vsub.s32 6, %v7101
          %v7103 = vrot.slane %v7072, %v7102
          %v7104 = vlaneseq
          %v7105 = vshrl.u32 %v7104, 7
          %v7106 = vsub.s32 7, %v7105
          %v7107 = vrot.slane %v7072, %v7106
          %v7108 = vlaneseq
          %v7109 = vshrl.u32 %v7108, 7
          %v7110 = vsub.s32 0, %v7109
          %v7111 = vrot.slane %v7073, %v7110
          %v7112 = vlaneseq
          %v7113 = vshrl.u32 %v7112, 7
          %v7114 = vsub.s32 1, %v7113
          %v7115 = vrot.slane %v7073, %v7114
          %v7116 = vlaneseq
          %v7117 = vshrl.u32 %v7116, 7
          %v7118 = vsub.s32 2, %v7117
          %v7119 = vrot.slane %v7073, %v7118
          %v7120 = vlaneseq
          %v7121 = vshrl.u32 %v7120, 7
          %v7122 = vsub.s32 3, %v7121
          %v7123 = vrot.slane %v7073, %v7122
          %v7124 = vlaneseq
          %v7125 = vshrl.u32 %v7124, 7
          %v7126 = vsub.s32 4, %v7125
          %v7127 = vrot.slane %v7073, %v7126
          %v7128 = vcombine.low %v7079, %v7083
          %v7129 = vcombine.low %v7087, %v7091
          %v7131 = vunpack.c.l.s4 1983009808
          %v7132 = vunpack.c.0.s8 %v7131
          %v7133 = vlaneseq
          %v7134 = vshrl.u32 %v7133, 7
          %v7135 = vsub.s32 %v7132, %v7134
          %v7136 = vrot.slane %v7128, %v7135
          %v7138 = vunpack.c.l.s4 1983009808
          %v7139 = vunpack.c.0.s8 %v7138
          %v7140 = vlaneseq
          %v7141 = vshrl.u32 %v7140, 7
          %v7142 = vsub.s32 %v7139, %v7141
          %v7143 = vrot.slane %v7129, %v7142
          %v7144 = vcombine.low %v7136, %v7143
          %v7145 = vcombine.low %v7095, %v7099
          %v7146 = vcombine.low %v7103, %v7107
          %v7148 = vunpack.c.l.s4 1983009808
          %v7149 = vunpack.c.0.s8 %v7148
          %v7150 = vlaneseq
          %v7151 = vshrl.u32 %v7150, 7
          %v7152 = vsub.s32 %v7149, %v7151
          %v7153 = vrot.slane %v7145, %v7152
          %v7155 = vunpack.c.l.s4 1983009808
          %v7156 = vunpack.c.0.s8 %v7155
          %v7157 = vlaneseq
          %v7158 = vshrl.u32 %v7157, 7
          %v7159 = vsub.s32 %v7156, %v7158
          %v7160 = vrot.slane %v7146, %v7159
          %v7161 = vcombine.low %v7153, %v7160
          %v7162 = vcombine.low %v7111, %v7115
          %v7163 = vcombine.low %v7119, %v7123
          %v7165 = vunpack.c.l.s4 1983009808
          %v7166 = vunpack.c.0.s8 %v7165
          %v7167 = vlaneseq
          %v7168 = vshrl.u32 %v7167, 7
          %v7169 = vsub.s32 %v7166, %v7168
          %v7170 = vrot.slane %v7162, %v7169
          %v7172 = vunpack.c.l.s4 1983009808
          %v7173 = vunpack.c.0.s8 %v7172
          %v7174 = vlaneseq
          %v7175 = vshrl.u32 %v7174, 7
          %v7176 = vsub.s32 %v7173, %v7175
          %v7177 = vrot.slane %v7163, %v7176
          %v7178 = vcombine.low %v7170, %v7177
          %v7180 = vunpack.c.l.s4 1983009808
          %v7181 = vunpack.c.0.s8 %v7180
          %v7182 = vlaneseq
          %v7183 = vshrl.u32 %v7182, 7
          %v7184 = vsub.s32 %v7181, %v7183
          %v7185 = vrot.slane %v7127, %v7184
          %v7190 = vadd.f32 %v7068, %v7144
          %v7191 = vadd.f32 %v7069, %v7161
          %v7192 = vadd.f32 %v7070, %v7178
          %v7193 = vadd.f32 %v7071, %v7185
          %v7194 = vmax.f32 %v7190, 0.0
          %v7195 = vmax.f32 %v7191, 0.0
          %v7196 = vmax.f32 %v7192, 0.0
          %v7197 = vmax.f32 %v7193, 0.0
          %v7198 = vld [vmem:[%s3] sm:$0xff]
          %v7199 = vld [vmem:[%s3 + $0x8] sm:$0xff]
          %v7200 = vld [vmem:[%s3 + $0x10] sm:$0xff]
          %v7201 = vld [vmem:[%s3 + $0x18] sm:$0xff]
          %v7202 = vld [vmem:[%s3 + $0x20] sm:$0xff]
          %v7203 = vld [vmem:[%s3 + $0x28] sm:$0xff]
          %v7204 = vld [vmem:[%s3 + $0x30] sm:$0xff]
          %v7205 = vld [vmem:[%s3 + $0x38] sm:$0xff]
          %v7206 = vld [vmem:[%s3 + $0x40] sm:$0xff]
          %v7207 = vld [vmem:[%s3 + $0x48] sm:$0xff]
          %v7208 = vld [vmem:[%s3 + $0x50] sm:$0xff]
          %v7209 = vld [vmem:[%s3 + $0x58] sm:$0xff]
          %v7210 = vld [vmem:[%s3 + $0x60] sm:$0xff]
          %v7211 = vld [vmem:[%s3 + $0x68] sm:$0xff]
          %v7212 = vld [vmem:[%s3 + $0x70] sm:$0xff]
          %v7213 = vld [vmem:[%s3 + $0x78] sm:$0xff]
          %v7214 = vld [vmem:[%s3 + $0x80] sm:$0xff]
          %v7215 = vld [vmem:[%s3 + $0x88] sm:$0xff]
          %v7216 = vld [vmem:[%s3 + $0x90] sm:$0xff]
          %v7217 = vld [vmem:[%s3 + $0x98] sm:$0xff]
          %v7218 = vld [vmem:[%s3 + $0xa0] sm:$0xff]
          %v7219 = vld [vmem:[%s3 + $0xa8] sm:$0xff]
          %v7220 = vld [vmem:[%s3 + $0xb0] sm:$0xff]
          %v7221 = vld [vmem:[%s3 + $0xb8] sm:$0xff]
          %v7222 = vld [vmem:[%s3 + $0xc0] sm:$0xff]
          %v7223 = vld [vmem:[%s3 + $0xc8] sm:$0xff]
          %v7224 = vld [vmem:[%s3 + $0xd0] sm:$0xff]
          %v7225 = vld [vmem:[%s3 + $0xd8] sm:$0xff]
          %v7226 = vld [vmem:[%s3 + $0xe0] sm:$0xff]
          %v7227 = vld [vmem:[%s3 + $0xe8] sm:$0xff]
          %v7228 = vld [vmem:[%s3 + $0xf0] sm:$0xff]
          %v7229 = vld [vmem:[%s3 + $0xf8] sm:$0xff]
          %v7230 = vld [vmem:[%s3 + $0x100] sm:$0xff]
          %v7231 = vld [vmem:[%s3 + $0x108] sm:$0xff]
          %v7232 = vld [vmem:[%s3 + $0x110] sm:$0xff]
          %v7233 = vld [vmem:[%s3 + $0x118] sm:$0xff]
          %v7234 = vld [vmem:[%s3 + $0x120] sm:$0xff]
          %v7235 = vld [vmem:[%s3 + $0x128] sm:$0xff]
          %v7236 = vld [vmem:[%s3 + $0x130] sm:$0xff]
          %v7237 = vld [vmem:[%s3 + $0x138] sm:$0xff]
          %v7238 = vld [vmem:[%s3 + $0x140] sm:$0xff]
          %v7239 = vld [vmem:[%s3 + $0x148] sm:$0xff]
          %v7240 = vld [vmem:[%s3 + $0x150] sm:$0xff]
          %v7241 = vld [vmem:[%s3 + $0x158] sm:$0xff]
          %v7242 = vld [vmem:[%s3 + $0x160] sm:$0xff]
          %v7243 = vld [vmem:[%s3 + $0x168] sm:$0xff]
          %v7244 = vld [vmem:[%s3 + $0x170] sm:$0xff]
          %v7245 = vld [vmem:[%s3 + $0x178] sm:$0xff]
          %v7246 = vld [vmem:[%s3 + $0x180] sm:$0xff]
          %v7247 = vld [vmem:[%s3 + $0x188] sm:$0xff]
          %v7248 = vld [vmem:[%s3 + $0x190] sm:$0xff]
          %v7249 = vld [vmem:[%s3 + $0x198] sm:$0xff]
          %v7250 = vld [vmem:[%s3 + $0x1a0] sm:$0xff]
          %v7251 = vld [vmem:[%s3 + $0x1a8] sm:$0xff]
          %v7252 = vld [vmem:[%s3 + $0x1b0] sm:$0xff]
          %v7253 = vld [vmem:[%s3 + $0x1b8] sm:$0xff]
          %v7254 = vld [vmem:[%s3 + $0x1c0] sm:$0xff]
          %v7255 = vld [vmem:[%s3 + $0x1c8] sm:$0xff]
          %v7256 = vld [vmem:[%s3 + $0x1d0] sm:$0xff]
          %v7257 = vld [vmem:[%s3 + $0x1d8] sm:$0xff]
          %v7258 = vld [vmem:[%s3 + $0x1e0] sm:$0xff]
          %v7259 = vld [vmem:[%s3 + $0x1e8] sm:$0xff]
          %v7260 = vld [vmem:[%s3 + $0x1f0] sm:$0xff]
          %v7261 = vld [vmem:[%s3 + $0x1f8] sm:$0xff]
          %v7262 = vld [vmem:[%s3 + $0x200] sm:$0xff]
          %v7263 = vld [vmem:[%s3 + $0x208] sm:$0xff]
          %v7264 = vld [vmem:[%s3 + $0x210] sm:$0xff]
          %v7265 = vld [vmem:[%s3 + $0x218] sm:$0xff]
          %v7266 = vld [vmem:[%s3 + $0x220] sm:$0xff]
          %v7267 = vld [vmem:[%s3 + $0x228] sm:$0xff]
          %v7268 = vld [vmem:[%s3 + $0x230] sm:$0xff]
          %v7269 = vld [vmem:[%s3 + $0x238] sm:$0xff]
          %v7270 = vld [vmem:[%s3 + $0x240] sm:$0xff]
          %v7271 = vld [vmem:[%s3 + $0x248] sm:$0xff]
          %v7272 = vld [vmem:[%s3 + $0x250] sm:$0xff]
          %v7273 = vld [vmem:[%s3 + $0x258] sm:$0xff]
          %v7274 = vld [vmem:[%s3 + $0x260] sm:$0xff]
          %v7275 = vld [vmem:[%s3 + $0x268] sm:$0xff]
          %v7276 = vld [vmem:[%s3 + $0x270] sm:$0xff]
          %v7277 = vld [vmem:[%s3 + $0x278] sm:$0xff]
          %v7278 = vld [vmem:[%s3 + $0x280] sm:$0xff]
          %v7279 = vld [vmem:[%s3 + $0x288] sm:$0xff]
          %v7280 = vld [vmem:[%s3 + $0x290] sm:$0xff]
          %v7281 = vld [vmem:[%s3 + $0x298] sm:$0xff]
          %v7282 = vld [vmem:[%s3 + $0x2a0] sm:$0xff]
          %v7283 = vld [vmem:[%s3 + $0x2a8] sm:$0xff]
          %v7284 = vld [vmem:[%s3 + $0x2b0] sm:$0xff]
          %v7285 = vld [vmem:[%s3 + $0x2b8] sm:$0xff]
          %v7286 = vld [vmem:[%s3 + $0x2c0] sm:$0xff]
          %v7287 = vld [vmem:[%s3 + $0x2c8] sm:$0xff]
          %v7288 = vld [vmem:[%s3 + $0x2d0] sm:$0xff]
          %v7289 = vld [vmem:[%s3 + $0x2d8] sm:$0xff]
          %v7290 = vld [vmem:[%s3 + $0x2e0] sm:$0xff]
          %v7291 = vld [vmem:[%s3 + $0x2e8] sm:$0xff]
          %v7292 = vld [vmem:[%s3 + $0x2f0] sm:$0xff]
          %v7293 = vld [vmem:[%s3 + $0x2f8] sm:$0xff]
          %v7294 = vld [vmem:[%s3 + $0x300] sm:$0xff]
          %v7295 = vld [vmem:[%s3 + $0x308] sm:$0xff]
          %v7296 = vld [vmem:[%s3 + $0x310] sm:$0xff]
          %v7297 = vld [vmem:[%s3 + $0x318] sm:$0xff]
          %v7298 = vld [vmem:[%s3 + $0x320] sm:$0xff]
          %v7299 = vld [vmem:[%s3 + $0x328] sm:$0xff]
          %v7300 = vld [vmem:[%s3 + $0x330] sm:$0xff]
          %v7301 = vld [vmem:[%s3 + $0x338] sm:$0xff]
          %v7302 = vld [vmem:[%s3 + $0x340] sm:$0xff]
          %v7303 = vld [vmem:[%s3 + $0x348] sm:$0xff]
          %v7304 = vld [vmem:[%s3 + $0x350] sm:$0xff]
          %v7305 = vld [vmem:[%s3 + $0x358] sm:$0xff]
          %v7306 = vld [vmem:[%s3 + $0x360] sm:$0xff]
          %v7307 = vld [vmem:[%s3 + $0x368] sm:$0xff]
          %v7308 = vld [vmem:[%s3 + $0x370] sm:$0xff]
          %v7309 = vld [vmem:[%s3 + $0x378] sm:$0xff]
          %v7310 = vld [vmem:[%s3 + $0x380] sm:$0xff]
          %v7311 = vld [vmem:[%s3 + $0x388] sm:$0xff]
          %v7312 = vld [vmem:[%s3 + $0x390] sm:$0xff]
          %v7313 = vld [vmem:[%s3 + $0x398] sm:$0xff]
          %v7314 = vld [vmem:[%s3 + $0x3a0] sm:$0xff]
          %v7315 = vld [vmem:[%s3 + $0x3a8] sm:$0xff]
          %v7316 = vld [vmem:[%s3 + $0x3b0] sm:$0xff]
          %v7317 = vld [vmem:[%s3 + $0x3b8] sm:$0xff]
          %v7318 = vld [vmem:[%s3 + $0x3c0] sm:$0xff]
          %v7319 = vld [vmem:[%s3 + $0x3c8] sm:$0xff]
          %v7320 = vld [vmem:[%s3 + $0x3d0] sm:$0xff]
          %v7321 = vld [vmem:[%s3 + $0x3d8] sm:$0xff]
          %v7322 = vld [vmem:[%s3 + $0x3e0] sm:$0xff]
          %v7323 = vld [vmem:[%s3 + $0x3e8] sm:$0xff]
          %v7324 = vld [vmem:[%s3 + $0x3f0] sm:$0xff]
          %v7325 = vld [vmem:[%s3 + $0x3f8] sm:$0xff]
          %v7326 = vld [vmem:[%s3 + $0x400] sm:$0xff]
          %v7327 = vld [vmem:[%s3 + $0x408] sm:$0xff]
          %v7328 = vld [vmem:[%s3 + $0x410] sm:$0xff]
          %v7329 = vld [vmem:[%s3 + $0x418] sm:$0xff]
          %v7330 = vld [vmem:[%s3 + $0x420] sm:$0xff]
          %v7331 = vld [vmem:[%s3 + $0x428] sm:$0xff]
          %v7332 = vld [vmem:[%s3 + $0x430] sm:$0xff]
          %v7333 = vld [vmem:[%s3 + $0x438] sm:$0xff]
          %v7334 = vld [vmem:[%s3 + $0x440] sm:$0xff]
          %v7335 = vld [vmem:[%s3 + $0x448] sm:$0xff]
          %v7336 = vld [vmem:[%s3 + $0x450] sm:$0xff]
          %v7337 = vld [vmem:[%s3 + $0x458] sm:$0xff]
          %v7338 = vld [vmem:[%s3 + $0x460] sm:$0xff]
          %v7339 = vld [vmem:[%s3 + $0x468] sm:$0xff]
          %v7340 = vld [vmem:[%s3 + $0x470] sm:$0xff]
          %v7341 = vld [vmem:[%s3 + $0x478] sm:$0xff]
          %v7342 = vld [vmem:[%s3 + $0x480] sm:$0xff]
          %v7343 = vld [vmem:[%s3 + $0x488] sm:$0xff]
          %v7344 = vld [vmem:[%s3 + $0x490] sm:$0xff]
          %v7345 = vld [vmem:[%s3 + $0x498] sm:$0xff]
          %v7346 = vld [vmem:[%s3 + $0x4a0] sm:$0xff]
          %v7347 = vld [vmem:[%s3 + $0x4a8] sm:$0xff]
          %v7348 = vld [vmem:[%s3 + $0x4b0] sm:$0xff]
          %v7349 = vld [vmem:[%s3 + $0x4b8] sm:$0xff]
          %v7350 = vld [vmem:[%s3 + $0x4c0] sm:$0xff]
          %v7351 = vld [vmem:[%s3 + $0x4c8] sm:$0xff]
          %v7352 = vld [vmem:[%s3 + $0x4d0] sm:$0xff]
          %v7353 = vld [vmem:[%s3 + $0x4d8] sm:$0xff]
          %v7354 = vld [vmem:[%s3 + $0x4e0] sm:$0xff]
          %v7355 = vld [vmem:[%s3 + $0x4e8] sm:$0xff]
          %v7356 = vld [vmem:[%s3 + $0x4f0] sm:$0xff]
          %v7357 = vld [vmem:[%s3 + $0x4f8] sm:$0xff]
          %v7358 = vld [vmem:[%s3 + $0x500] sm:$0xff]
          %v7359 = vld [vmem:[%s3 + $0x508] sm:$0xff]
          %v7360 = vld [vmem:[%s3 + $0x510] sm:$0xff]
          %v7361 = vld [vmem:[%s3 + $0x518] sm:$0xff]
          %v7362 = vld [vmem:[%s3 + $0x520] sm:$0xff]
          %v7363 = vld [vmem:[%s3 + $0x528] sm:$0xff]
          %v7364 = vld [vmem:[%s3 + $0x530] sm:$0xff]
          %v7365 = vld [vmem:[%s3 + $0x538] sm:$0xff]
          %v7366 = vld [vmem:[%s3 + $0x540] sm:$0xff]
          %v7367 = vld [vmem:[%s3 + $0x548] sm:$0xff]
          %v7368 = vld [vmem:[%s3 + $0x550] sm:$0xff]
          %v7369 = vld [vmem:[%s3 + $0x558] sm:$0xff]
          %v7370 = vld [vmem:[%s3 + $0x560] sm:$0xff]
          %v7371 = vld [vmem:[%s3 + $0x568] sm:$0xff]
          %v7372 = vld [vmem:[%s3 + $0x570] sm:$0xff]
          %v7373 = vld [vmem:[%s3 + $0x578] sm:$0xff]
          %v7374 = vld [vmem:[%s3 + $0x580] sm:$0xff]
          %v7375 = vld [vmem:[%s3 + $0x588] sm:$0xff]
          %v7376 = vld [vmem:[%s3 + $0x590] sm:$0xff]
          %v7377 = vld [vmem:[%s3 + $0x598] sm:$0xff]
          %v7378 = vld [vmem:[%s3 + $0x5a0] sm:$0xff]
          %v7379 = vld [vmem:[%s3 + $0x5a8] sm:$0xff]
          %v7380 = vld [vmem:[%s3 + $0x5b0] sm:$0xff]
          %v7381 = vld [vmem:[%s3 + $0x5b8] sm:$0xff]
          %v7382 = vld [vmem:[%s3 + $0x5c0] sm:$0xff]
          %v7383 = vld [vmem:[%s3 + $0x5c8] sm:$0xff]
          %v7384 = vld [vmem:[%s3 + $0x5d0] sm:$0xff]
          %v7385 = vld [vmem:[%s3 + $0x5d8] sm:$0xff]
          %v7386 = vld [vmem:[%s3 + $0x5e0] sm:$0xff]
          %v7387 = vld [vmem:[%s3 + $0x5e8] sm:$0xff]
          %v7388 = vld [vmem:[%s3 + $0x5f0] sm:$0xff]
          %v7389 = vld [vmem:[%s3 + $0x5f8] sm:$0xff]
          %v7390 = vld [vmem:[%s3 + $0x600] sm:$0xff]
          %v7391 = vld [vmem:[%s3 + $0x608] sm:$0xff]
          %v7392 = vld [vmem:[%s3 + $0x610] sm:$0xff]
          %v7393 = vld [vmem:[%s3 + $0x618] sm:$0xff]
          %v7394 = vld [vmem:[%s3 + $0x620] sm:$0xff]
          %v7395 = vld [vmem:[%s3 + $0x628] sm:$0xff]
          %v7396 = vld [vmem:[%s3 + $0x630] sm:$0xff]
          %v7397 = vld [vmem:[%s3 + $0x638] sm:$0xff]
          %v7398 = vld [vmem:[%s3 + $0x640] sm:$0xff]
          %v7399 = vld [vmem:[%s3 + $0x648] sm:$0xff]
          %v7400 = vld [vmem:[%s3 + $0x650] sm:$0xff]
          %v7401 = vld [vmem:[%s3 + $0x658] sm:$0xff]
          %v7402 = vld [vmem:[%s3 + $0x660] sm:$0xff]
          %v7403 = vld [vmem:[%s3 + $0x668] sm:$0xff]
          %v7404 = vld [vmem:[%s3 + $0x670] sm:$0xff]
          %v7405 = vld [vmem:[%s3 + $0x678] sm:$0xff]
          %v7406 = vld [vmem:[#allocation8] sm:$0x1]
          %v7408 = vlaneseq
          %v7409 = vshrl.u32 %v7408, 7
          %v7410 = vsub.s32 0, %v7409
          %v7411 = vrot.slane %v7406, %v7410
          %v7417 = vcombine.high %v7194, %v7194
          %v7419 = vunpack.c.l.s4 1983009808
          %v7420 = vunpack.c.0.s8 %v7419
          %v7421 = vlaneseq
          %v7422 = vshrl.u32 %v7421, 7
          %v7423 = vsub.s32 %v7420, %v7422
          %v7424 = vrot.slane %v7194, %v7423
          %v7426 = vunpack.c.l.s4 1983009808
          %v7427 = vunpack.c.0.s8 %v7426
          %v7428 = vlaneseq
          %v7429 = vshrl.u32 %v7428, 7
          %v7430 = vsub.s32 %v7427, %v7429
          %v7431 = vrot.slane %v7417, %v7430
          %v7432 = vcombine.high %v7424, %v7424
          %v7433 = vcombine.high %v7431, %v7431
          %v7434 = vcombine.high %v7195, %v7195
          %v7436 = vunpack.c.l.s4 1983009808
          %v7437 = vunpack.c.0.s8 %v7436
          %v7438 = vlaneseq
          %v7439 = vshrl.u32 %v7438, 7
          %v7440 = vsub.s32 %v7437, %v7439
          %v7441 = vrot.slane %v7195, %v7440
          %v7443 = vunpack.c.l.s4 1983009808
          %v7444 = vunpack.c.0.s8 %v7443
          %v7445 = vlaneseq
          %v7446 = vshrl.u32 %v7445, 7
          %v7447 = vsub.s32 %v7444, %v7446
          %v7448 = vrot.slane %v7434, %v7447
          %v7449 = vcombine.high %v7441, %v7441
          %v7450 = vcombine.high %v7448, %v7448
          %v7451 = vcombine.high %v7196, %v7196
          %v7453 = vunpack.c.l.s4 1983009808
          %v7454 = vunpack.c.0.s8 %v7453
          %v7455 = vlaneseq
          %v7456 = vshrl.u32 %v7455, 7
          %v7457 = vsub.s32 %v7454, %v7456
          %v7458 = vrot.slane %v7196, %v7457
          %v7460 = vunpack.c.l.s4 1983009808
          %v7461 = vunpack.c.0.s8 %v7460
          %v7462 = vlaneseq
          %v7463 = vshrl.u32 %v7462, 7
          %v7464 = vsub.s32 %v7461, %v7463
          %v7465 = vrot.slane %v7451, %v7464
          %v7466 = vcombine.high %v7458, %v7458
          %v7467 = vcombine.high %v7465, %v7465
          %v7469 = vunpack.c.l.s4 1983009808
          %v7470 = vunpack.c.0.s8 %v7469
          %v7471 = vlaneseq
          %v7472 = vshrl.u32 %v7471, 7
          %v7473 = vsub.s32 %v7470, %v7472
          %v7474 = vrot.slane %v7197, %v7473
          %7488 = vmatprep.subr.mxu0 0.0
          %7489 = vmatpush1.msra.mxu0 %v7213
          %7490 = vmatprep.subr.mxu0 0.0
          %7491 = vmatpush1.msra.mxu0 %v7212
          %7492 = vmatprep.subr.mxu0 0.0
          %7493 = vmatpush1.msra.mxu0 %v7211
          %7494 = vmatprep.subr.mxu0 0.0
          %7495 = vmatpush1.msra.mxu0 %v7210
          %7496 = vmatprep.subr.mxu0 0.0
          %7497 = vmatpush1.msra.mxu0 %v7209
          %7498 = vmatprep.subr.mxu0 0.0
          %7499 = vmatpush1.msra.mxu0 %v7208
          %7500 = vmatprep.subr.mxu0 0.0
          %7501 = vmatpush1.msra.mxu0 %v7207
          %7502 = vmatprep.subr.mxu0 0.0
          %7503 = vmatpush1.msra.mxu0 %v7206
          %7504 = vmatprep.subr.mxu0 0.0
          %7505 = vmatpush1.msra.mxu0 %v7205
          %7506 = vmatprep.subr.mxu0 0.0
          %7507 = vmatpush1.msra.mxu0 %v7204
          %7508 = vmatprep.subr.mxu0 0.0
          %7509 = vmatpush1.msra.mxu0 %v7203
          %7510 = vmatprep.subr.mxu0 0.0
          %7511 = vmatpush1.msra.mxu0 %v7202
          %7512 = vmatprep.subr.mxu0 0.0
          %7513 = vmatpush1.msra.mxu0 %v7201
          %7514 = vmatprep.subr.mxu0 0.0
          %7515 = vmatpush1.msra.mxu0 %v7200
          %7516 = vmatprep.subr.mxu0 0.0
          %7517 = vmatpush1.msra.mxu0 %v7199
          %7518 = vmatprep.subr.mxu0 0.0
          %7519 = vmatpush1.msra.mxu0 %v7198
          %7520 = vmatprep.subr.mxu0 0.0
          %7521 = vmatpush2.msra.mxu0 %v7229
          %7522 = vmatprep.subr.mxu0 0.0
          %7523 = vmatpush2.msra.mxu0 %v7228
          %7524 = vmatprep.subr.mxu0 0.0
          %7525 = vmatpush2.msra.mxu0 %v7227
          %7526 = vmatprep.subr.mxu0 0.0
          %7527 = vmatpush2.msra.mxu0 %v7226
          %7528 = vmatprep.subr.mxu0 0.0
          %7529 = vmatpush2.msra.mxu0 %v7225
          %7530 = vmatprep.subr.mxu0 0.0
          %7531 = vmatpush2.msra.mxu0 %v7224
          %7532 = vmatprep.subr.mxu0 0.0
          %7533 = vmatpush2.msra.mxu0 %v7223
          %7534 = vmatprep.subr.mxu0 0.0
          %7535 = vmatpush2.msra.mxu0 %v7222
          %7536 = vmatprep.subr.mxu0 0.0
          %7537 = vmatpush2.msra.mxu0 %v7221
          %7538 = vmatprep.subr.mxu0 0.0
          %7539 = vmatpush2.msra.mxu0 %v7220
          %7540 = vmatprep.subr.mxu0 0.0
          %7541 = vmatpush2.msra.mxu0 %v7219
          %7542 = vmatprep.subr.mxu0 0.0
          %7543 = vmatpush2.msra.mxu0 %v7218
          %7544 = vmatprep.subr.mxu0 0.0
          %7545 = vmatpush2.msra.mxu0 %v7217
          %7546 = vmatprep.subr.mxu0 0.0
          %7547 = vmatpush2.msra.mxu0 %v7216
          %7548 = vmatprep.subr.mxu0 0.0
          %7549 = vmatpush2.msra.mxu0 %v7215
          %7550 = vmatprep.subr.mxu0 0.0
          %7551 = vmatpush2.msra.mxu0 %v7214
          %7552 = vmatprep.mubr.f32.mxu0 %v7432
          %7553 = vmatmul.mubr.f32.gmra.mxu0 %v7424
          %v7554 = vpop.f32.mrf.mxu0
          %v7555 = vadd.f32 %v7411, %v7554
          %v7556 = vpop.f32.mrf.mxu0
          %7557 = vdwg.mxu0
          %7558 = vmatprep.subr.mxu0 0.0
          %7559 = vmatpush1.msra.mxu0 %v7245
          %7560 = vmatprep.subr.mxu0 0.0
          %7561 = vmatpush1.msra.mxu0 %v7244
          %7562 = vmatprep.subr.mxu0 0.0
          %7563 = vmatpush1.msra.mxu0 %v7243
          %7564 = vmatprep.subr.mxu0 0.0
          %7565 = vmatpush1.msra.mxu0 %v7242
          %7566 = vmatprep.subr.mxu0 0.0
          %7567 = vmatpush1.msra.mxu0 %v7241
          %7568 = vmatprep.subr.mxu0 0.0
          %7569 = vmatpush1.msra.mxu0 %v7240
          %7570 = vmatprep.subr.mxu0 0.0
          %7571 = vmatpush1.msra.mxu0 %v7239
          %7572 = vmatprep.subr.mxu0 0.0
          %7573 = vmatpush1.msra.mxu0 %v7238
          %7574 = vmatprep.subr.mxu0 0.0
          %7575 = vmatpush1.msra.mxu0 %v7237
          %7576 = vmatprep.subr.mxu0 0.0
          %7577 = vmatpush1.msra.mxu0 %v7236
          %7578 = vmatprep.subr.mxu0 0.0
          %7579 = vmatpush1.msra.mxu0 %v7235
          %7580 = vmatprep.subr.mxu0 0.0
          %7581 = vmatpush1.msra.mxu0 %v7234
          %7582 = vmatprep.subr.mxu0 0.0
          %7583 = vmatpush1.msra.mxu0 %v7233
          %7584 = vmatprep.subr.mxu0 0.0
          %7585 = vmatpush1.msra.mxu0 %v7232
          %7586 = vmatprep.subr.mxu0 0.0
          %7587 = vmatpush1.msra.mxu0 %v7231
          %7588 = vmatprep.subr.mxu0 0.0
          %7589 = vmatpush1.msra.mxu0 %v7230
          %7590 = vmatprep.subr.mxu0 0.0
          %7591 = vmatpush2.msra.mxu0 %v7261
          %7592 = vmatprep.subr.mxu0 0.0
          %7593 = vmatpush2.msra.mxu0 %v7260
          %7594 = vmatprep.subr.mxu0 0.0
          %7595 = vmatpush2.msra.mxu0 %v7259
          %7596 = vmatprep.subr.mxu0 0.0
          %7597 = vmatpush2.msra.mxu0 %v7258
          %7598 = vmatprep.subr.mxu0 0.0
          %7599 = vmatpush2.msra.mxu0 %v7257
          %7600 = vmatprep.subr.mxu0 0.0
          %7601 = vmatpush2.msra.mxu0 %v7256
          %7602 = vmatprep.subr.mxu0 0.0
          %7603 = vmatpush2.msra.mxu0 %v7255
          %7604 = vmatprep.subr.mxu0 0.0
          %7605 = vmatpush2.msra.mxu0 %v7254
          %7606 = vmatprep.subr.mxu0 0.0
          %7607 = vmatpush2.msra.mxu0 %v7253
          %7608 = vmatprep.subr.mxu0 0.0
          %7609 = vmatpush2.msra.mxu0 %v7252
          %7610 = vmatprep.subr.mxu0 0.0
          %7611 = vmatpush2.msra.mxu0 %v7251
          %7612 = vmatprep.subr.mxu0 0.0
          %7613 = vmatpush2.msra.mxu0 %v7250
          %7614 = vmatprep.subr.mxu0 0.0
          %7615 = vmatpush2.msra.mxu0 %v7249
          %7616 = vmatprep.subr.mxu0 0.0
          %7617 = vmatpush2.msra.mxu0 %v7248
          %7618 = vmatprep.subr.mxu0 0.0
          %7619 = vmatpush2.msra.mxu0 %v7247
          %7620 = vmatprep.subr.mxu0 0.0
          %7621 = vmatpush2.msra.mxu0 %v7246
          %7622 = vmatprep.mubr.f32.mxu0 %v7433
          %7623 = vmatmul.mubr.f32.gmra.mxu0 %v7431
          %v7624 = vpop.f32.mrf.mxu0
          %v7625 = vadd.f32 %v7555, %v7624
          %v7626 = vpop.f32.mrf.mxu0
          %7627 = vdwg.mxu0
          %7628 = vmatprep.subr.mxu0 0.0
          %7629 = vmatpush1.msra.mxu0 %v7277
          %7630 = vmatprep.subr.mxu0 0.0
          %7631 = vmatpush1.msra.mxu0 %v7276
          %7632 = vmatprep.subr.mxu0 0.0
          %7633 = vmatpush1.msra.mxu0 %v7275
          %7634 = vmatprep.subr.mxu0 0.0
          %7635 = vmatpush1.msra.mxu0 %v7274
          %7636 = vmatprep.subr.mxu0 0.0
          %7637 = vmatpush1.msra.mxu0 %v7273
          %7638 = vmatprep.subr.mxu0 0.0
          %7639 = vmatpush1.msra.mxu0 %v7272
          %7640 = vmatprep.subr.mxu0 0.0
          %7641 = vmatpush1.msra.mxu0 %v7271
          %7642 = vmatprep.subr.mxu0 0.0
          %7643 = vmatpush1.msra.mxu0 %v7270
          %7644 = vmatprep.subr.mxu0 0.0
          %7645 = vmatpush1.msra.mxu0 %v7269
          %7646 = vmatprep.subr.mxu0 0.0
          %7647 = vmatpush1.msra.mxu0 %v7268
          %7648 = vmatprep.subr.mxu0 0.0
          %7649 = vmatpush1.msra.mxu0 %v7267
          %7650 = vmatprep.subr.mxu0 0.0
          %7651 = vmatpush1.msra.mxu0 %v7266
          %7652 = vmatprep.subr.mxu0 0.0
          %7653 = vmatpush1.msra.mxu0 %v7265
          %7654 = vmatprep.subr.mxu0 0.0
          %7655 = vmatpush1.msra.mxu0 %v7264
          %7656 = vmatprep.subr.mxu0 0.0
          %7657 = vmatpush1.msra.mxu0 %v7263
          %7658 = vmatprep.subr.mxu0 0.0
          %7659 = vmatpush1.msra.mxu0 %v7262
          %7660 = vmatprep.subr.mxu0 0.0
          %7661 = vmatpush2.msra.mxu0 %v7293
          %7662 = vmatprep.subr.mxu0 0.0
          %7663 = vmatpush2.msra.mxu0 %v7292
          %7664 = vmatprep.subr.mxu0 0.0
          %7665 = vmatpush2.msra.mxu0 %v7291
          %7666 = vmatprep.subr.mxu0 0.0
          %7667 = vmatpush2.msra.mxu0 %v7290
          %7668 = vmatprep.subr.mxu0 0.0
          %7669 = vmatpush2.msra.mxu0 %v7289
          %7670 = vmatprep.subr.mxu0 0.0
          %7671 = vmatpush2.msra.mxu0 %v7288
          %7672 = vmatprep.subr.mxu0 0.0
          %7673 = vmatpush2.msra.mxu0 %v7287
          %7674 = vmatprep.subr.mxu0 0.0
          %7675 = vmatpush2.msra.mxu0 %v7286
          %7676 = vmatprep.subr.mxu0 0.0
          %7677 = vmatpush2.msra.mxu0 %v7285
          %7678 = vmatprep.subr.mxu0 0.0
          %7679 = vmatpush2.msra.mxu0 %v7284
          %7680 = vmatprep.subr.mxu0 0.0
          %7681 = vmatpush2.msra.mxu0 %v7283
          %7682 = vmatprep.subr.mxu0 0.0
          %7683 = vmatpush2.msra.mxu0 %v7282
          %7684 = vmatprep.subr.mxu0 0.0
          %7685 = vmatpush2.msra.mxu0 %v7281
          %7686 = vmatprep.subr.mxu0 0.0
          %7687 = vmatpush2.msra.mxu0 %v7280
          %7688 = vmatprep.subr.mxu0 0.0
          %7689 = vmatpush2.msra.mxu0 %v7279
          %7690 = vmatprep.subr.mxu0 0.0
          %7691 = vmatpush2.msra.mxu0 %v7278
          %7692 = vmatprep.mubr.f32.mxu0 %v7449
          %7693 = vmatmul.mubr.f32.gmra.mxu0 %v7441
          %v7694 = vpop.f32.mrf.mxu0
          %v7695 = vadd.f32 %v7625, %v7694
          %v7696 = vpop.f32.mrf.mxu0
          %7697 = vdwg.mxu0
          %7698 = vmatprep.subr.mxu0 0.0
          %7699 = vmatpush1.msra.mxu0 %v7309
          %7700 = vmatprep.subr.mxu0 0.0
          %7701 = vmatpush1.msra.mxu0 %v7308
          %7702 = vmatprep.subr.mxu0 0.0
          %7703 = vmatpush1.msra.mxu0 %v7307
          %7704 = vmatprep.subr.mxu0 0.0
          %7705 = vmatpush1.msra.mxu0 %v7306
          %7706 = vmatprep.subr.mxu0 0.0
          %7707 = vmatpush1.msra.mxu0 %v7305
          %7708 = vmatprep.subr.mxu0 0.0
          %7709 = vmatpush1.msra.mxu0 %v7304
          %7710 = vmatprep.subr.mxu0 0.0
          %7711 = vmatpush1.msra.mxu0 %v7303
          %7712 = vmatprep.subr.mxu0 0.0
          %7713 = vmatpush1.msra.mxu0 %v7302
          %7714 = vmatprep.subr.mxu0 0.0
          %7715 = vmatpush1.msra.mxu0 %v7301
          %7716 = vmatprep.subr.mxu0 0.0
          %7717 = vmatpush1.msra.mxu0 %v7300
          %7718 = vmatprep.subr.mxu0 0.0
          %7719 = vmatpush1.msra.mxu0 %v7299
          %7720 = vmatprep.subr.mxu0 0.0
          %7721 = vmatpush1.msra.mxu0 %v7298
          %7722 = vmatprep.subr.mxu0 0.0
          %7723 = vmatpush1.msra.mxu0 %v7297
          %7724 = vmatprep.subr.mxu0 0.0
          %7725 = vmatpush1.msra.mxu0 %v7296
          %7726 = vmatprep.subr.mxu0 0.0
          %7727 = vmatpush1.msra.mxu0 %v7295
          %7728 = vmatprep.subr.mxu0 0.0
          %7729 = vmatpush1.msra.mxu0 %v7294
          %7730 = vmatprep.subr.mxu0 0.0
          %7731 = vmatpush2.msra.mxu0 %v7325
          %7732 = vmatprep.subr.mxu0 0.0
          %7733 = vmatpush2.msra.mxu0 %v7324
          %7734 = vmatprep.subr.mxu0 0.0
          %7735 = vmatpush2.msra.mxu0 %v7323
          %7736 = vmatprep.subr.mxu0 0.0
          %7737 = vmatpush2.msra.mxu0 %v7322
          %7738 = vmatprep.subr.mxu0 0.0
          %7739 = vmatpush2.msra.mxu0 %v7321
          %7740 = vmatprep.subr.mxu0 0.0
          %7741 = vmatpush2.msra.mxu0 %v7320
          %7742 = vmatprep.subr.mxu0 0.0
          %7743 = vmatpush2.msra.mxu0 %v7319
          %7744 = vmatprep.subr.mxu0 0.0
          %7745 = vmatpush2.msra.mxu0 %v7318
          %7746 = vmatprep.subr.mxu0 0.0
          %7747 = vmatpush2.msra.mxu0 %v7317
          %7748 = vmatprep.subr.mxu0 0.0
          %7749 = vmatpush2.msra.mxu0 %v7316
          %7750 = vmatprep.subr.mxu0 0.0
          %7751 = vmatpush2.msra.mxu0 %v7315
          %7752 = vmatprep.subr.mxu0 0.0
          %7753 = vmatpush2.msra.mxu0 %v7314
          %7754 = vmatprep.subr.mxu0 0.0
          %7755 = vmatpush2.msra.mxu0 %v7313
          %7756 = vmatprep.subr.mxu0 0.0
          %7757 = vmatpush2.msra.mxu0 %v7312
          %7758 = vmatprep.subr.mxu0 0.0
          %7759 = vmatpush2.msra.mxu0 %v7311
          %7760 = vmatprep.subr.mxu0 0.0
          %7761 = vmatpush2.msra.mxu0 %v7310
          %7762 = vmatprep.mubr.f32.mxu0 %v7450
          %7763 = vmatmul.mubr.f32.gmra.mxu0 %v7448
          %v7764 = vpop.f32.mrf.mxu0
          %v7765 = vadd.f32 %v7695, %v7764
          %v7766 = vpop.f32.mrf.mxu0
          %7767 = vdwg.mxu0
          %7768 = vmatprep.subr.mxu0 0.0
          %7769 = vmatpush1.msra.mxu0 %v7341
          %7770 = vmatprep.subr.mxu0 0.0
          %7771 = vmatpush1.msra.mxu0 %v7340
          %7772 = vmatprep.subr.mxu0 0.0
          %7773 = vmatpush1.msra.mxu0 %v7339
          %7774 = vmatprep.subr.mxu0 0.0
          %7775 = vmatpush1.msra.mxu0 %v7338
          %7776 = vmatprep.subr.mxu0 0.0
          %7777 = vmatpush1.msra.mxu0 %v7337
          %7778 = vmatprep.subr.mxu0 0.0
          %7779 = vmatpush1.msra.mxu0 %v7336
          %7780 = vmatprep.subr.mxu0 0.0
          %7781 = vmatpush1.msra.mxu0 %v7335
          %7782 = vmatprep.subr.mxu0 0.0
          %7783 = vmatpush1.msra.mxu0 %v7334
          %7784 = vmatprep.subr.mxu0 0.0
          %7785 = vmatpush1.msra.mxu0 %v7333
          %7786 = vmatprep.subr.mxu0 0.0
          %7787 = vmatpush1.msra.mxu0 %v7332
          %7788 = vmatprep.subr.mxu0 0.0
          %7789 = vmatpush1.msra.mxu0 %v7331
          %7790 = vmatprep.subr.mxu0 0.0
          %7791 = vmatpush1.msra.mxu0 %v7330
          %7792 = vmatprep.subr.mxu0 0.0
          %7793 = vmatpush1.msra.mxu0 %v7329
          %7794 = vmatprep.subr.mxu0 0.0
          %7795 = vmatpush1.msra.mxu0 %v7328
          %7796 = vmatprep.subr.mxu0 0.0
          %7797 = vmatpush1.msra.mxu0 %v7327
          %7798 = vmatprep.subr.mxu0 0.0
          %7799 = vmatpush1.msra.mxu0 %v7326
          %7800 = vmatprep.subr.mxu0 0.0
          %7801 = vmatpush2.msra.mxu0 %v7357
          %7802 = vmatprep.subr.mxu0 0.0
          %7803 = vmatpush2.msra.mxu0 %v7356
          %7804 = vmatprep.subr.mxu0 0.0
          %7805 = vmatpush2.msra.mxu0 %v7355
          %7806 = vmatprep.subr.mxu0 0.0
          %7807 = vmatpush2.msra.mxu0 %v7354
          %7808 = vmatprep.subr.mxu0 0.0
          %7809 = vmatpush2.msra.mxu0 %v7353
          %7810 = vmatprep.subr.mxu0 0.0
          %7811 = vmatpush2.msra.mxu0 %v7352
          %7812 = vmatprep.subr.mxu0 0.0
          %7813 = vmatpush2.msra.mxu0 %v7351
          %7814 = vmatprep.subr.mxu0 0.0
          %7815 = vmatpush2.msra.mxu0 %v7350
          %7816 = vmatprep.subr.mxu0 0.0
          %7817 = vmatpush2.msra.mxu0 %v7349
          %7818 = vmatprep.subr.mxu0 0.0
          %7819 = vmatpush2.msra.mxu0 %v7348
          %7820 = vmatprep.subr.mxu0 0.0
          %7821 = vmatpush2.msra.mxu0 %v7347
          %7822 = vmatprep.subr.mxu0 0.0
          %7823 = vmatpush2.msra.mxu0 %v7346
          %7824 = vmatprep.subr.mxu0 0.0
          %7825 = vmatpush2.msra.mxu0 %v7345
          %7826 = vmatprep.subr.mxu0 0.0
          %7827 = vmatpush2.msra.mxu0 %v7344
          %7828 = vmatprep.subr.mxu0 0.0
          %7829 = vmatpush2.msra.mxu0 %v7343
          %7830 = vmatprep.subr.mxu0 0.0
          %7831 = vmatpush2.msra.mxu0 %v7342
          %7832 = vmatprep.mubr.f32.mxu0 %v7466
          %7833 = vmatmul.mubr.f32.gmra.mxu0 %v7458
          %v7834 = vpop.f32.mrf.mxu0
          %v7835 = vadd.f32 %v7765, %v7834
          %v7836 = vpop.f32.mrf.mxu0
          %7837 = vdwg.mxu0
          %7838 = vmatprep.subr.mxu0 0.0
          %7839 = vmatpush1.msra.mxu0 %v7373
          %7840 = vmatprep.subr.mxu0 0.0
          %7841 = vmatpush1.msra.mxu0 %v7372
          %7842 = vmatprep.subr.mxu0 0.0
          %7843 = vmatpush1.msra.mxu0 %v7371
          %7844 = vmatprep.subr.mxu0 0.0
          %7845 = vmatpush1.msra.mxu0 %v7370
          %7846 = vmatprep.subr.mxu0 0.0
          %7847 = vmatpush1.msra.mxu0 %v7369
          %7848 = vmatprep.subr.mxu0 0.0
          %7849 = vmatpush1.msra.mxu0 %v7368
          %7850 = vmatprep.subr.mxu0 0.0
          %7851 = vmatpush1.msra.mxu0 %v7367
          %7852 = vmatprep.subr.mxu0 0.0
          %7853 = vmatpush1.msra.mxu0 %v7366
          %7854 = vmatprep.subr.mxu0 0.0
          %7855 = vmatpush1.msra.mxu0 %v7365
          %7856 = vmatprep.subr.mxu0 0.0
          %7857 = vmatpush1.msra.mxu0 %v7364
          %7858 = vmatprep.subr.mxu0 0.0
          %7859 = vmatpush1.msra.mxu0 %v7363
          %7860 = vmatprep.subr.mxu0 0.0
          %7861 = vmatpush1.msra.mxu0 %v7362
          %7862 = vmatprep.subr.mxu0 0.0
          %7863 = vmatpush1.msra.mxu0 %v7361
          %7864 = vmatprep.subr.mxu0 0.0
          %7865 = vmatpush1.msra.mxu0 %v7360
          %7866 = vmatprep.subr.mxu0 0.0
          %7867 = vmatpush1.msra.mxu0 %v7359
          %7868 = vmatprep.subr.mxu0 0.0
          %7869 = vmatpush1.msra.mxu0 %v7358
          %7870 = vmatprep.subr.mxu0 0.0
          %7871 = vmatpush2.msra.mxu0 %v7389
          %7872 = vmatprep.subr.mxu0 0.0
          %7873 = vmatpush2.msra.mxu0 %v7388
          %7874 = vmatprep.subr.mxu0 0.0
          %7875 = vmatpush2.msra.mxu0 %v7387
          %7876 = vmatprep.subr.mxu0 0.0
          %7877 = vmatpush2.msra.mxu0 %v7386
          %7878 = vmatprep.subr.mxu0 0.0
          %7879 = vmatpush2.msra.mxu0 %v7385
          %7880 = vmatprep.subr.mxu0 0.0
          %7881 = vmatpush2.msra.mxu0 %v7384
          %7882 = vmatprep.subr.mxu0 0.0
          %7883 = vmatpush2.msra.mxu0 %v7383
          %7884 = vmatprep.subr.mxu0 0.0
          %7885 = vmatpush2.msra.mxu0 %v7382
          %7886 = vmatprep.subr.mxu0 0.0
          %7887 = vmatpush2.msra.mxu0 %v7381
          %7888 = vmatprep.subr.mxu0 0.0
          %7889 = vmatpush2.msra.mxu0 %v7380
          %7890 = vmatprep.subr.mxu0 0.0
          %7891 = vmatpush2.msra.mxu0 %v7379
          %7892 = vmatprep.subr.mxu0 0.0
          %7893 = vmatpush2.msra.mxu0 %v7378
          %7894 = vmatprep.subr.mxu0 0.0
          %7895 = vmatpush2.msra.mxu0 %v7377
          %7896 = vmatprep.subr.mxu0 0.0
          %7897 = vmatpush2.msra.mxu0 %v7376
          %7898 = vmatprep.subr.mxu0 0.0
          %7899 = vmatpush2.msra.mxu0 %v7375
          %7900 = vmatprep.subr.mxu0 0.0
          %7901 = vmatpush2.msra.mxu0 %v7374
          %7902 = vmatprep.mubr.f32.mxu0 %v7467
          %7903 = vmatmul.mubr.f32.gmra.mxu0 %v7465
          %v7904 = vpop.f32.mrf.mxu0
          %v7905 = vadd.f32 %v7835, %v7904
          %v7906 = vpop.f32.mrf.mxu0
          %7907 = vdwg.mxu0
          %7908 = vmatprep.subr.mxu0 0.0
          %7909 = vmatpush1.msra.mxu0 %v7405
          %7910 = vmatprep.subr.mxu0 0.0
          %7911 = vmatpush1.msra.mxu0 %v7404
          %7912 = vmatprep.subr.mxu0 0.0
          %7913 = vmatpush1.msra.mxu0 %v7403
          %7914 = vmatprep.subr.mxu0 0.0
          %7915 = vmatpush1.msra.mxu0 %v7402
          %7916 = vmatprep.subr.mxu0 0.0
          %7917 = vmatpush1.msra.mxu0 %v7401
          %7918 = vmatprep.subr.mxu0 0.0
          %7919 = vmatpush1.msra.mxu0 %v7400
          %7920 = vmatprep.subr.mxu0 0.0
          %7921 = vmatpush1.msra.mxu0 %v7399
          %7922 = vmatprep.subr.mxu0 0.0
          %7923 = vmatpush1.msra.mxu0 %v7398
          %7924 = vmatprep.subr.mxu0 0.0
          %7925 = vmatpush1.msra.mxu0 %v7397
          %7926 = vmatprep.subr.mxu0 0.0
          %7927 = vmatpush1.msra.mxu0 %v7396
          %7928 = vmatprep.subr.mxu0 0.0
          %7929 = vmatpush1.msra.mxu0 %v7395
          %7930 = vmatprep.subr.mxu0 0.0
          %7931 = vmatpush1.msra.mxu0 %v7394
          %7932 = vmatprep.subr.mxu0 0.0
          %7933 = vmatpush1.msra.mxu0 %v7393
          %7934 = vmatprep.subr.mxu0 0.0
          %7935 = vmatpush1.msra.mxu0 %v7392
          %7936 = vmatprep.subr.mxu0 0.0
          %7937 = vmatpush1.msra.mxu0 %v7391
          %7938 = vmatprep.subr.mxu0 0.0
          %7939 = vmatpush1.msra.mxu0 %v7390
          %7940 = vmatprep.subr.mxu0 0.0
          %7941 = vmatpush2.msra.mxu0 0.0
          %7942 = vmatprep.subr.mxu0 0.0
          %7943 = vmatpush2.msra.mxu0 0.0
          %7944 = vmatprep.subr.mxu0 0.0
          %7945 = vmatpush2.msra.mxu0 0.0
          %7946 = vmatprep.subr.mxu0 0.0
          %7947 = vmatpush2.msra.mxu0 0.0
          %7948 = vmatprep.subr.mxu0 0.0
          %7949 = vmatpush2.msra.mxu0 0.0
          %7950 = vmatprep.subr.mxu0 0.0
          %7951 = vmatpush2.msra.mxu0 0.0
          %7952 = vmatprep.subr.mxu0 0.0
          %7953 = vmatpush2.msra.mxu0 0.0
          %7954 = vmatprep.subr.mxu0 0.0
          %7955 = vmatpush2.msra.mxu0 0.0
          %7956 = vmatprep.subr.mxu0 0.0
          %7957 = vmatpush2.msra.mxu0 0.0
          %7958 = vmatprep.subr.mxu0 0.0
          %7959 = vmatpush2.msra.mxu0 0.0
          %7960 = vmatprep.subr.mxu0 0.0
          %7961 = vmatpush2.msra.mxu0 0.0
          %7962 = vmatprep.subr.mxu0 0.0
          %7963 = vmatpush2.msra.mxu0 0.0
          %7964 = vmatprep.subr.mxu0 0.0
          %7965 = vmatpush2.msra.mxu0 0.0
          %7966 = vmatprep.subr.mxu0 0.0
          %7967 = vmatpush2.msra.mxu0 0.0
          %7968 = vmatprep.subr.mxu0 0.0
          %7969 = vmatpush2.msra.mxu0 0.0
          %7970 = vmatprep.subr.mxu0 0.0
          %7971 = vmatpush2.msra.mxu0 0.0
          %7972 = vmatprep.mubr.f32.mxu0 0.0
          %7973 = vmatmul.mubr.f32.gmra.mxu0 %v7474
          %v7974 = vpop.f32.mrf.mxu0
          %v7975 = vadd.f32 %v7905, %v7974
          %v7976 = vpop.f32.mrf.mxu0
          %7977 = vdwg.mxu0
          %v7978 = vld [vmem:[%s5] sm:$0xff]
          %v7979 = vld [vmem:[%s5 + $0x8] sm:$0xff]
          %v7980 = vld [vmem:[%s5 + $0x10] sm:$0xff]
          %v7981 = vld [vmem:[%s5 + $0x18] sm:$0xff]
          %v7982 = vld [vmem:[%s5 + $0x20] sm:$0xff]
          %v7983 = vld [vmem:[%s5 + $0x28] sm:$0xff]
          %v7984 = vld [vmem:[%s5 + $0x30] sm:$0xff]
          %v7985 = vld [vmem:[%s5 + $0x38] sm:$0xff]
          %v7986 = vld [vmem:[%s5 + $0x40] sm:$0xff]
          %v7987 = vld [vmem:[%s5 + $0x48] sm:$0xff]
          %v7988 = vld [vmem:[%s5 + $0x50] sm:$0xff]
          %v7989 = vld [vmem:[%s5 + $0x58] sm:$0xff]
          %v7990 = vld [vmem:[%s5 + $0x60] sm:$0xff]
          %v7991 = vld [vmem:[%s5 + $0x68] sm:$0xff]
          %v7992 = vld [vmem:[%s5 + $0x70] sm:$0xff]
          %v7993 = vld [vmem:[%s5 + $0x78] sm:$0xff]
          %v7994 = vld [vmem:[%s5 + $0x80] sm:$0xff]
          %v7995 = vld [vmem:[%s5 + $0x88] sm:$0xff]
          %v7996 = vld [vmem:[%s5 + $0x90] sm:$0xff]
          %v7997 = vld [vmem:[%s5 + $0x98] sm:$0xff]
          %v7998 = vld [vmem:[%s5 + $0xa0] sm:$0xff]
          %v7999 = vld [vmem:[%s5 + $0xa8] sm:$0xff]
          %v8000 = vld [vmem:[%s5 + $0xb0] sm:$0xff]
          %v8001 = vld [vmem:[%s5 + $0xb8] sm:$0xff]
          %v8002 = vld [vmem:[%s5 + $0xc0] sm:$0xff]
          %v8003 = vld [vmem:[%s5 + $0xc8] sm:$0xff]
          %v8004 = vld [vmem:[%s5 + $0xd0] sm:$0xff]
          %v8005 = vld [vmem:[%s5 + $0xd8] sm:$0xff]
          %v8006 = vld [vmem:[%s5 + $0xe0] sm:$0xff]
          %v8007 = vld [vmem:[%s5 + $0xe8] sm:$0xff]
          %v8008 = vld [vmem:[%s5 + $0xf0] sm:$0xff]
          %v8009 = vld [vmem:[%s5 + $0xf8] sm:$0xff]
          %v8010 = vld [vmem:[%s5 + $0x100] sm:$0xff]
          %v8011 = vld [vmem:[%s5 + $0x108] sm:$0xff]
          %v8012 = vld [vmem:[%s5 + $0x110] sm:$0xff]
          %v8013 = vld [vmem:[%s5 + $0x118] sm:$0xff]
          %v8014 = vld [vmem:[%s5 + $0x120] sm:$0xff]
          %v8015 = vld [vmem:[%s5 + $0x128] sm:$0xff]
          %v8016 = vld [vmem:[%s5 + $0x130] sm:$0xff]
          %v8017 = vld [vmem:[%s5 + $0x138] sm:$0xff]
          %v8018 = vld [vmem:[%s5 + $0x140] sm:$0xff]
          %v8019 = vld [vmem:[%s5 + $0x148] sm:$0xff]
          %v8020 = vld [vmem:[%s5 + $0x150] sm:$0xff]
          %v8021 = vld [vmem:[%s5 + $0x158] sm:$0xff]
          %v8022 = vld [vmem:[%s5 + $0x160] sm:$0xff]
          %v8023 = vld [vmem:[%s5 + $0x168] sm:$0xff]
          %v8024 = vld [vmem:[%s5 + $0x170] sm:$0xff]
          %v8025 = vld [vmem:[%s5 + $0x178] sm:$0xff]
          %v8026 = vld [vmem:[%s5 + $0x180] sm:$0xff]
          %v8027 = vld [vmem:[%s5 + $0x188] sm:$0xff]
          %v8028 = vld [vmem:[%s5 + $0x190] sm:$0xff]
          %v8029 = vld [vmem:[%s5 + $0x198] sm:$0xff]
          %v8030 = vld [vmem:[%s5 + $0x1a0] sm:$0xff]
          %v8031 = vld [vmem:[%s5 + $0x1a8] sm:$0xff]
          %v8032 = vld [vmem:[%s5 + $0x1b0] sm:$0xff]
          %v8033 = vld [vmem:[%s5 + $0x1b8] sm:$0xff]
          %v8034 = vld [vmem:[%s5 + $0x1c0] sm:$0xff]
          %v8035 = vld [vmem:[%s5 + $0x1c8] sm:$0xff]
          %v8036 = vld [vmem:[%s5 + $0x1d0] sm:$0xff]
          %v8037 = vld [vmem:[%s5 + $0x1d8] sm:$0xff]
          %v8038 = vld [vmem:[%s5 + $0x1e0] sm:$0xff]
          %v8039 = vld [vmem:[%s5 + $0x1e8] sm:$0xff]
          %v8040 = vld [vmem:[%s5 + $0x1f0] sm:$0xff]
          %v8041 = vld [vmem:[%s5 + $0x1f8] sm:$0xff]
          %v8042 = vld [vmem:[%s5 + $0x200] sm:$0xff]
          %v8043 = vld [vmem:[%s5 + $0x208] sm:$0xff]
          %v8044 = vld [vmem:[%s5 + $0x210] sm:$0xff]
          %v8045 = vld [vmem:[%s5 + $0x218] sm:$0xff]
          %v8046 = vld [vmem:[%s5 + $0x220] sm:$0xff]
          %v8047 = vld [vmem:[%s5 + $0x228] sm:$0xff]
          %v8048 = vld [vmem:[%s5 + $0x230] sm:$0xff]
          %v8049 = vld [vmem:[%s5 + $0x238] sm:$0xff]
          %v8050 = vld [vmem:[%s5 + $0x240] sm:$0xff]
          %v8051 = vld [vmem:[%s5 + $0x248] sm:$0xff]
          %v8052 = vld [vmem:[%s5 + $0x250] sm:$0xff]
          %v8053 = vld [vmem:[%s5 + $0x258] sm:$0xff]
          %v8054 = vld [vmem:[%s5 + $0x260] sm:$0xff]
          %v8055 = vld [vmem:[%s5 + $0x268] sm:$0xff]
          %v8056 = vld [vmem:[%s5 + $0x270] sm:$0xff]
          %v8057 = vld [vmem:[%s5 + $0x278] sm:$0xff]
          %v8058 = vld [vmem:[%s5 + $0x280] sm:$0xff]
          %v8059 = vld [vmem:[%s5 + $0x288] sm:$0xff]
          %v8060 = vld [vmem:[%s5 + $0x290] sm:$0xff]
          %v8061 = vld [vmem:[%s5 + $0x298] sm:$0xff]
          %v8062 = vld [vmem:[%s5 + $0x2a0] sm:$0xff]
          %v8063 = vld [vmem:[%s5 + $0x2a8] sm:$0xff]
          %v8064 = vld [vmem:[%s5 + $0x2b0] sm:$0xff]
          %v8065 = vld [vmem:[%s5 + $0x2b8] sm:$0xff]
          %v8066 = vld [vmem:[%s5 + $0x2c0] sm:$0xff]
          %v8067 = vld [vmem:[%s5 + $0x2c8] sm:$0xff]
          %v8068 = vld [vmem:[%s5 + $0x2d0] sm:$0xff]
          %v8069 = vld [vmem:[%s5 + $0x2d8] sm:$0xff]
          %v8070 = vld [vmem:[%s5 + $0x2e0] sm:$0xff]
          %v8071 = vld [vmem:[%s5 + $0x2e8] sm:$0xff]
          %v8072 = vld [vmem:[%s5 + $0x2f0] sm:$0xff]
          %v8073 = vld [vmem:[%s5 + $0x2f8] sm:$0xff]
          %v8074 = vld [vmem:[%s5 + $0x300] sm:$0xff]
          %v8075 = vld [vmem:[%s5 + $0x308] sm:$0xff]
          %v8076 = vld [vmem:[%s5 + $0x310] sm:$0xff]
          %v8077 = vld [vmem:[%s5 + $0x318] sm:$0xff]
          %v8078 = vld [vmem:[%s5 + $0x320] sm:$0xff]
          %v8079 = vld [vmem:[%s5 + $0x328] sm:$0xff]
          %v8080 = vld [vmem:[%s5 + $0x330] sm:$0xff]
          %v8081 = vld [vmem:[%s5 + $0x338] sm:$0xff]
          %v8082 = vld [vmem:[%s5 + $0x340] sm:$0xff]
          %v8083 = vld [vmem:[%s5 + $0x348] sm:$0xff]
          %v8084 = vld [vmem:[%s5 + $0x350] sm:$0xff]
          %v8085 = vld [vmem:[%s5 + $0x358] sm:$0xff]
          %v8086 = vld [vmem:[%s5 + $0x360] sm:$0xff]
          %v8087 = vld [vmem:[%s5 + $0x368] sm:$0xff]
          %v8088 = vld [vmem:[%s5 + $0x370] sm:$0xff]
          %v8089 = vld [vmem:[%s5 + $0x378] sm:$0xff]
          %v8090 = vld [vmem:[%s5 + $0x380] sm:$0xff]
          %v8091 = vld [vmem:[%s5 + $0x388] sm:$0xff]
          %v8092 = vld [vmem:[%s5 + $0x390] sm:$0xff]
          %v8093 = vld [vmem:[%s5 + $0x398] sm:$0xff]
          %v8094 = vld [vmem:[%s5 + $0x3a0] sm:$0xff]
          %v8095 = vld [vmem:[%s5 + $0x3a8] sm:$0xff]
          %v8096 = vld [vmem:[%s5 + $0x3b0] sm:$0xff]
          %v8097 = vld [vmem:[%s5 + $0x3b8] sm:$0xff]
          %v8098 = vld [vmem:[%s5 + $0x3c0] sm:$0xff]
          %v8099 = vld [vmem:[%s5 + $0x3c8] sm:$0xff]
          %v8100 = vld [vmem:[%s5 + $0x3d0] sm:$0xff]
          %v8101 = vld [vmem:[%s5 + $0x3d8] sm:$0xff]
          %v8102 = vld [vmem:[%s5 + $0x3e0] sm:$0xff]
          %v8103 = vld [vmem:[%s5 + $0x3e8] sm:$0xff]
          %v8104 = vld [vmem:[%s5 + $0x3f0] sm:$0xff]
          %v8105 = vld [vmem:[%s5 + $0x3f8] sm:$0xff]
          %v8106 = vld [vmem:[%s5 + $0x400] sm:$0xff]
          %v8107 = vld [vmem:[%s5 + $0x408] sm:$0xff]
          %v8108 = vld [vmem:[%s5 + $0x410] sm:$0xff]
          %v8109 = vld [vmem:[%s5 + $0x418] sm:$0xff]
          %v8110 = vld [vmem:[%s5 + $0x420] sm:$0xff]
          %v8111 = vld [vmem:[%s5 + $0x428] sm:$0xff]
          %v8112 = vld [vmem:[%s5 + $0x430] sm:$0xff]
          %v8113 = vld [vmem:[%s5 + $0x438] sm:$0xff]
          %v8114 = vld [vmem:[%s5 + $0x440] sm:$0xff]
          %v8115 = vld [vmem:[%s5 + $0x448] sm:$0xff]
          %v8116 = vld [vmem:[%s5 + $0x450] sm:$0xff]
          %v8117 = vld [vmem:[%s5 + $0x458] sm:$0xff]
          %v8118 = vld [vmem:[%s5 + $0x460] sm:$0xff]
          %v8119 = vld [vmem:[%s5 + $0x468] sm:$0xff]
          %v8120 = vld [vmem:[%s5 + $0x470] sm:$0xff]
          %v8121 = vld [vmem:[%s5 + $0x478] sm:$0xff]
          %v8122 = vld [vmem:[%s5 + $0x480] sm:$0xff]
          %v8123 = vld [vmem:[%s5 + $0x488] sm:$0xff]
          %v8124 = vld [vmem:[%s5 + $0x490] sm:$0xff]
          %v8125 = vld [vmem:[%s5 + $0x498] sm:$0xff]
          %v8126 = vld [vmem:[%s5 + $0x4a0] sm:$0xff]
          %v8127 = vld [vmem:[%s5 + $0x4a8] sm:$0xff]
          %v8128 = vld [vmem:[%s5 + $0x4b0] sm:$0xff]
          %v8129 = vld [vmem:[%s5 + $0x4b8] sm:$0xff]
          %v8130 = vld [vmem:[%s5 + $0x4c0] sm:$0xff]
          %v8131 = vld [vmem:[%s5 + $0x4c8] sm:$0xff]
          %v8132 = vld [vmem:[%s5 + $0x4d0] sm:$0xff]
          %v8133 = vld [vmem:[%s5 + $0x4d8] sm:$0xff]
          %v8134 = vld [vmem:[%s5 + $0x4e0] sm:$0xff]
          %v8135 = vld [vmem:[%s5 + $0x4e8] sm:$0xff]
          %v8136 = vld [vmem:[%s5 + $0x4f0] sm:$0xff]
          %v8137 = vld [vmem:[%s5 + $0x4f8] sm:$0xff]
          %v8138 = vld [vmem:[%s5 + $0x500] sm:$0xff]
          %v8139 = vld [vmem:[%s5 + $0x508] sm:$0xff]
          %v8140 = vld [vmem:[%s5 + $0x510] sm:$0xff]
          %v8141 = vld [vmem:[%s5 + $0x518] sm:$0xff]
          %v8142 = vld [vmem:[%s5 + $0x520] sm:$0xff]
          %v8143 = vld [vmem:[%s5 + $0x528] sm:$0xff]
          %v8144 = vld [vmem:[%s5 + $0x530] sm:$0xff]
          %v8145 = vld [vmem:[%s5 + $0x538] sm:$0xff]
          %v8146 = vld [vmem:[%s5 + $0x540] sm:$0xff]
          %v8147 = vld [vmem:[%s5 + $0x548] sm:$0xff]
          %v8148 = vld [vmem:[%s5 + $0x550] sm:$0xff]
          %v8149 = vld [vmem:[%s5 + $0x558] sm:$0xff]
          %v8150 = vld [vmem:[%s5 + $0x560] sm:$0xff]
          %v8151 = vld [vmem:[%s5 + $0x568] sm:$0xff]
          %v8152 = vld [vmem:[%s5 + $0x570] sm:$0xff]
          %v8153 = vld [vmem:[%s5 + $0x578] sm:$0xff]
          %v8154 = vld [vmem:[%s5 + $0x580] sm:$0xff]
          %v8155 = vld [vmem:[%s5 + $0x588] sm:$0xff]
          %v8156 = vld [vmem:[%s5 + $0x590] sm:$0xff]
          %v8157 = vld [vmem:[%s5 + $0x598] sm:$0xff]
          %v8158 = vld [vmem:[%s5 + $0x5a0] sm:$0xff]
          %v8159 = vld [vmem:[%s5 + $0x5a8] sm:$0xff]
          %v8160 = vld [vmem:[%s5 + $0x5b0] sm:$0xff]
          %v8161 = vld [vmem:[%s5 + $0x5b8] sm:$0xff]
          %v8162 = vld [vmem:[%s5 + $0x5c0] sm:$0xff]
          %v8163 = vld [vmem:[%s5 + $0x5c8] sm:$0xff]
          %v8164 = vld [vmem:[%s5 + $0x5d0] sm:$0xff]
          %v8165 = vld [vmem:[%s5 + $0x5d8] sm:$0xff]
          %v8166 = vld [vmem:[%s5 + $0x5e0] sm:$0xff]
          %v8167 = vld [vmem:[%s5 + $0x5e8] sm:$0xff]
          %v8168 = vld [vmem:[%s5 + $0x5f0] sm:$0xff]
          %v8169 = vld [vmem:[%s5 + $0x5f8] sm:$0xff]
          %v8170 = vld [vmem:[%s5 + $0x600] sm:$0xff]
          %v8171 = vld [vmem:[%s5 + $0x608] sm:$0xff]
          %v8172 = vld [vmem:[%s5 + $0x610] sm:$0xff]
          %v8173 = vld [vmem:[%s5 + $0x618] sm:$0xff]
          %v8174 = vld [vmem:[%s5 + $0x620] sm:$0xff]
          %v8175 = vld [vmem:[%s5 + $0x628] sm:$0xff]
          %v8176 = vld [vmem:[%s5 + $0x630] sm:$0xff]
          %v8177 = vld [vmem:[%s5 + $0x638] sm:$0xff]
          %v8178 = vld [vmem:[%s5 + $0x640] sm:$0xff]
          %v8179 = vld [vmem:[%s5 + $0x648] sm:$0xff]
          %v8180 = vld [vmem:[%s5 + $0x650] sm:$0xff]
          %v8181 = vld [vmem:[%s5 + $0x658] sm:$0xff]
          %v8182 = vld [vmem:[%s5 + $0x660] sm:$0xff]
          %v8183 = vld [vmem:[%s5 + $0x668] sm:$0xff]
          %v8184 = vld [vmem:[%s5 + $0x670] sm:$0xff]
          %v8185 = vld [vmem:[%s5 + $0x678] sm:$0xff]
          %v8186 = vld [vmem:[#allocation9] sm:$0x1]
          %v8188 = vlaneseq
          %v8189 = vshrl.u32 %v8188, 7
          %v8190 = vsub.s32 0, %v8189
          %v8191 = vrot.slane %v8186, %v8190
          %8193 = vmatprep.subr.mxu0 0.0
          %8194 = vmatpush1.msra.mxu0 %v7993
          %8195 = vmatprep.subr.mxu0 0.0
          %8196 = vmatpush1.msra.mxu0 %v7992
          %8197 = vmatprep.subr.mxu0 0.0
          %8198 = vmatpush1.msra.mxu0 %v7991
          %8199 = vmatprep.subr.mxu0 0.0
          %8200 = vmatpush1.msra.mxu0 %v7990
          %8201 = vmatprep.subr.mxu0 0.0
          %8202 = vmatpush1.msra.mxu0 %v7989
          %8203 = vmatprep.subr.mxu0 0.0
          %8204 = vmatpush1.msra.mxu0 %v7988
          %8205 = vmatprep.subr.mxu0 0.0
          %8206 = vmatpush1.msra.mxu0 %v7987
          %8207 = vmatprep.subr.mxu0 0.0
          %8208 = vmatpush1.msra.mxu0 %v7986
          %8209 = vmatprep.subr.mxu0 0.0
          %8210 = vmatpush1.msra.mxu0 %v7985
          %8211 = vmatprep.subr.mxu0 0.0
          %8212 = vmatpush1.msra.mxu0 %v7984
          %8213 = vmatprep.subr.mxu0 0.0
          %8214 = vmatpush1.msra.mxu0 %v7983
          %8215 = vmatprep.subr.mxu0 0.0
          %8216 = vmatpush1.msra.mxu0 %v7982
          %8217 = vmatprep.subr.mxu0 0.0
          %8218 = vmatpush1.msra.mxu0 %v7981
          %8219 = vmatprep.subr.mxu0 0.0
          %8220 = vmatpush1.msra.mxu0 %v7980
          %8221 = vmatprep.subr.mxu0 0.0
          %8222 = vmatpush1.msra.mxu0 %v7979
          %8223 = vmatprep.subr.mxu0 0.0
          %8224 = vmatpush1.msra.mxu0 %v7978
          %8225 = vmatprep.subr.mxu0 0.0
          %8226 = vmatpush2.msra.mxu0 %v8009
          %8227 = vmatprep.subr.mxu0 0.0
          %8228 = vmatpush2.msra.mxu0 %v8008
          %8229 = vmatprep.subr.mxu0 0.0
          %8230 = vmatpush2.msra.mxu0 %v8007
          %8231 = vmatprep.subr.mxu0 0.0
          %8232 = vmatpush2.msra.mxu0 %v8006
          %8233 = vmatprep.subr.mxu0 0.0
          %8234 = vmatpush2.msra.mxu0 %v8005
          %8235 = vmatprep.subr.mxu0 0.0
          %8236 = vmatpush2.msra.mxu0 %v8004
          %8237 = vmatprep.subr.mxu0 0.0
          %8238 = vmatpush2.msra.mxu0 %v8003
          %8239 = vmatprep.subr.mxu0 0.0
          %8240 = vmatpush2.msra.mxu0 %v8002
          %8241 = vmatprep.subr.mxu0 0.0
          %8242 = vmatpush2.msra.mxu0 %v8001
          %8243 = vmatprep.subr.mxu0 0.0
          %8244 = vmatpush2.msra.mxu0 %v8000
          %8245 = vmatprep.subr.mxu0 0.0
          %8246 = vmatpush2.msra.mxu0 %v7999
          %8247 = vmatprep.subr.mxu0 0.0
          %8248 = vmatpush2.msra.mxu0 %v7998
          %8249 = vmatprep.subr.mxu0 0.0
          %8250 = vmatpush2.msra.mxu0 %v7997
          %8251 = vmatprep.subr.mxu0 0.0
          %8252 = vmatpush2.msra.mxu0 %v7996
          %8253 = vmatprep.subr.mxu0 0.0
          %8254 = vmatpush2.msra.mxu0 %v7995
          %8255 = vmatprep.subr.mxu0 0.0
          %8256 = vmatpush2.msra.mxu0 %v7994
          %8257 = vmatprep.mubr.f32.mxu0 %v7432
          %8258 = vmatmul.mubr.f32.gmra.mxu0 %v7424
          %v8259 = vpop.f32.mrf.mxu0
          %v8260 = vadd.f32 %v8191, %v8259
          %v8261 = vpop.f32.mrf.mxu0
          %8262 = vdwg.mxu0
          %8263 = vmatprep.subr.mxu0 0.0
          %8264 = vmatpush1.msra.mxu0 %v8025
          %8265 = vmatprep.subr.mxu0 0.0
          %8266 = vmatpush1.msra.mxu0 %v8024
          %8267 = vmatprep.subr.mxu0 0.0
          %8268 = vmatpush1.msra.mxu0 %v8023
          %8269 = vmatprep.subr.mxu0 0.0
          %8270 = vmatpush1.msra.mxu0 %v8022
          %8271 = vmatprep.subr.mxu0 0.0
          %8272 = vmatpush1.msra.mxu0 %v8021
          %8273 = vmatprep.subr.mxu0 0.0
          %8274 = vmatpush1.msra.mxu0 %v8020
          %8275 = vmatprep.subr.mxu0 0.0
          %8276 = vmatpush1.msra.mxu0 %v8019
          %8277 = vmatprep.subr.mxu0 0.0
          %8278 = vmatpush1.msra.mxu0 %v8018
          %8279 = vmatprep.subr.mxu0 0.0
          %8280 = vmatpush1.msra.mxu0 %v8017
          %8281 = vmatprep.subr.mxu0 0.0
          %8282 = vmatpush1.msra.mxu0 %v8016
          %8283 = vmatprep.subr.mxu0 0.0
          %8284 = vmatpush1.msra.mxu0 %v8015
          %8285 = vmatprep.subr.mxu0 0.0
          %8286 = vmatpush1.msra.mxu0 %v8014
          %8287 = vmatprep.subr.mxu0 0.0
          %8288 = vmatpush1.msra.mxu0 %v8013
          %8289 = vmatprep.subr.mxu0 0.0
          %8290 = vmatpush1.msra.mxu0 %v8012
          %8291 = vmatprep.subr.mxu0 0.0
          %8292 = vmatpush1.msra.mxu0 %v8011
          %8293 = vmatprep.subr.mxu0 0.0
          %8294 = vmatpush1.msra.mxu0 %v8010
          %8295 = vmatprep.subr.mxu0 0.0
          %8296 = vmatpush2.msra.mxu0 %v8041
          %8297 = vmatprep.subr.mxu0 0.0
          %8298 = vmatpush2.msra.mxu0 %v8040
          %8299 = vmatprep.subr.mxu0 0.0
          %8300 = vmatpush2.msra.mxu0 %v8039
          %8301 = vmatprep.subr.mxu0 0.0
          %8302 = vmatpush2.msra.mxu0 %v8038
          %8303 = vmatprep.subr.mxu0 0.0
          %8304 = vmatpush2.msra.mxu0 %v8037
          %8305 = vmatprep.subr.mxu0 0.0
          %8306 = vmatpush2.msra.mxu0 %v8036
          %8307 = vmatprep.subr.mxu0 0.0
          %8308 = vmatpush2.msra.mxu0 %v8035
          %8309 = vmatprep.subr.mxu0 0.0
          %8310 = vmatpush2.msra.mxu0 %v8034
          %8311 = vmatprep.subr.mxu0 0.0
          %8312 = vmatpush2.msra.mxu0 %v8033
          %8313 = vmatprep.subr.mxu0 0.0
          %8314 = vmatpush2.msra.mxu0 %v8032
          %8315 = vmatprep.subr.mxu0 0.0
          %8316 = vmatpush2.msra.mxu0 %v8031
          %8317 = vmatprep.subr.mxu0 0.0
          %8318 = vmatpush2.msra.mxu0 %v8030
          %8319 = vmatprep.subr.mxu0 0.0
          %8320 = vmatpush2.msra.mxu0 %v8029
          %8321 = vmatprep.subr.mxu0 0.0
          %8322 = vmatpush2.msra.mxu0 %v8028
          %8323 = vmatprep.subr.mxu0 0.0
          %8324 = vmatpush2.msra.mxu0 %v8027
          %8325 = vmatprep.subr.mxu0 0.0
          %8326 = vmatpush2.msra.mxu0 %v8026
          %8327 = vmatprep.mubr.f32.mxu0 %v7433
          %8328 = vmatmul.mubr.f32.gmra.mxu0 %v7431
          %v8329 = vpop.f32.mrf.mxu0
          %v8330 = vadd.f32 %v8260, %v8329
          %v8331 = vpop.f32.mrf.mxu0
          %8332 = vdwg.mxu0
          %8333 = vmatprep.subr.mxu0 0.0
          %8334 = vmatpush1.msra.mxu0 %v8057
          %8335 = vmatprep.subr.mxu0 0.0
          %8336 = vmatpush1.msra.mxu0 %v8056
          %8337 = vmatprep.subr.mxu0 0.0
          %8338 = vmatpush1.msra.mxu0 %v8055
          %8339 = vmatprep.subr.mxu0 0.0
          %8340 = vmatpush1.msra.mxu0 %v8054
          %8341 = vmatprep.subr.mxu0 0.0
          %8342 = vmatpush1.msra.mxu0 %v8053
          %8343 = vmatprep.subr.mxu0 0.0
          %8344 = vmatpush1.msra.mxu0 %v8052
          %8345 = vmatprep.subr.mxu0 0.0
          %8346 = vmatpush1.msra.mxu0 %v8051
          %8347 = vmatprep.subr.mxu0 0.0
          %8348 = vmatpush1.msra.mxu0 %v8050
          %8349 = vmatprep.subr.mxu0 0.0
          %8350 = vmatpush1.msra.mxu0 %v8049
          %8351 = vmatprep.subr.mxu0 0.0
          %8352 = vmatpush1.msra.mxu0 %v8048
          %8353 = vmatprep.subr.mxu0 0.0
          %8354 = vmatpush1.msra.mxu0 %v8047
          %8355 = vmatprep.subr.mxu0 0.0
          %8356 = vmatpush1.msra.mxu0 %v8046
          %8357 = vmatprep.subr.mxu0 0.0
          %8358 = vmatpush1.msra.mxu0 %v8045
          %8359 = vmatprep.subr.mxu0 0.0
          %8360 = vmatpush1.msra.mxu0 %v8044
          %8361 = vmatprep.subr.mxu0 0.0
          %8362 = vmatpush1.msra.mxu0 %v8043
          %8363 = vmatprep.subr.mxu0 0.0
          %8364 = vmatpush1.msra.mxu0 %v8042
          %8365 = vmatprep.subr.mxu0 0.0
          %8366 = vmatpush2.msra.mxu0 %v8073
          %8367 = vmatprep.subr.mxu0 0.0
          %8368 = vmatpush2.msra.mxu0 %v8072
          %8369 = vmatprep.subr.mxu0 0.0
          %8370 = vmatpush2.msra.mxu0 %v8071
          %8371 = vmatprep.subr.mxu0 0.0
          %8372 = vmatpush2.msra.mxu0 %v8070
          %8373 = vmatprep.subr.mxu0 0.0
          %8374 = vmatpush2.msra.mxu0 %v8069
          %8375 = vmatprep.subr.mxu0 0.0
          %8376 = vmatpush2.msra.mxu0 %v8068
          %8377 = vmatprep.subr.mxu0 0.0
          %8378 = vmatpush2.msra.mxu0 %v8067
          %8379 = vmatprep.subr.mxu0 0.0
          %8380 = vmatpush2.msra.mxu0 %v8066
          %8381 = vmatprep.subr.mxu0 0.0
          %8382 = vmatpush2.msra.mxu0 %v8065
          %8383 = vmatprep.subr.mxu0 0.0
          %8384 = vmatpush2.msra.mxu0 %v8064
          %8385 = vmatprep.subr.mxu0 0.0
          %8386 = vmatpush2.msra.mxu0 %v8063
          %8387 = vmatprep.subr.mxu0 0.0
          %8388 = vmatpush2.msra.mxu0 %v8062
          %8389 = vmatprep.subr.mxu0 0.0
          %8390 = vmatpush2.msra.mxu0 %v8061
          %8391 = vmatprep.subr.mxu0 0.0
          %8392 = vmatpush2.msra.mxu0 %v8060
          %8393 = vmatprep.subr.mxu0 0.0
          %8394 = vmatpush2.msra.mxu0 %v8059
          %8395 = vmatprep.subr.mxu0 0.0
          %8396 = vmatpush2.msra.mxu0 %v8058
          %8397 = vmatprep.mubr.f32.mxu0 %v7449
          %8398 = vmatmul.mubr.f32.gmra.mxu0 %v7441
          %v8399 = vpop.f32.mrf.mxu0
          %v8400 = vadd.f32 %v8330, %v8399
          %v8401 = vpop.f32.mrf.mxu0
          %8402 = vdwg.mxu0
          %8403 = vmatprep.subr.mxu0 0.0
          %8404 = vmatpush1.msra.mxu0 %v8089
          %8405 = vmatprep.subr.mxu0 0.0
          %8406 = vmatpush1.msra.mxu0 %v8088
          %8407 = vmatprep.subr.mxu0 0.0
          %8408 = vmatpush1.msra.mxu0 %v8087
          %8409 = vmatprep.subr.mxu0 0.0
          %8410 = vmatpush1.msra.mxu0 %v8086
          %8411 = vmatprep.subr.mxu0 0.0
          %8412 = vmatpush1.msra.mxu0 %v8085
          %8413 = vmatprep.subr.mxu0 0.0
          %8414 = vmatpush1.msra.mxu0 %v8084
          %8415 = vmatprep.subr.mxu0 0.0
          %8416 = vmatpush1.msra.mxu0 %v8083
          %8417 = vmatprep.subr.mxu0 0.0
          %8418 = vmatpush1.msra.mxu0 %v8082
          %8419 = vmatprep.subr.mxu0 0.0
          %8420 = vmatpush1.msra.mxu0 %v8081
          %8421 = vmatprep.subr.mxu0 0.0
          %8422 = vmatpush1.msra.mxu0 %v8080
          %8423 = vmatprep.subr.mxu0 0.0
          %8424 = vmatpush1.msra.mxu0 %v8079
          %8425 = vmatprep.subr.mxu0 0.0
          %8426 = vmatpush1.msra.mxu0 %v8078
          %8427 = vmatprep.subr.mxu0 0.0
          %8428 = vmatpush1.msra.mxu0 %v8077
          %8429 = vmatprep.subr.mxu0 0.0
          %8430 = vmatpush1.msra.mxu0 %v8076
          %8431 = vmatprep.subr.mxu0 0.0
          %8432 = vmatpush1.msra.mxu0 %v8075
          %8433 = vmatprep.subr.mxu0 0.0
          %8434 = vmatpush1.msra.mxu0 %v8074
          %8435 = vmatprep.subr.mxu0 0.0
          %8436 = vmatpush2.msra.mxu0 %v8105
          %8437 = vmatprep.subr.mxu0 0.0
          %8438 = vmatpush2.msra.mxu0 %v8104
          %8439 = vmatprep.subr.mxu0 0.0
          %8440 = vmatpush2.msra.mxu0 %v8103
          %8441 = vmatprep.subr.mxu0 0.0
          %8442 = vmatpush2.msra.mxu0 %v8102
          %8443 = vmatprep.subr.mxu0 0.0
          %8444 = vmatpush2.msra.mxu0 %v8101
          %8445 = vmatprep.subr.mxu0 0.0
          %8446 = vmatpush2.msra.mxu0 %v8100
          %8447 = vmatprep.subr.mxu0 0.0
          %8448 = vmatpush2.msra.mxu0 %v8099
          %8449 = vmatprep.subr.mxu0 0.0
          %8450 = vmatpush2.msra.mxu0 %v8098
          %8451 = vmatprep.subr.mxu0 0.0
          %8452 = vmatpush2.msra.mxu0 %v8097
          %8453 = vmatprep.subr.mxu0 0.0
          %8454 = vmatpush2.msra.mxu0 %v8096
          %8455 = vmatprep.subr.mxu0 0.0
          %8456 = vmatpush2.msra.mxu0 %v8095
          %8457 = vmatprep.subr.mxu0 0.0
          %8458 = vmatpush2.msra.mxu0 %v8094
          %8459 = vmatprep.subr.mxu0 0.0
          %8460 = vmatpush2.msra.mxu0 %v8093
          %8461 = vmatprep.subr.mxu0 0.0
          %8462 = vmatpush2.msra.mxu0 %v8092
          %8463 = vmatprep.subr.mxu0 0.0
          %8464 = vmatpush2.msra.mxu0 %v8091
          %8465 = vmatprep.subr.mxu0 0.0
          %8466 = vmatpush2.msra.mxu0 %v8090
          %8467 = vmatprep.mubr.f32.mxu0 %v7450
          %8468 = vmatmul.mubr.f32.gmra.mxu0 %v7448
          %v8469 = vpop.f32.mrf.mxu0
          %v8470 = vadd.f32 %v8400, %v8469
          %v8471 = vpop.f32.mrf.mxu0
          %8472 = vdwg.mxu0
          %8473 = vmatprep.subr.mxu0 0.0
          %8474 = vmatpush1.msra.mxu0 %v8121
          %8475 = vmatprep.subr.mxu0 0.0
          %8476 = vmatpush1.msra.mxu0 %v8120
          %8477 = vmatprep.subr.mxu0 0.0
          %8478 = vmatpush1.msra.mxu0 %v8119
          %8479 = vmatprep.subr.mxu0 0.0
          %8480 = vmatpush1.msra.mxu0 %v8118
          %8481 = vmatprep.subr.mxu0 0.0
          %8482 = vmatpush1.msra.mxu0 %v8117
          %8483 = vmatprep.subr.mxu0 0.0
          %8484 = vmatpush1.msra.mxu0 %v8116
          %8485 = vmatprep.subr.mxu0 0.0
          %8486 = vmatpush1.msra.mxu0 %v8115
          %8487 = vmatprep.subr.mxu0 0.0
          %8488 = vmatpush1.msra.mxu0 %v8114
          %8489 = vmatprep.subr.mxu0 0.0
          %8490 = vmatpush1.msra.mxu0 %v8113
          %8491 = vmatprep.subr.mxu0 0.0
          %8492 = vmatpush1.msra.mxu0 %v8112
          %8493 = vmatprep.subr.mxu0 0.0
          %8494 = vmatpush1.msra.mxu0 %v8111
          %8495 = vmatprep.subr.mxu0 0.0
          %8496 = vmatpush1.msra.mxu0 %v8110
          %8497 = vmatprep.subr.mxu0 0.0
          %8498 = vmatpush1.msra.mxu0 %v8109
          %8499 = vmatprep.subr.mxu0 0.0
          %8500 = vmatpush1.msra.mxu0 %v8108
          %8501 = vmatprep.subr.mxu0 0.0
          %8502 = vmatpush1.msra.mxu0 %v8107
          %8503 = vmatprep.subr.mxu0 0.0
          %8504 = vmatpush1.msra.mxu0 %v8106
          %8505 = vmatprep.subr.mxu0 0.0
          %8506 = vmatpush2.msra.mxu0 %v8137
          %8507 = vmatprep.subr.mxu0 0.0
          %8508 = vmatpush2.msra.mxu0 %v8136
          %8509 = vmatprep.subr.mxu0 0.0
          %8510 = vmatpush2.msra.mxu0 %v8135
          %8511 = vmatprep.subr.mxu0 0.0
          %8512 = vmatpush2.msra.mxu0 %v8134
          %8513 = vmatprep.subr.mxu0 0.0
          %8514 = vmatpush2.msra.mxu0 %v8133
          %8515 = vmatprep.subr.mxu0 0.0
          %8516 = vmatpush2.msra.mxu0 %v8132
          %8517 = vmatprep.subr.mxu0 0.0
          %8518 = vmatpush2.msra.mxu0 %v8131
          %8519 = vmatprep.subr.mxu0 0.0
          %8520 = vmatpush2.msra.mxu0 %v8130
          %8521 = vmatprep.subr.mxu0 0.0
          %8522 = vmatpush2.msra.mxu0 %v8129
          %8523 = vmatprep.subr.mxu0 0.0
          %8524 = vmatpush2.msra.mxu0 %v8128
          %8525 = vmatprep.subr.mxu0 0.0
          %8526 = vmatpush2.msra.mxu0 %v8127
          %8527 = vmatprep.subr.mxu0 0.0
          %8528 = vmatpush2.msra.mxu0 %v8126
          %8529 = vmatprep.subr.mxu0 0.0
          %8530 = vmatpush2.msra.mxu0 %v8125
          %8531 = vmatprep.subr.mxu0 0.0
          %8532 = vmatpush2.msra.mxu0 %v8124
          %8533 = vmatprep.subr.mxu0 0.0
          %8534 = vmatpush2.msra.mxu0 %v8123
          %8535 = vmatprep.subr.mxu0 0.0
          %8536 = vmatpush2.msra.mxu0 %v8122
          %8537 = vmatprep.mubr.f32.mxu0 %v7466
          %8538 = vmatmul.mubr.f32.gmra.mxu0 %v7458
          %v8539 = vpop.f32.mrf.mxu0
          %v8540 = vadd.f32 %v8470, %v8539
          %v8541 = vpop.f32.mrf.mxu0
          %8542 = vdwg.mxu0
          %8543 = vmatprep.subr.mxu0 0.0
          %8544 = vmatpush1.msra.mxu0 %v8153
          %8545 = vmatprep.subr.mxu0 0.0
          %8546 = vmatpush1.msra.mxu0 %v8152
          %8547 = vmatprep.subr.mxu0 0.0
          %8548 = vmatpush1.msra.mxu0 %v8151
          %8549 = vmatprep.subr.mxu0 0.0
          %8550 = vmatpush1.msra.mxu0 %v8150
          %8551 = vmatprep.subr.mxu0 0.0
          %8552 = vmatpush1.msra.mxu0 %v8149
          %8553 = vmatprep.subr.mxu0 0.0
          %8554 = vmatpush1.msra.mxu0 %v8148
          %8555 = vmatprep.subr.mxu0 0.0
          %8556 = vmatpush1.msra.mxu0 %v8147
          %8557 = vmatprep.subr.mxu0 0.0
          %8558 = vmatpush1.msra.mxu0 %v8146
          %8559 = vmatprep.subr.mxu0 0.0
          %8560 = vmatpush1.msra.mxu0 %v8145
          %8561 = vmatprep.subr.mxu0 0.0
          %8562 = vmatpush1.msra.mxu0 %v8144
          %8563 = vmatprep.subr.mxu0 0.0
          %8564 = vmatpush1.msra.mxu0 %v8143
          %8565 = vmatprep.subr.mxu0 0.0
          %8566 = vmatpush1.msra.mxu0 %v8142
          %8567 = vmatprep.subr.mxu0 0.0
          %8568 = vmatpush1.msra.mxu0 %v8141
          %8569 = vmatprep.subr.mxu0 0.0
          %8570 = vmatpush1.msra.mxu0 %v8140
          %8571 = vmatprep.subr.mxu0 0.0
          %8572 = vmatpush1.msra.mxu0 %v8139
          %8573 = vmatprep.subr.mxu0 0.0
          %8574 = vmatpush1.msra.mxu0 %v8138
          %8575 = vmatprep.subr.mxu0 0.0
          %8576 = vmatpush2.msra.mxu0 %v8169
          %8577 = vmatprep.subr.mxu0 0.0
          %8578 = vmatpush2.msra.mxu0 %v8168
          %8579 = vmatprep.subr.mxu0 0.0
          %8580 = vmatpush2.msra.mxu0 %v8167
          %8581 = vmatprep.subr.mxu0 0.0
          %8582 = vmatpush2.msra.mxu0 %v8166
          %8583 = vmatprep.subr.mxu0 0.0
          %8584 = vmatpush2.msra.mxu0 %v8165
          %8585 = vmatprep.subr.mxu0 0.0
          %8586 = vmatpush2.msra.mxu0 %v8164
          %8587 = vmatprep.subr.mxu0 0.0
          %8588 = vmatpush2.msra.mxu0 %v8163
          %8589 = vmatprep.subr.mxu0 0.0
          %8590 = vmatpush2.msra.mxu0 %v8162
          %8591 = vmatprep.subr.mxu0 0.0
          %8592 = vmatpush2.msra.mxu0 %v8161
          %8593 = vmatprep.subr.mxu0 0.0
          %8594 = vmatpush2.msra.mxu0 %v8160
          %8595 = vmatprep.subr.mxu0 0.0
          %8596 = vmatpush2.msra.mxu0 %v8159
          %8597 = vmatprep.subr.mxu0 0.0
          %8598 = vmatpush2.msra.mxu0 %v8158
          %8599 = vmatprep.subr.mxu0 0.0
          %8600 = vmatpush2.msra.mxu0 %v8157
          %8601 = vmatprep.subr.mxu0 0.0
          %8602 = vmatpush2.msra.mxu0 %v8156
          %8603 = vmatprep.subr.mxu0 0.0
          %8604 = vmatpush2.msra.mxu0 %v8155
          %8605 = vmatprep.subr.mxu0 0.0
          %8606 = vmatpush2.msra.mxu0 %v8154
          %8607 = vmatprep.mubr.f32.mxu0 %v7467
          %8608 = vmatmul.mubr.f32.gmra.mxu0 %v7465
          %v8609 = vpop.f32.mrf.mxu0
          %v8610 = vadd.f32 %v8540, %v8609
          %v8611 = vpop.f32.mrf.mxu0
          %8612 = vdwg.mxu0
          %8613 = vmatprep.subr.mxu0 0.0
          %8614 = vmatpush1.msra.mxu0 %v8185
          %8615 = vmatprep.subr.mxu0 0.0
          %8616 = vmatpush1.msra.mxu0 %v8184
          %8617 = vmatprep.subr.mxu0 0.0
          %8618 = vmatpush1.msra.mxu0 %v8183
          %8619 = vmatprep.subr.mxu0 0.0
          %8620 = vmatpush1.msra.mxu0 %v8182
          %8621 = vmatprep.subr.mxu0 0.0
          %8622 = vmatpush1.msra.mxu0 %v8181
          %8623 = vmatprep.subr.mxu0 0.0
          %8624 = vmatpush1.msra.mxu0 %v8180
          %8625 = vmatprep.subr.mxu0 0.0
          %8626 = vmatpush1.msra.mxu0 %v8179
          %8627 = vmatprep.subr.mxu0 0.0
          %8628 = vmatpush1.msra.mxu0 %v8178
          %8629 = vmatprep.subr.mxu0 0.0
          %8630 = vmatpush1.msra.mxu0 %v8177
          %8631 = vmatprep.subr.mxu0 0.0
          %8632 = vmatpush1.msra.mxu0 %v8176
          %8633 = vmatprep.subr.mxu0 0.0
          %8634 = vmatpush1.msra.mxu0 %v8175
          %8635 = vmatprep.subr.mxu0 0.0
          %8636 = vmatpush1.msra.mxu0 %v8174
          %8637 = vmatprep.subr.mxu0 0.0
          %8638 = vmatpush1.msra.mxu0 %v8173
          %8639 = vmatprep.subr.mxu0 0.0
          %8640 = vmatpush1.msra.mxu0 %v8172
          %8641 = vmatprep.subr.mxu0 0.0
          %8642 = vmatpush1.msra.mxu0 %v8171
          %8643 = vmatprep.subr.mxu0 0.0
          %8644 = vmatpush1.msra.mxu0 %v8170
          %8645 = vmatprep.subr.mxu0 0.0
          %8646 = vmatpush2.msra.mxu0 0.0
          %8647 = vmatprep.subr.mxu0 0.0
          %8648 = vmatpush2.msra.mxu0 0.0
          %8649 = vmatprep.subr.mxu0 0.0
          %8650 = vmatpush2.msra.mxu0 0.0
          %8651 = vmatprep.subr.mxu0 0.0
          %8652 = vmatpush2.msra.mxu0 0.0
          %8653 = vmatprep.subr.mxu0 0.0
          %8654 = vmatpush2.msra.mxu0 0.0
          %8655 = vmatprep.subr.mxu0 0.0
          %8656 = vmatpush2.msra.mxu0 0.0
          %8657 = vmatprep.subr.mxu0 0.0
          %8658 = vmatpush2.msra.mxu0 0.0
          %8659 = vmatprep.subr.mxu0 0.0
          %8660 = vmatpush2.msra.mxu0 0.0
          %8661 = vmatprep.subr.mxu0 0.0
          %8662 = vmatpush2.msra.mxu0 0.0
          %8663 = vmatprep.subr.mxu0 0.0
          %8664 = vmatpush2.msra.mxu0 0.0
          %8665 = vmatprep.subr.mxu0 0.0
          %8666 = vmatpush2.msra.mxu0 0.0
          %8667 = vmatprep.subr.mxu0 0.0
          %8668 = vmatpush2.msra.mxu0 0.0
          %8669 = vmatprep.subr.mxu0 0.0
          %8670 = vmatpush2.msra.mxu0 0.0
          %8671 = vmatprep.subr.mxu0 0.0
          %8672 = vmatpush2.msra.mxu0 0.0
          %8673 = vmatprep.subr.mxu0 0.0
          %8674 = vmatpush2.msra.mxu0 0.0
          %8675 = vmatprep.subr.mxu0 0.0
          %8676 = vmatpush2.msra.mxu0 0.0
          %8677 = vmatprep.mubr.f32.mxu0 0.0
          %8678 = vmatmul.mubr.f32.gmra.mxu0 %v7474
          %v8679 = vpop.f32.mrf.mxu0
          %v8680 = vadd.f32 %v8610, %v8679
          %v8681 = vpop.f32.mrf.mxu0
          %8682 = vdwg.mxu0
          %v8683 = vld [vmem:[%s7] sm:$0x3]
          %v8684 = vmul.f32 %v8680, 0.5
          %v8685 = vmul.f32 %v8684, 1.442695
          %v8686 = vpow.pop %v8685
          %v8687 = vmul.f32 %v8683, %v8686
          %v8688 = vadd.f32 %v7975, %v8687
          %v8689 = vld [vmem:[#allocation11] sm:$0xff]
          %v8690 = vld [vmem:[#allocation11 + $0x8] sm:$0xff]
          %v8691 = vld [vmem:[#allocation11 + $0x10] sm:$0xff]
          %v8692 = vld [vmem:[#allocation11 + $0x18] sm:$0xff]
          %v8693 = vld [vmem:[#allocation11 + $0x20] sm:$0xff]
          %v8694 = vld [vmem:[#allocation11 + $0x28] sm:$0xff]
          %v8695 = vld [vmem:[#allocation11 + $0x30] sm:$0xff]
          %v8696 = vld [vmem:[#allocation11 + $0x38] sm:$0xff]
          %v8697 = vld [vmem:[#allocation11 + $0x40] sm:$0xff]
          %v8698 = vld [vmem:[#allocation11 + $0x48] sm:$0xff]
          %v8699 = vld [vmem:[#allocation11 + $0x50] sm:$0xff]
          %v8700 = vld [vmem:[#allocation11 + $0x58] sm:$0xff]
          %v8701 = vld [vmem:[#allocation11 + $0x60] sm:$0xff]
          %v8702 = vld [vmem:[#allocation12] sm:$0xff]
          %v8703 = vld [vmem:[#allocation12 + $0x8] sm:$0x1f]
          %v8706 = vlaneseq
          %v8707 = vshrl.u32 %v8706, 7
          %v8708 = vsub.s32 0, %v8707
          %v8709 = vrot.slane %v8702, %v8708
          %v8710 = vlaneseq
          %v8711 = vshrl.u32 %v8710, 7
          %v8712 = vsub.s32 1, %v8711
          %v8713 = vrot.slane %v8702, %v8712
          %v8714 = vlaneseq
          %v8715 = vshrl.u32 %v8714, 7
          %v8716 = vsub.s32 2, %v8715
          %v8717 = vrot.slane %v8702, %v8716
          %v8718 = vlaneseq
          %v8719 = vshrl.u32 %v8718, 7
          %v8720 = vsub.s32 3, %v8719
          %v8721 = vrot.slane %v8702, %v8720
          %v8722 = vlaneseq
          %v8723 = vshrl.u32 %v8722, 7
          %v8724 = vsub.s32 4, %v8723
          %v8725 = vrot.slane %v8702, %v8724
          %v8726 = vlaneseq
          %v8727 = vshrl.u32 %v8726, 7
          %v8728 = vsub.s32 5, %v8727
          %v8729 = vrot.slane %v8702, %v8728
          %v8730 = vlaneseq
          %v8731 = vshrl.u32 %v8730, 7
          %v8732 = vsub.s32 6, %v8731
          %v8733 = vrot.slane %v8702, %v8732
          %v8734 = vlaneseq
          %v8735 = vshrl.u32 %v8734, 7
          %v8736 = vsub.s32 7, %v8735
          %v8737 = vrot.slane %v8702, %v8736
          %v8738 = vlaneseq
          %v8739 = vshrl.u32 %v8738, 7
          %v8740 = vsub.s32 0, %v8739
          %v8741 = vrot.slane %v8703, %v8740
          %v8742 = vlaneseq
          %v8743 = vshrl.u32 %v8742, 7
          %v8744 = vsub.s32 1, %v8743
          %v8745 = vrot.slane %v8703, %v8744
          %v8746 = vlaneseq
          %v8747 = vshrl.u32 %v8746, 7
          %v8748 = vsub.s32 2, %v8747
          %v8749 = vrot.slane %v8703, %v8748
          %v8750 = vlaneseq
          %v8751 = vshrl.u32 %v8750, 7
          %v8752 = vsub.s32 3, %v8751
          %v8753 = vrot.slane %v8703, %v8752
          %v8754 = vlaneseq
          %v8755 = vshrl.u32 %v8754, 7
          %v8756 = vsub.s32 4, %v8755
          %v8757 = vrot.slane %v8703, %v8756
          %vm8771 = vcmask 64512
          %v8773 = vsel %vm8771, %v8688, 0
          %8775 = vmatprep.subr.mxu0 0.0
          %8776 = vmatpush1.msra.mxu0 0.0
          %8777 = vmatprep.subr.mxu0 0.0
          %8778 = vmatpush1.msra.mxu0 0.0
          %8779 = vmatprep.subr.mxu0 0.0
          %8780 = vmatpush1.msra.mxu0 0.0
          %8781 = vmatprep.subr.mxu0 0.0
          %8782 = vmatpush1.msra.mxu0 0.0
          %8783 = vmatprep.subr.mxu0 0.0
          %8784 = vmatpush1.msra.mxu0 0.0
          %8785 = vmatprep.subr.mxu0 0.0
          %8786 = vmatpush1.msra.mxu0 0.0
          %8787 = vmatprep.subr.mxu0 0.0
          %8788 = vmatpush1.msra.mxu0 0.0
          %8789 = vmatprep.subr.mxu0 0.0
          %8790 = vmatpush1.msra.mxu0 0.0
          %8791 = vmatprep.subr.mxu0 0.0
          %8792 = vmatpush1.msra.mxu0 0.0
          %8793 = vmatprep.subr.mxu0 0.0
          %8794 = vmatpush1.msra.mxu0 0.0
          %8795 = vmatprep.subr.mxu0 0.0
          %8796 = vmatpush1.msra.mxu0 0.0
          %8797 = vmatprep.subr.mxu0 0.0
          %8798 = vmatpush1.msra.mxu0 0.0
          %8799 = vmatprep.subr.mxu0 0.0
          %8800 = vmatpush1.msra.mxu0 0.0
          %8801 = vmatprep.subr.mxu0 0.0
          %8802 = vmatpush1.msra.mxu0 0.0
          %8803 = vmatprep.subr.mxu0 0.0
          %8804 = vmatpush1.msra.mxu0 0.0
          %8805 = vmatprep.subr.mxu0 %v8690
          %8806 = vmatpush1.msra.mxu0 %v8689
          %8807 = vmatprep.subr.mxu0 0.0
          %8808 = vmatpush2.msra.mxu0 0.0
          %8809 = vmatprep.subr.mxu0 0.0
          %8810 = vmatpush2.msra.mxu0 0.0
          %8811 = vmatprep.subr.mxu0 0.0
          %8812 = vmatpush2.msra.mxu0 0.0
          %8813 = vmatprep.subr.mxu0 0.0
          %8814 = vmatpush2.msra.mxu0 0.0
          %8815 = vmatprep.subr.mxu0 0.0
          %8816 = vmatpush2.msra.mxu0 0.0
          %8817 = vmatprep.subr.mxu0 0.0
          %8818 = vmatpush2.msra.mxu0 0.0
          %8819 = vmatprep.subr.mxu0 0.0
          %8820 = vmatpush2.msra.mxu0 0.0
          %8821 = vmatprep.subr.mxu0 0.0
          %8822 = vmatpush2.msra.mxu0 0.0
          %8823 = vmatprep.subr.mxu0 0.0
          %8824 = vmatpush2.msra.mxu0 0.0
          %8825 = vmatprep.subr.mxu0 0.0
          %8826 = vmatpush2.msra.mxu0 0.0
          %8827 = vmatprep.subr.mxu0 0.0
          %8828 = vmatpush2.msra.mxu0 0.0
          %8829 = vmatprep.subr.mxu0 0.0
          %8830 = vmatpush2.msra.mxu0 0.0
          %8831 = vmatprep.subr.mxu0 0.0
          %8832 = vmatpush2.msra.mxu0 0.0
          %8833 = vmatprep.subr.mxu0 0.0
          %8834 = vmatpush2.msra.mxu0 0.0
          %8835 = vmatprep.subr.mxu0 0.0
          %8836 = vmatpush2.msra.mxu0 0.0
          %8837 = vmatprep.subr.mxu0 0.0
          %8838 = vmatpush2.msra.mxu0 0.0
          %8839 = vmatprep.mubr.f32.mxu0 0.0
          %8840 = vmatmul.mubr.f32.gmra.mxu0 %v8773
          %v8841 = vpop.f32.mrf.mxu0
          %v8842 = vadd.f32 %v8709, %v8841
          %v8843 = vpop.f32.mrf.mxu0
          %v8844 = vadd.f32 %v8713, %v8843
          %8845 = vdwg.mxu0
          %8846 = vmatprep.subr.mxu0 0.0
          %8847 = vmatpush1.msra.mxu0 0.0
          %8848 = vmatprep.subr.mxu0 0.0
          %8849 = vmatpush1.msra.mxu0 0.0
          %8850 = vmatprep.subr.mxu0 0.0
          %8851 = vmatpush1.msra.mxu0 0.0
          %8852 = vmatprep.subr.mxu0 0.0
          %8853 = vmatpush1.msra.mxu0 0.0
          %8854 = vmatprep.subr.mxu0 0.0
          %8855 = vmatpush1.msra.mxu0 0.0
          %8856 = vmatprep.subr.mxu0 0.0
          %8857 = vmatpush1.msra.mxu0 0.0
          %8858 = vmatprep.subr.mxu0 0.0
          %8859 = vmatpush1.msra.mxu0 0.0
          %8860 = vmatprep.subr.mxu0 0.0
          %8861 = vmatpush1.msra.mxu0 0.0
          %8862 = vmatprep.subr.mxu0 0.0
          %8863 = vmatpush1.msra.mxu0 0.0
          %8864 = vmatprep.subr.mxu0 0.0
          %8865 = vmatpush1.msra.mxu0 0.0
          %8866 = vmatprep.subr.mxu0 0.0
          %8867 = vmatpush1.msra.mxu0 0.0
          %8868 = vmatprep.subr.mxu0 0.0
          %8869 = vmatpush1.msra.mxu0 0.0
          %8870 = vmatprep.subr.mxu0 0.0
          %8871 = vmatpush1.msra.mxu0 0.0
          %8872 = vmatprep.subr.mxu0 0.0
          %8873 = vmatpush1.msra.mxu0 0.0
          %8874 = vmatprep.subr.mxu0 0.0
          %8875 = vmatpush1.msra.mxu0 0.0
          %8876 = vmatprep.subr.mxu0 %v8692
          %8877 = vmatpush1.msra.mxu0 %v8691
          %8878 = vmatprep.subr.mxu0 0.0
          %8879 = vmatpush2.msra.mxu0 0.0
          %8880 = vmatprep.subr.mxu0 0.0
          %8881 = vmatpush2.msra.mxu0 0.0
          %8882 = vmatprep.subr.mxu0 0.0
          %8883 = vmatpush2.msra.mxu0 0.0
          %8884 = vmatprep.subr.mxu0 0.0
          %8885 = vmatpush2.msra.mxu0 0.0
          %8886 = vmatprep.subr.mxu0 0.0
          %8887 = vmatpush2.msra.mxu0 0.0
          %8888 = vmatprep.subr.mxu0 0.0
          %8889 = vmatpush2.msra.mxu0 0.0
          %8890 = vmatprep.subr.mxu0 0.0
          %8891 = vmatpush2.msra.mxu0 0.0
          %8892 = vmatprep.subr.mxu0 0.0
          %8893 = vmatpush2.msra.mxu0 0.0
          %8894 = vmatprep.subr.mxu0 0.0
          %8895 = vmatpush2.msra.mxu0 0.0
          %8896 = vmatprep.subr.mxu0 0.0
          %8897 = vmatpush2.msra.mxu0 0.0
          %8898 = vmatprep.subr.mxu0 0.0
          %8899 = vmatpush2.msra.mxu0 0.0
          %8900 = vmatprep.subr.mxu0 0.0
          %8901 = vmatpush2.msra.mxu0 0.0
          %8902 = vmatprep.subr.mxu0 0.0
          %8903 = vmatpush2.msra.mxu0 0.0
          %8904 = vmatprep.subr.mxu0 0.0
          %8905 = vmatpush2.msra.mxu0 0.0
          %8906 = vmatprep.subr.mxu0 0.0
          %8907 = vmatpush2.msra.mxu0 0.0
          %8908 = vmatprep.subr.mxu0 0.0
          %8909 = vmatpush2.msra.mxu0 0.0
          %8910 = vmatprep.mubr.f32.mxu0 0.0
          %8911 = vmatmul.mubr.f32.gmra.mxu0 %v8773
          %v8912 = vpop.f32.mrf.mxu0
          %v8913 = vadd.f32 %v8717, %v8912
          %v8914 = vpop.f32.mrf.mxu0
          %v8915 = vadd.f32 %v8721, %v8914
          %8916 = vdwg.mxu0
          %8917 = vmatprep.subr.mxu0 0.0
          %8918 = vmatpush1.msra.mxu0 0.0
          %8919 = vmatprep.subr.mxu0 0.0
          %8920 = vmatpush1.msra.mxu0 0.0
          %8921 = vmatprep.subr.mxu0 0.0
          %8922 = vmatpush1.msra.mxu0 0.0
          %8923 = vmatprep.subr.mxu0 0.0
          %8924 = vmatpush1.msra.mxu0 0.0
          %8925 = vmatprep.subr.mxu0 0.0
          %8926 = vmatpush1.msra.mxu0 0.0
          %8927 = vmatprep.subr.mxu0 0.0
          %8928 = vmatpush1.msra.mxu0 0.0
          %8929 = vmatprep.subr.mxu0 0.0
          %8930 = vmatpush1.msra.mxu0 0.0
          %8931 = vmatprep.subr.mxu0 0.0
          %8932 = vmatpush1.msra.mxu0 0.0
          %8933 = vmatprep.subr.mxu0 0.0
          %8934 = vmatpush1.msra.mxu0 0.0
          %8935 = vmatprep.subr.mxu0 0.0
          %8936 = vmatpush1.msra.mxu0 0.0
          %8937 = vmatprep.subr.mxu0 0.0
          %8938 = vmatpush1.msra.mxu0 0.0
          %8939 = vmatprep.subr.mxu0 0.0
          %8940 = vmatpush1.msra.mxu0 0.0
          %8941 = vmatprep.subr.mxu0 0.0
          %8942 = vmatpush1.msra.mxu0 0.0
          %8943 = vmatprep.subr.mxu0 0.0
          %8944 = vmatpush1.msra.mxu0 0.0
          %8945 = vmatprep.subr.mxu0 0.0
          %8946 = vmatpush1.msra.mxu0 0.0
          %8947 = vmatprep.subr.mxu0 %v8694
          %8948 = vmatpush1.msra.mxu0 %v8693
          %8949 = vmatprep.subr.mxu0 0.0
          %8950 = vmatpush2.msra.mxu0 0.0
          %8951 = vmatprep.subr.mxu0 0.0
          %8952 = vmatpush2.msra.mxu0 0.0
          %8953 = vmatprep.subr.mxu0 0.0
          %8954 = vmatpush2.msra.mxu0 0.0
          %8955 = vmatprep.subr.mxu0 0.0
          %8956 = vmatpush2.msra.mxu0 0.0
          %8957 = vmatprep.subr.mxu0 0.0
          %8958 = vmatpush2.msra.mxu0 0.0
          %8959 = vmatprep.subr.mxu0 0.0
          %8960 = vmatpush2.msra.mxu0 0.0
          %8961 = vmatprep.subr.mxu0 0.0
          %8962 = vmatpush2.msra.mxu0 0.0
          %8963 = vmatprep.subr.mxu0 0.0
          %8964 = vmatpush2.msra.mxu0 0.0
          %8965 = vmatprep.subr.mxu0 0.0
          %8966 = vmatpush2.msra.mxu0 0.0
          %8967 = vmatprep.subr.mxu0 0.0
          %8968 = vmatpush2.msra.mxu0 0.0
          %8969 = vmatprep.subr.mxu0 0.0
          %8970 = vmatpush2.msra.mxu0 0.0
          %8971 = vmatprep.subr.mxu0 0.0
          %8972 = vmatpush2.msra.mxu0 0.0
          %8973 = vmatprep.subr.mxu0 0.0
          %8974 = vmatpush2.msra.mxu0 0.0
          %8975 = vmatprep.subr.mxu0 0.0
          %8976 = vmatpush2.msra.mxu0 0.0
          %8977 = vmatprep.subr.mxu0 0.0
          %8978 = vmatpush2.msra.mxu0 0.0
          %8979 = vmatprep.subr.mxu0 0.0
          %8980 = vmatpush2.msra.mxu0 0.0
          %8981 = vmatprep.mubr.f32.mxu0 0.0
          %8982 = vmatmul.mubr.f32.gmra.mxu0 %v8773
          %v8983 = vpop.f32.mrf.mxu0
          %v8984 = vadd.f32 %v8725, %v8983
          %v8985 = vpop.f32.mrf.mxu0
          %v8986 = vadd.f32 %v8729, %v8985
          %8987 = vdwg.mxu0
          %8988 = vmatprep.subr.mxu0 0.0
          %8989 = vmatpush1.msra.mxu0 0.0
          %8990 = vmatprep.subr.mxu0 0.0
          %8991 = vmatpush1.msra.mxu0 0.0
          %8992 = vmatprep.subr.mxu0 0.0
          %8993 = vmatpush1.msra.mxu0 0.0
          %8994 = vmatprep.subr.mxu0 0.0
          %8995 = vmatpush1.msra.mxu0 0.0
          %8996 = vmatprep.subr.mxu0 0.0
          %8997 = vmatpush1.msra.mxu0 0.0
          %8998 = vmatprep.subr.mxu0 0.0
          %8999 = vmatpush1.msra.mxu0 0.0
          %9000 = vmatprep.subr.mxu0 0.0
          %9001 = vmatpush1.msra.mxu0 0.0
          %9002 = vmatprep.subr.mxu0 0.0
          %9003 = vmatpush1.msra.mxu0 0.0
          %9004 = vmatprep.subr.mxu0 0.0
          %9005 = vmatpush1.msra.mxu0 0.0
          %9006 = vmatprep.subr.mxu0 0.0
          %9007 = vmatpush1.msra.mxu0 0.0
          %9008 = vmatprep.subr.mxu0 0.0
          %9009 = vmatpush1.msra.mxu0 0.0
          %9010 = vmatprep.subr.mxu0 0.0
          %9011 = vmatpush1.msra.mxu0 0.0
          %9012 = vmatprep.subr.mxu0 0.0
          %9013 = vmatpush1.msra.mxu0 0.0
          %9014 = vmatprep.subr.mxu0 0.0
          %9015 = vmatpush1.msra.mxu0 0.0
          %9016 = vmatprep.subr.mxu0 0.0
          %9017 = vmatpush1.msra.mxu0 0.0
          %9018 = vmatprep.subr.mxu0 %v8696
          %9019 = vmatpush1.msra.mxu0 %v8695
          %9020 = vmatprep.subr.mxu0 0.0
          %9021 = vmatpush2.msra.mxu0 0.0
          %9022 = vmatprep.subr.mxu0 0.0
          %9023 = vmatpush2.msra.mxu0 0.0
          %9024 = vmatprep.subr.mxu0 0.0
          %9025 = vmatpush2.msra.mxu0 0.0
          %9026 = vmatprep.subr.mxu0 0.0
          %9027 = vmatpush2.msra.mxu0 0.0
          %9028 = vmatprep.subr.mxu0 0.0
          %9029 = vmatpush2.msra.mxu0 0.0
          %9030 = vmatprep.subr.mxu0 0.0
          %9031 = vmatpush2.msra.mxu0 0.0
          %9032 = vmatprep.subr.mxu0 0.0
          %9033 = vmatpush2.msra.mxu0 0.0
          %9034 = vmatprep.subr.mxu0 0.0
          %9035 = vmatpush2.msra.mxu0 0.0
          %9036 = vmatprep.subr.mxu0 0.0
          %9037 = vmatpush2.msra.mxu0 0.0
          %9038 = vmatprep.subr.mxu0 0.0
          %9039 = vmatpush2.msra.mxu0 0.0
          %9040 = vmatprep.subr.mxu0 0.0
          %9041 = vmatpush2.msra.mxu0 0.0
          %9042 = vmatprep.subr.mxu0 0.0
          %9043 = vmatpush2.msra.mxu0 0.0
          %9044 = vmatprep.subr.mxu0 0.0
          %9045 = vmatpush2.msra.mxu0 0.0
          %9046 = vmatprep.subr.mxu0 0.0
          %9047 = vmatpush2.msra.mxu0 0.0
          %9048 = vmatprep.subr.mxu0 0.0
          %9049 = vmatpush2.msra.mxu0 0.0
          %9050 = vmatprep.subr.mxu0 0.0
          %9051 = vmatpush2.msra.mxu0 0.0
          %9052 = vmatprep.mubr.f32.mxu0 0.0
          %9053 = vmatmul.mubr.f32.gmra.mxu0 %v8773
          %v9054 = vpop.f32.mrf.mxu0
          %v9055 = vadd.f32 %v8733, %v9054
          %v9056 = vpop.f32.mrf.mxu0
          %v9057 = vadd.f32 %v8737, %v9056
          %9058 = vdwg.mxu0
          %9059 = vmatprep.subr.mxu0 0.0
          %9060 = vmatpush1.msra.mxu0 0.0
          %9061 = vmatprep.subr.mxu0 0.0
          %9062 = vmatpush1.msra.mxu0 0.0
          %9063 = vmatprep.subr.mxu0 0.0
          %9064 = vmatpush1.msra.mxu0 0.0
          %9065 = vmatprep.subr.mxu0 0.0
          %9066 = vmatpush1.msra.mxu0 0.0
          %9067 = vmatprep.subr.mxu0 0.0
          %9068 = vmatpush1.msra.mxu0 0.0
          %9069 = vmatprep.subr.mxu0 0.0
          %9070 = vmatpush1.msra.mxu0 0.0
          %9071 = vmatprep.subr.mxu0 0.0
          %9072 = vmatpush1.msra.mxu0 0.0
          %9073 = vmatprep.subr.mxu0 0.0
          %9074 = vmatpush1.msra.mxu0 0.0
          %9075 = vmatprep.subr.mxu0 0.0
          %9076 = vmatpush1.msra.mxu0 0.0
          %9077 = vmatprep.subr.mxu0 0.0
          %9078 = vmatpush1.msra.mxu0 0.0
          %9079 = vmatprep.subr.mxu0 0.0
          %9080 = vmatpush1.msra.mxu0 0.0
          %9081 = vmatprep.subr.mxu0 0.0
          %9082 = vmatpush1.msra.mxu0 0.0
          %9083 = vmatprep.subr.mxu0 0.0
          %9084 = vmatpush1.msra.mxu0 0.0
          %9085 = vmatprep.subr.mxu0 0.0
          %9086 = vmatpush1.msra.mxu0 0.0
          %9087 = vmatprep.subr.mxu0 0.0
          %9088 = vmatpush1.msra.mxu0 0.0
          %9089 = vmatprep.subr.mxu0 %v8698
          %9090 = vmatpush1.msra.mxu0 %v8697
          %9091 = vmatprep.subr.mxu0 0.0
          %9092 = vmatpush2.msra.mxu0 0.0
          %9093 = vmatprep.subr.mxu0 0.0
          %9094 = vmatpush2.msra.mxu0 0.0
          %9095 = vmatprep.subr.mxu0 0.0
          %9096 = vmatpush2.msra.mxu0 0.0
          %9097 = vmatprep.subr.mxu0 0.0
          %9098 = vmatpush2.msra.mxu0 0.0
          %9099 = vmatprep.subr.mxu0 0.0
          %9100 = vmatpush2.msra.mxu0 0.0
          %9101 = vmatprep.subr.mxu0 0.0
          %9102 = vmatpush2.msra.mxu0 0.0
          %9103 = vmatprep.subr.mxu0 0.0
          %9104 = vmatpush2.msra.mxu0 0.0
          %9105 = vmatprep.subr.mxu0 0.0
          %9106 = vmatpush2.msra.mxu0 0.0
          %9107 = vmatprep.subr.mxu0 0.0
          %9108 = vmatpush2.msra.mxu0 0.0
          %9109 = vmatprep.subr.mxu0 0.0
          %9110 = vmatpush2.msra.mxu0 0.0
          %9111 = vmatprep.subr.mxu0 0.0
          %9112 = vmatpush2.msra.mxu0 0.0
          %9113 = vmatprep.subr.mxu0 0.0
          %9114 = vmatpush2.msra.mxu0 0.0
          %9115 = vmatprep.subr.mxu0 0.0
          %9116 = vmatpush2.msra.mxu0 0.0
          %9117 = vmatprep.subr.mxu0 0.0
          %9118 = vmatpush2.msra.mxu0 0.0
          %9119 = vmatprep.subr.mxu0 0.0
          %9120 = vmatpush2.msra.mxu0 0.0
          %9121 = vmatprep.subr.mxu0 0.0
          %9122 = vmatpush2.msra.mxu0 0.0
          %9123 = vmatprep.mubr.f32.mxu0 0.0
          %9124 = vmatmul.mubr.f32.gmra.mxu0 %v8773
          %v9125 = vpop.f32.mrf.mxu0
          %v9126 = vadd.f32 %v8741, %v9125
          %v9127 = vpop.f32.mrf.mxu0
          %v9128 = vadd.f32 %v8745, %v9127
          %9129 = vdwg.mxu0
          %9130 = vmatprep.subr.mxu0 0.0
          %9131 = vmatpush1.msra.mxu0 0.0
          %9132 = vmatprep.subr.mxu0 0.0
          %9133 = vmatpush1.msra.mxu0 0.0
          %9134 = vmatprep.subr.mxu0 0.0
          %9135 = vmatpush1.msra.mxu0 0.0
          %9136 = vmatprep.subr.mxu0 0.0
          %9137 = vmatpush1.msra.mxu0 0.0
          %9138 = vmatprep.subr.mxu0 0.0
          %9139 = vmatpush1.msra.mxu0 0.0
          %9140 = vmatprep.subr.mxu0 0.0
          %9141 = vmatpush1.msra.mxu0 0.0
          %9142 = vmatprep.subr.mxu0 0.0
          %9143 = vmatpush1.msra.mxu0 0.0
          %9144 = vmatprep.subr.mxu0 0.0
          %9145 = vmatpush1.msra.mxu0 0.0
          %9146 = vmatprep.subr.mxu0 0.0
          %9147 = vmatpush1.msra.mxu0 0.0
          %9148 = vmatprep.subr.mxu0 0.0
          %9149 = vmatpush1.msra.mxu0 0.0
          %9150 = vmatprep.subr.mxu0 0.0
          %9151 = vmatpush1.msra.mxu0 0.0
          %9152 = vmatprep.subr.mxu0 0.0
          %9153 = vmatpush1.msra.mxu0 0.0
          %9154 = vmatprep.subr.mxu0 0.0
          %9155 = vmatpush1.msra.mxu0 0.0
          %9156 = vmatprep.subr.mxu0 0.0
          %9157 = vmatpush1.msra.mxu0 0.0
          %9158 = vmatprep.subr.mxu0 0.0
          %9159 = vmatpush1.msra.mxu0 0.0
          %9160 = vmatprep.subr.mxu0 %v8700
          %9161 = vmatpush1.msra.mxu0 %v8699
          %9162 = vmatprep.subr.mxu0 0.0
          %9163 = vmatpush2.msra.mxu0 0.0
          %9164 = vmatprep.subr.mxu0 0.0
          %9165 = vmatpush2.msra.mxu0 0.0
          %9166 = vmatprep.subr.mxu0 0.0
          %9167 = vmatpush2.msra.mxu0 0.0
          %9168 = vmatprep.subr.mxu0 0.0
          %9169 = vmatpush2.msra.mxu0 0.0
          %9170 = vmatprep.subr.mxu0 0.0
          %9171 = vmatpush2.msra.mxu0 0.0
          %9172 = vmatprep.subr.mxu0 0.0
          %9173 = vmatpush2.msra.mxu0 0.0
          %9174 = vmatprep.subr.mxu0 0.0
          %9175 = vmatpush2.msra.mxu0 0.0
          %9176 = vmatprep.subr.mxu0 0.0
          %9177 = vmatpush2.msra.mxu0 0.0
          %9178 = vmatprep.subr.mxu0 0.0
          %9179 = vmatpush2.msra.mxu0 0.0
          %9180 = vmatprep.subr.mxu0 0.0
          %9181 = vmatpush2.msra.mxu0 0.0
          %9182 = vmatprep.subr.mxu0 0.0
          %9183 = vmatpush2.msra.mxu0 0.0
          %9184 = vmatprep.subr.mxu0 0.0
          %9185 = vmatpush2.msra.mxu0 0.0
          %9186 = vmatprep.subr.mxu0 0.0
          %9187 = vmatpush2.msra.mxu0 0.0
          %9188 = vmatprep.subr.mxu0 0.0
          %9189 = vmatpush2.msra.mxu0 0.0
          %9190 = vmatprep.subr.mxu0 0.0
          %9191 = vmatpush2.msra.mxu0 0.0
          %9192 = vmatprep.subr.mxu0 0.0
          %9193 = vmatpush2.msra.mxu0 0.0
          %9194 = vmatprep.mubr.f32.mxu0 0.0
          %9195 = vmatmul.mubr.f32.gmra.mxu0 %v8773
          %v9196 = vpop.f32.mrf.mxu0
          %v9197 = vadd.f32 %v8749, %v9196
          %v9198 = vpop.f32.mrf.mxu0
          %v9199 = vadd.f32 %v8753, %v9198
          %9200 = vdwg.mxu0
          %9201 = vmatprep.subr.mxu0 0.0
          %9202 = vmatpush1.msra.mxu0 0.0
          %9203 = vmatprep.subr.mxu0 0.0
          %9204 = vmatpush1.msra.mxu0 0.0
          %9205 = vmatprep.subr.mxu0 0.0
          %9206 = vmatpush1.msra.mxu0 0.0
          %9207 = vmatprep.subr.mxu0 0.0
          %9208 = vmatpush1.msra.mxu0 0.0
          %9209 = vmatprep.subr.mxu0 0.0
          %9210 = vmatpush1.msra.mxu0 0.0
          %9211 = vmatprep.subr.mxu0 0.0
          %9212 = vmatpush1.msra.mxu0 0.0
          %9213 = vmatprep.subr.mxu0 0.0
          %9214 = vmatpush1.msra.mxu0 0.0
          %9215 = vmatprep.subr.mxu0 0.0
          %9216 = vmatpush1.msra.mxu0 0.0
          %9217 = vmatprep.subr.mxu0 0.0
          %9218 = vmatpush1.msra.mxu0 0.0
          %9219 = vmatprep.subr.mxu0 0.0
          %9220 = vmatpush1.msra.mxu0 0.0
          %9221 = vmatprep.subr.mxu0 0.0
          %9222 = vmatpush1.msra.mxu0 0.0
          %9223 = vmatprep.subr.mxu0 0.0
          %9224 = vmatpush1.msra.mxu0 0.0
          %9225 = vmatprep.subr.mxu0 0.0
          %9226 = vmatpush1.msra.mxu0 0.0
          %9227 = vmatprep.subr.mxu0 0.0
          %9228 = vmatpush1.msra.mxu0 0.0
          %9229 = vmatprep.subr.mxu0 0.0
          %9230 = vmatpush1.msra.mxu0 0.0
          %9231 = vmatprep.subr.mxu0 0.0
          %9232 = vmatpush1.msra.mxu0 %v8701
          %9233 = vmatprep.subr.mxu0 0.0
          %9234 = vmatpush2.msra.mxu0 0.0
          %9235 = vmatprep.subr.mxu0 0.0
          %9236 = vmatpush2.msra.mxu0 0.0
          %9237 = vmatprep.subr.mxu0 0.0
          %9238 = vmatpush2.msra.mxu0 0.0
          %9239 = vmatprep.subr.mxu0 0.0
          %9240 = vmatpush2.msra.mxu0 0.0
          %9241 = vmatprep.subr.mxu0 0.0
          %9242 = vmatpush2.msra.mxu0 0.0
          %9243 = vmatprep.subr.mxu0 0.0
          %9244 = vmatpush2.msra.mxu0 0.0
          %9245 = vmatprep.subr.mxu0 0.0
          %9246 = vmatpush2.msra.mxu0 0.0
          %9247 = vmatprep.subr.mxu0 0.0
          %9248 = vmatpush2.msra.mxu0 0.0
          %9249 = vmatprep.subr.mxu0 0.0
          %9250 = vmatpush2.msra.mxu0 0.0
          %9251 = vmatprep.subr.mxu0 0.0
          %9252 = vmatpush2.msra.mxu0 0.0
          %9253 = vmatprep.subr.mxu0 0.0
          %9254 = vmatpush2.msra.mxu0 0.0
          %9255 = vmatprep.subr.mxu0 0.0
          %9256 = vmatpush2.msra.mxu0 0.0
          %9257 = vmatprep.subr.mxu0 0.0
          %9258 = vmatpush2.msra.mxu0 0.0
          %9259 = vmatprep.subr.mxu0 0.0
          %9260 = vmatpush2.msra.mxu0 0.0
          %9261 = vmatprep.subr.mxu0 0.0
          %9262 = vmatpush2.msra.mxu0 0.0
          %9263 = vmatprep.subr.mxu0 0.0
          %9264 = vmatpush2.msra.mxu0 0.0
          %9265 = vmatprep.mubr.f32.mxu0 0.0
          %9266 = vmatmul.mubr.f32.gmra.mxu0 %v8773
          %v9267 = vpop.f32.mrf.mxu0
          %v9268 = vadd.f32 %v8757, %v9267
          %v9269 = vpop.f32.mrf.mxu0
          %9270 = vdwg.mxu0
          %v9271 = vpack.c.bf16 %v8842, %v8842
          %v9272 = vpack.c.bf16 %v8844, %v8844
          %v9273 = vpack.c.bf16 %v8913, %v8913
          %v9274 = vpack.c.bf16 %v8915, %v8915
          %v9275 = vpack.c.bf16 %v8984, %v8984
          %v9276 = vpack.c.bf16 %v8986, %v8986
          %v9277 = vpack.c.bf16 %v9055, %v9055
          %v9278 = vpack.c.bf16 %v9057, %v9057
          %v9279 = vpack.c.bf16 %v9126, %v9126
          %v9280 = vpack.c.bf16 %v9128, %v9128
          %v9281 = vpack.c.bf16 %v9197, %v9197
          %v9282 = vpack.c.bf16 %v9199, %v9199
          %v9283 = vpack.c.bf16 %v9268, %v9268
          %v9284 = vld [vmem:[#allocation14] sm:$0xf]
          %v9285 = vld [vmem:[#allocation14 + $0x4] sm:$0xf]
          %v9286 = vld [vmem:[#allocation14 + $0x8] sm:$0xf]
          %v9287 = vld [vmem:[#allocation14 + $0xc] sm:$0xf]
          %v9288 = vld [vmem:[#allocation14 + $0x10] sm:$0xf]
          %v9289 = vld [vmem:[#allocation14 + $0x14] sm:$0xf]
          %v9290 = vld [vmem:[#allocation14 + $0x18] sm:$0xf]
          %v9291 = vld [vmem:[#allocation14 + $0x1c] sm:$0xf]
          %v9292 = vld [vmem:[#allocation14 + $0x20] sm:$0xf]
          %v9293 = vld [vmem:[#allocation14 + $0x24] sm:$0xf]
          %v9294 = vld [vmem:[#allocation14 + $0x28] sm:$0xf]
          %v9295 = vld [vmem:[#allocation14 + $0x2c] sm:$0xf]
          %v9296 = vld [vmem:[#allocation14 + $0x30] sm:$0xf]
          %v9297 = vld [vmem:[#allocation14 + $0x34] sm:$0xf]
          %v9298 = vld [vmem:[#allocation14 + $0x38] sm:$0xf]
          %v9299 = vld [vmem:[#allocation14 + $0x3c] sm:$0xf]
          %v9300 = vld [vmem:[#allocation14 + $0x40] sm:$0xf]
          %v9301 = vld [vmem:[#allocation14 + $0x44] sm:$0xf]
          %v9302 = vld [vmem:[#allocation14 + $0x48] sm:$0xf]
          %v9303 = vld [vmem:[#allocation14 + $0x4c] sm:$0xf]
          %v9304 = vld [vmem:[#allocation14 + $0x50] sm:$0xf]
          %v9305 = vld [vmem:[#allocation14 + $0x54] sm:$0xf]
          %v9306 = vld [vmem:[#allocation14 + $0x58] sm:$0xf]
          %v9307 = vld [vmem:[#allocation14 + $0x5c] sm:$0xf]
          %v9308 = vld [vmem:[#allocation14 + $0x60] sm:$0xf]
          %v9309 = vld [vmem:[#allocation14 + $0x64] sm:$0xf]
          %v9310 = vld [vmem:[#allocation14 + $0x68] sm:$0xf]
          %v9311 = vld [vmem:[#allocation14 + $0x6c] sm:$0xf]
          %v9312 = vld [vmem:[#allocation14 + $0x70] sm:$0xf]
          %v9313 = vld [vmem:[#allocation14 + $0x74] sm:$0xf]
          %v9314 = vld [vmem:[#allocation14 + $0x78] sm:$0xf]
          %v9315 = vld [vmem:[#allocation14 + $0x7c] sm:$0xf]
          %v9316 = vld [vmem:[#allocation14 + $0x80] sm:$0xf]
          %v9317 = vld [vmem:[#allocation14 + $0x84] sm:$0xf]
          %v9318 = vld [vmem:[#allocation14 + $0x88] sm:$0xf]
          %v9319 = vld [vmem:[#allocation14 + $0x8c] sm:$0xf]
          %v9320 = vld [vmem:[#allocation14 + $0x90] sm:$0xf]
          %v9321 = vld [vmem:[#allocation14 + $0x94] sm:$0xf]
          %v9322 = vld [vmem:[#allocation14 + $0x98] sm:$0xf]
          %v9323 = vld [vmem:[#allocation14 + $0x9c] sm:$0xf]
          %v9324 = vld [vmem:[#allocation14 + $0xa0] sm:$0xf]
          %v9325 = vld [vmem:[#allocation14 + $0xa4] sm:$0xf]
          %v9326 = vld [vmem:[#allocation14 + $0xa8] sm:$0xf]
          %v9327 = vld [vmem:[#allocation14 + $0xac] sm:$0xf]
          %v9328 = vld [vmem:[#allocation14 + $0xb0] sm:$0xf]
          %v9329 = vld [vmem:[#allocation14 + $0xb4] sm:$0xf]
          %v9330 = vld [vmem:[#allocation14 + $0xb8] sm:$0xf]
          %v9331 = vld [vmem:[#allocation14 + $0xbc] sm:$0xf]
          %v9332 = vld [vmem:[#allocation14 + $0xc0] sm:$0xf]
          %v9333 = vld [vmem:[#allocation14 + $0xc4] sm:$0xf]
          %v9334 = vld [vmem:[#allocation14 + $0xc8] sm:$0xf]
          %v9335 = vld [vmem:[#allocation14 + $0xcc] sm:$0xf]
          %v9336 = vld [vmem:[#allocation14 + $0xd0] sm:$0xf]
          %v9337 = vld [vmem:[#allocation14 + $0xd4] sm:$0xf]
          %v9338 = vld [vmem:[#allocation14 + $0xd8] sm:$0xf]
          %v9339 = vld [vmem:[#allocation14 + $0xdc] sm:$0xf]
          %v9340 = vld [vmem:[#allocation14 + $0xe0] sm:$0xf]
          %v9341 = vld [vmem:[#allocation14 + $0xe4] sm:$0xf]
          %v9342 = vld [vmem:[#allocation14 + $0xe8] sm:$0xf]
          %v9343 = vld [vmem:[#allocation14 + $0xec] sm:$0xf]
          %v9344 = vld [vmem:[#allocation14 + $0xf0] sm:$0xf]
          %v9345 = vld [vmem:[#allocation14 + $0xf4] sm:$0xf]
          %v9346 = vld [vmem:[#allocation14 + $0xf8] sm:$0xf]
          %v9347 = vld [vmem:[#allocation14 + $0xfc] sm:$0xf]
          %v9348 = vld [vmem:[#allocation14 + $0x100] sm:$0xf]
          %v9349 = vld [vmem:[#allocation14 + $0x104] sm:$0xf]
          %v9350 = vld [vmem:[#allocation14 + $0x108] sm:$0xf]
          %v9351 = vld [vmem:[#allocation14 + $0x10c] sm:$0xf]
          %v9352 = vld [vmem:[#allocation14 + $0x110] sm:$0xf]
          %v9353 = vld [vmem:[#allocation14 + $0x114] sm:$0xf]
          %v9354 = vld [vmem:[#allocation14 + $0x118] sm:$0xf]
          %v9355 = vld [vmem:[#allocation14 + $0x11c] sm:$0xf]
          %v9356 = vld [vmem:[#allocation14 + $0x120] sm:$0xf]
          %v9357 = vld [vmem:[#allocation14 + $0x124] sm:$0xf]
          %v9358 = vld [vmem:[#allocation14 + $0x128] sm:$0xf]
          %v9359 = vld [vmem:[#allocation14 + $0x12c] sm:$0xf]
          %v9360 = vld [vmem:[#allocation14 + $0x130] sm:$0xf]
          %v9361 = vld [vmem:[#allocation14 + $0x134] sm:$0xf]
          %v9362 = vld [vmem:[#allocation14 + $0x138] sm:$0xf]
          %v9363 = vld [vmem:[#allocation14 + $0x13c] sm:$0xf]
          %v9364 = vld [vmem:[#allocation14 + $0x140] sm:$0xf]
          %v9365 = vld [vmem:[#allocation14 + $0x144] sm:$0xf]
          %v9366 = vld [vmem:[#allocation14 + $0x148] sm:$0xf]
          %v9367 = vld [vmem:[#allocation14 + $0x14c] sm:$0xf]
          %v9368 = vld [vmem:[#allocation14 + $0x150] sm:$0xf]
          %v9369 = vld [vmem:[#allocation14 + $0x154] sm:$0xf]
          %v9370 = vld [vmem:[#allocation14 + $0x158] sm:$0xf]
          %v9371 = vld [vmem:[#allocation14 + $0x15c] sm:$0xf]
          %v9372 = vld [vmem:[#allocation14 + $0x160] sm:$0xf]
          %v9373 = vld [vmem:[#allocation14 + $0x164] sm:$0xf]
          %v9374 = vld [vmem:[#allocation14 + $0x168] sm:$0xf]
          %v9375 = vld [vmem:[#allocation14 + $0x16c] sm:$0xf]
          %v9376 = vld [vmem:[#allocation14 + $0x170] sm:$0xf]
          %v9377 = vld [vmem:[#allocation14 + $0x174] sm:$0xf]
          %v9378 = vld [vmem:[#allocation14 + $0x178] sm:$0xf]
          %v9379 = vld [vmem:[#allocation14 + $0x17c] sm:$0xf]
          %v9380 = vld [vmem:[#allocation14 + $0x180] sm:$0xf]
          %v9381 = vld [vmem:[#allocation14 + $0x184] sm:$0xf]
          %v9382 = vld [vmem:[#allocation14 + $0x188] sm:$0xf]
          %v9383 = vld [vmem:[#allocation14 + $0x18c] sm:$0xf]
          %v9384 = vld [vmem:[#allocation14 + $0x190] sm:$0xf]
          %v9385 = vld [vmem:[#allocation14 + $0x194] sm:$0xf]
          %v9386 = vld [vmem:[#allocation14 + $0x198] sm:$0xf]
          %v9387 = vld [vmem:[#allocation14 + $0x19c] sm:$0xf]
          %v9388 = vld [vmem:[#allocation14 + $0x1a0] sm:$0xf]
          %v9389 = vld [vmem:[#allocation14 + $0x1a4] sm:$0xf]
          %v9390 = vld [vmem:[#allocation14 + $0x1a8] sm:$0xf]
          %v9391 = vld [vmem:[#allocation14 + $0x1ac] sm:$0xf]
          %v9392 = vld [vmem:[#allocation14 + $0x1b0] sm:$0xf]
          %v9393 = vld [vmem:[#allocation14 + $0x1b4] sm:$0xf]
          %v9394 = vld [vmem:[#allocation14 + $0x1b8] sm:$0xf]
          %v9395 = vld [vmem:[#allocation14 + $0x1bc] sm:$0xf]
          %v9396 = vld [vmem:[#allocation14 + $0x1c0] sm:$0xf]
          %v9397 = vld [vmem:[#allocation14 + $0x1c4] sm:$0xf]
          %v9398 = vld [vmem:[#allocation14 + $0x1c8] sm:$0xf]
          %v9399 = vld [vmem:[#allocation14 + $0x1cc] sm:$0xf]
          %v9400 = vld [vmem:[#allocation14 + $0x1d0] sm:$0xf]
          %v9401 = vld [vmem:[#allocation14 + $0x1d4] sm:$0xf]
          %v9402 = vld [vmem:[#allocation14 + $0x1d8] sm:$0xf]
          %v9403 = vld [vmem:[#allocation14 + $0x1dc] sm:$0xf]
          %v9404 = vld [vmem:[#allocation14 + $0x1e0] sm:$0xf]
          %v9405 = vld [vmem:[#allocation14 + $0x1e4] sm:$0xf]
          %v9406 = vld [vmem:[#allocation14 + $0x1e8] sm:$0xf]
          %v9407 = vld [vmem:[#allocation14 + $0x1ec] sm:$0xf]
          %v9408 = vld [vmem:[#allocation14 + $0x1f0] sm:$0xf]
          %v9409 = vld [vmem:[#allocation14 + $0x1f4] sm:$0xf]
          %v9410 = vld [vmem:[#allocation14 + $0x1f8] sm:$0xf]
          %v9411 = vld [vmem:[#allocation14 + $0x1fc] sm:$0xf]
          %v9412 = vld [vmem:[#allocation14 + $0x200] sm:$0xf]
          %v9413 = vld [vmem:[#allocation14 + $0x204] sm:$0xf]
          %v9414 = vld [vmem:[#allocation14 + $0x208] sm:$0xf]
          %v9415 = vld [vmem:[#allocation14 + $0x20c] sm:$0xf]
          %v9416 = vld [vmem:[#allocation14 + $0x210] sm:$0xf]
          %v9417 = vld [vmem:[#allocation14 + $0x214] sm:$0xf]
          %v9418 = vld [vmem:[#allocation14 + $0x218] sm:$0xf]
          %v9419 = vld [vmem:[#allocation14 + $0x21c] sm:$0xf]
          %v9420 = vld [vmem:[#allocation14 + $0x220] sm:$0xf]
          %v9421 = vld [vmem:[#allocation14 + $0x224] sm:$0xf]
          %v9422 = vld [vmem:[#allocation14 + $0x228] sm:$0xf]
          %v9423 = vld [vmem:[#allocation14 + $0x22c] sm:$0xf]
          %v9424 = vld [vmem:[#allocation14 + $0x230] sm:$0xf]
          %v9425 = vld [vmem:[#allocation14 + $0x234] sm:$0xf]
          %v9426 = vld [vmem:[#allocation14 + $0x238] sm:$0xf]
          %v9427 = vld [vmem:[#allocation14 + $0x23c] sm:$0xf]
          %v9428 = vld [vmem:[#allocation14 + $0x240] sm:$0xf]
          %v9429 = vld [vmem:[#allocation14 + $0x244] sm:$0xf]
          %v9430 = vld [vmem:[#allocation14 + $0x248] sm:$0xf]
          %v9431 = vld [vmem:[#allocation14 + $0x24c] sm:$0xf]
          %v9432 = vld [vmem:[#allocation14 + $0x250] sm:$0xf]
          %v9433 = vld [vmem:[#allocation14 + $0x254] sm:$0xf]
          %v9434 = vld [vmem:[#allocation14 + $0x258] sm:$0xf]
          %v9435 = vld [vmem:[#allocation14 + $0x25c] sm:$0xf]
          %v9436 = vld [vmem:[#allocation14 + $0x260] sm:$0xf]
          %v9437 = vld [vmem:[#allocation14 + $0x264] sm:$0xf]
          %v9438 = vld [vmem:[#allocation14 + $0x268] sm:$0xf]
          %v9439 = vld [vmem:[#allocation14 + $0x26c] sm:$0xf]
          %v9440 = vld [vmem:[#allocation14 + $0x270] sm:$0xf]
          %v9441 = vld [vmem:[#allocation14 + $0x274] sm:$0xf]
          %v9442 = vld [vmem:[#allocation14 + $0x278] sm:$0xf]
          %v9443 = vld [vmem:[#allocation14 + $0x27c] sm:$0xf]
          %v9444 = vld [vmem:[#allocation14 + $0x280] sm:$0xf]
          %v9445 = vld [vmem:[#allocation14 + $0x284] sm:$0xf]
          %v9446 = vld [vmem:[#allocation14 + $0x288] sm:$0xf]
          %v9447 = vld [vmem:[#allocation14 + $0x28c] sm:$0xf]
          %v9448 = vld [vmem:[#allocation14 + $0x290] sm:$0xf]
          %v9449 = vld [vmem:[#allocation14 + $0x294] sm:$0xf]
          %v9450 = vld [vmem:[#allocation14 + $0x298] sm:$0xf]
          %v9451 = vld [vmem:[#allocation14 + $0x29c] sm:$0xf]
          %v9452 = vld [vmem:[#allocation14 + $0x2a0] sm:$0xf]
          %v9453 = vld [vmem:[#allocation14 + $0x2a4] sm:$0xf]
          %v9454 = vld [vmem:[#allocation14 + $0x2a8] sm:$0xf]
          %v9455 = vld [vmem:[#allocation14 + $0x2ac] sm:$0xf]
          %v9456 = vld [vmem:[#allocation14 + $0x2b0] sm:$0xf]
          %v9457 = vld [vmem:[#allocation14 + $0x2b4] sm:$0xf]
          %v9458 = vld [vmem:[#allocation14 + $0x2b8] sm:$0xf]
          %v9459 = vld [vmem:[#allocation14 + $0x2bc] sm:$0xf]
          %v9460 = vld [vmem:[#allocation14 + $0x2c0] sm:$0xf]
          %v9461 = vld [vmem:[#allocation14 + $0x2c4] sm:$0xf]
          %v9462 = vld [vmem:[#allocation14 + $0x2c8] sm:$0xf]
          %v9463 = vld [vmem:[#allocation14 + $0x2cc] sm:$0xf]
          %v9464 = vld [vmem:[#allocation14 + $0x2d0] sm:$0xf]
          %v9465 = vld [vmem:[#allocation14 + $0x2d4] sm:$0xf]
          %v9466 = vld [vmem:[#allocation14 + $0x2d8] sm:$0xf]
          %v9467 = vld [vmem:[#allocation14 + $0x2dc] sm:$0xf]
          %v9468 = vld [vmem:[#allocation14 + $0x2e0] sm:$0xf]
          %v9469 = vld [vmem:[#allocation14 + $0x2e4] sm:$0xf]
          %v9470 = vld [vmem:[#allocation14 + $0x2e8] sm:$0xf]
          %v9471 = vld [vmem:[#allocation14 + $0x2ec] sm:$0xf]
          %v9472 = vld [vmem:[#allocation14 + $0x2f0] sm:$0xf]
          %v9473 = vld [vmem:[#allocation14 + $0x2f4] sm:$0xf]
          %v9474 = vld [vmem:[#allocation14 + $0x2f8] sm:$0xf]
          %v9475 = vld [vmem:[#allocation14 + $0x2fc] sm:$0xf]
          %v9476 = vld [vmem:[#allocation14 + $0x300] sm:$0xf]
          %v9477 = vld [vmem:[#allocation14 + $0x304] sm:$0xf]
          %v9478 = vld [vmem:[#allocation14 + $0x308] sm:$0xf]
          %v9479 = vld [vmem:[#allocation14 + $0x30c] sm:$0xf]
          %v9480 = vld [vmem:[#allocation14 + $0x310] sm:$0xf]
          %v9481 = vld [vmem:[#allocation14 + $0x314] sm:$0xf]
          %v9482 = vld [vmem:[#allocation14 + $0x318] sm:$0xf]
          %v9483 = vld [vmem:[#allocation14 + $0x31c] sm:$0xf]
          %v9484 = vld [vmem:[#allocation14 + $0x320] sm:$0xf]
          %v9485 = vld [vmem:[#allocation14 + $0x324] sm:$0xf]
          %v9486 = vld [vmem:[#allocation14 + $0x328] sm:$0xf]
          %v9487 = vld [vmem:[#allocation14 + $0x32c] sm:$0xf]
          %v9488 = vld [vmem:[#allocation14 + $0x330] sm:$0xf]
          %v9489 = vld [vmem:[#allocation14 + $0x334] sm:$0xf]
          %v9490 = vld [vmem:[#allocation14 + $0x338] sm:$0xf]
          %v9491 = vld [vmem:[#allocation14 + $0x33c] sm:$0xf]
          %v9492 = vld [vmem:[#allocation15] sm:$0x1]
          %v9494 = vlaneseq
          %v9495 = vshrl.u32 %v9494, 7
          %v9496 = vsub.s32 0, %v9495
          %v9497 = vrot.slane %v9492, %v9496
          %v9707 = vunpack.c.l.b16 %v9284
          %v9708 = vunpack.c.l.b16 %v9285
          %v9709 = vunpack.c.l.b16 %v9286
          %v9710 = vunpack.c.l.b16 %v9287
          %v9711 = vunpack.c.l.b16 %v9288
          %v9712 = vunpack.c.l.b16 %v9289
          %v9713 = vunpack.c.l.b16 %v9290
          %v9714 = vunpack.c.l.b16 %v9291
          %v9715 = vunpack.c.l.b16 %v9292
          %v9716 = vunpack.c.l.b16 %v9293
          %v9717 = vunpack.c.l.b16 %v9294
          %v9718 = vunpack.c.l.b16 %v9295
          %v9719 = vunpack.c.l.b16 %v9296
          %v9720 = vunpack.c.l.b16 %v9297
          %v9721 = vunpack.c.l.b16 %v9298
          %v9722 = vunpack.c.l.b16 %v9299
          %v9723 = vunpack.c.l.b16 %v9300
          %v9724 = vunpack.c.l.b16 %v9301
          %v9725 = vunpack.c.l.b16 %v9302
          %v9726 = vunpack.c.l.b16 %v9303
          %v9727 = vunpack.c.l.b16 %v9304
          %v9728 = vunpack.c.l.b16 %v9305
          %v9729 = vunpack.c.l.b16 %v9306
          %v9730 = vunpack.c.l.b16 %v9307
          %v9731 = vunpack.c.l.b16 %v9308
          %v9732 = vunpack.c.l.b16 %v9309
          %v9733 = vunpack.c.l.b16 %v9310
          %v9734 = vunpack.c.l.b16 %v9311
          %v9735 = vunpack.c.l.b16 %v9312
          %v9736 = vunpack.c.l.b16 %v9313
          %v9737 = vunpack.c.l.b16 %v9314
          %v9738 = vunpack.c.l.b16 %v9315
          %v9739 = vunpack.c.l.b16 %v9316
          %v9740 = vunpack.c.l.b16 %v9317
          %v9741 = vunpack.c.l.b16 %v9318
          %v9742 = vunpack.c.l.b16 %v9319
          %v9743 = vunpack.c.l.b16 %v9320
          %v9744 = vunpack.c.l.b16 %v9321
          %v9745 = vunpack.c.l.b16 %v9322
          %v9746 = vunpack.c.l.b16 %v9323
          %v9747 = vunpack.c.l.b16 %v9324
          %v9748 = vunpack.c.l.b16 %v9325
          %v9749 = vunpack.c.l.b16 %v9326
          %v9750 = vunpack.c.l.b16 %v9327
          %v9751 = vunpack.c.l.b16 %v9328
          %v9752 = vunpack.c.l.b16 %v9329
          %v9753 = vunpack.c.l.b16 %v9330
          %v9754 = vunpack.c.l.b16 %v9331
          %v9755 = vunpack.c.l.b16 %v9332
          %v9756 = vunpack.c.l.b16 %v9333
          %v9757 = vunpack.c.l.b16 %v9334
          %v9758 = vunpack.c.l.b16 %v9335
          %v9759 = vunpack.c.l.b16 %v9336
          %v9760 = vunpack.c.l.b16 %v9337
          %v9761 = vunpack.c.l.b16 %v9338
          %v9762 = vunpack.c.l.b16 %v9339
          %v9763 = vunpack.c.l.b16 %v9340
          %v9764 = vunpack.c.l.b16 %v9341
          %v9765 = vunpack.c.l.b16 %v9342
          %v9766 = vunpack.c.l.b16 %v9343
          %v9767 = vunpack.c.l.b16 %v9344
          %v9768 = vunpack.c.l.b16 %v9345
          %v9769 = vunpack.c.l.b16 %v9346
          %v9770 = vunpack.c.l.b16 %v9347
          %v9771 = vunpack.c.l.b16 %v9348
          %v9772 = vunpack.c.l.b16 %v9349
          %v9773 = vunpack.c.l.b16 %v9350
          %v9774 = vunpack.c.l.b16 %v9351
          %v9775 = vunpack.c.l.b16 %v9352
          %v9776 = vunpack.c.l.b16 %v9353
          %v9777 = vunpack.c.l.b16 %v9354
          %v9778 = vunpack.c.l.b16 %v9355
          %v9779 = vunpack.c.l.b16 %v9356
          %v9780 = vunpack.c.l.b16 %v9357
          %v9781 = vunpack.c.l.b16 %v9358
          %v9782 = vunpack.c.l.b16 %v9359
          %v9783 = vunpack.c.l.b16 %v9360
          %v9784 = vunpack.c.l.b16 %v9361
          %v9785 = vunpack.c.l.b16 %v9362
          %v9786 = vunpack.c.l.b16 %v9363
          %v9787 = vunpack.c.l.b16 %v9364
          %v9788 = vunpack.c.l.b16 %v9365
          %v9789 = vunpack.c.l.b16 %v9366
          %v9790 = vunpack.c.l.b16 %v9367
          %v9791 = vunpack.c.l.b16 %v9368
          %v9792 = vunpack.c.l.b16 %v9369
          %v9793 = vunpack.c.l.b16 %v9370
          %v9794 = vunpack.c.l.b16 %v9371
          %v9795 = vunpack.c.l.b16 %v9372
          %v9796 = vunpack.c.l.b16 %v9373
          %v9797 = vunpack.c.l.b16 %v9374
          %v9798 = vunpack.c.l.b16 %v9375
          %v9799 = vunpack.c.l.b16 %v9376
          %v9800 = vunpack.c.l.b16 %v9377
          %v9801 = vunpack.c.l.b16 %v9378
          %v9802 = vunpack.c.l.b16 %v9379
          %v9803 = vunpack.c.l.b16 %v9380
          %v9804 = vunpack.c.l.b16 %v9381
          %v9805 = vunpack.c.l.b16 %v9382
          %v9806 = vunpack.c.l.b16 %v9383
          %v9807 = vunpack.c.l.b16 %v9384
          %v9808 = vunpack.c.l.b16 %v9385
          %v9809 = vunpack.c.l.b16 %v9386
          %v9810 = vunpack.c.l.b16 %v9387
          %v9811 = vunpack.c.l.b16 %v9388
          %v9812 = vunpack.c.l.b16 %v9389
          %v9813 = vunpack.c.l.b16 %v9390
          %v9814 = vunpack.c.l.b16 %v9391
          %v9815 = vunpack.c.l.b16 %v9392
          %v9816 = vunpack.c.l.b16 %v9393
          %v9817 = vunpack.c.l.b16 %v9394
          %v9818 = vunpack.c.l.b16 %v9395
          %v9819 = vunpack.c.l.b16 %v9396
          %v9820 = vunpack.c.l.b16 %v9397
          %v9821 = vunpack.c.l.b16 %v9398
          %v9822 = vunpack.c.l.b16 %v9399
          %v9823 = vunpack.c.l.b16 %v9400
          %v9824 = vunpack.c.l.b16 %v9401
          %v9825 = vunpack.c.l.b16 %v9402
          %v9826 = vunpack.c.l.b16 %v9403
          %v9827 = vunpack.c.l.b16 %v9404
          %v9828 = vunpack.c.l.b16 %v9405
          %v9829 = vunpack.c.l.b16 %v9406
          %v9830 = vunpack.c.l.b16 %v9407
          %v9831 = vunpack.c.l.b16 %v9408
          %v9832 = vunpack.c.l.b16 %v9409
          %v9833 = vunpack.c.l.b16 %v9410
          %v9834 = vunpack.c.l.b16 %v9411
          %v9835 = vunpack.c.l.b16 %v9412
          %v9836 = vunpack.c.l.b16 %v9413
          %v9837 = vunpack.c.l.b16 %v9414
          %v9838 = vunpack.c.l.b16 %v9415
          %v9839 = vunpack.c.l.b16 %v9416
          %v9840 = vunpack.c.l.b16 %v9417
          %v9841 = vunpack.c.l.b16 %v9418
          %v9842 = vunpack.c.l.b16 %v9419
          %v9843 = vunpack.c.l.b16 %v9420
          %v9844 = vunpack.c.l.b16 %v9421
          %v9845 = vunpack.c.l.b16 %v9422
          %v9846 = vunpack.c.l.b16 %v9423
          %v9847 = vunpack.c.l.b16 %v9424
          %v9848 = vunpack.c.l.b16 %v9425
          %v9849 = vunpack.c.l.b16 %v9426
          %v9850 = vunpack.c.l.b16 %v9427
          %v9851 = vunpack.c.l.b16 %v9428
          %v9852 = vunpack.c.l.b16 %v9429
          %v9853 = vunpack.c.l.b16 %v9430
          %v9854 = vunpack.c.l.b16 %v9431
          %v9855 = vunpack.c.l.b16 %v9432
          %v9856 = vunpack.c.l.b16 %v9433
          %v9857 = vunpack.c.l.b16 %v9434
          %v9858 = vunpack.c.l.b16 %v9435
          %v9859 = vunpack.c.l.b16 %v9436
          %v9860 = vunpack.c.l.b16 %v9437
          %v9861 = vunpack.c.l.b16 %v9438
          %v9862 = vunpack.c.l.b16 %v9439
          %v9863 = vunpack.c.l.b16 %v9440
          %v9864 = vunpack.c.l.b16 %v9441
          %v9865 = vunpack.c.l.b16 %v9442
          %v9866 = vunpack.c.l.b16 %v9443
          %v9867 = vunpack.c.l.b16 %v9444
          %v9868 = vunpack.c.l.b16 %v9445
          %v9869 = vunpack.c.l.b16 %v9446
          %v9870 = vunpack.c.l.b16 %v9447
          %v9871 = vunpack.c.l.b16 %v9448
          %v9872 = vunpack.c.l.b16 %v9449
          %v9873 = vunpack.c.l.b16 %v9450
          %v9874 = vunpack.c.l.b16 %v9451
          %v9875 = vunpack.c.l.b16 %v9452
          %v9876 = vunpack.c.l.b16 %v9453
          %v9877 = vunpack.c.l.b16 %v9454
          %v9878 = vunpack.c.l.b16 %v9455
          %v9879 = vunpack.c.l.b16 %v9456
          %v9880 = vunpack.c.l.b16 %v9457
          %v9881 = vunpack.c.l.b16 %v9458
          %v9882 = vunpack.c.l.b16 %v9459
          %v9883 = vunpack.c.l.b16 %v9460
          %v9884 = vunpack.c.l.b16 %v9461
          %v9885 = vunpack.c.l.b16 %v9462
          %v9886 = vunpack.c.l.b16 %v9463
          %v9887 = vunpack.c.l.b16 %v9464
          %v9888 = vunpack.c.l.b16 %v9465
          %v9889 = vunpack.c.l.b16 %v9466
          %v9890 = vunpack.c.l.b16 %v9467
          %v9891 = vunpack.c.l.b16 %v9468
          %v9892 = vunpack.c.l.b16 %v9469
          %v9893 = vunpack.c.l.b16 %v9470
          %v9894 = vunpack.c.l.b16 %v9471
          %v9895 = vunpack.c.l.b16 %v9472
          %v9896 = vunpack.c.l.b16 %v9473
          %v9897 = vunpack.c.l.b16 %v9474
          %v9898 = vunpack.c.l.b16 %v9475
          %v9899 = vunpack.c.l.b16 %v9476
          %v9900 = vunpack.c.l.b16 %v9477
          %v9901 = vunpack.c.l.b16 %v9478
          %v9902 = vunpack.c.l.b16 %v9479
          %v9903 = vunpack.c.l.b16 %v9480
          %v9904 = vunpack.c.l.b16 %v9481
          %v9905 = vunpack.c.l.b16 %v9482
          %v9906 = vunpack.c.l.b16 %v9483
          %v9907 = vunpack.c.l.b16 %v9484
          %v9908 = vunpack.c.l.b16 %v9485
          %v9909 = vunpack.c.l.b16 %v9486
          %v9910 = vunpack.c.l.b16 %v9487
          %v9911 = vunpack.c.l.b16 %v9488
          %v9912 = vunpack.c.l.b16 %v9489
          %v9913 = vunpack.c.l.b16 %v9490
          %v9914 = vunpack.c.l.b16 %v9491
          %v9915 = vpack.c.b16 %v9708, %v9707
          %v9916 = vpack.c.b16 %v9710, %v9709
          %v9917 = vpack.c.b16 %v9712, %v9711
          %v9918 = vpack.c.b16 %v9714, %v9713
          %v9919 = vpack.c.b16 %v9716, %v9715
          %v9920 = vpack.c.b16 %v9718, %v9717
          %v9921 = vpack.c.b16 %v9720, %v9719
          %v9922 = vpack.c.b16 %v9722, %v9721
          %v9923 = vpack.c.b16 %v9724, %v9723
          %v9924 = vpack.c.b16 %v9726, %v9725
          %v9925 = vpack.c.b16 %v9728, %v9727
          %v9926 = vpack.c.b16 %v9730, %v9729
          %v9927 = vpack.c.b16 %v9732, %v9731
          %v9928 = vpack.c.b16 %v9734, %v9733
          %v9929 = vpack.c.b16 %v9736, %v9735
          %v9930 = vpack.c.b16 %v9738, %v9737
          %v9931 = vpack.c.b16 %v9740, %v9739
          %v9932 = vpack.c.b16 %v9742, %v9741
          %v9933 = vpack.c.b16 %v9744, %v9743
          %v9934 = vpack.c.b16 %v9746, %v9745
          %v9935 = vpack.c.b16 %v9748, %v9747
          %v9936 = vpack.c.b16 %v9750, %v9749
          %v9937 = vpack.c.b16 %v9752, %v9751
          %v9938 = vpack.c.b16 %v9754, %v9753
          %v9939 = vpack.c.b16 %v9756, %v9755
          %v9940 = vpack.c.b16 %v9758, %v9757
          %v9941 = vpack.c.b16 %v9760, %v9759
          %v9942 = vpack.c.b16 %v9762, %v9761
          %v9943 = vpack.c.b16 %v9764, %v9763
          %v9944 = vpack.c.b16 %v9766, %v9765
          %v9945 = vpack.c.b16 %v9768, %v9767
          %v9946 = vpack.c.b16 %v9770, %v9769
          %v9947 = vpack.c.b16 %v9772, %v9771
          %v9948 = vpack.c.b16 %v9774, %v9773
          %v9949 = vpack.c.b16 %v9776, %v9775
          %v9950 = vpack.c.b16 %v9778, %v9777
          %v9951 = vpack.c.b16 %v9780, %v9779
          %v9952 = vpack.c.b16 %v9782, %v9781
          %v9953 = vpack.c.b16 %v9784, %v9783
          %v9954 = vpack.c.b16 %v9786, %v9785
          %v9955 = vpack.c.b16 %v9788, %v9787
          %v9956 = vpack.c.b16 %v9790, %v9789
          %v9957 = vpack.c.b16 %v9792, %v9791
          %v9958 = vpack.c.b16 %v9794, %v9793
          %v9959 = vpack.c.b16 %v9796, %v9795
          %v9960 = vpack.c.b16 %v9798, %v9797
          %v9961 = vpack.c.b16 %v9800, %v9799
          %v9962 = vpack.c.b16 %v9802, %v9801
          %v9963 = vpack.c.b16 %v9804, %v9803
          %v9964 = vpack.c.b16 %v9806, %v9805
          %v9965 = vpack.c.b16 %v9808, %v9807
          %v9966 = vpack.c.b16 %v9810, %v9809
          %v9967 = vpack.c.b16 %v9812, %v9811
          %v9968 = vpack.c.b16 %v9814, %v9813
          %v9969 = vpack.c.b16 %v9816, %v9815
          %v9970 = vpack.c.b16 %v9818, %v9817
          %v9971 = vpack.c.b16 %v9820, %v9819
          %v9972 = vpack.c.b16 %v9822, %v9821
          %v9973 = vpack.c.b16 %v9824, %v9823
          %v9974 = vpack.c.b16 %v9826, %v9825
          %v9975 = vpack.c.b16 %v9828, %v9827
          %v9976 = vpack.c.b16 %v9830, %v9829
          %v9977 = vpack.c.b16 %v9832, %v9831
          %v9978 = vpack.c.b16 %v9834, %v9833
          %v9979 = vpack.c.b16 %v9836, %v9835
          %v9980 = vpack.c.b16 %v9838, %v9837
          %v9981 = vpack.c.b16 %v9840, %v9839
          %v9982 = vpack.c.b16 %v9842, %v9841
          %v9983 = vpack.c.b16 %v9844, %v9843
          %v9984 = vpack.c.b16 %v9846, %v9845
          %v9985 = vpack.c.b16 %v9848, %v9847
          %v9986 = vpack.c.b16 %v9850, %v9849
          %v9987 = vpack.c.b16 %v9852, %v9851
          %v9988 = vpack.c.b16 %v9854, %v9853
          %v9989 = vpack.c.b16 %v9856, %v9855
          %v9990 = vpack.c.b16 %v9858, %v9857
          %v9991 = vpack.c.b16 %v9860, %v9859
          %v9992 = vpack.c.b16 %v9862, %v9861
          %v9993 = vpack.c.b16 %v9864, %v9863
          %v9994 = vpack.c.b16 %v9866, %v9865
          %v9995 = vpack.c.b16 %v9868, %v9867
          %v9996 = vpack.c.b16 %v9870, %v9869
          %v9997 = vpack.c.b16 %v9872, %v9871
          %v9998 = vpack.c.b16 %v9874, %v9873
          %v9999 = vpack.c.b16 %v9876, %v9875
          %v10000 = vpack.c.b16 %v9878, %v9877
          %v10001 = vpack.c.b16 %v9880, %v9879
          %v10002 = vpack.c.b16 %v9882, %v9881
          %v10003 = vpack.c.b16 %v9884, %v9883
          %v10004 = vpack.c.b16 %v9886, %v9885
          %v10005 = vpack.c.b16 %v9888, %v9887
          %v10006 = vpack.c.b16 %v9890, %v9889
          %v10007 = vpack.c.b16 %v9892, %v9891
          %v10008 = vpack.c.b16 %v9894, %v9893
          %v10009 = vpack.c.b16 %v9896, %v9895
          %v10010 = vpack.c.b16 %v9898, %v9897
          %v10011 = vpack.c.b16 %v9900, %v9899
          %v10012 = vpack.c.b16 %v9902, %v9901
          %v10013 = vpack.c.b16 %v9904, %v9903
          %v10014 = vpack.c.b16 %v9906, %v9905
          %v10015 = vpack.c.b16 %v9908, %v9907
          %v10016 = vpack.c.b16 %v9910, %v9909
          %v10017 = vpack.c.b16 %v9912, %v9911
          %v10018 = vpack.c.b16 %v9914, %v9913
          %10123 = vmatprep.subr.bf16.mxu0 0
          %10124 = vmatpush1.bf16.msra.mxu0 %v9922
          %10125 = vmatprep.subr.bf16.mxu0 0
          %10126 = vmatpush1.bf16.msra.mxu0 %v9921
          %10127 = vmatprep.subr.bf16.mxu0 0
          %10128 = vmatpush1.bf16.msra.mxu0 %v9920
          %10129 = vmatprep.subr.bf16.mxu0 0
          %10130 = vmatpush1.bf16.msra.mxu0 %v9919
          %10131 = vmatprep.subr.bf16.mxu0 0
          %10132 = vmatpush1.bf16.msra.mxu0 %v9918
          %10133 = vmatprep.subr.bf16.mxu0 0
          %10134 = vmatpush1.bf16.msra.mxu0 %v9917
          %10135 = vmatprep.subr.bf16.mxu0 0
          %10136 = vmatpush1.bf16.msra.mxu0 %v9916
          %10137 = vmatprep.subr.bf16.mxu0 0
          %10138 = vmatpush1.bf16.msra.mxu0 %v9915
          %10139 = vmatprep.subr.bf16.mxu0 0
          %10140 = vmatpush2.bf16.msra.mxu0 %v9930
          %10141 = vmatprep.subr.bf16.mxu0 0
          %10142 = vmatpush2.bf16.msra.mxu0 %v9929
          %10143 = vmatprep.subr.bf16.mxu0 0
          %10144 = vmatpush2.bf16.msra.mxu0 %v9928
          %10145 = vmatprep.subr.bf16.mxu0 0
          %10146 = vmatpush2.bf16.msra.mxu0 %v9927
          %10147 = vmatprep.subr.bf16.mxu0 0
          %10148 = vmatpush2.bf16.msra.mxu0 %v9926
          %10149 = vmatprep.subr.bf16.mxu0 0
          %10150 = vmatpush2.bf16.msra.mxu0 %v9925
          %10151 = vmatprep.subr.bf16.mxu0 0
          %10152 = vmatpush2.bf16.msra.mxu0 %v9924
          %10153 = vmatprep.subr.bf16.mxu0 0
          %10154 = vmatpush2.bf16.msra.mxu0 %v9923
          %10155 = vmatprep.mubr.bf16.mxu0 %v9272
          %10156 = vmatmul.mubr.bf16.gmra.mxu0 %v9271
          %v10157 = vpop.f32.mrf.mxu0
          %v10158 = vadd.f32 %v9497, %v10157
          %v10159 = vpop.f32.mrf.mxu0
          %v10160 = vpop.f32.mrf.mxu0
          %v10161 = vpop.f32.mrf.mxu0
          %10162 = vdwg.mxu0
          %10163 = vmatprep.subr.bf16.mxu0 0
          %10164 = vmatpush1.bf16.msra.mxu0 %v9938
          %10165 = vmatprep.subr.bf16.mxu0 0
          %10166 = vmatpush1.bf16.msra.mxu0 %v9937
          %10167 = vmatprep.subr.bf16.mxu0 0
          %10168 = vmatpush1.bf16.msra.mxu0 %v9936
          %10169 = vmatprep.subr.bf16.mxu0 0
          %10170 = vmatpush1.bf16.msra.mxu0 %v9935
          %10171 = vmatprep.subr.bf16.mxu0 0
          %10172 = vmatpush1.bf16.msra.mxu0 %v9934
          %10173 = vmatprep.subr.bf16.mxu0 0
          %10174 = vmatpush1.bf16.msra.mxu0 %v9933
          %10175 = vmatprep.subr.bf16.mxu0 0
          %10176 = vmatpush1.bf16.msra.mxu0 %v9932
          %10177 = vmatprep.subr.bf16.mxu0 0
          %10178 = vmatpush1.bf16.msra.mxu0 %v9931
          %10179 = vmatprep.subr.bf16.mxu0 0
          %10180 = vmatpush2.bf16.msra.mxu0 %v9946
          %10181 = vmatprep.subr.bf16.mxu0 0
          %10182 = vmatpush2.bf16.msra.mxu0 %v9945
          %10183 = vmatprep.subr.bf16.mxu0 0
          %10184 = vmatpush2.bf16.msra.mxu0 %v9944
          %10185 = vmatprep.subr.bf16.mxu0 0
          %10186 = vmatpush2.bf16.msra.mxu0 %v9943
          %10187 = vmatprep.subr.bf16.mxu0 0
          %10188 = vmatpush2.bf16.msra.mxu0 %v9942
          %10189 = vmatprep.subr.bf16.mxu0 0
          %10190 = vmatpush2.bf16.msra.mxu0 %v9941
          %10191 = vmatprep.subr.bf16.mxu0 0
          %10192 = vmatpush2.bf16.msra.mxu0 %v9940
          %10193 = vmatprep.subr.bf16.mxu0 0
          %10194 = vmatpush2.bf16.msra.mxu0 %v9939
          %10195 = vmatprep.mubr.bf16.mxu0 %v9274
          %10196 = vmatmul.mubr.bf16.gmra.mxu0 %v9273
          %v10197 = vpop.f32.mrf.mxu0
          %v10198 = vadd.f32 %v10158, %v10197
          %v10199 = vpop.f32.mrf.mxu0
          %v10200 = vpop.f32.mrf.mxu0
          %v10201 = vpop.f32.mrf.mxu0
          %10202 = vdwg.mxu0
          %10203 = vmatprep.subr.bf16.mxu0 0
          %10204 = vmatpush1.bf16.msra.mxu0 %v9954
          %10205 = vmatprep.subr.bf16.mxu0 0
          %10206 = vmatpush1.bf16.msra.mxu0 %v9953
          %10207 = vmatprep.subr.bf16.mxu0 0
          %10208 = vmatpush1.bf16.msra.mxu0 %v9952
          %10209 = vmatprep.subr.bf16.mxu0 0
          %10210 = vmatpush1.bf16.msra.mxu0 %v9951
          %10211 = vmatprep.subr.bf16.mxu0 0
          %10212 = vmatpush1.bf16.msra.mxu0 %v9950
          %10213 = vmatprep.subr.bf16.mxu0 0
          %10214 = vmatpush1.bf16.msra.mxu0 %v9949
          %10215 = vmatprep.subr.bf16.mxu0 0
          %10216 = vmatpush1.bf16.msra.mxu0 %v9948
          %10217 = vmatprep.subr.bf16.mxu0 0
          %10218 = vmatpush1.bf16.msra.mxu0 %v9947
          %10219 = vmatprep.subr.bf16.mxu0 0
          %10220 = vmatpush2.bf16.msra.mxu0 %v9962
          %10221 = vmatprep.subr.bf16.mxu0 0
          %10222 = vmatpush2.bf16.msra.mxu0 %v9961
          %10223 = vmatprep.subr.bf16.mxu0 0
          %10224 = vmatpush2.bf16.msra.mxu0 %v9960
          %10225 = vmatprep.subr.bf16.mxu0 0
          %10226 = vmatpush2.bf16.msra.mxu0 %v9959
          %10227 = vmatprep.subr.bf16.mxu0 0
          %10228 = vmatpush2.bf16.msra.mxu0 %v9958
          %10229 = vmatprep.subr.bf16.mxu0 0
          %10230 = vmatpush2.bf16.msra.mxu0 %v9957
          %10231 = vmatprep.subr.bf16.mxu0 0
          %10232 = vmatpush2.bf16.msra.mxu0 %v9956
          %10233 = vmatprep.subr.bf16.mxu0 0
          %10234 = vmatpush2.bf16.msra.mxu0 %v9955
          %10235 = vmatprep.mubr.bf16.mxu0 %v9276
          %10236 = vmatmul.mubr.bf16.gmra.mxu0 %v9275
          %v10237 = vpop.f32.mrf.mxu0
          %v10238 = vadd.f32 %v10198, %v10237
          %v10239 = vpop.f32.mrf.mxu0
          %v10240 = vpop.f32.mrf.mxu0
          %v10241 = vpop.f32.mrf.mxu0
          %10242 = vdwg.mxu0
          %10243 = vmatprep.subr.bf16.mxu0 0
          %10244 = vmatpush1.bf16.msra.mxu0 %v9970
          %10245 = vmatprep.subr.bf16.mxu0 0
          %10246 = vmatpush1.bf16.msra.mxu0 %v9969
          %10247 = vmatprep.subr.bf16.mxu0 0
          %10248 = vmatpush1.bf16.msra.mxu0 %v9968
          %10249 = vmatprep.subr.bf16.mxu0 0
          %10250 = vmatpush1.bf16.msra.mxu0 %v9967
          %10251 = vmatprep.subr.bf16.mxu0 0
          %10252 = vmatpush1.bf16.msra.mxu0 %v9966
          %10253 = vmatprep.subr.bf16.mxu0 0
          %10254 = vmatpush1.bf16.msra.mxu0 %v9965
          %10255 = vmatprep.subr.bf16.mxu0 0
          %10256 = vmatpush1.bf16.msra.mxu0 %v9964
          %10257 = vmatprep.subr.bf16.mxu0 0
          %10258 = vmatpush1.bf16.msra.mxu0 %v9963
          %10259 = vmatprep.subr.bf16.mxu0 0
          %10260 = vmatpush2.bf16.msra.mxu0 %v9978
          %10261 = vmatprep.subr.bf16.mxu0 0
          %10262 = vmatpush2.bf16.msra.mxu0 %v9977
          %10263 = vmatprep.subr.bf16.mxu0 0
          %10264 = vmatpush2.bf16.msra.mxu0 %v9976
          %10265 = vmatprep.subr.bf16.mxu0 0
          %10266 = vmatpush2.bf16.msra.mxu0 %v9975
          %10267 = vmatprep.subr.bf16.mxu0 0
          %10268 = vmatpush2.bf16.msra.mxu0 %v9974
          %10269 = vmatprep.subr.bf16.mxu0 0
          %10270 = vmatpush2.bf16.msra.mxu0 %v9973
          %10271 = vmatprep.subr.bf16.mxu0 0
          %10272 = vmatpush2.bf16.msra.mxu0 %v9972
          %10273 = vmatprep.subr.bf16.mxu0 0
          %10274 = vmatpush2.bf16.msra.mxu0 %v9971
          %10275 = vmatprep.mubr.bf16.mxu0 %v9278
          %10276 = vmatmul.mubr.bf16.gmra.mxu0 %v9277
          %v10277 = vpop.f32.mrf.mxu0
          %v10278 = vadd.f32 %v10238, %v10277
          %v10279 = vpop.f32.mrf.mxu0
          %v10280 = vpop.f32.mrf.mxu0
          %v10281 = vpop.f32.mrf.mxu0
          %10282 = vdwg.mxu0
          %10283 = vmatprep.subr.bf16.mxu0 0
          %10284 = vmatpush1.bf16.msra.mxu0 %v9986
          %10285 = vmatprep.subr.bf16.mxu0 0
          %10286 = vmatpush1.bf16.msra.mxu0 %v9985
          %10287 = vmatprep.subr.bf16.mxu0 0
          %10288 = vmatpush1.bf16.msra.mxu0 %v9984
          %10289 = vmatprep.subr.bf16.mxu0 0
          %10290 = vmatpush1.bf16.msra.mxu0 %v9983
          %10291 = vmatprep.subr.bf16.mxu0 0
          %10292 = vmatpush1.bf16.msra.mxu0 %v9982
          %10293 = vmatprep.subr.bf16.mxu0 0
          %10294 = vmatpush1.bf16.msra.mxu0 %v9981
          %10295 = vmatprep.subr.bf16.mxu0 0
          %10296 = vmatpush1.bf16.msra.mxu0 %v9980
          %10297 = vmatprep.subr.bf16.mxu0 0
          %10298 = vmatpush1.bf16.msra.mxu0 %v9979
          %10299 = vmatprep.subr.bf16.mxu0 0
          %10300 = vmatpush2.bf16.msra.mxu0 %v9994
          %10301 = vmatprep.subr.bf16.mxu0 0
          %10302 = vmatpush2.bf16.msra.mxu0 %v9993
          %10303 = vmatprep.subr.bf16.mxu0 0
          %10304 = vmatpush2.bf16.msra.mxu0 %v9992
          %10305 = vmatprep.subr.bf16.mxu0 0
          %10306 = vmatpush2.bf16.msra.mxu0 %v9991
          %10307 = vmatprep.subr.bf16.mxu0 0
          %10308 = vmatpush2.bf16.msra.mxu0 %v9990
          %10309 = vmatprep.subr.bf16.mxu0 0
          %10310 = vmatpush2.bf16.msra.mxu0 %v9989
          %10311 = vmatprep.subr.bf16.mxu0 0
          %10312 = vmatpush2.bf16.msra.mxu0 %v9988
          %10313 = vmatprep.subr.bf16.mxu0 0
          %10314 = vmatpush2.bf16.msra.mxu0 %v9987
          %10315 = vmatprep.mubr.bf16.mxu0 %v9280
          %10316 = vmatmul.mubr.bf16.gmra.mxu0 %v9279
          %v10317 = vpop.f32.mrf.mxu0
          %v10318 = vadd.f32 %v10278, %v10317
          %v10319 = vpop.f32.mrf.mxu0
          %v10320 = vpop.f32.mrf.mxu0
          %v10321 = vpop.f32.mrf.mxu0
          %10322 = vdwg.mxu0
          %10323 = vmatprep.subr.bf16.mxu0 0
          %10324 = vmatpush1.bf16.msra.mxu0 %v10002
          %10325 = vmatprep.subr.bf16.mxu0 0
          %10326 = vmatpush1.bf16.msra.mxu0 %v10001
          %10327 = vmatprep.subr.bf16.mxu0 0
          %10328 = vmatpush1.bf16.msra.mxu0 %v10000
          %10329 = vmatprep.subr.bf16.mxu0 0
          %10330 = vmatpush1.bf16.msra.mxu0 %v9999
          %10331 = vmatprep.subr.bf16.mxu0 0
          %10332 = vmatpush1.bf16.msra.mxu0 %v9998
          %10333 = vmatprep.subr.bf16.mxu0 0
          %10334 = vmatpush1.bf16.msra.mxu0 %v9997
          %10335 = vmatprep.subr.bf16.mxu0 0
          %10336 = vmatpush1.bf16.msra.mxu0 %v9996
          %10337 = vmatprep.subr.bf16.mxu0 0
          %10338 = vmatpush1.bf16.msra.mxu0 %v9995
          %10339 = vmatprep.subr.bf16.mxu0 0
          %10340 = vmatpush2.bf16.msra.mxu0 %v10010
          %10341 = vmatprep.subr.bf16.mxu0 0
          %10342 = vmatpush2.bf16.msra.mxu0 %v10009
          %10343 = vmatprep.subr.bf16.mxu0 0
          %10344 = vmatpush2.bf16.msra.mxu0 %v10008
          %10345 = vmatprep.subr.bf16.mxu0 0
          %10346 = vmatpush2.bf16.msra.mxu0 %v10007
          %10347 = vmatprep.subr.bf16.mxu0 0
          %10348 = vmatpush2.bf16.msra.mxu0 %v10006
          %10349 = vmatprep.subr.bf16.mxu0 0
          %10350 = vmatpush2.bf16.msra.mxu0 %v10005
          %10351 = vmatprep.subr.bf16.mxu0 0
          %10352 = vmatpush2.bf16.msra.mxu0 %v10004
          %10353 = vmatprep.subr.bf16.mxu0 0
          %10354 = vmatpush2.bf16.msra.mxu0 %v10003
          %10355 = vmatprep.mubr.bf16.mxu0 %v9282
          %10356 = vmatmul.mubr.bf16.gmra.mxu0 %v9281
          %v10357 = vpop.f32.mrf.mxu0
          %v10358 = vadd.f32 %v10318, %v10357
          %v10359 = vpop.f32.mrf.mxu0
          %v10360 = vpop.f32.mrf.mxu0
          %v10361 = vpop.f32.mrf.mxu0
          %10362 = vdwg.mxu0
          %10363 = vmatprep.subr.bf16.mxu0 0
          %10364 = vmatpush1.bf16.msra.mxu0 %v10018
          %10365 = vmatprep.subr.bf16.mxu0 0
          %10366 = vmatpush1.bf16.msra.mxu0 %v10017
          %10367 = vmatprep.subr.bf16.mxu0 0
          %10368 = vmatpush1.bf16.msra.mxu0 %v10016
          %10369 = vmatprep.subr.bf16.mxu0 0
          %10370 = vmatpush1.bf16.msra.mxu0 %v10015
          %10371 = vmatprep.subr.bf16.mxu0 0
          %10372 = vmatpush1.bf16.msra.mxu0 %v10014
          %10373 = vmatprep.subr.bf16.mxu0 0
          %10374 = vmatpush1.bf16.msra.mxu0 %v10013
          %10375 = vmatprep.subr.bf16.mxu0 0
          %10376 = vmatpush1.bf16.msra.mxu0 %v10012
          %10377 = vmatprep.subr.bf16.mxu0 0
          %10378 = vmatpush1.bf16.msra.mxu0 %v10011
          %10379 = vmatprep.subr.bf16.mxu0 0
          %10380 = vmatpush2.bf16.msra.mxu0 0
          %10381 = vmatprep.subr.bf16.mxu0 0
          %10382 = vmatpush2.bf16.msra.mxu0 0
          %10383 = vmatprep.subr.bf16.mxu0 0
          %10384 = vmatpush2.bf16.msra.mxu0 0
          %10385 = vmatprep.subr.bf16.mxu0 0
          %10386 = vmatpush2.bf16.msra.mxu0 0
          %10387 = vmatprep.subr.bf16.mxu0 0
          %10388 = vmatpush2.bf16.msra.mxu0 0
          %10389 = vmatprep.subr.bf16.mxu0 0
          %10390 = vmatpush2.bf16.msra.mxu0 0
          %10391 = vmatprep.subr.bf16.mxu0 0
          %10392 = vmatpush2.bf16.msra.mxu0 0
          %10393 = vmatprep.subr.bf16.mxu0 0
          %10394 = vmatpush2.bf16.msra.mxu0 0
          %10395 = vmatprep.mubr.bf16.mxu0 0
          %10396 = vmatmul.mubr.bf16.gmra.mxu0 %v9283
          %v10397 = vpop.f32.mrf.mxu0
          %v10398 = vadd.f32 %v10358, %v10397
          %v10399 = vpop.f32.mrf.mxu0
          %v10400 = vpop.f32.mrf.mxu0
          %v10401 = vpop.f32.mrf.mxu0
          %10402 = vdwg.mxu0
          %v10403 = vmax.f32 %v10398, 0.0
          %v10404 = vld [vmem:[%s12] sm:$0xff]
          %v10405 = vld [vmem:[%s12 + $0x8] sm:$0xff]
          %v10406 = vld [vmem:[%s12 + $0x10] sm:$0xff]
          %v10407 = vld [vmem:[%s12 + $0x18] sm:$0xff]
          %v10408 = vld [vmem:[%s12 + $0x20] sm:$0xff]
          %v10409 = vld [vmem:[%s12 + $0x28] sm:$0xff]
          %v10410 = vld [vmem:[%s12 + $0x30] sm:$0xff]
          %v10411 = vld [vmem:[%s12 + $0x38] sm:$0xff]
          %v10412 = vld [vmem:[%s12 + $0x40] sm:$0xff]
          %v10413 = vld [vmem:[%s12 + $0x48] sm:$0xff]
          %v10414 = vld [vmem:[%s12 + $0x50] sm:$0xff]
          %v10415 = vld [vmem:[%s12 + $0x58] sm:$0xff]
          %v10416 = vld [vmem:[%s12 + $0x60] sm:$0xff]
          %v10417 = vld [vmem:[%s12 + $0x68] sm:$0xff]
          %v10418 = vld [vmem:[%s12 + $0x70] sm:$0xff]
          %v10419 = vld [vmem:[%s12 + $0x78] sm:$0xff]
          %v10420 = vld [vmem:[#allocation17] sm:$0x1]
          %v10422 = vlaneseq
          %v10423 = vshrl.u32 %v10422, 7
          %v10424 = vsub.s32 0, %v10423
          %v10425 = vrot.slane %v10420, %v10424
          %10427 = vmatprep.subr.mxu0 0.0
          %10428 = vmatpush1.msra.mxu0 %v10419
          %10429 = vmatprep.subr.mxu0 0.0
          %10430 = vmatpush1.msra.mxu0 %v10418
          %10431 = vmatprep.subr.mxu0 0.0
          %10432 = vmatpush1.msra.mxu0 %v10417
          %10433 = vmatprep.subr.mxu0 0.0
          %10434 = vmatpush1.msra.mxu0 %v10416
          %10435 = vmatprep.subr.mxu0 0.0
          %10436 = vmatpush1.msra.mxu0 %v10415
          %10437 = vmatprep.subr.mxu0 0.0
          %10438 = vmatpush1.msra.mxu0 %v10414
          %10439 = vmatprep.subr.mxu0 0.0
          %10440 = vmatpush1.msra.mxu0 %v10413
          %10441 = vmatprep.subr.mxu0 0.0
          %10442 = vmatpush1.msra.mxu0 %v10412
          %10443 = vmatprep.subr.mxu0 0.0
          %10444 = vmatpush1.msra.mxu0 %v10411
          %10445 = vmatprep.subr.mxu0 0.0
          %10446 = vmatpush1.msra.mxu0 %v10410
          %10447 = vmatprep.subr.mxu0 0.0
          %10448 = vmatpush1.msra.mxu0 %v10409
          %10449 = vmatprep.subr.mxu0 0.0
          %10450 = vmatpush1.msra.mxu0 %v10408
          %10451 = vmatprep.subr.mxu0 0.0
          %10452 = vmatpush1.msra.mxu0 %v10407
          %10453 = vmatprep.subr.mxu0 0.0
          %10454 = vmatpush1.msra.mxu0 %v10406
          %10455 = vmatprep.subr.mxu0 0.0
          %10456 = vmatpush1.msra.mxu0 %v10405
          %10457 = vmatprep.subr.mxu0 0.0
          %10458 = vmatpush1.msra.mxu0 %v10404
          %10459 = vmatprep.subr.mxu0 0.0
          %10460 = vmatpush2.msra.mxu0 0.0
          %10461 = vmatprep.subr.mxu0 0.0
          %10462 = vmatpush2.msra.mxu0 0.0
          %10463 = vmatprep.subr.mxu0 0.0
          %10464 = vmatpush2.msra.mxu0 0.0
          %10465 = vmatprep.subr.mxu0 0.0
          %10466 = vmatpush2.msra.mxu0 0.0
          %10467 = vmatprep.subr.mxu0 0.0
          %10468 = vmatpush2.msra.mxu0 0.0
          %10469 = vmatprep.subr.mxu0 0.0
          %10470 = vmatpush2.msra.mxu0 0.0
          %10471 = vmatprep.subr.mxu0 0.0
          %10472 = vmatpush2.msra.mxu0 0.0
          %10473 = vmatprep.subr.mxu0 0.0
          %10474 = vmatpush2.msra.mxu0 0.0
          %10475 = vmatprep.subr.mxu0 0.0
          %10476 = vmatpush2.msra.mxu0 0.0
          %10477 = vmatprep.subr.mxu0 0.0
          %10478 = vmatpush2.msra.mxu0 0.0
          %10479 = vmatprep.subr.mxu0 0.0
          %10480 = vmatpush2.msra.mxu0 0.0
          %10481 = vmatprep.subr.mxu0 0.0
          %10482 = vmatpush2.msra.mxu0 0.0
          %10483 = vmatprep.subr.mxu0 0.0
          %10484 = vmatpush2.msra.mxu0 0.0
          %10485 = vmatprep.subr.mxu0 0.0
          %10486 = vmatpush2.msra.mxu0 0.0
          %10487 = vmatprep.subr.mxu0 0.0
          %10488 = vmatpush2.msra.mxu0 0.0
          %10489 = vmatprep.subr.mxu0 0.0
          %10490 = vmatpush2.msra.mxu0 0.0
          %10491 = vmatprep.mubr.f32.mxu0 0.0
          %10492 = vmatmul.mubr.f32.gmra.mxu0 %v10403
          %v10493 = vpop.f32.mrf.mxu0
          %v10494 = vadd.f32 %v10425, %v10493
          %v10495 = vpop.f32.mrf.mxu0
          %10496 = vdwg.mxu0
          %vm10497 = vcmask 58368
          %10498 = vst.msk [vmem:[#allocation18] sm:$0x3] %vm10497, %v7975
          %10499 = vst.msk [vmem:[#allocation19] sm:$0x3] %vm10497, %v8680
          %vm10500 = vcmask 386048
          %10501 = vst.msk [vmem:[%s16] sm:$0x3] %vm10500, %v10494
        $region120: #{vae_forward.1} parent=75 // pred_fallthru
          _
        // Predicated region
        $region121: #{vae_forward.1} parent=75 // pred_check
          %p10502 = pneg %p354
        $region122: #{vae_forward.1} parent=75 // pred_check_branch
          %10504 = sbr.rel (%p10502) target = $region124
        $region123: #{vae_forward.1} parent=75 // pred_region
          %s10506 = ssub.s32 32, 32
          %10507 = vsyncadd [#allocation5], %s10506
          %s10509 = sshll.u32 [#allocation18], 4
          %s10510 = int_to_ptr.vmem [resolvable:$true] %s10509
          %10512 = dma.vmem_to_hbm [thread:$0]  %s10510, 32, %s14, [#allocation5]
        $region124: #{vae_forward.1} parent=75 // pred_fallthru
          _
        // Predicated region
        $region125: #{vae_forward.1} parent=75 // pred_check
          %p10513 = pneg %p375
        $region126: #{vae_forward.1} parent=75 // pred_check_branch
          %10515 = sbr.rel (%p10513) target = $region128
        $region127: #{vae_forward.1} parent=75 // pred_region
          %s10517 = ssub.s32 32, 32
          %10518 = vsyncadd [#allocation20], %s10517
          %s10520 = sshll.u32 [#allocation19], 4
          %s10521 = int_to_ptr.vmem [resolvable:$true] %s10520
          %10523 = dma.vmem_to_hbm [thread:$0]  %s10521, 32, %s15, [#allocation20]
        $region128: #{vae_forward.1} parent=75 // pred_fallthru
          _
        // Predicated region
        $region129: #{vae_forward.1} parent=75 // pred_check
          %p10524 = pneg %p396
        $region130: #{vae_forward.1} parent=75 // pred_check_branch
          %10526 = sbr.rel (%p10524) target = $region132
        $region131: #{vae_forward.1} parent=75 // pred_region
          _
        $region132: #{vae_forward.1} parent=75 // pred_fallthru
          _
        // Predicated region
        $region133: #{vae_forward.1} parent=75 // pred_check
          %p10527 = pneg %p354
        $region134: #{vae_forward.1} parent=75 // pred_check_branch
          %10529 = sbr.rel (%p10527) target = $region136
        $region135: #{vae_forward.1} parent=75 // pred_region
          %10530 = dma.done [#allocation5], 32
        $region136: #{vae_forward.1} parent=75 // pred_fallthru
          _
        // Predicated region
        $region137: #{vae_forward.1} parent=75 // pred_check
          %p10531 = pneg %p375
        $region138: #{vae_forward.1} parent=75 // pred_check_branch
          %10533 = sbr.rel (%p10531) target = $region140
        $region139: #{vae_forward.1} parent=75 // pred_region
          %10534 = dma.done [#allocation20], 32
        $region140: #{vae_forward.1} parent=75 // pred_fallthru
          _
        // Predicated region
        $region141: #{vae_forward.1} parent=75 // pred_check
          %p10535 = pneg %p396
        $region142: #{vae_forward.1} parent=75 // pred_check_branch
          %10537 = sbr.rel (%p10535) target = $region144
        $region143: #{vae_forward.1} parent=75 // pred_region
          _
        $region144: #{vae_forward.1} parent=75 // pred_fallthru
          _
      $region76: #{vae_forward.1} parent=5 // pred_fallthru
        _
      %p10538 = scmp.le.s32.totalorder 2, %s32
      // Predicated region
      $region145: #{vae_forward.1} parent=5 // pred_check
        %p10539 = pneg %p10538
      $region146: #{vae_forward.1} parent=5 // pred_check_branch
        %10541 = sbr.rel (%p10539) target = $region148
      $region147: #{vae_forward.1} parent=5 // pred_region
        %s10542 = ssub.s32 %s32, 2
      $region148: #{vae_forward.1} parent=5 // pred_fallthru
        _
    $region6: #{vae_forward.1} parent=1 // loop_footer
      %s36 = sadd.s32 1, %s32
    $region7: #{vae_forward.1} parent=1 // loop_footer_branch
      %31 = sbr.rel target = $region3
    $region8: #{vae_forward.1} parent=1 // loop_exit
      _
    %10543 = vsyncpa [#allocation4], 1
    %s10544 = scalar_lea.sflag [#allocation4], 1
    %10545 = vsyncpa %s10544, 1
    %10546 = vsyncpa [#allocation7], 1
    %10547 = vsyncpa [#allocation10], 1
    %10548 = vsyncpa [#allocation13], 1
    %10549 = vsyncpa [#allocation16], 1
    %10550 = vsyncpa [#allocation5], 1
    %s10551 = scalar_lea.sflag [#allocation5], 1
    %10552 = vsyncpa %s10551, 1
    %10553 = vsyncpa [#allocation20], 1

</llo_original>
